<compile_context>
chip_gen: v5e
topology: v5e:2x2
jax: 0.10.0
libtpu: 0.0.40
codegen_flags: <defaults>
</compile_context>

<pallas_src>
import math

import jax
import jax.numpy as jnp
from jax.experimental import pallas as pl
from jax.experimental.pallas import tpu as pltpu


TB_CONV = 32     # images per conv-stage grid step
TB_MLP = 256     # images per MLP grid step (shrunk for small batches)
GRID = 324       # 18*18 zero-bordered conv2 grid rows per image
PROWS = 336      # per-image patch rows (324 grid rows + 12 zero rows, 16-aligned)
P1ROWS = 400     # pool1 staging rows (336 written + zero tail for conv2 taps)
POOL2R = 248     # pool2 rows computed (max valid row is 36*6 + 2*6 = 247)


# ----------------------------------------------------------------------------
# Kernel 1: conv1 + pool1 + conv2 + pool2 (per batch tile, all in VMEM)
# ----------------------------------------------------------------------------

def _conv_stage_kernel(p_ref, w1_ref, w2_ref, b2_ref, sel_ref, out_ref,
                       p1_s, c2_s):
    # p_ref  : (TB, 336, 64) bf16  6x6-window conv1 patches on the 18x18
    #          zero-bordered grid; col 36 = bias indicator, cols 37..63 = 0,
    #          rows 324..335 = zero padding.
    # w1_ref : (64, 256) bf16  4 pool-phase conv1 weight blocks (BN folded,
    #          bias in row 36), concatenated along N.
    # w2_ref : (5, 320, 64) bf16  conv2 weights grouped per kh, K = kw*64 + ic.
    # b2_ref : (1, 64) f32    conv2 bias.
    # sel_ref: (49, 248) bf16  0/1 matrix mapping pool2 row 36u+2v -> 7u+v.
    # out_ref: (TB, 49, 64) bf16  pooled conv2 features, row = 7u + v.
    # p1_s   : (400, 64) bf16  pool1 activation on the bordered grid + 0 tail.
    # c2_s   : (324, 64) f32   conv2 activation.

    # Zero the pool1 staging tail once per grid step: per-image writes only
    # touch rows 0..335, so the tail stays zero across the image loop.
    p1_s[336:400, :] = jnp.zeros((64, 64), jnp.bfloat16)

    w1 = w1_ref[...]
    b2 = b2_ref[...]
    sel = sel_ref[...]

    def per_image(b, carry):
        # ---- conv1 (+folded BN, bias via indicator) + ReLU + 2x2 maxpool ----
        # One (336,64)x(64,256) matmul covers all 4 pool phases; max over the
        # 4 phase column blocks implements the 2x2 pool (ReLU commutes).
        h = jnp.dot(p_ref[b], w1, preferred_element_type=jnp.float32)
        h = jnp.maximum(h, 0.0)
        pool1 = jnp.maximum(jnp.maximum(h[:, 0:64], h[:, 64:128]),
                            jnp.maximum(h[:, 128:192], h[:, 192:256]))
        p1_s[0:336, :] = pool1.astype(jnp.bfloat16)

        # ---- conv2 + bias + ReLU: 5 kw-grouped (324,320)x(320,64) matmuls ----
        acc = jnp.zeros((324, 64), jnp.float32)
        for kh in range(5):
            base = kh * 18
            lhs = jnp.concatenate(
                [p1_s[base + kw: base + kw + 324, :] for kw in range(5)],
                axis=-1)                                         # (324, 320)
            acc = acc + jnp.dot(lhs, w2_ref[kh],
                                preferred_element_type=jnp.float32)
        c2_s[...] = jnp.maximum(acc + b2, 0.0)

        # ---- 2x2 maxpool + compaction to the 49 valid rows (7x7 output) ----
        pooled = jnp.maximum(jnp.maximum(c2_s[0:248, :], c2_s[1:249, :]),
                             jnp.maximum(c2_s[18:266, :], c2_s[19:267, :]))
        out = jnp.dot(sel, pooled.astype(jnp.bfloat16),
                      preferred_element_type=jnp.float32)        # (49, 64)
        out_ref[b] = out.astype(jnp.bfloat16)
        return carry

    jax.lax.fori_loop(0, TB_CONV, per_image, 0)


def conv_stage(patches, w1cat, w2g, b2m, sel, batch_pad):
    grid_b = batch_pad // TB_CONV
    return pl.pallas_call(
        _conv_stage_kernel,
        out_shape=jax.ShapeDtypeStruct((batch_pad, 49, 64), jnp.bfloat16),
        grid=(grid_b,),
        in_specs=[
            pl.BlockSpec((TB_CONV, PROWS, 64), lambda i: (i, 0, 0)),
            pl.BlockSpec((64, 256), lambda i: (0, 0)),
            pl.BlockSpec((5, 320, 64), lambda i: (0, 0, 0)),
            pl.BlockSpec((1, 64), lambda i: (0, 0)),
            pl.BlockSpec((49, POOL2R), lambda i: (0, 0)),
        ],
        out_specs=pl.BlockSpec((TB_CONV, 49, 64), lambda i: (i, 0, 0)),
        scratch_shapes=[
            pltpu.VMEM((P1ROWS, 64), jnp.bfloat16),
            pltpu.VMEM((GRID, 64), jnp.float32),
        ],
        compiler_params=pltpu.CompilerParams(dimension_semantics=("parallel",)),
    )(patches, w1cat, w2g, b2m, sel)


# ----------------------------------------------------------------------------
# Kernel 2: fc1 -> ReLU -> fc2 -> ReLU (BN1d folded) -> fc3 -> log_softmax
# ----------------------------------------------------------------------------

def _mlp_kernel(x_ref, w1_ref, b1_ref, w2_ref, b2_ref, w3_ref, b3_ref, o_ref):
    x = x_ref[...]                                              # (TB, 3136) bf16
    h1 = jnp.dot(x, w1_ref[...], preferred_element_type=jnp.float32) + b1_ref[...]
    h1 = jnp.maximum(h1, 0.0)
    # (dropout = identity at inference; BN1d eval scale folded into fc2)
    h2 = jnp.dot(h1.astype(jnp.bfloat16), w2_ref[...],
                 preferred_element_type=jnp.float32) + b2_ref[...]
    h2 = jnp.maximum(h2, 0.0)
    # fc3: N padded to 128 lanes; padded columns carry a -1e30 bias so they
    # contribute exactly zero probability mass to the softmax.
    logits = jnp.dot(h2.astype(jnp.bfloat16), w3_ref[...],
                     preferred_element_type=jnp.float32) + b3_ref[...]
    m = jnp.max(logits, axis=-1, keepdims=True)
    z = logits - m
    lse = jnp.log(jnp.sum(jnp.exp(z), axis=-1, keepdims=True))
    o_ref[...] = z - lse


def mlp_stage(flat, p, batch_pad, tb):
    grid_b = batch_pad // tb
    return pl.pallas_call(
        _mlp_kernel,
        out_shape=jax.ShapeDtypeStruct((batch_pad, 128), jnp.float32),
        grid=(grid_b,),
        in_specs=[
            pl.BlockSpec((tb, 3136), lambda i: (i, 0)),
            pl.BlockSpec((3136, 256), lambda i: (0, 0)),
            pl.BlockSpec((1, 256), lambda i: (0, 0)),
            pl.BlockSpec((256, 64), lambda i: (0, 0)),
            pl.BlockSpec((1, 64), lambda i: (0, 0)),
            pl.BlockSpec((64, 128), lambda i: (0, 0)),
            pl.BlockSpec((1, 128), lambda i: (0, 0)),
        ],
        out_specs=pl.BlockSpec((tb, 128), lambda i: (i, 0)),
        compiler_params=pltpu.CompilerParams(dimension_semantics=("parallel",)),
    )(flat, p["fc1_w"], p["fc1_b"], p["fc2_w"], p["fc2_b"],
      p["fc3_w"], p["fc3_b"])


# ----------------------------------------------------------------------------
# Parameter setup (matches the PyTorch module's init; layouts pre-permuted)
# ----------------------------------------------------------------------------

def init_params(key):
    eps = 1e-5
    ks = jax.random.split(key, 11)

    # BatchNorm2d(1): gamma ~ N(0, 0.02), beta=0, running mean=0, var=1.
    bn1_gamma = jax.random.normal(ks[0], (1,), jnp.float32) * 0.02
    bn1_scale = bn1_gamma[0] / jnp.sqrt(1.0 + eps)

    conv1_w = jax.random.normal(ks[1], (64, 1, 5, 5), jnp.float32) * 0.02
    conv1_b = jax.random.uniform(ks[2], (64,), jnp.float32,
                                 -1 / math.sqrt(25), 1 / math.sqrt(25))
    conv2_w = jax.random.normal(ks[3], (64, 64, 5, 5), jnp.float32) * 0.02
    conv2_b = jax.random.uniform(ks[4], (64,), jnp.float32,
                                 -1 / math.sqrt(64 * 25), 1 / math.sqrt(64 * 25))

    def linear(kw_, kb_, fan_out, fan_in):
        std = math.sqrt(2.0 / (fan_in + fan_out))
        w = jax.random.normal(kw_, (fan_out, fan_in), jnp.float32) * std
        b = jax.random.uniform(kb_, (fan_out,), jnp.float32,
                               -1 / math.sqrt(fan_in), 1 / math.sqrt(fan_in))
        return w, b

    fc1_w, fc1_b = linear(ks[5], ks[6], 256, 64 * 7 * 7)
    fc2_w, fc2_b = linear(ks[7], ks[8], 64, 256)
    fc3_w, fc3_b = linear(ks[9], ks[10], 10, 64)

    # conv1 as 4 pool-phase matmul blocks over the 6x6 input-window patches.
    # Phase (a, c): row 6*(a+kh) + (c+kw) gets W1[:, 0, kh, kw] * bn_scale;
    # row 36 (bias indicator) gets conv1_b.
    wk = conv1_w[:, 0] * bn1_scale                          # (64, 5, 5)
    w1cat = jnp.zeros((64, 256), jnp.float32)
    for a in (0, 1):
        for c in (0, 1):
            ph = 2 * a + c
            blk = jnp.zeros((64, 64), jnp.float32)
            for kh in range(5):
                for kw in range(5):
                    blk = blk.at[6 * (a + kh) + (c + kw), :].set(wk[:, kh, kw])
            blk = blk.at[36, :].set(conv1_b)
            w1cat = w1cat.at[:, ph * 64:(ph + 1) * 64].set(blk)

    # conv2 weights grouped per kh: (oc, ic, kh, kw) -> (kh, kw*64 + ic, oc).
    w2g = jnp.transpose(conv2_w, (2, 3, 1, 0)).reshape(5, 320, 64)
    b2m = conv2_b.reshape(1, 64)

    # pool2 row-selection matrix: output row 7u+v <- conv2 grid row 36u+2v.
    r = jnp.arange(49)
    sel = jnp.zeros((49, POOL2R), jnp.float32)
    sel = sel.at[r, 36 * (r // 7) + 2 * (r % 7)].set(1.0)

    # fc1: permute input rows from PyTorch (c, u, v) flatten order to (u, v, c).
    fc1m = jnp.transpose(fc1_w.reshape(256, 64, 7, 7),
                         (2, 3, 1, 0)).reshape(3136, 256)

    # BatchNorm1d(64): default init (gamma=1, beta=0), eval running stats
    # (mean=0, var=1) -> pure positive scale, folded into fc2 (commutes with
    # the ReLU between fc2 and bn2).
    bn2_scale = 1.0 / math.sqrt(1.0 + eps)
    fc2m = fc2_w.T * bn2_scale
    fc2bf = fc2_b * bn2_scale

    # fc3 padded from 10 to 128 output lanes; padded logits forced to -1e30.
    fc3m = jnp.zeros((64, 128), jnp.float32).at[:, :10].set(fc3_w.T)
    fc3bp = jnp.full((1, 128), -1e30, jnp.float32).at[0, :10].set(fc3_b)

    return {
        "w1cat": w1cat.astype(jnp.bfloat16),
        "w2g": w2g.astype(jnp.bfloat16),
        "b2m": b2m,
        "sel": sel.astype(jnp.bfloat16),
        "fc1_w": fc1m.astype(jnp.bfloat16), "fc1_b": fc1_b.reshape(1, 256),
        "fc2_w": fc2m.astype(jnp.bfloat16), "fc2_b": fc2bf.reshape(1, 64),
        "fc3_w": fc3m.astype(jnp.bfloat16), "fc3_b": fc3bp,
    }


# ----------------------------------------------------------------------------
# Forward pass
# ----------------------------------------------------------------------------

def _round_up(n, m):
    return ((n + m - 1) // m) * m


def cnn_forward(x_nchw, params):
    """x_nchw: (B, 1, 28, 28) float32 -> (B, 10) log-probabilities."""
    B = x_nchw.shape[0]
    B_pad = _round_up(B, TB_CONV)
    x = x_nchw[:, 0].astype(jnp.float32)                         # (B, 28, 28)
    if B_pad != B:
        x = jnp.pad(x, ((0, B_pad - B), (0, 0), (0, 0)))
    xp = jnp.pad(x, ((0, 0), (2, 2), (2, 2)))                    # (B_pad, 32, 32)

    # Compact conv1 patches: one 6x6 input window per pooled pixel (covers the
    # 5x5 conv taps of all four 2x2-pool phases) + a bias-indicator column,
    # embedded on the 18x18 zero-bordered grid used by the in-kernel conv2,
    # rows padded 324 -> 336 for sublane alignment.
    cols = [xp[:, p:p + 28:2, q:q + 28:2] for p in range(6) for q in range(6)]
    pk = jnp.stack(cols, axis=-1)                                # (B_pad,14,14,36)
    pk = jnp.concatenate(
        [pk,
         jnp.ones((B_pad, 14, 14, 1), jnp.float32),              # bias indicator
         jnp.zeros((B_pad, 14, 14, 27), jnp.float32)], axis=-1)  # K pad 37..63
    pk = jnp.pad(pk, ((0, 0), (2, 2), (2, 2), (0, 0)))           # (B_pad,18,18,64)
    patches = pk.reshape(B_pad, GRID, 64)
    patches = jnp.pad(patches, ((0, 0), (0, PROWS - GRID), (0, 0)))
    patches = patches.astype(jnp.bfloat16)                       # (B_pad,336,64)

    # Fused conv stage: dense (B_pad, 49, 64) pooled features, row = 7u + v.
    conv_out = conv_stage(patches, params["w1cat"], params["w2g"],
                          params["b2m"], params["sel"], B_pad)
    flat = conv_out.reshape(B_pad, 49 * 64)                      # (u, v, c) order

    # MLP uses its own (larger) batch tile.
    tb_mlp = TB_MLP if B >= TB_MLP else _round_up(max(B, 1), 8)
    B_mlp = _round_up(B, tb_mlp)
    if B_mlp > B_pad:
        flat = jnp.pad(flat, ((0, B_mlp - B_pad), (0, 0)))
    elif B_mlp < B_pad:
        flat = flat[:B_mlp]

    logp = mlp_stage(flat, params, B_mlp, tb_mlp)                # (B_mlp, 128)
    return logp[:B, :10]


if __name__ == "__main__":
    key = jax.random.PRNGKey(0)
    pkey, xkey = jax.random.split(key)
    params = init_params(pkey)

    # MNIST-shaped input (the 64*7*7 flatten pins the spatial size to 28x28).
    x = jax.random.normal(xkey, (2, 1, 28, 28), jnp.float32)

    out = jax.jit(cnn_forward)(x, params)
    out = jax.block_until_ready(out)

    assert out.shape == (2, 10), out.shape
    assert bool(jnp.all(jnp.isfinite(out)))
    # log_softmax rows should sum (in prob space) to ~1
    assert bool(jnp.allclose(jnp.sum(jnp.exp(out), axis=1), 1.0, atol=1e-4))
    print("KERNEL_OK")
</pallas_src>

<mosaic_0001>
module attributes {stable_mosaic.version = 11 : i64} {
  func.func @_conv_stage_kernel(%arg0: i32, %arg1: memref<32x336x64xbf16, #tpu.memory_space<vmem>>, %arg2: memref<64x256xbf16, #tpu.memory_space<vmem>>, %arg3: memref<5x320x64xbf16, #tpu.memory_space<vmem>>, %arg4: memref<1x64xf32, #tpu.memory_space<vmem>>, %arg5: memref<49x248xbf16, #tpu.memory_space<vmem>>, %arg6: memref<32x49x64xbf16, #tpu.memory_space<vmem>>, %arg7: memref<400x64xbf16, #tpu.memory_space<vmem>>, %arg8: memref<324x64xf32, #tpu.memory_space<vmem>>) attributes {dimension_semantics = [#tpu.dimension_semantics<parallel>], iteration_bounds = array<i64: 1>, scalar_prefetch = 0 : i64, scratch_operands = 2 : i64, tpu.core_type = #tpu.core_type<tc>, window_params = [{transform_indices = @transform_0, window_bounds = array<i64: 32, 336, 64>}, {pipeline_mode = #tpu.pipeline_mode<synchronous>, transform_indices = @transform_1, window_bounds = array<i64: 64, 256>}, {pipeline_mode = #tpu.pipeline_mode<synchronous>, transform_indices = @transform_2, window_bounds = array<i64: 5, 320, 64>}, {pipeline_mode = #tpu.pipeline_mode<synchronous>, transform_indices = @transform_3, window_bounds = array<i64: 1, 64>}, {pipeline_mode = #tpu.pipeline_mode<synchronous>, transform_indices = @transform_4, window_bounds = array<i64: 49, 248>}, {transform_indices = @transform_5, window_bounds = array<i64: 32, 49, 64>}]} {
    %cst = arith.constant 0.000000e+00 : bf16
    %0 = vector.broadcast %cst : bf16 to vector<64x64xbf16>
    %c336 = arith.constant 336 : index
    %c0 = arith.constant 0 : index
    %1 = vector.load %arg7[%c336, %c0] : memref<400x64xbf16, #tpu.memory_space<vmem>>, vector<64x64xbf16>
    tpu.vector_store %arg7[%c336, %c0], %0 {strides = array<i32>} : memref<400x64xbf16, #tpu.memory_space<vmem>>, vector<64x64xbf16>,
    %c0_0 = arith.constant 0 : index
    %c0_1 = arith.constant 0 : index
    %2 = vector.load %arg2[%c0_0, %c0_1] : memref<64x256xbf16, #tpu.memory_space<vmem>>, vector<64x256xbf16>
    %c0_2 = arith.constant 0 : index
    %c0_3 = arith.constant 0 : index
    %3 = vector.load %arg4[%c0_2, %c0_3] : memref<1x64xf32, #tpu.memory_space<vmem>>, vector<1x64xf32>
    %c0_4 = arith.constant 0 : index
    %c0_5 = arith.constant 0 : index
    %4 = vector.load %arg5[%c0_4, %c0_5] : memref<49x248xbf16, #tpu.memory_space<vmem>>, vector<49x248xbf16>
    %c0_i32 = arith.constant 0 : i32
    %c32_i32 = arith.constant 32 : i32
    %5 = arith.addi %c0_i32, %c32_i32 : i32
    %c1_i32 = arith.constant 1 : i32
    scf.for %arg9 = %c0_i32 to %5 step %c1_i32  : i32 {
      %6 = arith.index_cast %arg9 : i32 to index
      %c0_7 = arith.constant 0 : index
      %c0_8 = arith.constant 0 : index
      %7 = vector.load %arg1[%6, %c0_7, %c0_8] : memref<32x336x64xbf16, #tpu.memory_space<vmem>>, vector<1x336x64xbf16>
      %8 = vector.shape_cast %7 : vector<1x336x64xbf16> to vector<336x64xbf16>
      %cst_9 = arith.constant dense<0.000000e+00> : vector<336x256xf32>
      %9 = tpu.matmul %8, %2, %cst_9 {dimension_numbers = #tpu.dot_dimension_numbers<[1], [0], [0], [1], [0, 0, 1, 1], [], []>} : vector<336x64xbf16>, vector<64x256xbf16>, vector<336x256xf32> -> vector<336x256xf32>
      %cst_10 = arith.constant 0.000000e+00 : f32
      %10 = vector.broadcast %cst_10 : f32 to vector<336x256xf32>
      %11 = arith.maximumf %9, %10 : vector<336x256xf32>
      %12 = vector.extract_strided_slice %11 {offsets = [0, 0], sizes = [336, 64], strides = [1, 1]} : vector<336x256xf32> to vector<336x64xf32>
      %13 = vector.extract_strided_slice %11 {offsets = [0, 64], sizes = [336, 64], strides = [1, 1]} : vector<336x256xf32> to vector<336x64xf32>
      %14 = arith.maximumf %12, %13 : vector<336x64xf32>
      %15 = vector.extract_strided_slice %11 {offsets = [0, 128], sizes = [336, 64], strides = [1, 1]} : vector<336x256xf32> to vector<336x64xf32>
      %16 = vector.extract_strided_slice %11 {offsets = [0, 192], sizes = [336, 64], strides = [1, 1]} : vector<336x256xf32> to vector<336x64xf32>
      %17 = arith.maximumf %15, %16 : vector<336x64xf32>
      %18 = arith.maximumf %14, %17 : vector<336x64xf32>
      %19 = arith.truncf %18 : vector<336x64xf32> to vector<336x64xbf16>
      %c0_11 = arith.constant 0 : index
      %c0_12 = arith.constant 0 : index
      %20 = vector.load %arg7[%c0_11, %c0_12] : memref<400x64xbf16, #tpu.memory_space<vmem>>, vector<336x64xbf16>
      tpu.vector_store %arg7[%c0_11, %c0_12], %19 {strides = array<i32>} : memref<400x64xbf16, #tpu.memory_space<vmem>>, vector<336x64xbf16>,
      %cst_13 = arith.constant 0.000000e+00 : f32
      %21 = vector.broadcast %cst_13 : f32 to vector<324x64xf32>
      %c0_14 = arith.constant 0 : index
      %c0_15 = arith.constant 0 : index
      %22 = vector.load %arg7[%c0_14, %c0_15] : memref<400x64xbf16, #tpu.memory_space<vmem>>, vector<324x64xbf16>
      %c1 = arith.constant 1 : index
      %c0_16 = arith.constant 0 : index
      %23 = vector.load %arg7[%c1, %c0_16] : memref<400x64xbf16, #tpu.memory_space<vmem>>, vector<324x64xbf16>
      %c2 = arith.constant 2 : index
      %c0_17 = arith.constant 0 : index
      %24 = vector.load %arg7[%c2, %c0_17] : memref<400x64xbf16, #tpu.memory_space<vmem>>, vector<324x64xbf16>
      %c3 = arith.constant 3 : index
      %c0_18 = arith.constant 0 : index
      %25 = vector.load %arg7[%c3, %c0_18] : memref<400x64xbf16, #tpu.memory_space<vmem>>, vector<324x64xbf16>
      %c4 = arith.constant 4 : index
      %c0_19 = arith.constant 0 : index
      %26 = vector.load %arg7[%c4, %c0_19] : memref<400x64xbf16, #tpu.memory_space<vmem>>, vector<324x64xbf16>
      %27 = tpu.concatenate %22, %23, %24, %25, %26 in 1 : vector<324x64xbf16>, vector<324x64xbf16>, vector<324x64xbf16>, vector<324x64xbf16>, vector<324x64xbf16> -> vector<324x320xbf16>
      %c0_20 = arith.constant 0 : index
      %c0_21 = arith.constant 0 : index
      %c0_22 = arith.constant 0 : index
      %28 = vector.load %arg3[%c0_20, %c0_21, %c0_22] : memref<5x320x64xbf16, #tpu.memory_space<vmem>>, vector<1x320x64xbf16>
      %29 = vector.shape_cast %28 : vector<1x320x64xbf16> to vector<320x64xbf16>
      %cst_23 = arith.constant dense<0.000000e+00> : vector<324x64xf32>
      %30 = tpu.matmul %27, %29, %cst_23 {dimension_numbers = #tpu.dot_dimension_numbers<[1], [0], [0], [1], [0, 0, 1, 1], [], []>} : vector<324x320xbf16>, vector<320x64xbf16>, vector<324x64xf32> -> vector<324x64xf32>
      %31 = arith.addf %21, %30 : vector<324x64xf32>
      %c18 = arith.constant 18 : index
      %c0_24 = arith.constant 0 : index
      %32 = vector.load %arg7[%c18, %c0_24] : memref<400x64xbf16, #tpu.memory_space<vmem>>, vector<324x64xbf16>
      %c19 = arith.constant 19 : index
      %c0_25 = arith.constant 0 : index
      %33 = vector.load %arg7[%c19, %c0_25] : memref<400x64xbf16, #tpu.memory_space<vmem>>, vector<324x64xbf16>
      %c20 = arith.constant 20 : index
      %c0_26 = arith.constant 0 : index
      %34 = vector.load %arg7[%c20, %c0_26] : memref<400x64xbf16, #tpu.memory_space<vmem>>, vector<324x64xbf16>
      %c21 = arith.constant 21 : index
      %c0_27 = arith.constant 0 : index
      %35 = vector.load %arg7[%c21, %c0_27] : memref<400x64xbf16, #tpu.memory_space<vmem>>, vector<324x64xbf16>
      %c22 = arith.constant 22 : index
      %c0_28 = arith.constant 0 : index
      %36 = vector.load %arg7[%c22, %c0_28] : memref<400x64xbf16, #tpu.memory_space<vmem>>, vector<324x64xbf16>
      %37 = tpu.concatenate %32, %33, %34, %35, %36 in 1 : vector<324x64xbf16>, vector<324x64xbf16>, vector<324x64xbf16>, vector<324x64xbf16>, vector<324x64xbf16> -> vector<324x320xbf16>
      %c1_29 = arith.constant 1 : index
      %c0_30 = arith.constant 0 : index
      %c0_31 = arith.constant 0 : index
      %38 = vector.load %arg3[%c1_29, %c0_30, %c0_31] : memref<5x320x64xbf16, #tpu.memory_space<vmem>>, vector<1x320x64xbf16>
      %39 = vector.shape_cast %38 : vector<1x320x64xbf16> to vector<320x64xbf16>
      %cst_32 = arith.constant dense<0.000000e+00> : vector<324x64xf32>
      %40 = tpu.matmul %37, %39, %cst_32 {dimension_numbers = #tpu.dot_dimension_numbers<[1], [0], [0], [1], [0, 0, 1, 1], [], []>} : vector<324x320xbf16>, vector<320x64xbf16>, vector<324x64xf32> -> vector<324x64xf32>
      %41 = arith.addf %31, %40 : vector<324x64xf32>
      %c36 = arith.constant 36 : index
      %c0_33 = arith.constant 0 : index
      %42 = vector.load %arg7[%c36, %c0_33] : memref<400x64xbf16, #tpu.memory_space<vmem>>, vector<324x64xbf16>
      %c37 = arith.constant 37 : index
      %c0_34 = arith.constant 0 : index
      %43 = vector.load %arg7[%c37, %c0_34] : memref<400x64xbf16, #tpu.memory_space<vmem>>, vector<324x64xbf16>
      %c38 = arith.constant 38 : index
      %c0_35 = arith.constant 0 : index
      %44 = vector.load %arg7[%c38, %c0_35] : memref<400x64xbf16, #tpu.memory_space<vmem>>, vector<324x64xbf16>
      %c39 = arith.constant 39 : index
      %c0_36 = arith.constant 0 : index
      %45 = vector.load %arg7[%c39, %c0_36] : memref<400x64xbf16, #tpu.memory_space<vmem>>, vector<324x64xbf16>
      %c40 = arith.constant 40 : index
      %c0_37 = arith.constant 0 : index
      %46 = vector.load %arg7[%c40, %c0_37] : memref<400x64xbf16, #tpu.memory_space<vmem>>, vector<324x64xbf16>
      %47 = tpu.concatenate %42, %43, %44, %45, %46 in 1 : vector<324x64xbf16>, vector<324x64xbf16>, vector<324x64xbf16>, vector<324x64xbf16>, vector<324x64xbf16> -> vector<324x320xbf16>
      %c2_38 = arith.constant 2 : index
      %c0_39 = arith.constant 0 : index
      %c0_40 = arith.constant 0 : index
      %48 = vector.load %arg3[%c2_38, %c0_39, %c0_40] : memref<5x320x64xbf16, #tpu.memory_space<vmem>>, vector<1x320x64xbf16>
      %49 = vector.shape_cast %48 : vector<1x320x64xbf16> to vector<320x64xbf16>
      %cst_41 = arith.constant dense<0.000000e+00> : vector<324x64xf32>
      %50 = tpu.matmul %47, %49, %cst_41 {dimension_numbers = #tpu.dot_dimension_numbers<[1], [0], [0], [1], [0, 0, 1, 1], [], []>} : vector<324x320xbf16>, vector<320x64xbf16>, vector<324x64xf32> -> vector<324x64xf32>
      %51 = arith.addf %41, %50 : vector<324x64xf32>
      %c54 = arith.constant 54 : index
      %c0_42 = arith.constant 0 : index
      %52 = vector.load %arg7[%c54, %c0_42] : memref<400x64xbf16, #tpu.memory_space<vmem>>, vector<324x64xbf16>
      %c55 = arith.constant 55 : index
      %c0_43 = arith.constant 0 : index
      %53 = vector.load %arg7[%c55, %c0_43] : memref<400x64xbf16, #tpu.memory_space<vmem>>, vector<324x64xbf16>
      %c56 = arith.constant 56 : index
      %c0_44 = arith.constant 0 : index
      %54 = vector.load %arg7[%c56, %c0_44] : memref<400x64xbf16, #tpu.memory_space<vmem>>, vector<324x64xbf16>
      %c57 = arith.constant 57 : index
      %c0_45 = arith.constant 0 : index
      %55 = vector.load %arg7[%c57, %c0_45] : memref<400x64xbf16, #tpu.memory_space<vmem>>, vector<324x64xbf16>
      %c58 = arith.constant 58 : index
      %c0_46 = arith.constant 0 : index
      %56 = vector.load %arg7[%c58, %c0_46] : memref<400x64xbf16, #tpu.memory_space<vmem>>, vector<324x64xbf16>
      %57 = tpu.concatenate %52, %53, %54, %55, %56 in 1 : vector<324x64xbf16>, vector<324x64xbf16>, vector<324x64xbf16>, vector<324x64xbf16>, vector<324x64xbf16> -> vector<324x320xbf16>
      %c3_47 = arith.constant 3 : index
      %c0_48 = arith.constant 0 : index
      %c0_49 = arith.constant 0 : index
      %58 = vector.load %arg3[%c3_47, %c0_48, %c0_49] : memref<5x320x64xbf16, #tpu.memory_space<vmem>>, vector<1x320x64xbf16>
      %59 = vector.shape_cast %58 : vector<1x320x64xbf16> to vector<320x64xbf16>
      %cst_50 = arith.constant dense<0.000000e+00> : vector<324x64xf32>
      %60 = tpu.matmul %57, %59, %cst_50 {dimension_numbers = #tpu.dot_dimension_numbers<[1], [0], [0], [1], [0, 0, 1, 1], [], []>} : vector<324x320xbf16>, vector<320x64xbf16>, vector<324x64xf32> -> vector<324x64xf32>
      %61 = arith.addf %51, %60 : vector<324x64xf32>
      %c72 = arith.constant 72 : index
      %c0_51 = arith.constant 0 : index
      %62 = vector.load %arg7[%c72, %c0_51] : memref<400x64xbf16, #tpu.memory_space<vmem>>, vector<324x64xbf16>
      %c73 = arith.constant 73 : index
      %c0_52 = arith.constant 0 : index
      %63 = vector.load %arg7[%c73, %c0_52] : memref<400x64xbf16, #tpu.memory_space<vmem>>, vector<324x64xbf16>
      %c74 = arith.constant 74 : index
      %c0_53 = arith.constant 0 : index
      %64 = vector.load %arg7[%c74, %c0_53] : memref<400x64xbf16, #tpu.memory_space<vmem>>, vector<324x64xbf16>
      %c75 = arith.constant 75 : index
      %c0_54 = arith.constant 0 : index
      %65 = vector.load %arg7[%c75, %c0_54] : memref<400x64xbf16, #tpu.memory_space<vmem>>, vector<324x64xbf16>
      %c76 = arith.constant 76 : index
      %c0_55 = arith.constant 0 : index
      %66 = vector.load %arg7[%c76, %c0_55] : memref<400x64xbf16, #tpu.memory_space<vmem>>, vector<324x64xbf16>
      %67 = tpu.concatenate %62, %63, %64, %65, %66 in 1 : vector<324x64xbf16>, vector<324x64xbf16>, vector<324x64xbf16>, vector<324x64xbf16>, vector<324x64xbf16> -> vector<324x320xbf16>
      %c4_56 = arith.constant 4 : index
      %c0_57 = arith.constant 0 : index
      %c0_58 = arith.constant 0 : index
      %68 = vector.load %arg3[%c4_56, %c0_57, %c0_58] : memref<5x320x64xbf16, #tpu.memory_space<vmem>>, vector<1x320x64xbf16>
      %69 = vector.shape_cast %68 : vector<1x320x64xbf16> to vector<320x64xbf16>
      %cst_59 = arith.constant dense<0.000000e+00> : vector<324x64xf32>
      %70 = tpu.matmul %67, %69, %cst_59 {dimension_numbers = #tpu.dot_dimension_numbers<[1], [0], [0], [1], [0, 0, 1, 1], [], []>} : vector<324x320xbf16>, vector<320x64xbf16>, vector<324x64xf32> -> vector<324x64xf32>
      %71 = arith.addf %61, %70 : vector<324x64xf32>
      %72 = vector.broadcast %3 : vector<1x64xf32> to vector<324x64xf32>
      %73 = arith.addf %71, %72 : vector<324x64xf32>
      %cst_60 = arith.constant 0.000000e+00 : f32
      %74 = vector.broadcast %cst_60 : f32 to vector<324x64xf32>
      %75 = arith.maximumf %73, %74 : vector<324x64xf32>
      %c0_61 = arith.constant 0 : index
      %c0_62 = arith.constant 0 : index
      %76 = vector.load %arg8[%c0_61, %c0_62] : memref<324x64xf32, #tpu.memory_space<vmem>>, vector<324x64xf32>
      tpu.vector_store %arg8[%c0_61, %c0_62], %75 {strides = array<i32>} : memref<324x64xf32, #tpu.memory_space<vmem>>, vector<324x64xf32>,
      %c0_63 = arith.constant 0 : index
      %c0_64 = arith.constant 0 : index
      %77 = vector.load %arg8[%c0_63, %c0_64] : memref<324x64xf32, #tpu.memory_space<vmem>>, vector<248x64xf32>
      %c1_65 = arith.constant 1 : index
      %c0_66 = arith.constant 0 : index
      %78 = vector.load %arg8[%c1_65, %c0_66] : memref<324x64xf32, #tpu.memory_space<vmem>>, vector<248x64xf32>
      %79 = arith.maximumf %77, %78 : vector<248x64xf32>
      %c18_67 = arith.constant 18 : index
      %c0_68 = arith.constant 0 : index
      %80 = vector.load %arg8[%c18_67, %c0_68] : memref<324x64xf32, #tpu.memory_space<vmem>>, vector<248x64xf32>
      %c19_69 = arith.constant 19 : index
      %c0_70 = arith.constant 0 : index
      %81 = vector.load %arg8[%c19_69, %c0_70] : memref<324x64xf32, #tpu.memory_space<vmem>>, vector<248x64xf32>
      %82 = arith.maximumf %80, %81 : vector<248x64xf32>
      %83 = arith.maximumf %79, %82 : vector<248x64xf32>
      %84 = arith.truncf %83 : vector<248x64xf32> to vector<248x64xbf16>
      %cst_71 = arith.constant dense<0.000000e+00> : vector<49x64xf32>
      %85 = tpu.matmul %4, %84, %cst_71 {dimension_numbers = #tpu.dot_dimension_numbers<[1], [0], [0], [1], [0, 0, 1, 1], [], []>} : vector<49x248xbf16>, vector<248x64xbf16>, vector<49x64xf32> -> vector<49x64xf32>
      %86 = arith.truncf %85 : vector<49x64xf32> to vector<49x64xbf16>
      %87 = arith.index_cast %arg9 : i32 to index
      %c0_72 = arith.constant 0 : index
      %c0_73 = arith.constant 0 : index
      %88 = vector.load %arg6[%87, %c0_72, %c0_73] : memref<32x49x64xbf16, #tpu.memory_space<vmem>>, vector<1x49x64xbf16>
      %89 = vector.shape_cast %88 : vector<1x49x64xbf16> to vector<49x64xbf16>
      %90 = vector.shape_cast %86 : vector<49x64xbf16> to vector<1x49x64xbf16>
      tpu.vector_store %arg6[%87, %c0_72, %c0_73], %90 {strides = array<i32>} : memref<32x49x64xbf16, #tpu.memory_space<vmem>>, vector<1x49x64xbf16>,
    }
    %c32_i32_6 = arith.constant 32 : i32
    return
  }
  func.func @transform_0(%arg0: i32) -> (i32, i32, i32) {
    %c0_i32 = arith.constant 0 : i32
    %c0_i32_0 = arith.constant 0 : i32
    %c0_i32_1 = arith.constant 0 : i32
    return %arg0, %c0_i32, %c0_i32_0 : i32, i32, i32
  }
  func.func @transform_1(%arg0: i32) -> (i32, i32) {
    %c0_i32 = arith.constant 0 : i32
    %c0_i32_0 = arith.constant 0 : i32
    %c0_i32_1 = arith.constant 0 : i32
    return %c0_i32, %c0_i32_0 : i32, i32
  }
  func.func @transform_2(%arg0: i32) -> (i32, i32, i32) {
    %c0_i32 = arith.constant 0 : i32
    %c0_i32_0 = arith.constant 0 : i32
    %c0_i32_1 = arith.constant 0 : i32
    %c0_i32_2 = arith.constant 0 : i32
    return %c0_i32, %c0_i32_0, %c0_i32_1 : i32, i32, i32
  }
  func.func @transform_3(%arg0: i32) -> (i32, i32) {
    %c0_i32 = arith.constant 0 : i32
    %c0_i32_0 = arith.constant 0 : i32
    %c0_i32_1 = arith.constant 0 : i32
    return %c0_i32, %c0_i32_0 : i32, i32
  }
  func.func @transform_4(%arg0: i32) -> (i32, i32) {
    %c0_i32 = arith.constant 0 : i32
    %c0_i32_0 = arith.constant 0 : i32
    %c0_i32_1 = arith.constant 0 : i32
    return %c0_i32, %c0_i32_0 : i32, i32
  }
  func.func @transform_5(%arg0: i32) -> (i32, i32, i32) {
    %c0_i32 = arith.constant 0 : i32
    %c0_i32_0 = arith.constant 0 : i32
    %c0_i32_1 = arith.constant 0 : i32
    return %arg0, %c0_i32, %c0_i32_0 : i32, i32, i32
  }
}

module attributes {stable_mosaic.version = 11 : i64} {
  func.func @_mlp_kernel(%arg0: i32, %arg1: memref<8x3136xbf16, #tpu.memory_space<vmem>>, %arg2: memref<3136x256xbf16, #tpu.memory_space<vmem>>, %arg3: memref<1x256xf32, #tpu.memory_space<vmem>>, %arg4: memref<256x64xbf16, #tpu.memory_space<vmem>>, %arg5: memref<1x64xf32, #tpu.memory_space<vmem>>, %arg6: memref<64x128xbf16, #tpu.memory_space<vmem>>, %arg7: memref<1x128xf32, #tpu.memory_space<vmem>>, %arg8: memref<8x128xf32, #tpu.memory_space<vmem>>) attributes {dimension_semantics = [#tpu.dimension_semantics<parallel>], iteration_bounds = array<i64: 1>, scalar_prefetch = 0 : i64, scratch_operands = 0 : i64, tpu.core_type = #tpu.core_type<tc>, window_params = [{transform_indices = @transform_0, window_bounds = array<i64: 8, 3136>}, {pipeline_mode = #tpu.pipeline_mode<synchronous>, transform_indices = @transform_1, window_bounds = array<i64: 3136, 256>}, {pipeline_mode = #tpu.pipeline_mode<synchronous>, transform_indices = @transform_2, window_bounds = array<i64: 1, 256>}, {pipeline_mode = #tpu.pipeline_mode<synchronous>, transform_indices = @transform_3, window_bounds = array<i64: 256, 64>}, {pipeline_mode = #tpu.pipeline_mode<synchronous>, transform_indices = @transform_4, window_bounds = array<i64: 1, 64>}, {pipeline_mode = #tpu.pipeline_mode<synchronous>, transform_indices = @transform_5, window_bounds = array<i64: 64, 128>}, {pipeline_mode = #tpu.pipeline_mode<synchronous>, transform_indices = @transform_6, window_bounds = array<i64: 1, 128>}, {transform_indices = @transform_7, window_bounds = array<i64: 8, 128>}]} {
    %c0 = arith.constant 0 : index
    %c0_0 = arith.constant 0 : index
    %0 = vector.load %arg1[%c0, %c0_0] : memref<8x3136xbf16, #tpu.memory_space<vmem>>, vector<8x3136xbf16>
    %c0_1 = arith.constant 0 : index
    %c0_2 = arith.constant 0 : index
    %1 = vector.load %arg2[%c0_1, %c0_2] : memref<3136x256xbf16, #tpu.memory_space<vmem>>, vector<3136x256xbf16>
    %cst = arith.constant dense<0.000000e+00> : vector<8x256xf32>
    %2 = tpu.matmul %0, %1, %cst {dimension_numbers = #tpu.dot_dimension_numbers<[1], [0], [0], [1], [0, 0, 1, 1], [], []>} : vector<8x3136xbf16>, vector<3136x256xbf16>, vector<8x256xf32> -> vector<8x256xf32>
    %c0_3 = arith.constant 0 : index
    %c0_4 = arith.constant 0 : index
    %3 = vector.load %arg3[%c0_3, %c0_4] : memref<1x256xf32, #tpu.memory_space<vmem>>, vector<1x256xf32>
    %4 = vector.broadcast %3 : vector<1x256xf32> to vector<8x256xf32>
    %5 = arith.addf %2, %4 : vector<8x256xf32>
    %cst_5 = arith.constant 0.000000e+00 : f32
    %6 = vector.broadcast %cst_5 : f32 to vector<8x256xf32>
    %7 = arith.maximumf %5, %6 : vector<8x256xf32>
    %8 = arith.truncf %7 : vector<8x256xf32> to vector<8x256xbf16>
    %c0_6 = arith.constant 0 : index
    %c0_7 = arith.constant 0 : index
    %9 = vector.load %arg4[%c0_6, %c0_7] : memref<256x64xbf16, #tpu.memory_space<vmem>>, vector<256x64xbf16>
    %cst_8 = arith.constant dense<0.000000e+00> : vector<8x64xf32>
    %10 = tpu.matmul %8, %9, %cst_8 {dimension_numbers = #tpu.dot_dimension_numbers<[1], [0], [0], [1], [0, 0, 1, 1], [], []>} : vector<8x256xbf16>, vector<256x64xbf16>, vector<8x64xf32> -> vector<8x64xf32>
    %c0_9 = arith.constant 0 : index
    %c0_10 = arith.constant 0 : index
    %11 = vector.load %arg5[%c0_9, %c0_10] : memref<1x64xf32, #tpu.memory_space<vmem>>, vector<1x64xf32>
    %12 = vector.broadcast %11 : vector<1x64xf32> to vector<8x64xf32>
    %13 = arith.addf %10, %12 : vector<8x64xf32>
    %cst_11 = arith.constant 0.000000e+00 : f32
    %14 = vector.broadcast %cst_11 : f32 to vector<8x64xf32>
    %15 = arith.maximumf %13, %14 : vector<8x64xf32>
    %16 = arith.truncf %15 : vector<8x64xf32> to vector<8x64xbf16>
    %c0_12 = arith.constant 0 : index
    %c0_13 = arith.constant 0 : index
    %17 = vector.load %arg6[%c0_12, %c0_13] : memref<64x128xbf16, #tpu.memory_space<vmem>>, vector<64x128xbf16>
    %cst_14 = arith.constant dense<0.000000e+00> : vector<8x128xf32>
    %18 = tpu.matmul %16, %17, %cst_14 {dimension_numbers = #tpu.dot_dimension_numbers<[1], [0], [0], [1], [0, 0, 1, 1], [], []>} : vector<8x64xbf16>, vector<64x128xbf16>, vector<8x128xf32> -> vector<8x128xf32>
    %c0_15 = arith.constant 0 : index
    %c0_16 = arith.constant 0 : index
    %19 = vector.load %arg7[%c0_15, %c0_16] : memref<1x128xf32, #tpu.memory_space<vmem>>, vector<1x128xf32>
    %20 = vector.broadcast %19 : vector<1x128xf32> to vector<8x128xf32>
    %21 = arith.addf %18, %20 : vector<8x128xf32>
    %cst_17 = arith.constant dense<0xFF800000> : vector<8xf32>
    %22 = vector.multi_reduction <maximumf>, %21, %cst_17 [1] : vector<8x128xf32> to vector<8xf32>
    %23 = vector.shape_cast %22 : vector<8xf32> to vector<8x1xf32>
    %24 = vector.broadcast %23 : vector<8x1xf32> to vector<8x128xf32>
    %25 = arith.subf %21, %24 : vector<8x128xf32>
    %26 = math.exp %25 : vector<8x128xf32>
    %cst_18 = arith.constant dense<0.000000e+00> : vector<8xf32>
    %27 = vector.multi_reduction <add>, %26, %cst_18 [1] : vector<8x128xf32> to vector<8xf32>
    %28 = vector.shape_cast %27 : vector<8xf32> to vector<8x1xf32>
    %29 = math.log %28 : vector<8x1xf32>
    %30 = vector.broadcast %29 : vector<8x1xf32> to vector<8x128xf32>
    %31 = arith.subf %25, %30 : vector<8x128xf32>
    %c0_19 = arith.constant 0 : index
    %c0_20 = arith.constant 0 : index
    %32 = vector.load %arg8[%c0_19, %c0_20] : memref<8x128xf32, #tpu.memory_space<vmem>>, vector<8x128xf32>
    tpu.vector_store %arg8[%c0_19, %c0_20], %31 {strides = array<i32>} : memref<8x128xf32, #tpu.memory_space<vmem>>, vector<8x128xf32>,
    return
  }
  func.func @transform_0(%arg0: i32) -> (i32, i32) {
    %c0_i32 = arith.constant 0 : i32
    %c0_i32_0 = arith.constant 0 : i32
    return %arg0, %c0_i32 : i32, i32
  }
  func.func @transform_1(%arg0: i32) -> (i32, i32) {
    %c0_i32 = arith.constant 0 : i32
    %c0_i32_0 = arith.constant 0 : i32
    %c0_i32_1 = arith.constant 0 : i32
    return %c0_i32, %c0_i32_0 : i32, i32
  }
  func.func @transform_2(%arg0: i32) -> (i32, i32) {
    %c0_i32 = arith.constant 0 : i32
    %c0_i32_0 = arith.constant 0 : i32
    %c0_i32_1 = arith.constant 0 : i32
    return %c0_i32, %c0_i32_0 : i32, i32
  }
  func.func @transform_3(%arg0: i32) -> (i32, i32) {
    %c0_i32 = arith.constant 0 : i32
    %c0_i32_0 = arith.constant 0 : i32
    %c0_i32_1 = arith.constant 0 : i32
    return %c0_i32, %c0_i32_0 : i32, i32
  }
  func.func @transform_4(%arg0: i32) -> (i32, i32) {
    %c0_i32 = arith.constant 0 : i32
    %c0_i32_0 = arith.constant 0 : i32
    %c0_i32_1 = arith.constant 0 : i32
    return %c0_i32, %c0_i32_0 : i32, i32
  }
  func.func @transform_5(%arg0: i32) -> (i32, i32) {
    %c0_i32 = arith.constant 0 : i32
    %c0_i32_0 = arith.constant 0 : i32
    %c0_i32_1 = arith.constant 0 : i32
    return %c0_i32, %c0_i32_0 : i32, i32
  }
  func.func @transform_6(%arg0: i32) -> (i32, i32) {
    %c0_i32 = arith.constant 0 : i32
    %c0_i32_0 = arith.constant 0 : i32
    %c0_i32_1 = arith.constant 0 : i32
    return %c0_i32, %c0_i32_0 : i32, i32
  }
  func.func @transform_7(%arg0: i32) -> (i32, i32) {
    %c0_i32 = arith.constant 0 : i32
    %c0_i32_0 = arith.constant 0 : i32
    return %arg0, %c0_i32 : i32, i32
  }
}

</mosaic_0001>

<llo_original>
// kernel: cnn_forward.3
$region0: #{cnn_forward.3}
  #allocation0 [shape = 'u32[]', space=smem, size = 0x4, offset = 0x4, fixed_abs, tag = 'smem constant byte address 0x4 - core index']
  #allocation1 [shape = 'u32[72,128]{1,0:T(1,128)}', space=vmem, size = 0x9000, scoped, tag = 'internal scratch']
  %s0 = inlined_call_operand.vmem [shape: bf16[8,3136], index: 0, kind: input, shape index: {}]
  %s1 = inlined_call_operand.vmem [shape: bf16[3136,256], index: 1, kind: input, shape index: {}]
  %s2 = inlined_call_operand.vmem [shape: f32[1,256], index: 2, kind: input, shape index: {}]
  %s3 = inlined_call_operand.vmem [shape: bf16[256,64], index: 3, kind: input, shape index: {}]
  %s4 = inlined_call_operand.vmem [shape: f32[1,64], index: 4, kind: input, shape index: {}]
  %s5 = inlined_call_operand.vmem [shape: bf16[64,128], index: 5, kind: input, shape index: {}]
  %s6 = inlined_call_operand.vmem [shape: f32[1,128], index: 6, kind: input, shape index: {}]
  %s7 = inlined_call_operand.vmem [shape: f32[8,128], index: 7, kind: output, shape index: {}]
  %s8 = sld [smem:[#allocation0]]
  $region38: #{cnn_forward.3} parent=0
    _
  %s10 = ssub.s32 1, %s8
  %s11 = scalar_select 0, %s10, %s8
  // Predicated region
  $region2: #{cnn_forward.3} parent=0 // pred_check
    _
  $region3: #{cnn_forward.3} parent=0 // pred_check_branch
    %13 = sbr.rel (0) target = $region5
  $region4: #{cnn_forward.3} parent=0 // pred_region
    _
  $region5: #{cnn_forward.3} parent=0 // pred_fallthru
    _
  // Predicated region
  $region6: #{cnn_forward.3} parent=0 // pred_check
    _
  $region7: #{cnn_forward.3} parent=0 // pred_check_branch
    %15 = sbr.rel (0) target = $region9
  $region8: #{cnn_forward.3} parent=0 // pred_region
    _
  $region9: #{cnn_forward.3} parent=0 // pred_fallthru
    _
  // Predicated region
  $region10: #{cnn_forward.3} parent=0 // pred_check
    _
  $region11: #{cnn_forward.3} parent=0 // pred_check_branch
    %17 = sbr.rel (0) target = $region13
  $region12: #{cnn_forward.3} parent=0 // pred_region
    _
  $region13: #{cnn_forward.3} parent=0 // pred_fallthru
    _
  // Predicated region
  $region14: #{cnn_forward.3} parent=0 // pred_check
    _
  $region15: #{cnn_forward.3} parent=0 // pred_check_branch
    %19 = sbr.rel (0) target = $region17
  $region16: #{cnn_forward.3} parent=0 // pred_region
    _
  $region17: #{cnn_forward.3} parent=0 // pred_fallthru
    _
  // Predicated region
  $region18: #{cnn_forward.3} parent=0 // pred_check
    _
  $region19: #{cnn_forward.3} parent=0 // pred_check_branch
    %21 = sbr.rel (0) target = $region21
  $region20: #{cnn_forward.3} parent=0 // pred_region
    _
  $region21: #{cnn_forward.3} parent=0 // pred_fallthru
    _
  // Predicated region
  $region22: #{cnn_forward.3} parent=0 // pred_check
    _
  $region23: #{cnn_forward.3} parent=0 // pred_check_branch
    %23 = sbr.rel (0) target = $region25
  $region24: #{cnn_forward.3} parent=0 // pred_region
    _
  $region25: #{cnn_forward.3} parent=0 // pred_fallthru
    _
  // Predicated region
  $region26: #{cnn_forward.3} parent=0 // pred_check
    _
  $region27: #{cnn_forward.3} parent=0 // pred_check_branch
    %25 = sbr.rel (0) target = $region29
  $region28: #{cnn_forward.3} parent=0 // pred_region
    _
  $region29: #{cnn_forward.3} parent=0 // pred_fallthru
    _
  %v27 = vld [vmem:[%s0] sm:$0xff]
  %v28 = vld [vmem:[%s0 + $0x8] sm:$0xff]
  %v29 = vld [vmem:[%s0 + $0x10] sm:$0xff]
  %v30 = vld [vmem:[%s0 + $0x18] sm:$0xff]
  %v31 = vld [vmem:[%s0 + $0x20] sm:$0xff]
  %v32 = vld [vmem:[%s0 + $0x28] sm:$0xff]
  %v33 = vld [vmem:[%s0 + $0x30] sm:$0xff]
  %v34 = vld [vmem:[%s0 + $0x38] sm:$0xff]
  %v35 = vld [vmem:[%s0 + $0x40] sm:$0xff]
  %v36 = vld [vmem:[%s0 + $0x48] sm:$0xff]
  %v37 = vld [vmem:[%s0 + $0x50] sm:$0xff]
  %v38 = vld [vmem:[%s0 + $0x58] sm:$0xff]
  %v39 = vld [vmem:[%s0 + $0x60] sm:$0xf]
  %v40 = vld [vmem:[%s1] sm:$0xff]
  %v41 = vld [vmem:[%s1 + $0x8] sm:$0xff]
  %v42 = vld [vmem:[%s1 + $0x10] sm:$0xff]
  %v43 = vld [vmem:[%s1 + $0x18] sm:$0xff]
  %v44 = vld [vmem:[%s1 + $0x20] sm:$0xff]
  %v45 = vld [vmem:[%s1 + $0x28] sm:$0xff]
  %v46 = vld [vmem:[%s1 + $0x30] sm:$0xff]
  %v47 = vld [vmem:[%s1 + $0x38] sm:$0xff]
  %v48 = vld [vmem:[%s1 + $0x40] sm:$0xff]
  %v49 = vld [vmem:[%s1 + $0x48] sm:$0xff]
  %v50 = vld [vmem:[%s1 + $0x50] sm:$0xff]
  %v51 = vld [vmem:[%s1 + $0x58] sm:$0xff]
  %v52 = vld [vmem:[%s1 + $0x60] sm:$0xff]
  %v53 = vld [vmem:[%s1 + $0x68] sm:$0xff]
  %v54 = vld [vmem:[%s1 + $0x70] sm:$0xff]
  %v55 = vld [vmem:[%s1 + $0x78] sm:$0xff]
  %v56 = vld [vmem:[%s1 + $0x80] sm:$0xff]
  %v57 = vld [vmem:[%s1 + $0x88] sm:$0xff]
  %v58 = vld [vmem:[%s1 + $0x90] sm:$0xff]
  %v59 = vld [vmem:[%s1 + $0x98] sm:$0xff]
  %v60 = vld [vmem:[%s1 + $0xa0] sm:$0xff]
  %v61 = vld [vmem:[%s1 + $0xa8] sm:$0xff]
  %v62 = vld [vmem:[%s1 + $0xb0] sm:$0xff]
  %v63 = vld [vmem:[%s1 + $0xb8] sm:$0xff]
  %v64 = vld [vmem:[%s1 + $0xc0] sm:$0xff]
  %v65 = vld [vmem:[%s1 + $0xc8] sm:$0xff]
  %v66 = vld [vmem:[%s1 + $0xd0] sm:$0xff]
  %v67 = vld [vmem:[%s1 + $0xd8] sm:$0xff]
  %v68 = vld [vmem:[%s1 + $0xe0] sm:$0xff]
  %v69 = vld [vmem:[%s1 + $0xe8] sm:$0xff]
  %v70 = vld [vmem:[%s1 + $0xf0] sm:$0xff]
  %v71 = vld [vmem:[%s1 + $0xf8] sm:$0xff]
  %v72 = vld [vmem:[%s1 + $0x100] sm:$0xff]
  %v73 = vld [vmem:[%s1 + $0x108] sm:$0xff]
  %v74 = vld [vmem:[%s1 + $0x110] sm:$0xff]
  %v75 = vld [vmem:[%s1 + $0x118] sm:$0xff]
  %v76 = vld [vmem:[%s1 + $0x120] sm:$0xff]
  %v77 = vld [vmem:[%s1 + $0x128] sm:$0xff]
  %v78 = vld [vmem:[%s1 + $0x130] sm:$0xff]
  %v79 = vld [vmem:[%s1 + $0x138] sm:$0xff]
  %v80 = vld [vmem:[%s1 + $0x140] sm:$0xff]
  %v81 = vld [vmem:[%s1 + $0x148] sm:$0xff]
  %v82 = vld [vmem:[%s1 + $0x150] sm:$0xff]
  %v83 = vld [vmem:[%s1 + $0x158] sm:$0xff]
  %v84 = vld [vmem:[%s1 + $0x160] sm:$0xff]
  %v85 = vld [vmem:[%s1 + $0x168] sm:$0xff]
  %v86 = vld [vmem:[%s1 + $0x170] sm:$0xff]
  %v87 = vld [vmem:[%s1 + $0x178] sm:$0xff]
  %v88 = vld [vmem:[%s1 + $0x180] sm:$0xff]
  %v89 = vld [vmem:[%s1 + $0x188] sm:$0xff]
  %v90 = vld [vmem:[%s1 + $0x190] sm:$0xff]
  %v91 = vld [vmem:[%s1 + $0x198] sm:$0xff]
  %v92 = vld [vmem:[%s1 + $0x1a0] sm:$0xff]
  %v93 = vld [vmem:[%s1 + $0x1a8] sm:$0xff]
  %v94 = vld [vmem:[%s1 + $0x1b0] sm:$0xff]
  %v95 = vld [vmem:[%s1 + $0x1b8] sm:$0xff]
  %v96 = vld [vmem:[%s1 + $0x1c0] sm:$0xff]
  %v97 = vld [vmem:[%s1 + $0x1c8] sm:$0xff]
  %v98 = vld [vmem:[%s1 + $0x1d0] sm:$0xff]
  %v99 = vld [vmem:[%s1 + $0x1d8] sm:$0xff]
  %v100 = vld [vmem:[%s1 + $0x1e0] sm:$0xff]
  %v101 = vld [vmem:[%s1 + $0x1e8] sm:$0xff]
  %v102 = vld [vmem:[%s1 + $0x1f0] sm:$0xff]
  %v103 = vld [vmem:[%s1 + $0x1f8] sm:$0xff]
  %v104 = vld [vmem:[%s1 + $0x200] sm:$0xff]
  %v105 = vld [vmem:[%s1 + $0x208] sm:$0xff]
  %v106 = vld [vmem:[%s1 + $0x210] sm:$0xff]
  %v107 = vld [vmem:[%s1 + $0x218] sm:$0xff]
  %v108 = vld [vmem:[%s1 + $0x220] sm:$0xff]
  %v109 = vld [vmem:[%s1 + $0x228] sm:$0xff]
  %v110 = vld [vmem:[%s1 + $0x230] sm:$0xff]
  %v111 = vld [vmem:[%s1 + $0x238] sm:$0xff]
  %v112 = vld [vmem:[%s1 + $0x240] sm:$0xff]
  %v113 = vld [vmem:[%s1 + $0x248] sm:$0xff]
  %v114 = vld [vmem:[%s1 + $0x250] sm:$0xff]
  %v115 = vld [vmem:[%s1 + $0x258] sm:$0xff]
  %v116 = vld [vmem:[%s1 + $0x260] sm:$0xff]
  %v117 = vld [vmem:[%s1 + $0x268] sm:$0xff]
  %v118 = vld [vmem:[%s1 + $0x270] sm:$0xff]
  %v119 = vld [vmem:[%s1 + $0x278] sm:$0xff]
  %v120 = vld [vmem:[%s1 + $0x280] sm:$0xff]
  %v121 = vld [vmem:[%s1 + $0x288] sm:$0xff]
  %v122 = vld [vmem:[%s1 + $0x290] sm:$0xff]
  %v123 = vld [vmem:[%s1 + $0x298] sm:$0xff]
  %v124 = vld [vmem:[%s1 + $0x2a0] sm:$0xff]
  %v125 = vld [vmem:[%s1 + $0x2a8] sm:$0xff]
  %v126 = vld [vmem:[%s1 + $0x2b0] sm:$0xff]
  %v127 = vld [vmem:[%s1 + $0x2b8] sm:$0xff]
  %v128 = vld [vmem:[%s1 + $0x2c0] sm:$0xff]
  %v129 = vld [vmem:[%s1 + $0x2c8] sm:$0xff]
  %v130 = vld [vmem:[%s1 + $0x2d0] sm:$0xff]
  %v131 = vld [vmem:[%s1 + $0x2d8] sm:$0xff]
  %v132 = vld [vmem:[%s1 + $0x2e0] sm:$0xff]
  %v133 = vld [vmem:[%s1 + $0x2e8] sm:$0xff]
  %v134 = vld [vmem:[%s1 + $0x2f0] sm:$0xff]
  %v135 = vld [vmem:[%s1 + $0x2f8] sm:$0xff]
  %v136 = vld [vmem:[%s1 + $0x300] sm:$0xff]
  %v137 = vld [vmem:[%s1 + $0x308] sm:$0xff]
  %v138 = vld [vmem:[%s1 + $0x310] sm:$0xff]
  %v139 = vld [vmem:[%s1 + $0x318] sm:$0xff]
  %v140 = vld [vmem:[%s1 + $0x320] sm:$0xff]
  %v141 = vld [vmem:[%s1 + $0x328] sm:$0xff]
  %v142 = vld [vmem:[%s1 + $0x330] sm:$0xff]
  %v143 = vld [vmem:[%s1 + $0x338] sm:$0xff]
  %v144 = vld [vmem:[%s1 + $0x340] sm:$0xff]
  %v145 = vld [vmem:[%s1 + $0x348] sm:$0xff]
  %v146 = vld [vmem:[%s1 + $0x350] sm:$0xff]
  %v147 = vld [vmem:[%s1 + $0x358] sm:$0xff]
  %v148 = vld [vmem:[%s1 + $0x360] sm:$0xff]
  %v149 = vld [vmem:[%s1 + $0x368] sm:$0xff]
  %v150 = vld [vmem:[%s1 + $0x370] sm:$0xff]
  %v151 = vld [vmem:[%s1 + $0x378] sm:$0xff]
  %v152 = vld [vmem:[%s1 + $0x380] sm:$0xff]
  %v153 = vld [vmem:[%s1 + $0x388] sm:$0xff]
  %v154 = vld [vmem:[%s1 + $0x390] sm:$0xff]
  %v155 = vld [vmem:[%s1 + $0x398] sm:$0xff]
  %v156 = vld [vmem:[%s1 + $0x3a0] sm:$0xff]
  %v157 = vld [vmem:[%s1 + $0x3a8] sm:$0xff]
  %v158 = vld [vmem:[%s1 + $0x3b0] sm:$0xff]
  %v159 = vld [vmem:[%s1 + $0x3b8] sm:$0xff]
  %v160 = vld [vmem:[%s1 + $0x3c0] sm:$0xff]
  %v161 = vld [vmem:[%s1 + $0x3c8] sm:$0xff]
  %v162 = vld [vmem:[%s1 + $0x3d0] sm:$0xff]
  %v163 = vld [vmem:[%s1 + $0x3d8] sm:$0xff]
  %v164 = vld [vmem:[%s1 + $0x3e0] sm:$0xff]
  %v165 = vld [vmem:[%s1 + $0x3e8] sm:$0xff]
  %v166 = vld [vmem:[%s1 + $0x3f0] sm:$0xff]
  %v167 = vld [vmem:[%s1 + $0x3f8] sm:$0xff]
  %v168 = vld [vmem:[%s1 + $0x400] sm:$0xff]
  %v169 = vld [vmem:[%s1 + $0x408] sm:$0xff]
  %v170 = vld [vmem:[%s1 + $0x410] sm:$0xff]
  %v171 = vld [vmem:[%s1 + $0x418] sm:$0xff]
  %v172 = vld [vmem:[%s1 + $0x420] sm:$0xff]
  %v173 = vld [vmem:[%s1 + $0x428] sm:$0xff]
  %v174 = vld [vmem:[%s1 + $0x430] sm:$0xff]
  %v175 = vld [vmem:[%s1 + $0x438] sm:$0xff]
  %v176 = vld [vmem:[%s1 + $0x440] sm:$0xff]
  %v177 = vld [vmem:[%s1 + $0x448] sm:$0xff]
  %v178 = vld [vmem:[%s1 + $0x450] sm:$0xff]
  %v179 = vld [vmem:[%s1 + $0x458] sm:$0xff]
  %v180 = vld [vmem:[%s1 + $0x460] sm:$0xff]
  %v181 = vld [vmem:[%s1 + $0x468] sm:$0xff]
  %v182 = vld [vmem:[%s1 + $0x470] sm:$0xff]
  %v183 = vld [vmem:[%s1 + $0x478] sm:$0xff]
  %v184 = vld [vmem:[%s1 + $0x480] sm:$0xff]
  %v185 = vld [vmem:[%s1 + $0x488] sm:$0xff]
  %v186 = vld [vmem:[%s1 + $0x490] sm:$0xff]
  %v187 = vld [vmem:[%s1 + $0x498] sm:$0xff]
  %v188 = vld [vmem:[%s1 + $0x4a0] sm:$0xff]
  %v189 = vld [vmem:[%s1 + $0x4a8] sm:$0xff]
  %v190 = vld [vmem:[%s1 + $0x4b0] sm:$0xff]
  %v191 = vld [vmem:[%s1 + $0x4b8] sm:$0xff]
  %v192 = vld [vmem:[%s1 + $0x4c0] sm:$0xff]
  %v193 = vld [vmem:[%s1 + $0x4c8] sm:$0xff]
  %v194 = vld [vmem:[%s1 + $0x4d0] sm:$0xff]
  %v195 = vld [vmem:[%s1 + $0x4d8] sm:$0xff]
  %v196 = vld [vmem:[%s1 + $0x4e0] sm:$0xff]
  %v197 = vld [vmem:[%s1 + $0x4e8] sm:$0xff]
  %v198 = vld [vmem:[%s1 + $0x4f0] sm:$0xff]
  %v199 = vld [vmem:[%s1 + $0x4f8] sm:$0xff]
  %v200 = vld [vmem:[%s1 + $0x500] sm:$0xff]
  %v201 = vld [vmem:[%s1 + $0x508] sm:$0xff]
  %v202 = vld [vmem:[%s1 + $0x510] sm:$0xff]
  %v203 = vld [vmem:[%s1 + $0x518] sm:$0xff]
  %v204 = vld [vmem:[%s1 + $0x520] sm:$0xff]
  %v205 = vld [vmem:[%s1 + $0x528] sm:$0xff]
  %v206 = vld [vmem:[%s1 + $0x530] sm:$0xff]
  %v207 = vld [vmem:[%s1 + $0x538] sm:$0xff]
  %v208 = vld [vmem:[%s1 + $0x540] sm:$0xff]
  %v209 = vld [vmem:[%s1 + $0x548] sm:$0xff]
  %v210 = vld [vmem:[%s1 + $0x550] sm:$0xff]
  %v211 = vld [vmem:[%s1 + $0x558] sm:$0xff]
  %v212 = vld [vmem:[%s1 + $0x560] sm:$0xff]
  %v213 = vld [vmem:[%s1 + $0x568] sm:$0xff]
  %v214 = vld [vmem:[%s1 + $0x570] sm:$0xff]
  %v215 = vld [vmem:[%s1 + $0x578] sm:$0xff]
  %v216 = vld [vmem:[%s1 + $0x580] sm:$0xff]
  %v217 = vld [vmem:[%s1 + $0x588] sm:$0xff]
  %v218 = vld [vmem:[%s1 + $0x590] sm:$0xff]
  %v219 = vld [vmem:[%s1 + $0x598] sm:$0xff]
  %v220 = vld [vmem:[%s1 + $0x5a0] sm:$0xff]
  %v221 = vld [vmem:[%s1 + $0x5a8] sm:$0xff]
  %v222 = vld [vmem:[%s1 + $0x5b0] sm:$0xff]
  %v223 = vld [vmem:[%s1 + $0x5b8] sm:$0xff]
  %v224 = vld [vmem:[%s1 + $0x5c0] sm:$0xff]
  %v225 = vld [vmem:[%s1 + $0x5c8] sm:$0xff]
  %v226 = vld [vmem:[%s1 + $0x5d0] sm:$0xff]
  %v227 = vld [vmem:[%s1 + $0x5d8] sm:$0xff]
  %v228 = vld [vmem:[%s1 + $0x5e0] sm:$0xff]
  %v229 = vld [vmem:[%s1 + $0x5e8] sm:$0xff]
  %v230 = vld [vmem:[%s1 + $0x5f0] sm:$0xff]
  %v231 = vld [vmem:[%s1 + $0x5f8] sm:$0xff]
  %v232 = vld [vmem:[%s1 + $0x600] sm:$0xff]
  %v233 = vld [vmem:[%s1 + $0x608] sm:$0xff]
  %v234 = vld [vmem:[%s1 + $0x610] sm:$0xff]
  %v235 = vld [vmem:[%s1 + $0x618] sm:$0xff]
  %v236 = vld [vmem:[%s1 + $0x620] sm:$0xff]
  %v237 = vld [vmem:[%s1 + $0x628] sm:$0xff]
  %v238 = vld [vmem:[%s1 + $0x630] sm:$0xff]
  %v239 = vld [vmem:[%s1 + $0x638] sm:$0xff]
  %v240 = vld [vmem:[%s1 + $0x640] sm:$0xff]
  %v241 = vld [vmem:[%s1 + $0x648] sm:$0xff]
  %v242 = vld [vmem:[%s1 + $0x650] sm:$0xff]
  %v243 = vld [vmem:[%s1 + $0x658] sm:$0xff]
  %v244 = vld [vmem:[%s1 + $0x660] sm:$0xff]
  %v245 = vld [vmem:[%s1 + $0x668] sm:$0xff]
  %v246 = vld [vmem:[%s1 + $0x670] sm:$0xff]
  %v247 = vld [vmem:[%s1 + $0x678] sm:$0xff]
  %v248 = vld [vmem:[%s1 + $0x680] sm:$0xff]
  %v249 = vld [vmem:[%s1 + $0x688] sm:$0xff]
  %v250 = vld [vmem:[%s1 + $0x690] sm:$0xff]
  %v251 = vld [vmem:[%s1 + $0x698] sm:$0xff]
  %v252 = vld [vmem:[%s1 + $0x6a0] sm:$0xff]
  %v253 = vld [vmem:[%s1 + $0x6a8] sm:$0xff]
  %v254 = vld [vmem:[%s1 + $0x6b0] sm:$0xff]
  %v255 = vld [vmem:[%s1 + $0x6b8] sm:$0xff]
  %v256 = vld [vmem:[%s1 + $0x6c0] sm:$0xff]
  %v257 = vld [vmem:[%s1 + $0x6c8] sm:$0xff]
  %v258 = vld [vmem:[%s1 + $0x6d0] sm:$0xff]
  %v259 = vld [vmem:[%s1 + $0x6d8] sm:$0xff]
  %v260 = vld [vmem:[%s1 + $0x6e0] sm:$0xff]
  %v261 = vld [vmem:[%s1 + $0x6e8] sm:$0xff]
  %v262 = vld [vmem:[%s1 + $0x6f0] sm:$0xff]
  %v263 = vld [vmem:[%s1 + $0x6f8] sm:$0xff]
  %v264 = vld [vmem:[%s1 + $0x700] sm:$0xff]
  %v265 = vld [vmem:[%s1 + $0x708] sm:$0xff]
  %v266 = vld [vmem:[%s1 + $0x710] sm:$0xff]
  %v267 = vld [vmem:[%s1 + $0x718] sm:$0xff]
  %v268 = vld [vmem:[%s1 + $0x720] sm:$0xff]
  %v269 = vld [vmem:[%s1 + $0x728] sm:$0xff]
  %v270 = vld [vmem:[%s1 + $0x730] sm:$0xff]
  %v271 = vld [vmem:[%s1 + $0x738] sm:$0xff]
  %v272 = vld [vmem:[%s1 + $0x740] sm:$0xff]
  %v273 = vld [vmem:[%s1 + $0x748] sm:$0xff]
  %v274 = vld [vmem:[%s1 + $0x750] sm:$0xff]
  %v275 = vld [vmem:[%s1 + $0x758] sm:$0xff]
  %v276 = vld [vmem:[%s1 + $0x760] sm:$0xff]
  %v277 = vld [vmem:[%s1 + $0x768] sm:$0xff]
  %v278 = vld [vmem:[%s1 + $0x770] sm:$0xff]
  %v279 = vld [vmem:[%s1 + $0x778] sm:$0xff]
  %v280 = vld [vmem:[%s1 + $0x780] sm:$0xff]
  %v281 = vld [vmem:[%s1 + $0x788] sm:$0xff]
  %v282 = vld [vmem:[%s1 + $0x790] sm:$0xff]
  %v283 = vld [vmem:[%s1 + $0x798] sm:$0xff]
  %v284 = vld [vmem:[%s1 + $0x7a0] sm:$0xff]
  %v285 = vld [vmem:[%s1 + $0x7a8] sm:$0xff]
  %v286 = vld [vmem:[%s1 + $0x7b0] sm:$0xff]
  %v287 = vld [vmem:[%s1 + $0x7b8] sm:$0xff]
  %v288 = vld [vmem:[%s1 + $0x7c0] sm:$0xff]
  %v289 = vld [vmem:[%s1 + $0x7c8] sm:$0xff]
  %v290 = vld [vmem:[%s1 + $0x7d0] sm:$0xff]
  %v291 = vld [vmem:[%s1 + $0x7d8] sm:$0xff]
  %v292 = vld [vmem:[%s1 + $0x7e0] sm:$0xff]
  %v293 = vld [vmem:[%s1 + $0x7e8] sm:$0xff]
  %v294 = vld [vmem:[%s1 + $0x7f0] sm:$0xff]
  %v295 = vld [vmem:[%s1 + $0x7f8] sm:$0xff]
  %v296 = vld [vmem:[%s1 + $0x800] sm:$0xff]
  %v297 = vld [vmem:[%s1 + $0x808] sm:$0xff]
  %v298 = vld [vmem:[%s1 + $0x810] sm:$0xff]
  %v299 = vld [vmem:[%s1 + $0x818] sm:$0xff]
  %v300 = vld [vmem:[%s1 + $0x820] sm:$0xff]
  %v301 = vld [vmem:[%s1 + $0x828] sm:$0xff]
  %v302 = vld [vmem:[%s1 + $0x830] sm:$0xff]
  %v303 = vld [vmem:[%s1 + $0x838] sm:$0xff]
  %v304 = vld [vmem:[%s1 + $0x840] sm:$0xff]
  %v305 = vld [vmem:[%s1 + $0x848] sm:$0xff]
  %v306 = vld [vmem:[%s1 + $0x850] sm:$0xff]
  %v307 = vld [vmem:[%s1 + $0x858] sm:$0xff]
  %v308 = vld [vmem:[%s1 + $0x860] sm:$0xff]
  %v309 = vld [vmem:[%s1 + $0x868] sm:$0xff]
  %v310 = vld [vmem:[%s1 + $0x870] sm:$0xff]
  %v311 = vld [vmem:[%s1 + $0x878] sm:$0xff]
  %v312 = vld [vmem:[%s1 + $0x880] sm:$0xff]
  %v313 = vld [vmem:[%s1 + $0x888] sm:$0xff]
  %v314 = vld [vmem:[%s1 + $0x890] sm:$0xff]
  %v315 = vld [vmem:[%s1 + $0x898] sm:$0xff]
  %v316 = vld [vmem:[%s1 + $0x8a0] sm:$0xff]
  %v317 = vld [vmem:[%s1 + $0x8a8] sm:$0xff]
  %v318 = vld [vmem:[%s1 + $0x8b0] sm:$0xff]
  %v319 = vld [vmem:[%s1 + $0x8b8] sm:$0xff]
  %v320 = vld [vmem:[%s1 + $0x8c0] sm:$0xff]
  %v321 = vld [vmem:[%s1 + $0x8c8] sm:$0xff]
  %v322 = vld [vmem:[%s1 + $0x8d0] sm:$0xff]
  %v323 = vld [vmem:[%s1 + $0x8d8] sm:$0xff]
  %v324 = vld [vmem:[%s1 + $0x8e0] sm:$0xff]
  %v325 = vld [vmem:[%s1 + $0x8e8] sm:$0xff]
  %v326 = vld [vmem:[%s1 + $0x8f0] sm:$0xff]
  %v327 = vld [vmem:[%s1 + $0x8f8] sm:$0xff]
  %v328 = vld [vmem:[%s1 + $0x900] sm:$0xff]
  %v329 = vld [vmem:[%s1 + $0x908] sm:$0xff]
  %v330 = vld [vmem:[%s1 + $0x910] sm:$0xff]
  %v331 = vld [vmem:[%s1 + $0x918] sm:$0xff]
  %v332 = vld [vmem:[%s1 + $0x920] sm:$0xff]
  %v333 = vld [vmem:[%s1 + $0x928] sm:$0xff]
  %v334 = vld [vmem:[%s1 + $0x930] sm:$0xff]
  %v335 = vld [vmem:[%s1 + $0x938] sm:$0xff]
  %v336 = vld [vmem:[%s1 + $0x940] sm:$0xff]
  %v337 = vld [vmem:[%s1 + $0x948] sm:$0xff]
  %v338 = vld [vmem:[%s1 + $0x950] sm:$0xff]
  %v339 = vld [vmem:[%s1 + $0x958] sm:$0xff]
  %v340 = vld [vmem:[%s1 + $0x960] sm:$0xff]
  %v341 = vld [vmem:[%s1 + $0x968] sm:$0xff]
  %v342 = vld [vmem:[%s1 + $0x970] sm:$0xff]
  %v343 = vld [vmem:[%s1 + $0x978] sm:$0xff]
  %v344 = vld [vmem:[%s1 + $0x980] sm:$0xff]
  %v345 = vld [vmem:[%s1 + $0x988] sm:$0xff]
  %v346 = vld [vmem:[%s1 + $0x990] sm:$0xff]
  %v347 = vld [vmem:[%s1 + $0x998] sm:$0xff]
  %v348 = vld [vmem:[%s1 + $0x9a0] sm:$0xff]
  %v349 = vld [vmem:[%s1 + $0x9a8] sm:$0xff]
  %v350 = vld [vmem:[%s1 + $0x9b0] sm:$0xff]
  %v351 = vld [vmem:[%s1 + $0x9b8] sm:$0xff]
  %v352 = vld [vmem:[%s1 + $0x9c0] sm:$0xff]
  %v353 = vld [vmem:[%s1 + $0x9c8] sm:$0xff]
  %v354 = vld [vmem:[%s1 + $0x9d0] sm:$0xff]
  %v355 = vld [vmem:[%s1 + $0x9d8] sm:$0xff]
  %v356 = vld [vmem:[%s1 + $0x9e0] sm:$0xff]
  %v357 = vld [vmem:[%s1 + $0x9e8] sm:$0xff]
  %v358 = vld [vmem:[%s1 + $0x9f0] sm:$0xff]
  %v359 = vld [vmem:[%s1 + $0x9f8] sm:$0xff]
  %v360 = vld [vmem:[%s1 + $0xa00] sm:$0xff]
  %v361 = vld [vmem:[%s1 + $0xa08] sm:$0xff]
  %v362 = vld [vmem:[%s1 + $0xa10] sm:$0xff]
  %v363 = vld [vmem:[%s1 + $0xa18] sm:$0xff]
  %v364 = vld [vmem:[%s1 + $0xa20] sm:$0xff]
  %v365 = vld [vmem:[%s1 + $0xa28] sm:$0xff]
  %v366 = vld [vmem:[%s1 + $0xa30] sm:$0xff]
  %v367 = vld [vmem:[%s1 + $0xa38] sm:$0xff]
  %v368 = vld [vmem:[%s1 + $0xa40] sm:$0xff]
  %v369 = vld [vmem:[%s1 + $0xa48] sm:$0xff]
  %v370 = vld [vmem:[%s1 + $0xa50] sm:$0xff]
  %v371 = vld [vmem:[%s1 + $0xa58] sm:$0xff]
  %v372 = vld [vmem:[%s1 + $0xa60] sm:$0xff]
  %v373 = vld [vmem:[%s1 + $0xa68] sm:$0xff]
  %v374 = vld [vmem:[%s1 + $0xa70] sm:$0xff]
  %v375 = vld [vmem:[%s1 + $0xa78] sm:$0xff]
  %v376 = vld [vmem:[%s1 + $0xa80] sm:$0xff]
  %v377 = vld [vmem:[%s1 + $0xa88] sm:$0xff]
  %v378 = vld [vmem:[%s1 + $0xa90] sm:$0xff]
  %v379 = vld [vmem:[%s1 + $0xa98] sm:$0xff]
  %v380 = vld [vmem:[%s1 + $0xaa0] sm:$0xff]
  %v381 = vld [vmem:[%s1 + $0xaa8] sm:$0xff]
  %v382 = vld [vmem:[%s1 + $0xab0] sm:$0xff]
  %v383 = vld [vmem:[%s1 + $0xab8] sm:$0xff]
  %v384 = vld [vmem:[%s1 + $0xac0] sm:$0xff]
  %v385 = vld [vmem:[%s1 + $0xac8] sm:$0xff]
  %v386 = vld [vmem:[%s1 + $0xad0] sm:$0xff]
  %v387 = vld [vmem:[%s1 + $0xad8] sm:$0xff]
  %v388 = vld [vmem:[%s1 + $0xae0] sm:$0xff]
  %v389 = vld [vmem:[%s1 + $0xae8] sm:$0xff]
  %v390 = vld [vmem:[%s1 + $0xaf0] sm:$0xff]
  %v391 = vld [vmem:[%s1 + $0xaf8] sm:$0xff]
  %v392 = vld [vmem:[%s1 + $0xb00] sm:$0xff]
  %v393 = vld [vmem:[%s1 + $0xb08] sm:$0xff]
  %v394 = vld [vmem:[%s1 + $0xb10] sm:$0xff]
  %v395 = vld [vmem:[%s1 + $0xb18] sm:$0xff]
  %v396 = vld [vmem:[%s1 + $0xb20] sm:$0xff]
  %v397 = vld [vmem:[%s1 + $0xb28] sm:$0xff]
  %v398 = vld [vmem:[%s1 + $0xb30] sm:$0xff]
  %v399 = vld [vmem:[%s1 + $0xb38] sm:$0xff]
  %v400 = vld [vmem:[%s1 + $0xb40] sm:$0xff]
  %v401 = vld [vmem:[%s1 + $0xb48] sm:$0xff]
  %v402 = vld [vmem:[%s1 + $0xb50] sm:$0xff]
  %v403 = vld [vmem:[%s1 + $0xb58] sm:$0xff]
  %v404 = vld [vmem:[%s1 + $0xb60] sm:$0xff]
  %v405 = vld [vmem:[%s1 + $0xb68] sm:$0xff]
  %v406 = vld [vmem:[%s1 + $0xb70] sm:$0xff]
  %v407 = vld [vmem:[%s1 + $0xb78] sm:$0xff]
  %v408 = vld [vmem:[%s1 + $0xb80] sm:$0xff]
  %v409 = vld [vmem:[%s1 + $0xb88] sm:$0xff]
  %v410 = vld [vmem:[%s1 + $0xb90] sm:$0xff]
  %v411 = vld [vmem:[%s1 + $0xb98] sm:$0xff]
  %v412 = vld [vmem:[%s1 + $0xba0] sm:$0xff]
  %v413 = vld [vmem:[%s1 + $0xba8] sm:$0xff]
  %v414 = vld [vmem:[%s1 + $0xbb0] sm:$0xff]
  %v415 = vld [vmem:[%s1 + $0xbb8] sm:$0xff]
  %v416 = vld [vmem:[%s1 + $0xbc0] sm:$0xff]
  %v417 = vld [vmem:[%s1 + $0xbc8] sm:$0xff]
  %v418 = vld [vmem:[%s1 + $0xbd0] sm:$0xff]
  %v419 = vld [vmem:[%s1 + $0xbd8] sm:$0xff]
  %v420 = vld [vmem:[%s1 + $0xbe0] sm:$0xff]
  %v421 = vld [vmem:[%s1 + $0xbe8] sm:$0xff]
  %v422 = vld [vmem:[%s1 + $0xbf0] sm:$0xff]
  %v423 = vld [vmem:[%s1 + $0xbf8] sm:$0xff]
  %v424 = vld [vmem:[%s1 + $0xc00] sm:$0xff]
  %v425 = vld [vmem:[%s1 + $0xc08] sm:$0xff]
  %v426 = vld [vmem:[%s1 + $0xc10] sm:$0xff]
  %v427 = vld [vmem:[%s1 + $0xc18] sm:$0xff]
  %v428 = vld [vmem:[%s1 + $0xc20] sm:$0xff]
  %v429 = vld [vmem:[%s1 + $0xc28] sm:$0xff]
  %v430 = vld [vmem:[%s1 + $0xc30] sm:$0xff]
  %v431 = vld [vmem:[%s1 + $0xc38] sm:$0xff]
  %v432 = vld [vmem:[%s2] sm:$0x3]
  %v434 = vperm.slane %v432, 0
  %v435 = vperm.slane %v432, 1
  %v451 = vunpack.c.l.b16 %v27
  %v452 = vunpack.c.h.b16 %v27
  %v453 = vunpack.c.l.b16 %v28
  %v454 = vunpack.c.h.b16 %v28
  %v455 = vunpack.c.l.b16 %v29
  %v456 = vunpack.c.h.b16 %v29
  %v457 = vunpack.c.l.b16 %v30
  %v458 = vunpack.c.h.b16 %v30
  %v459 = vunpack.c.l.b16 %v31
  %v460 = vunpack.c.h.b16 %v31
  %v461 = vunpack.c.l.b16 %v32
  %v462 = vunpack.c.h.b16 %v32
  %v463 = vunpack.c.l.b16 %v33
  %v464 = vunpack.c.h.b16 %v33
  %v465 = vunpack.c.l.b16 %v34
  %v466 = vunpack.c.h.b16 %v34
  %v467 = vunpack.c.l.b16 %v35
  %v468 = vunpack.c.h.b16 %v35
  %v469 = vunpack.c.l.b16 %v36
  %v470 = vunpack.c.h.b16 %v36
  %v471 = vunpack.c.l.b16 %v37
  %v472 = vunpack.c.h.b16 %v37
  %v473 = vunpack.c.l.b16 %v38
  %v474 = vunpack.c.h.b16 %v38
  %v475 = vunpack.c.l.b16 %v39
  %v476 = vpack.c.b16 %v451, %v451
  %v477 = vpack.c.b16 %v452, %v452
  %v478 = vpack.c.b16 %v453, %v453
  %v479 = vpack.c.b16 %v454, %v454
  %v480 = vpack.c.b16 %v455, %v455
  %v481 = vpack.c.b16 %v456, %v456
  %v482 = vpack.c.b16 %v457, %v457
  %v483 = vpack.c.b16 %v458, %v458
  %v484 = vpack.c.b16 %v459, %v459
  %v485 = vpack.c.b16 %v460, %v460
  %v486 = vpack.c.b16 %v461, %v461
  %v487 = vpack.c.b16 %v462, %v462
  %v488 = vpack.c.b16 %v463, %v463
  %v489 = vpack.c.b16 %v464, %v464
  %v490 = vpack.c.b16 %v465, %v465
  %v491 = vpack.c.b16 %v466, %v466
  %v492 = vpack.c.b16 %v467, %v467
  %v493 = vpack.c.b16 %v468, %v468
  %v494 = vpack.c.b16 %v469, %v469
  %v495 = vpack.c.b16 %v470, %v470
  %v496 = vpack.c.b16 %v471, %v471
  %v497 = vpack.c.b16 %v472, %v472
  %v498 = vpack.c.b16 %v473, %v473
  %v499 = vpack.c.b16 %v474, %v474
  %v500 = vpack.c.b16 %v475, %v475
  %v917 = vunpack.c.l.b16 %v40
  %v918 = vunpack.c.h.b16 %v40
  %v919 = vunpack.c.l.b16 %v41
  %v920 = vunpack.c.h.b16 %v41
  %v921 = vunpack.c.l.b16 %v42
  %v922 = vunpack.c.h.b16 %v42
  %v923 = vunpack.c.l.b16 %v43
  %v924 = vunpack.c.h.b16 %v43
  %v925 = vunpack.c.l.b16 %v44
  %v926 = vunpack.c.h.b16 %v44
  %v927 = vunpack.c.l.b16 %v45
  %v928 = vunpack.c.h.b16 %v45
  %v929 = vunpack.c.l.b16 %v46
  %v930 = vunpack.c.h.b16 %v46
  %v931 = vunpack.c.l.b16 %v47
  %v932 = vunpack.c.h.b16 %v47
  %v933 = vunpack.c.l.b16 %v48
  %v934 = vunpack.c.h.b16 %v48
  %v935 = vunpack.c.l.b16 %v49
  %v936 = vunpack.c.h.b16 %v49
  %v937 = vunpack.c.l.b16 %v50
  %v938 = vunpack.c.h.b16 %v50
  %v939 = vunpack.c.l.b16 %v51
  %v940 = vunpack.c.h.b16 %v51
  %v941 = vunpack.c.l.b16 %v52
  %v942 = vunpack.c.h.b16 %v52
  %v943 = vunpack.c.l.b16 %v53
  %v944 = vunpack.c.h.b16 %v53
  %v945 = vunpack.c.l.b16 %v54
  %v946 = vunpack.c.h.b16 %v54
  %v947 = vunpack.c.l.b16 %v55
  %v948 = vunpack.c.h.b16 %v55
  %v949 = vunpack.c.l.b16 %v56
  %v950 = vunpack.c.h.b16 %v56
  %v951 = vunpack.c.l.b16 %v57
  %v952 = vunpack.c.h.b16 %v57
  %v953 = vunpack.c.l.b16 %v58
  %v954 = vunpack.c.h.b16 %v58
  %v955 = vunpack.c.l.b16 %v59
  %v956 = vunpack.c.h.b16 %v59
  %v957 = vunpack.c.l.b16 %v60
  %v958 = vunpack.c.h.b16 %v60
  %v959 = vunpack.c.l.b16 %v61
  %v960 = vunpack.c.h.b16 %v61
  %v961 = vunpack.c.l.b16 %v62
  %v962 = vunpack.c.h.b16 %v62
  %v963 = vunpack.c.l.b16 %v63
  %v964 = vunpack.c.h.b16 %v63
  %v965 = vunpack.c.l.b16 %v64
  %v966 = vunpack.c.h.b16 %v64
  %v967 = vunpack.c.l.b16 %v65
  %v968 = vunpack.c.h.b16 %v65
  %v969 = vunpack.c.l.b16 %v66
  %v970 = vunpack.c.h.b16 %v66
  %v971 = vunpack.c.l.b16 %v67
  %v972 = vunpack.c.h.b16 %v67
  %v973 = vunpack.c.l.b16 %v68
  %v974 = vunpack.c.h.b16 %v68
  %v975 = vunpack.c.l.b16 %v69
  %v976 = vunpack.c.h.b16 %v69
  %v977 = vunpack.c.l.b16 %v70
  %v978 = vunpack.c.h.b16 %v70
  %v979 = vunpack.c.l.b16 %v71
  %v980 = vunpack.c.h.b16 %v71
  %v981 = vunpack.c.l.b16 %v72
  %v982 = vunpack.c.h.b16 %v72
  %v983 = vunpack.c.l.b16 %v73
  %v984 = vunpack.c.h.b16 %v73
  %v985 = vunpack.c.l.b16 %v74
  %v986 = vunpack.c.h.b16 %v74
  %v987 = vunpack.c.l.b16 %v75
  %v988 = vunpack.c.h.b16 %v75
  %v989 = vunpack.c.l.b16 %v76
  %v990 = vunpack.c.h.b16 %v76
  %v991 = vunpack.c.l.b16 %v77
  %v992 = vunpack.c.h.b16 %v77
  %v993 = vunpack.c.l.b16 %v78
  %v994 = vunpack.c.h.b16 %v78
  %v995 = vunpack.c.l.b16 %v79
  %v996 = vunpack.c.h.b16 %v79
  %v997 = vunpack.c.l.b16 %v80
  %v998 = vunpack.c.h.b16 %v80
  %v999 = vunpack.c.l.b16 %v81
  %v1000 = vunpack.c.h.b16 %v81
  %v1001 = vunpack.c.l.b16 %v82
  %v1002 = vunpack.c.h.b16 %v82
  %v1003 = vunpack.c.l.b16 %v83
  %v1004 = vunpack.c.h.b16 %v83
  %v1005 = vunpack.c.l.b16 %v84
  %v1006 = vunpack.c.h.b16 %v84
  %v1007 = vunpack.c.l.b16 %v85
  %v1008 = vunpack.c.h.b16 %v85
  %v1009 = vunpack.c.l.b16 %v86
  %v1010 = vunpack.c.h.b16 %v86
  %v1011 = vunpack.c.l.b16 %v87
  %v1012 = vunpack.c.h.b16 %v87
  %v1013 = vunpack.c.l.b16 %v88
  %v1014 = vunpack.c.h.b16 %v88
  %v1015 = vunpack.c.l.b16 %v89
  %v1016 = vunpack.c.h.b16 %v89
  %v1017 = vunpack.c.l.b16 %v90
  %v1018 = vunpack.c.h.b16 %v90
  %v1019 = vunpack.c.l.b16 %v91
  %v1020 = vunpack.c.h.b16 %v91
  %v1021 = vunpack.c.l.b16 %v92
  %v1022 = vunpack.c.h.b16 %v92
  %v1023 = vunpack.c.l.b16 %v93
  %v1024 = vunpack.c.h.b16 %v93
  %v1025 = vunpack.c.l.b16 %v94
  %v1026 = vunpack.c.h.b16 %v94
  %v1027 = vunpack.c.l.b16 %v95
  %v1028 = vunpack.c.h.b16 %v95
  %v1029 = vunpack.c.l.b16 %v96
  %v1030 = vunpack.c.h.b16 %v96
  %v1031 = vunpack.c.l.b16 %v97
  %v1032 = vunpack.c.h.b16 %v97
  %v1033 = vunpack.c.l.b16 %v98
  %v1034 = vunpack.c.h.b16 %v98
  %v1035 = vunpack.c.l.b16 %v99
  %v1036 = vunpack.c.h.b16 %v99
  %v1037 = vunpack.c.l.b16 %v100
  %v1038 = vunpack.c.h.b16 %v100
  %v1039 = vunpack.c.l.b16 %v101
  %v1040 = vunpack.c.h.b16 %v101
  %v1041 = vunpack.c.l.b16 %v102
  %v1042 = vunpack.c.h.b16 %v102
  %v1043 = vunpack.c.l.b16 %v103
  %v1044 = vunpack.c.h.b16 %v103
  %v1045 = vunpack.c.l.b16 %v104
  %v1046 = vunpack.c.h.b16 %v104
  %v1047 = vunpack.c.l.b16 %v105
  %v1048 = vunpack.c.h.b16 %v105
  %v1049 = vunpack.c.l.b16 %v106
  %v1050 = vunpack.c.h.b16 %v106
  %v1051 = vunpack.c.l.b16 %v107
  %v1052 = vunpack.c.h.b16 %v107
  %v1053 = vunpack.c.l.b16 %v108
  %v1054 = vunpack.c.h.b16 %v108
  %v1055 = vunpack.c.l.b16 %v109
  %v1056 = vunpack.c.h.b16 %v109
  %v1057 = vunpack.c.l.b16 %v110
  %v1058 = vunpack.c.h.b16 %v110
  %v1059 = vunpack.c.l.b16 %v111
  %v1060 = vunpack.c.h.b16 %v111
  %v1061 = vunpack.c.l.b16 %v112
  %v1062 = vunpack.c.h.b16 %v112
  %v1063 = vunpack.c.l.b16 %v113
  %v1064 = vunpack.c.h.b16 %v113
  %v1065 = vunpack.c.l.b16 %v114
  %v1066 = vunpack.c.h.b16 %v114
  %v1067 = vunpack.c.l.b16 %v115
  %v1068 = vunpack.c.h.b16 %v115
  %v1069 = vunpack.c.l.b16 %v116
  %v1070 = vunpack.c.h.b16 %v116
  %v1071 = vunpack.c.l.b16 %v117
  %v1072 = vunpack.c.h.b16 %v117
  %v1073 = vunpack.c.l.b16 %v118
  %v1074 = vunpack.c.h.b16 %v118
  %v1075 = vunpack.c.l.b16 %v119
  %v1076 = vunpack.c.h.b16 %v119
  %v1077 = vunpack.c.l.b16 %v120
  %v1078 = vunpack.c.h.b16 %v120
  %v1079 = vunpack.c.l.b16 %v121
  %v1080 = vunpack.c.h.b16 %v121
  %v1081 = vunpack.c.l.b16 %v122
  %v1082 = vunpack.c.h.b16 %v122
  %v1083 = vunpack.c.l.b16 %v123
  %v1084 = vunpack.c.h.b16 %v123
  %v1085 = vunpack.c.l.b16 %v124
  %v1086 = vunpack.c.h.b16 %v124
  %v1087 = vunpack.c.l.b16 %v125
  %v1088 = vunpack.c.h.b16 %v125
  %v1089 = vunpack.c.l.b16 %v126
  %v1090 = vunpack.c.h.b16 %v126
  %v1091 = vunpack.c.l.b16 %v127
  %v1092 = vunpack.c.h.b16 %v127
  %v1093 = vunpack.c.l.b16 %v128
  %v1094 = vunpack.c.h.b16 %v128
  %v1095 = vunpack.c.l.b16 %v129
  %v1096 = vunpack.c.h.b16 %v129
  %v1097 = vunpack.c.l.b16 %v130
  %v1098 = vunpack.c.h.b16 %v130
  %v1099 = vunpack.c.l.b16 %v131
  %v1100 = vunpack.c.h.b16 %v131
  %v1101 = vunpack.c.l.b16 %v132
  %v1102 = vunpack.c.h.b16 %v132
  %v1103 = vunpack.c.l.b16 %v133
  %v1104 = vunpack.c.h.b16 %v133
  %v1105 = vunpack.c.l.b16 %v134
  %v1106 = vunpack.c.h.b16 %v134
  %v1107 = vunpack.c.l.b16 %v135
  %v1108 = vunpack.c.h.b16 %v135
  %v1109 = vunpack.c.l.b16 %v136
  %v1110 = vunpack.c.h.b16 %v136
  %v1111 = vunpack.c.l.b16 %v137
  %v1112 = vunpack.c.h.b16 %v137
  %v1113 = vunpack.c.l.b16 %v138
  %v1114 = vunpack.c.h.b16 %v138
  %v1115 = vunpack.c.l.b16 %v139
  %v1116 = vunpack.c.h.b16 %v139
  %v1117 = vunpack.c.l.b16 %v140
  %v1118 = vunpack.c.h.b16 %v140
  %v1119 = vunpack.c.l.b16 %v141
  %v1120 = vunpack.c.h.b16 %v141
  %v1121 = vunpack.c.l.b16 %v142
  %v1122 = vunpack.c.h.b16 %v142
  %v1123 = vunpack.c.l.b16 %v143
  %v1124 = vunpack.c.h.b16 %v143
  %v1125 = vunpack.c.l.b16 %v144
  %v1126 = vunpack.c.h.b16 %v144
  %v1127 = vunpack.c.l.b16 %v145
  %v1128 = vunpack.c.h.b16 %v145
  %v1129 = vunpack.c.l.b16 %v146
  %v1130 = vunpack.c.h.b16 %v146
  %v1131 = vunpack.c.l.b16 %v147
  %v1132 = vunpack.c.h.b16 %v147
  %v1133 = vunpack.c.l.b16 %v148
  %v1134 = vunpack.c.h.b16 %v148
  %v1135 = vunpack.c.l.b16 %v149
  %v1136 = vunpack.c.h.b16 %v149
  %v1137 = vunpack.c.l.b16 %v150
  %v1138 = vunpack.c.h.b16 %v150
  %v1139 = vunpack.c.l.b16 %v151
  %v1140 = vunpack.c.h.b16 %v151
  %v1141 = vunpack.c.l.b16 %v152
  %v1142 = vunpack.c.h.b16 %v152
  %v1143 = vunpack.c.l.b16 %v153
  %v1144 = vunpack.c.h.b16 %v153
  %v1145 = vunpack.c.l.b16 %v154
  %v1146 = vunpack.c.h.b16 %v154
  %v1147 = vunpack.c.l.b16 %v155
  %v1148 = vunpack.c.h.b16 %v155
  %v1149 = vunpack.c.l.b16 %v156
  %v1150 = vunpack.c.h.b16 %v156
  %v1151 = vunpack.c.l.b16 %v157
  %v1152 = vunpack.c.h.b16 %v157
  %v1153 = vunpack.c.l.b16 %v158
  %v1154 = vunpack.c.h.b16 %v158
  %v1155 = vunpack.c.l.b16 %v159
  %v1156 = vunpack.c.h.b16 %v159
  %v1157 = vunpack.c.l.b16 %v160
  %v1158 = vunpack.c.h.b16 %v160
  %v1159 = vunpack.c.l.b16 %v161
  %v1160 = vunpack.c.h.b16 %v161
  %v1161 = vunpack.c.l.b16 %v162
  %v1162 = vunpack.c.h.b16 %v162
  %v1163 = vunpack.c.l.b16 %v163
  %v1164 = vunpack.c.h.b16 %v163
  %v1165 = vunpack.c.l.b16 %v164
  %v1166 = vunpack.c.h.b16 %v164
  %v1167 = vunpack.c.l.b16 %v165
  %v1168 = vunpack.c.h.b16 %v165
  %v1169 = vunpack.c.l.b16 %v166
  %v1170 = vunpack.c.h.b16 %v166
  %v1171 = vunpack.c.l.b16 %v167
  %v1172 = vunpack.c.h.b16 %v167
  %v1173 = vunpack.c.l.b16 %v168
  %v1174 = vunpack.c.h.b16 %v168
  %v1175 = vunpack.c.l.b16 %v169
  %v1176 = vunpack.c.h.b16 %v169
  %v1177 = vunpack.c.l.b16 %v170
  %v1178 = vunpack.c.h.b16 %v170
  %v1179 = vunpack.c.l.b16 %v171
  %v1180 = vunpack.c.h.b16 %v171
  %v1181 = vunpack.c.l.b16 %v172
  %v1182 = vunpack.c.h.b16 %v172
  %v1183 = vunpack.c.l.b16 %v173
  %v1184 = vunpack.c.h.b16 %v173
  %v1185 = vunpack.c.l.b16 %v174
  %v1186 = vunpack.c.h.b16 %v174
  %v1187 = vunpack.c.l.b16 %v175
  %v1188 = vunpack.c.h.b16 %v175
  %v1189 = vunpack.c.l.b16 %v176
  %v1190 = vunpack.c.h.b16 %v176
  %v1191 = vunpack.c.l.b16 %v177
  %v1192 = vunpack.c.h.b16 %v177
  %v1193 = vunpack.c.l.b16 %v178
  %v1194 = vunpack.c.h.b16 %v178
  %v1195 = vunpack.c.l.b16 %v179
  %v1196 = vunpack.c.h.b16 %v179
  %v1197 = vunpack.c.l.b16 %v180
  %v1198 = vunpack.c.h.b16 %v180
  %v1199 = vunpack.c.l.b16 %v181
  %v1200 = vunpack.c.h.b16 %v181
  %v1201 = vunpack.c.l.b16 %v182
  %v1202 = vunpack.c.h.b16 %v182
  %v1203 = vunpack.c.l.b16 %v183
  %v1204 = vunpack.c.h.b16 %v183
  %v1205 = vunpack.c.l.b16 %v184
  %v1206 = vunpack.c.h.b16 %v184
  %v1207 = vunpack.c.l.b16 %v185
  %v1208 = vunpack.c.h.b16 %v185
  %v1209 = vunpack.c.l.b16 %v186
  %v1210 = vunpack.c.h.b16 %v186
  %v1211 = vunpack.c.l.b16 %v187
  %v1212 = vunpack.c.h.b16 %v187
  %v1213 = vunpack.c.l.b16 %v188
  %v1214 = vunpack.c.h.b16 %v188
  %v1215 = vunpack.c.l.b16 %v189
  %v1216 = vunpack.c.h.b16 %v189
  %v1217 = vunpack.c.l.b16 %v190
  %v1218 = vunpack.c.h.b16 %v190
  %v1219 = vunpack.c.l.b16 %v191
  %v1220 = vunpack.c.h.b16 %v191
  %v1221 = vunpack.c.l.b16 %v192
  %v1222 = vunpack.c.h.b16 %v192
  %v1223 = vunpack.c.l.b16 %v193
  %v1224 = vunpack.c.h.b16 %v193
  %v1225 = vunpack.c.l.b16 %v194
  %v1226 = vunpack.c.h.b16 %v194
  %v1227 = vunpack.c.l.b16 %v195
  %v1228 = vunpack.c.h.b16 %v195
  %v1229 = vunpack.c.l.b16 %v196
  %v1230 = vunpack.c.h.b16 %v196
  %v1231 = vunpack.c.l.b16 %v197
  %v1232 = vunpack.c.h.b16 %v197
  %v1233 = vunpack.c.l.b16 %v198
  %v1234 = vunpack.c.h.b16 %v198
  %v1235 = vunpack.c.l.b16 %v199
  %v1236 = vunpack.c.h.b16 %v199
  %v1237 = vunpack.c.l.b16 %v200
  %v1238 = vunpack.c.h.b16 %v200
  %v1239 = vunpack.c.l.b16 %v201
  %v1240 = vunpack.c.h.b16 %v201
  %v1241 = vunpack.c.l.b16 %v202
  %v1242 = vunpack.c.h.b16 %v202
  %v1243 = vunpack.c.l.b16 %v203
  %v1244 = vunpack.c.h.b16 %v203
  %v1245 = vunpack.c.l.b16 %v204
  %v1246 = vunpack.c.h.b16 %v204
  %v1247 = vunpack.c.l.b16 %v205
  %v1248 = vunpack.c.h.b16 %v205
  %v1249 = vunpack.c.l.b16 %v206
  %v1250 = vunpack.c.h.b16 %v206
  %v1251 = vunpack.c.l.b16 %v207
  %v1252 = vunpack.c.h.b16 %v207
  %v1253 = vunpack.c.l.b16 %v208
  %v1254 = vunpack.c.h.b16 %v208
  %v1255 = vunpack.c.l.b16 %v209
  %v1256 = vunpack.c.h.b16 %v209
  %v1257 = vunpack.c.l.b16 %v210
  %v1258 = vunpack.c.h.b16 %v210
  %v1259 = vunpack.c.l.b16 %v211
  %v1260 = vunpack.c.h.b16 %v211
  %v1261 = vunpack.c.l.b16 %v212
  %v1262 = vunpack.c.h.b16 %v212
  %v1263 = vunpack.c.l.b16 %v213
  %v1264 = vunpack.c.h.b16 %v213
  %v1265 = vunpack.c.l.b16 %v214
  %v1266 = vunpack.c.h.b16 %v214
  %v1267 = vunpack.c.l.b16 %v215
  %v1268 = vunpack.c.h.b16 %v215
  %v1269 = vunpack.c.l.b16 %v216
  %v1270 = vunpack.c.h.b16 %v216
  %v1271 = vunpack.c.l.b16 %v217
  %v1272 = vunpack.c.h.b16 %v217
  %v1273 = vunpack.c.l.b16 %v218
  %v1274 = vunpack.c.h.b16 %v218
  %v1275 = vunpack.c.l.b16 %v219
  %v1276 = vunpack.c.h.b16 %v219
  %v1277 = vunpack.c.l.b16 %v220
  %v1278 = vunpack.c.h.b16 %v220
  %v1279 = vunpack.c.l.b16 %v221
  %v1280 = vunpack.c.h.b16 %v221
  %v1281 = vunpack.c.l.b16 %v222
  %v1282 = vunpack.c.h.b16 %v222
  %v1283 = vunpack.c.l.b16 %v223
  %v1284 = vunpack.c.h.b16 %v223
  %v1285 = vunpack.c.l.b16 %v224
  %v1286 = vunpack.c.h.b16 %v224
  %v1287 = vunpack.c.l.b16 %v225
  %v1288 = vunpack.c.h.b16 %v225
  %v1289 = vunpack.c.l.b16 %v226
  %v1290 = vunpack.c.h.b16 %v226
  %v1291 = vunpack.c.l.b16 %v227
  %v1292 = vunpack.c.h.b16 %v227
  %v1293 = vunpack.c.l.b16 %v228
  %v1294 = vunpack.c.h.b16 %v228
  %v1295 = vunpack.c.l.b16 %v229
  %v1296 = vunpack.c.h.b16 %v229
  %v1297 = vunpack.c.l.b16 %v230
  %v1298 = vunpack.c.h.b16 %v230
  %v1299 = vunpack.c.l.b16 %v231
  %v1300 = vunpack.c.h.b16 %v231
  %v1301 = vunpack.c.l.b16 %v232
  %v1302 = vunpack.c.h.b16 %v232
  %v1303 = vunpack.c.l.b16 %v233
  %v1304 = vunpack.c.h.b16 %v233
  %v1305 = vunpack.c.l.b16 %v234
  %v1306 = vunpack.c.h.b16 %v234
  %v1307 = vunpack.c.l.b16 %v235
  %v1308 = vunpack.c.h.b16 %v235
  %v1309 = vunpack.c.l.b16 %v236
  %v1310 = vunpack.c.h.b16 %v236
  %v1311 = vunpack.c.l.b16 %v237
  %v1312 = vunpack.c.h.b16 %v237
  %v1313 = vunpack.c.l.b16 %v238
  %v1314 = vunpack.c.h.b16 %v238
  %v1315 = vunpack.c.l.b16 %v239
  %v1316 = vunpack.c.h.b16 %v239
  %v1317 = vunpack.c.l.b16 %v240
  %v1318 = vunpack.c.h.b16 %v240
  %v1319 = vunpack.c.l.b16 %v241
  %v1320 = vunpack.c.h.b16 %v241
  %v1321 = vunpack.c.l.b16 %v242
  %v1322 = vunpack.c.h.b16 %v242
  %v1323 = vunpack.c.l.b16 %v243
  %v1324 = vunpack.c.h.b16 %v243
  %v1325 = vunpack.c.l.b16 %v244
  %v1326 = vunpack.c.h.b16 %v244
  %v1327 = vunpack.c.l.b16 %v245
  %v1328 = vunpack.c.h.b16 %v245
  %v1329 = vunpack.c.l.b16 %v246
  %v1330 = vunpack.c.h.b16 %v246
  %v1331 = vunpack.c.l.b16 %v247
  %v1332 = vunpack.c.h.b16 %v247
  %v1333 = vunpack.c.l.b16 %v248
  %v1334 = vunpack.c.h.b16 %v248
  %v1335 = vunpack.c.l.b16 %v249
  %v1336 = vunpack.c.h.b16 %v249
  %v1337 = vunpack.c.l.b16 %v250
  %v1338 = vunpack.c.h.b16 %v250
  %v1339 = vunpack.c.l.b16 %v251
  %v1340 = vunpack.c.h.b16 %v251
  %v1341 = vunpack.c.l.b16 %v252
  %v1342 = vunpack.c.h.b16 %v252
  %v1343 = vunpack.c.l.b16 %v253
  %v1344 = vunpack.c.h.b16 %v253
  %v1345 = vunpack.c.l.b16 %v254
  %v1346 = vunpack.c.h.b16 %v254
  %v1347 = vunpack.c.l.b16 %v255
  %v1348 = vunpack.c.h.b16 %v255
  %v1349 = vunpack.c.l.b16 %v256
  %v1350 = vunpack.c.h.b16 %v256
  %v1351 = vunpack.c.l.b16 %v257
  %v1352 = vunpack.c.h.b16 %v257
  %v1353 = vunpack.c.l.b16 %v258
  %v1354 = vunpack.c.h.b16 %v258
  %v1355 = vunpack.c.l.b16 %v259
  %v1356 = vunpack.c.h.b16 %v259
  %v1357 = vunpack.c.l.b16 %v260
  %v1358 = vunpack.c.h.b16 %v260
  %v1359 = vunpack.c.l.b16 %v261
  %v1360 = vunpack.c.h.b16 %v261
  %v1361 = vunpack.c.l.b16 %v262
  %v1362 = vunpack.c.h.b16 %v262
  %v1363 = vunpack.c.l.b16 %v263
  %v1364 = vunpack.c.h.b16 %v263
  %v1365 = vunpack.c.l.b16 %v264
  %v1366 = vunpack.c.h.b16 %v264
  %v1367 = vunpack.c.l.b16 %v265
  %v1368 = vunpack.c.h.b16 %v265
  %v1369 = vunpack.c.l.b16 %v266
  %v1370 = vunpack.c.h.b16 %v266
  %v1371 = vunpack.c.l.b16 %v267
  %v1372 = vunpack.c.h.b16 %v267
  %v1373 = vunpack.c.l.b16 %v268
  %v1374 = vunpack.c.h.b16 %v268
  %v1375 = vunpack.c.l.b16 %v269
  %v1376 = vunpack.c.h.b16 %v269
  %v1377 = vunpack.c.l.b16 %v270
  %v1378 = vunpack.c.h.b16 %v270
  %v1379 = vunpack.c.l.b16 %v271
  %v1380 = vunpack.c.h.b16 %v271
  %v1381 = vunpack.c.l.b16 %v272
  %v1382 = vunpack.c.h.b16 %v272
  %v1383 = vunpack.c.l.b16 %v273
  %v1384 = vunpack.c.h.b16 %v273
  %v1385 = vunpack.c.l.b16 %v274
  %v1386 = vunpack.c.h.b16 %v274
  %v1387 = vunpack.c.l.b16 %v275
  %v1388 = vunpack.c.h.b16 %v275
  %v1389 = vunpack.c.l.b16 %v276
  %v1390 = vunpack.c.h.b16 %v276
  %v1391 = vunpack.c.l.b16 %v277
  %v1392 = vunpack.c.h.b16 %v277
  %v1393 = vunpack.c.l.b16 %v278
  %v1394 = vunpack.c.h.b16 %v278
  %v1395 = vunpack.c.l.b16 %v279
  %v1396 = vunpack.c.h.b16 %v279
  %v1397 = vunpack.c.l.b16 %v280
  %v1398 = vunpack.c.h.b16 %v280
  %v1399 = vunpack.c.l.b16 %v281
  %v1400 = vunpack.c.h.b16 %v281
  %v1401 = vunpack.c.l.b16 %v282
  %v1402 = vunpack.c.h.b16 %v282
  %v1403 = vunpack.c.l.b16 %v283
  %v1404 = vunpack.c.h.b16 %v283
  %v1405 = vunpack.c.l.b16 %v284
  %v1406 = vunpack.c.h.b16 %v284
  %v1407 = vunpack.c.l.b16 %v285
  %v1408 = vunpack.c.h.b16 %v285
  %v1409 = vunpack.c.l.b16 %v286
  %v1410 = vunpack.c.h.b16 %v286
  %v1411 = vunpack.c.l.b16 %v287
  %v1412 = vunpack.c.h.b16 %v287
  %v1413 = vunpack.c.l.b16 %v288
  %v1414 = vunpack.c.h.b16 %v288
  %v1415 = vunpack.c.l.b16 %v289
  %v1416 = vunpack.c.h.b16 %v289
  %v1417 = vunpack.c.l.b16 %v290
  %v1418 = vunpack.c.h.b16 %v290
  %v1419 = vunpack.c.l.b16 %v291
  %v1420 = vunpack.c.h.b16 %v291
  %v1421 = vunpack.c.l.b16 %v292
  %v1422 = vunpack.c.h.b16 %v292
  %v1423 = vunpack.c.l.b16 %v293
  %v1424 = vunpack.c.h.b16 %v293
  %v1425 = vunpack.c.l.b16 %v294
  %v1426 = vunpack.c.h.b16 %v294
  %v1427 = vunpack.c.l.b16 %v295
  %v1428 = vunpack.c.h.b16 %v295
  %v1429 = vunpack.c.l.b16 %v296
  %v1430 = vunpack.c.h.b16 %v296
  %v1431 = vunpack.c.l.b16 %v297
  %v1432 = vunpack.c.h.b16 %v297
  %v1433 = vunpack.c.l.b16 %v298
  %v1434 = vunpack.c.h.b16 %v298
  %v1435 = vunpack.c.l.b16 %v299
  %v1436 = vunpack.c.h.b16 %v299
  %v1437 = vunpack.c.l.b16 %v300
  %v1438 = vunpack.c.h.b16 %v300
  %v1439 = vunpack.c.l.b16 %v301
  %v1440 = vunpack.c.h.b16 %v301
  %v1441 = vunpack.c.l.b16 %v302
  %v1442 = vunpack.c.h.b16 %v302
  %v1443 = vunpack.c.l.b16 %v303
  %v1444 = vunpack.c.h.b16 %v303
  %v1445 = vunpack.c.l.b16 %v304
  %v1446 = vunpack.c.h.b16 %v304
  %v1447 = vunpack.c.l.b16 %v305
  %v1448 = vunpack.c.h.b16 %v305
  %v1449 = vunpack.c.l.b16 %v306
  %v1450 = vunpack.c.h.b16 %v306
  %v1451 = vunpack.c.l.b16 %v307
  %v1452 = vunpack.c.h.b16 %v307
  %v1453 = vunpack.c.l.b16 %v308
  %v1454 = vunpack.c.h.b16 %v308
  %v1455 = vunpack.c.l.b16 %v309
  %v1456 = vunpack.c.h.b16 %v309
  %v1457 = vunpack.c.l.b16 %v310
  %v1458 = vunpack.c.h.b16 %v310
  %v1459 = vunpack.c.l.b16 %v311
  %v1460 = vunpack.c.h.b16 %v311
  %v1461 = vunpack.c.l.b16 %v312
  %v1462 = vunpack.c.h.b16 %v312
  %v1463 = vunpack.c.l.b16 %v313
  %v1464 = vunpack.c.h.b16 %v313
  %v1465 = vunpack.c.l.b16 %v314
  %v1466 = vunpack.c.h.b16 %v314
  %v1467 = vunpack.c.l.b16 %v315
  %v1468 = vunpack.c.h.b16 %v315
  %v1469 = vunpack.c.l.b16 %v316
  %v1470 = vunpack.c.h.b16 %v316
  %v1471 = vunpack.c.l.b16 %v317
  %v1472 = vunpack.c.h.b16 %v317
  %v1473 = vunpack.c.l.b16 %v318
  %v1474 = vunpack.c.h.b16 %v318
  %v1475 = vunpack.c.l.b16 %v319
  %v1476 = vunpack.c.h.b16 %v319
  %v1477 = vunpack.c.l.b16 %v320
  %v1478 = vunpack.c.h.b16 %v320
  %v1479 = vunpack.c.l.b16 %v321
  %v1480 = vunpack.c.h.b16 %v321
  %v1481 = vunpack.c.l.b16 %v322
  %v1482 = vunpack.c.h.b16 %v322
  %v1483 = vunpack.c.l.b16 %v323
  %v1484 = vunpack.c.h.b16 %v323
  %v1485 = vunpack.c.l.b16 %v324
  %v1486 = vunpack.c.h.b16 %v324
  %v1487 = vunpack.c.l.b16 %v325
  %v1488 = vunpack.c.h.b16 %v325
  %v1489 = vunpack.c.l.b16 %v326
  %v1490 = vunpack.c.h.b16 %v326
  %v1491 = vunpack.c.l.b16 %v327
  %v1492 = vunpack.c.h.b16 %v327
  %v1493 = vunpack.c.l.b16 %v328
  %v1494 = vunpack.c.h.b16 %v328
  %v1495 = vunpack.c.l.b16 %v329
  %v1496 = vunpack.c.h.b16 %v329
  %v1497 = vunpack.c.l.b16 %v330
  %v1498 = vunpack.c.h.b16 %v330
  %v1499 = vunpack.c.l.b16 %v331
  %v1500 = vunpack.c.h.b16 %v331
  %v1501 = vunpack.c.l.b16 %v332
  %v1502 = vunpack.c.h.b16 %v332
  %v1503 = vunpack.c.l.b16 %v333
  %v1504 = vunpack.c.h.b16 %v333
  %v1505 = vunpack.c.l.b16 %v334
  %v1506 = vunpack.c.h.b16 %v334
  %v1507 = vunpack.c.l.b16 %v335
  %v1508 = vunpack.c.h.b16 %v335
  %v1509 = vunpack.c.l.b16 %v336
  %v1510 = vunpack.c.h.b16 %v336
  %v1511 = vunpack.c.l.b16 %v337
  %v1512 = vunpack.c.h.b16 %v337
  %v1513 = vunpack.c.l.b16 %v338
  %v1514 = vunpack.c.h.b16 %v338
  %v1515 = vunpack.c.l.b16 %v339
  %v1516 = vunpack.c.h.b16 %v339
  %v1517 = vunpack.c.l.b16 %v340
  %v1518 = vunpack.c.h.b16 %v340
  %v1519 = vunpack.c.l.b16 %v341
  %v1520 = vunpack.c.h.b16 %v341
  %v1521 = vunpack.c.l.b16 %v342
  %v1522 = vunpack.c.h.b16 %v342
  %v1523 = vunpack.c.l.b16 %v343
  %v1524 = vunpack.c.h.b16 %v343
  %v1525 = vunpack.c.l.b16 %v344
  %v1526 = vunpack.c.h.b16 %v344
  %v1527 = vunpack.c.l.b16 %v345
  %v1528 = vunpack.c.h.b16 %v345
  %v1529 = vunpack.c.l.b16 %v346
  %v1530 = vunpack.c.h.b16 %v346
  %v1531 = vunpack.c.l.b16 %v347
  %v1532 = vunpack.c.h.b16 %v347
  %v1533 = vunpack.c.l.b16 %v348
  %v1534 = vunpack.c.h.b16 %v348
  %v1535 = vunpack.c.l.b16 %v349
  %v1536 = vunpack.c.h.b16 %v349
  %v1537 = vunpack.c.l.b16 %v350
  %v1538 = vunpack.c.h.b16 %v350
  %v1539 = vunpack.c.l.b16 %v351
  %v1540 = vunpack.c.h.b16 %v351
  %v1541 = vunpack.c.l.b16 %v352
  %v1542 = vunpack.c.h.b16 %v352
  %v1543 = vunpack.c.l.b16 %v353
  %v1544 = vunpack.c.h.b16 %v353
  %v1545 = vunpack.c.l.b16 %v354
  %v1546 = vunpack.c.h.b16 %v354
  %v1547 = vunpack.c.l.b16 %v355
  %v1548 = vunpack.c.h.b16 %v355
  %v1549 = vunpack.c.l.b16 %v356
  %v1550 = vunpack.c.h.b16 %v356
  %v1551 = vunpack.c.l.b16 %v357
  %v1552 = vunpack.c.h.b16 %v357
  %v1553 = vunpack.c.l.b16 %v358
  %v1554 = vunpack.c.h.b16 %v358
  %v1555 = vunpack.c.l.b16 %v359
  %v1556 = vunpack.c.h.b16 %v359
  %v1557 = vunpack.c.l.b16 %v360
  %v1558 = vunpack.c.h.b16 %v360
  %v1559 = vunpack.c.l.b16 %v361
  %v1560 = vunpack.c.h.b16 %v361
  %v1561 = vunpack.c.l.b16 %v362
  %v1562 = vunpack.c.h.b16 %v362
  %v1563 = vunpack.c.l.b16 %v363
  %v1564 = vunpack.c.h.b16 %v363
  %v1565 = vunpack.c.l.b16 %v364
  %v1566 = vunpack.c.h.b16 %v364
  %v1567 = vunpack.c.l.b16 %v365
  %v1568 = vunpack.c.h.b16 %v365
  %v1569 = vunpack.c.l.b16 %v366
  %v1570 = vunpack.c.h.b16 %v366
  %v1571 = vunpack.c.l.b16 %v367
  %v1572 = vunpack.c.h.b16 %v367
  %v1573 = vunpack.c.l.b16 %v368
  %v1574 = vunpack.c.h.b16 %v368
  %v1575 = vunpack.c.l.b16 %v369
  %v1576 = vunpack.c.h.b16 %v369
  %v1577 = vunpack.c.l.b16 %v370
  %v1578 = vunpack.c.h.b16 %v370
  %v1579 = vunpack.c.l.b16 %v371
  %v1580 = vunpack.c.h.b16 %v371
  %v1581 = vunpack.c.l.b16 %v372
  %v1582 = vunpack.c.h.b16 %v372
  %v1583 = vunpack.c.l.b16 %v373
  %v1584 = vunpack.c.h.b16 %v373
  %v1585 = vunpack.c.l.b16 %v374
  %v1586 = vunpack.c.h.b16 %v374
  %v1587 = vunpack.c.l.b16 %v375
  %v1588 = vunpack.c.h.b16 %v375
  %v1589 = vunpack.c.l.b16 %v376
  %v1590 = vunpack.c.h.b16 %v376
  %v1591 = vunpack.c.l.b16 %v377
  %v1592 = vunpack.c.h.b16 %v377
  %v1593 = vunpack.c.l.b16 %v378
  %v1594 = vunpack.c.h.b16 %v378
  %v1595 = vunpack.c.l.b16 %v379
  %v1596 = vunpack.c.h.b16 %v379
  %v1597 = vunpack.c.l.b16 %v380
  %v1598 = vunpack.c.h.b16 %v380
  %v1599 = vunpack.c.l.b16 %v381
  %v1600 = vunpack.c.h.b16 %v381
  %v1601 = vunpack.c.l.b16 %v382
  %v1602 = vunpack.c.h.b16 %v382
  %v1603 = vunpack.c.l.b16 %v383
  %v1604 = vunpack.c.h.b16 %v383
  %v1605 = vunpack.c.l.b16 %v384
  %v1606 = vunpack.c.h.b16 %v384
  %v1607 = vunpack.c.l.b16 %v385
  %v1608 = vunpack.c.h.b16 %v385
  %v1609 = vunpack.c.l.b16 %v386
  %v1610 = vunpack.c.h.b16 %v386
  %v1611 = vunpack.c.l.b16 %v387
  %v1612 = vunpack.c.h.b16 %v387
  %v1613 = vunpack.c.l.b16 %v388
  %v1614 = vunpack.c.h.b16 %v388
  %v1615 = vunpack.c.l.b16 %v389
  %v1616 = vunpack.c.h.b16 %v389
  %v1617 = vunpack.c.l.b16 %v390
  %v1618 = vunpack.c.h.b16 %v390
  %v1619 = vunpack.c.l.b16 %v391
  %v1620 = vunpack.c.h.b16 %v391
  %v1621 = vunpack.c.l.b16 %v392
  %v1622 = vunpack.c.h.b16 %v392
  %v1623 = vunpack.c.l.b16 %v393
  %v1624 = vunpack.c.h.b16 %v393
  %v1625 = vunpack.c.l.b16 %v394
  %v1626 = vunpack.c.h.b16 %v394
  %v1627 = vunpack.c.l.b16 %v395
  %v1628 = vunpack.c.h.b16 %v395
  %v1629 = vunpack.c.l.b16 %v396
  %v1630 = vunpack.c.h.b16 %v396
  %v1631 = vunpack.c.l.b16 %v397
  %v1632 = vunpack.c.h.b16 %v397
  %v1633 = vunpack.c.l.b16 %v398
  %v1634 = vunpack.c.h.b16 %v398
  %v1635 = vunpack.c.l.b16 %v399
  %v1636 = vunpack.c.h.b16 %v399
  %v1637 = vunpack.c.l.b16 %v400
  %v1638 = vunpack.c.h.b16 %v400
  %v1639 = vunpack.c.l.b16 %v401
  %v1640 = vunpack.c.h.b16 %v401
  %v1641 = vunpack.c.l.b16 %v402
  %v1642 = vunpack.c.h.b16 %v402
  %v1643 = vunpack.c.l.b16 %v403
  %v1644 = vunpack.c.h.b16 %v403
  %v1645 = vunpack.c.l.b16 %v404
  %v1646 = vunpack.c.h.b16 %v404
  %v1647 = vunpack.c.l.b16 %v405
  %v1648 = vunpack.c.h.b16 %v405
  %v1649 = vunpack.c.l.b16 %v406
  %v1650 = vunpack.c.h.b16 %v406
  %v1651 = vunpack.c.l.b16 %v407
  %v1652 = vunpack.c.h.b16 %v407
  %v1653 = vunpack.c.l.b16 %v408
  %v1654 = vunpack.c.h.b16 %v408
  %v1655 = vunpack.c.l.b16 %v409
  %v1656 = vunpack.c.h.b16 %v409
  %v1657 = vunpack.c.l.b16 %v410
  %v1658 = vunpack.c.h.b16 %v410
  %v1659 = vunpack.c.l.b16 %v411
  %v1660 = vunpack.c.h.b16 %v411
  %v1661 = vunpack.c.l.b16 %v412
  %v1662 = vunpack.c.h.b16 %v412
  %v1663 = vunpack.c.l.b16 %v413
  %v1664 = vunpack.c.h.b16 %v413
  %v1665 = vunpack.c.l.b16 %v414
  %v1666 = vunpack.c.h.b16 %v414
  %v1667 = vunpack.c.l.b16 %v415
  %v1668 = vunpack.c.h.b16 %v415
  %v1669 = vunpack.c.l.b16 %v416
  %v1670 = vunpack.c.h.b16 %v416
  %v1671 = vunpack.c.l.b16 %v417
  %v1672 = vunpack.c.h.b16 %v417
  %v1673 = vunpack.c.l.b16 %v418
  %v1674 = vunpack.c.h.b16 %v418
  %v1675 = vunpack.c.l.b16 %v419
  %v1676 = vunpack.c.h.b16 %v419
  %v1677 = vunpack.c.l.b16 %v420
  %v1678 = vunpack.c.h.b16 %v420
  %v1679 = vunpack.c.l.b16 %v421
  %v1680 = vunpack.c.h.b16 %v421
  %v1681 = vunpack.c.l.b16 %v422
  %v1682 = vunpack.c.h.b16 %v422
  %v1683 = vunpack.c.l.b16 %v423
  %v1684 = vunpack.c.h.b16 %v423
  %v1685 = vunpack.c.l.b16 %v424
  %v1686 = vunpack.c.h.b16 %v424
  %v1687 = vunpack.c.l.b16 %v425
  %v1688 = vunpack.c.h.b16 %v425
  %v1689 = vunpack.c.l.b16 %v426
  %v1690 = vunpack.c.h.b16 %v426
  %v1691 = vunpack.c.l.b16 %v427
  %v1692 = vunpack.c.h.b16 %v427
  %v1693 = vunpack.c.l.b16 %v428
  %v1694 = vunpack.c.h.b16 %v428
  %v1695 = vunpack.c.l.b16 %v429
  %v1696 = vunpack.c.h.b16 %v429
  %v1697 = vunpack.c.l.b16 %v430
  %v1698 = vunpack.c.h.b16 %v430
  %v1699 = vunpack.c.l.b16 %v431
  %v1700 = vunpack.c.h.b16 %v431
  %v1701 = vpack.c.b16 %v919, %v917
  %v1702 = vpack.c.b16 %v920, %v918
  %v1703 = vpack.c.b16 %v923, %v921
  %v1704 = vpack.c.b16 %v924, %v922
  %v1705 = vpack.c.b16 %v927, %v925
  %v1706 = vpack.c.b16 %v928, %v926
  %v1707 = vpack.c.b16 %v931, %v929
  %v1708 = vpack.c.b16 %v932, %v930
  %v1709 = vpack.c.b16 %v935, %v933
  %v1710 = vpack.c.b16 %v936, %v934
  %v1711 = vpack.c.b16 %v939, %v937
  %v1712 = vpack.c.b16 %v940, %v938
  %v1713 = vpack.c.b16 %v943, %v941
  %v1714 = vpack.c.b16 %v944, %v942
  %v1715 = vpack.c.b16 %v947, %v945
  %v1716 = vpack.c.b16 %v948, %v946
  %v1717 = vpack.c.b16 %v951, %v949
  %v1718 = vpack.c.b16 %v952, %v950
  %v1719 = vpack.c.b16 %v955, %v953
  %v1720 = vpack.c.b16 %v956, %v954
  %v1721 = vpack.c.b16 %v959, %v957
  %v1722 = vpack.c.b16 %v960, %v958
  %v1723 = vpack.c.b16 %v963, %v961
  %v1724 = vpack.c.b16 %v964, %v962
  %v1725 = vpack.c.b16 %v967, %v965
  %v1726 = vpack.c.b16 %v968, %v966
  %v1727 = vpack.c.b16 %v971, %v969
  %v1728 = vpack.c.b16 %v972, %v970
  %v1729 = vpack.c.b16 %v975, %v973
  %v1730 = vpack.c.b16 %v976, %v974
  %v1731 = vpack.c.b16 %v979, %v977
  %v1732 = vpack.c.b16 %v980, %v978
  %v1733 = vpack.c.b16 %v983, %v981
  %v1734 = vpack.c.b16 %v984, %v982
  %v1735 = vpack.c.b16 %v987, %v985
  %v1736 = vpack.c.b16 %v988, %v986
  %v1737 = vpack.c.b16 %v991, %v989
  %v1738 = vpack.c.b16 %v992, %v990
  %v1739 = vpack.c.b16 %v995, %v993
  %v1740 = vpack.c.b16 %v996, %v994
  %v1741 = vpack.c.b16 %v999, %v997
  %v1742 = vpack.c.b16 %v1000, %v998
  %v1743 = vpack.c.b16 %v1003, %v1001
  %v1744 = vpack.c.b16 %v1004, %v1002
  %v1745 = vpack.c.b16 %v1007, %v1005
  %v1746 = vpack.c.b16 %v1008, %v1006
  %v1747 = vpack.c.b16 %v1011, %v1009
  %v1748 = vpack.c.b16 %v1012, %v1010
  %v1749 = vpack.c.b16 %v1015, %v1013
  %v1750 = vpack.c.b16 %v1016, %v1014
  %v1751 = vpack.c.b16 %v1019, %v1017
  %v1752 = vpack.c.b16 %v1020, %v1018
  %v1753 = vpack.c.b16 %v1023, %v1021
  %v1754 = vpack.c.b16 %v1024, %v1022
  %v1755 = vpack.c.b16 %v1027, %v1025
  %v1756 = vpack.c.b16 %v1028, %v1026
  %v1757 = vpack.c.b16 %v1031, %v1029
  %v1758 = vpack.c.b16 %v1032, %v1030
  %v1759 = vpack.c.b16 %v1035, %v1033
  %v1760 = vpack.c.b16 %v1036, %v1034
  %v1761 = vpack.c.b16 %v1039, %v1037
  %v1762 = vpack.c.b16 %v1040, %v1038
  %v1763 = vpack.c.b16 %v1043, %v1041
  %v1764 = vpack.c.b16 %v1044, %v1042
  %v1765 = vpack.c.b16 %v1047, %v1045
  %v1766 = vpack.c.b16 %v1048, %v1046
  %v1767 = vpack.c.b16 %v1051, %v1049
  %v1768 = vpack.c.b16 %v1052, %v1050
  %v1769 = vpack.c.b16 %v1055, %v1053
  %v1770 = vpack.c.b16 %v1056, %v1054
  %v1771 = vpack.c.b16 %v1059, %v1057
  %v1772 = vpack.c.b16 %v1060, %v1058
  %v1773 = vpack.c.b16 %v1063, %v1061
  %v1774 = vpack.c.b16 %v1064, %v1062
  %v1775 = vpack.c.b16 %v1067, %v1065
  %v1776 = vpack.c.b16 %v1068, %v1066
  %v1777 = vpack.c.b16 %v1071, %v1069
  %v1778 = vpack.c.b16 %v1072, %v1070
  %v1779 = vpack.c.b16 %v1075, %v1073
  %v1780 = vpack.c.b16 %v1076, %v1074
  %v1781 = vpack.c.b16 %v1079, %v1077
  %v1782 = vpack.c.b16 %v1080, %v1078
  %v1783 = vpack.c.b16 %v1083, %v1081
  %v1784 = vpack.c.b16 %v1084, %v1082
  %v1785 = vpack.c.b16 %v1087, %v1085
  %v1786 = vpack.c.b16 %v1088, %v1086
  %v1787 = vpack.c.b16 %v1091, %v1089
  %v1788 = vpack.c.b16 %v1092, %v1090
  %v1789 = vpack.c.b16 %v1095, %v1093
  %v1790 = vpack.c.b16 %v1096, %v1094
  %v1791 = vpack.c.b16 %v1099, %v1097
  %v1792 = vpack.c.b16 %v1100, %v1098
  %v1793 = vpack.c.b16 %v1103, %v1101
  %v1794 = vpack.c.b16 %v1104, %v1102
  %v1795 = vpack.c.b16 %v1107, %v1105
  %v1796 = vpack.c.b16 %v1108, %v1106
  %v1797 = vpack.c.b16 %v1111, %v1109
  %v1798 = vpack.c.b16 %v1112, %v1110
  %v1799 = vpack.c.b16 %v1115, %v1113
  %v1800 = vpack.c.b16 %v1116, %v1114
  %v1801 = vpack.c.b16 %v1119, %v1117
  %v1802 = vpack.c.b16 %v1120, %v1118
  %v1803 = vpack.c.b16 %v1123, %v1121
  %v1804 = vpack.c.b16 %v1124, %v1122
  %v1805 = vpack.c.b16 %v1127, %v1125
  %v1806 = vpack.c.b16 %v1128, %v1126
  %v1807 = vpack.c.b16 %v1131, %v1129
  %v1808 = vpack.c.b16 %v1132, %v1130
  %v1809 = vpack.c.b16 %v1135, %v1133
  %v1810 = vpack.c.b16 %v1136, %v1134
  %v1811 = vpack.c.b16 %v1139, %v1137
  %v1812 = vpack.c.b16 %v1140, %v1138
  %v1813 = vpack.c.b16 %v1143, %v1141
  %v1814 = vpack.c.b16 %v1144, %v1142
  %v1815 = vpack.c.b16 %v1147, %v1145
  %v1816 = vpack.c.b16 %v1148, %v1146
  %v1817 = vpack.c.b16 %v1151, %v1149
  %v1818 = vpack.c.b16 %v1152, %v1150
  %v1819 = vpack.c.b16 %v1155, %v1153
  %v1820 = vpack.c.b16 %v1156, %v1154
  %v1821 = vpack.c.b16 %v1159, %v1157
  %v1822 = vpack.c.b16 %v1160, %v1158
  %v1823 = vpack.c.b16 %v1163, %v1161
  %v1824 = vpack.c.b16 %v1164, %v1162
  %v1825 = vpack.c.b16 %v1167, %v1165
  %v1826 = vpack.c.b16 %v1168, %v1166
  %v1827 = vpack.c.b16 %v1171, %v1169
  %v1828 = vpack.c.b16 %v1172, %v1170
  %v1829 = vpack.c.b16 %v1175, %v1173
  %v1830 = vpack.c.b16 %v1176, %v1174
  %v1831 = vpack.c.b16 %v1179, %v1177
  %v1832 = vpack.c.b16 %v1180, %v1178
  %v1833 = vpack.c.b16 %v1183, %v1181
  %v1834 = vpack.c.b16 %v1184, %v1182
  %v1835 = vpack.c.b16 %v1187, %v1185
  %v1836 = vpack.c.b16 %v1188, %v1186
  %v1837 = vpack.c.b16 %v1191, %v1189
  %v1838 = vpack.c.b16 %v1192, %v1190
  %v1839 = vpack.c.b16 %v1195, %v1193
  %v1840 = vpack.c.b16 %v1196, %v1194
  %v1841 = vpack.c.b16 %v1199, %v1197
  %v1842 = vpack.c.b16 %v1200, %v1198
  %v1843 = vpack.c.b16 %v1203, %v1201
  %v1844 = vpack.c.b16 %v1204, %v1202
  %v1845 = vpack.c.b16 %v1207, %v1205
  %v1846 = vpack.c.b16 %v1208, %v1206
  %v1847 = vpack.c.b16 %v1211, %v1209
  %v1848 = vpack.c.b16 %v1212, %v1210
  %v1849 = vpack.c.b16 %v1215, %v1213
  %v1850 = vpack.c.b16 %v1216, %v1214
  %v1851 = vpack.c.b16 %v1219, %v1217
  %v1852 = vpack.c.b16 %v1220, %v1218
  %v1853 = vpack.c.b16 %v1223, %v1221
  %v1854 = vpack.c.b16 %v1224, %v1222
  %v1855 = vpack.c.b16 %v1227, %v1225
  %v1856 = vpack.c.b16 %v1228, %v1226
  %v1857 = vpack.c.b16 %v1231, %v1229
  %v1858 = vpack.c.b16 %v1232, %v1230
  %v1859 = vpack.c.b16 %v1235, %v1233
  %v1860 = vpack.c.b16 %v1236, %v1234
  %v1861 = vpack.c.b16 %v1239, %v1237
  %v1862 = vpack.c.b16 %v1240, %v1238
  %v1863 = vpack.c.b16 %v1243, %v1241
  %v1864 = vpack.c.b16 %v1244, %v1242
  %v1865 = vpack.c.b16 %v1247, %v1245
  %v1866 = vpack.c.b16 %v1248, %v1246
  %v1867 = vpack.c.b16 %v1251, %v1249
  %v1868 = vpack.c.b16 %v1252, %v1250
  %v1869 = vpack.c.b16 %v1255, %v1253
  %v1870 = vpack.c.b16 %v1256, %v1254
  %v1871 = vpack.c.b16 %v1259, %v1257
  %v1872 = vpack.c.b16 %v1260, %v1258
  %v1873 = vpack.c.b16 %v1263, %v1261
  %v1874 = vpack.c.b16 %v1264, %v1262
  %v1875 = vpack.c.b16 %v1267, %v1265
  %v1876 = vpack.c.b16 %v1268, %v1266
  %v1877 = vpack.c.b16 %v1271, %v1269
  %v1878 = vpack.c.b16 %v1272, %v1270
  %v1879 = vpack.c.b16 %v1275, %v1273
  %v1880 = vpack.c.b16 %v1276, %v1274
  %v1881 = vpack.c.b16 %v1279, %v1277
  %v1882 = vpack.c.b16 %v1280, %v1278
  %v1883 = vpack.c.b16 %v1283, %v1281
  %v1884 = vpack.c.b16 %v1284, %v1282
  %v1885 = vpack.c.b16 %v1287, %v1285
  %v1886 = vpack.c.b16 %v1288, %v1286
  %v1887 = vpack.c.b16 %v1291, %v1289
  %v1888 = vpack.c.b16 %v1292, %v1290
  %v1889 = vpack.c.b16 %v1295, %v1293
  %v1890 = vpack.c.b16 %v1296, %v1294
  %v1891 = vpack.c.b16 %v1299, %v1297
  %v1892 = vpack.c.b16 %v1300, %v1298
  %v1893 = vpack.c.b16 %v1303, %v1301
  %v1894 = vpack.c.b16 %v1304, %v1302
  %v1895 = vpack.c.b16 %v1307, %v1305
  %v1896 = vpack.c.b16 %v1308, %v1306
  %v1897 = vpack.c.b16 %v1311, %v1309
  %v1898 = vpack.c.b16 %v1312, %v1310
  %v1899 = vpack.c.b16 %v1315, %v1313
  %v1900 = vpack.c.b16 %v1316, %v1314
  %v1901 = vpack.c.b16 %v1319, %v1317
  %v1902 = vpack.c.b16 %v1320, %v1318
  %v1903 = vpack.c.b16 %v1323, %v1321
  %v1904 = vpack.c.b16 %v1324, %v1322
  %v1905 = vpack.c.b16 %v1327, %v1325
  %v1906 = vpack.c.b16 %v1328, %v1326
  %v1907 = vpack.c.b16 %v1331, %v1329
  %v1908 = vpack.c.b16 %v1332, %v1330
  %v1909 = vpack.c.b16 %v1335, %v1333
  %v1910 = vpack.c.b16 %v1336, %v1334
  %v1911 = vpack.c.b16 %v1339, %v1337
  %v1912 = vpack.c.b16 %v1340, %v1338
  %v1913 = vpack.c.b16 %v1343, %v1341
  %v1914 = vpack.c.b16 %v1344, %v1342
  %v1915 = vpack.c.b16 %v1347, %v1345
  %v1916 = vpack.c.b16 %v1348, %v1346
  %v1917 = vpack.c.b16 %v1351, %v1349
  %v1918 = vpack.c.b16 %v1352, %v1350
  %v1919 = vpack.c.b16 %v1355, %v1353
  %v1920 = vpack.c.b16 %v1356, %v1354
  %v1921 = vpack.c.b16 %v1359, %v1357
  %v1922 = vpack.c.b16 %v1360, %v1358
  %v1923 = vpack.c.b16 %v1363, %v1361
  %v1924 = vpack.c.b16 %v1364, %v1362
  %v1925 = vpack.c.b16 %v1367, %v1365
  %v1926 = vpack.c.b16 %v1368, %v1366
  %v1927 = vpack.c.b16 %v1371, %v1369
  %v1928 = vpack.c.b16 %v1372, %v1370
  %v1929 = vpack.c.b16 %v1375, %v1373
  %v1930 = vpack.c.b16 %v1376, %v1374
  %v1931 = vpack.c.b16 %v1379, %v1377
  %v1932 = vpack.c.b16 %v1380, %v1378
  %v1933 = vpack.c.b16 %v1383, %v1381
  %v1934 = vpack.c.b16 %v1384, %v1382
  %v1935 = vpack.c.b16 %v1387, %v1385
  %v1936 = vpack.c.b16 %v1388, %v1386
  %v1937 = vpack.c.b16 %v1391, %v1389
  %v1938 = vpack.c.b16 %v1392, %v1390
  %v1939 = vpack.c.b16 %v1395, %v1393
  %v1940 = vpack.c.b16 %v1396, %v1394
  %v1941 = vpack.c.b16 %v1399, %v1397
  %v1942 = vpack.c.b16 %v1400, %v1398
  %v1943 = vpack.c.b16 %v1403, %v1401
  %v1944 = vpack.c.b16 %v1404, %v1402
  %v1945 = vpack.c.b16 %v1407, %v1405
  %v1946 = vpack.c.b16 %v1408, %v1406
  %v1947 = vpack.c.b16 %v1411, %v1409
  %v1948 = vpack.c.b16 %v1412, %v1410
  %v1949 = vpack.c.b16 %v1415, %v1413
  %v1950 = vpack.c.b16 %v1416, %v1414
  %v1951 = vpack.c.b16 %v1419, %v1417
  %v1952 = vpack.c.b16 %v1420, %v1418
  %v1953 = vpack.c.b16 %v1423, %v1421
  %v1954 = vpack.c.b16 %v1424, %v1422
  %v1955 = vpack.c.b16 %v1427, %v1425
  %v1956 = vpack.c.b16 %v1428, %v1426
  %v1957 = vpack.c.b16 %v1431, %v1429
  %v1958 = vpack.c.b16 %v1432, %v1430
  %v1959 = vpack.c.b16 %v1435, %v1433
  %v1960 = vpack.c.b16 %v1436, %v1434
  %v1961 = vpack.c.b16 %v1439, %v1437
  %v1962 = vpack.c.b16 %v1440, %v1438
  %v1963 = vpack.c.b16 %v1443, %v1441
  %v1964 = vpack.c.b16 %v1444, %v1442
  %v1965 = vpack.c.b16 %v1447, %v1445
  %v1966 = vpack.c.b16 %v1448, %v1446
  %v1967 = vpack.c.b16 %v1451, %v1449
  %v1968 = vpack.c.b16 %v1452, %v1450
  %v1969 = vpack.c.b16 %v1455, %v1453
  %v1970 = vpack.c.b16 %v1456, %v1454
  %v1971 = vpack.c.b16 %v1459, %v1457
  %v1972 = vpack.c.b16 %v1460, %v1458
  %v1973 = vpack.c.b16 %v1463, %v1461
  %v1974 = vpack.c.b16 %v1464, %v1462
  %v1975 = vpack.c.b16 %v1467, %v1465
  %v1976 = vpack.c.b16 %v1468, %v1466
  %v1977 = vpack.c.b16 %v1471, %v1469
  %v1978 = vpack.c.b16 %v1472, %v1470
  %v1979 = vpack.c.b16 %v1475, %v1473
  %v1980 = vpack.c.b16 %v1476, %v1474
  %v1981 = vpack.c.b16 %v1479, %v1477
  %v1982 = vpack.c.b16 %v1480, %v1478
  %v1983 = vpack.c.b16 %v1483, %v1481
  %v1984 = vpack.c.b16 %v1484, %v1482
  %v1985 = vpack.c.b16 %v1487, %v1485
  %v1986 = vpack.c.b16 %v1488, %v1486
  %v1987 = vpack.c.b16 %v1491, %v1489
  %v1988 = vpack.c.b16 %v1492, %v1490
  %v1989 = vpack.c.b16 %v1495, %v1493
  %v1990 = vpack.c.b16 %v1496, %v1494
  %v1991 = vpack.c.b16 %v1499, %v1497
  %v1992 = vpack.c.b16 %v1500, %v1498
  %v1993 = vpack.c.b16 %v1503, %v1501
  %v1994 = vpack.c.b16 %v1504, %v1502
  %v1995 = vpack.c.b16 %v1507, %v1505
  %v1996 = vpack.c.b16 %v1508, %v1506
  %v1997 = vpack.c.b16 %v1511, %v1509
  %v1998 = vpack.c.b16 %v1512, %v1510
  %v1999 = vpack.c.b16 %v1515, %v1513
  %v2000 = vpack.c.b16 %v1516, %v1514
  %v2001 = vpack.c.b16 %v1519, %v1517
  %v2002 = vpack.c.b16 %v1520, %v1518
  %v2003 = vpack.c.b16 %v1523, %v1521
  %v2004 = vpack.c.b16 %v1524, %v1522
  %v2005 = vpack.c.b16 %v1527, %v1525
  %v2006 = vpack.c.b16 %v1528, %v1526
  %v2007 = vpack.c.b16 %v1531, %v1529
  %v2008 = vpack.c.b16 %v1532, %v1530
  %v2009 = vpack.c.b16 %v1535, %v1533
  %v2010 = vpack.c.b16 %v1536, %v1534
  %v2011 = vpack.c.b16 %v1539, %v1537
  %v2012 = vpack.c.b16 %v1540, %v1538
  %v2013 = vpack.c.b16 %v1543, %v1541
  %v2014 = vpack.c.b16 %v1544, %v1542
  %v2015 = vpack.c.b16 %v1547, %v1545
  %v2016 = vpack.c.b16 %v1548, %v1546
  %v2017 = vpack.c.b16 %v1551, %v1549
  %v2018 = vpack.c.b16 %v1552, %v1550
  %v2019 = vpack.c.b16 %v1555, %v1553
  %v2020 = vpack.c.b16 %v1556, %v1554
  %v2021 = vpack.c.b16 %v1559, %v1557
  %v2022 = vpack.c.b16 %v1560, %v1558
  %v2023 = vpack.c.b16 %v1563, %v1561
  %v2024 = vpack.c.b16 %v1564, %v1562
  %v2025 = vpack.c.b16 %v1567, %v1565
  %v2026 = vpack.c.b16 %v1568, %v1566
  %v2027 = vpack.c.b16 %v1571, %v1569
  %v2028 = vpack.c.b16 %v1572, %v1570
  %v2029 = vpack.c.b16 %v1575, %v1573
  %v2030 = vpack.c.b16 %v1576, %v1574
  %v2031 = vpack.c.b16 %v1579, %v1577
  %v2032 = vpack.c.b16 %v1580, %v1578
  %v2033 = vpack.c.b16 %v1583, %v1581
  %v2034 = vpack.c.b16 %v1584, %v1582
  %v2035 = vpack.c.b16 %v1587, %v1585
  %v2036 = vpack.c.b16 %v1588, %v1586
  %v2037 = vpack.c.b16 %v1591, %v1589
  %v2038 = vpack.c.b16 %v1592, %v1590
  %v2039 = vpack.c.b16 %v1595, %v1593
  %v2040 = vpack.c.b16 %v1596, %v1594
  %v2041 = vpack.c.b16 %v1599, %v1597
  %v2042 = vpack.c.b16 %v1600, %v1598
  %v2043 = vpack.c.b16 %v1603, %v1601
  %v2044 = vpack.c.b16 %v1604, %v1602
  %v2045 = vpack.c.b16 %v1607, %v1605
  %v2046 = vpack.c.b16 %v1608, %v1606
  %v2047 = vpack.c.b16 %v1611, %v1609
  %v2048 = vpack.c.b16 %v1612, %v1610
  %v2049 = vpack.c.b16 %v1615, %v1613
  %v2050 = vpack.c.b16 %v1616, %v1614
  %v2051 = vpack.c.b16 %v1619, %v1617
  %v2052 = vpack.c.b16 %v1620, %v1618
  %v2053 = vpack.c.b16 %v1623, %v1621
  %v2054 = vpack.c.b16 %v1624, %v1622
  %v2055 = vpack.c.b16 %v1627, %v1625
  %v2056 = vpack.c.b16 %v1628, %v1626
  %v2057 = vpack.c.b16 %v1631, %v1629
  %v2058 = vpack.c.b16 %v1632, %v1630
  %v2059 = vpack.c.b16 %v1635, %v1633
  %v2060 = vpack.c.b16 %v1636, %v1634
  %v2061 = vpack.c.b16 %v1639, %v1637
  %v2062 = vpack.c.b16 %v1640, %v1638
  %v2063 = vpack.c.b16 %v1643, %v1641
  %v2064 = vpack.c.b16 %v1644, %v1642
  %v2065 = vpack.c.b16 %v1647, %v1645
  %v2066 = vpack.c.b16 %v1648, %v1646
  %v2067 = vpack.c.b16 %v1651, %v1649
  %v2068 = vpack.c.b16 %v1652, %v1650
  %v2069 = vpack.c.b16 %v1655, %v1653
  %v2070 = vpack.c.b16 %v1656, %v1654
  %v2071 = vpack.c.b16 %v1659, %v1657
  %v2072 = vpack.c.b16 %v1660, %v1658
  %v2073 = vpack.c.b16 %v1663, %v1661
  %v2074 = vpack.c.b16 %v1664, %v1662
  %v2075 = vpack.c.b16 %v1667, %v1665
  %v2076 = vpack.c.b16 %v1668, %v1666
  %v2077 = vpack.c.b16 %v1671, %v1669
  %v2078 = vpack.c.b16 %v1672, %v1670
  %v2079 = vpack.c.b16 %v1675, %v1673
  %v2080 = vpack.c.b16 %v1676, %v1674
  %v2081 = vpack.c.b16 %v1679, %v1677
  %v2082 = vpack.c.b16 %v1680, %v1678
  %v2083 = vpack.c.b16 %v1683, %v1681
  %v2084 = vpack.c.b16 %v1684, %v1682
  %v2085 = vpack.c.b16 %v1687, %v1685
  %v2086 = vpack.c.b16 %v1688, %v1686
  %v2087 = vpack.c.b16 %v1691, %v1689
  %v2088 = vpack.c.b16 %v1692, %v1690
  %v2089 = vpack.c.b16 %v1695, %v1693
  %v2090 = vpack.c.b16 %v1696, %v1694
  %v2091 = vpack.c.b16 %v1699, %v1697
  %v2092 = vpack.c.b16 %v1700, %v1698
  %vm2485 = vcmask 523264
  %v2487 = vsel %vm2485, %v500, 0
  %2489 = vmatpush.bf16.msra.mxu0 %v1715
  %2490 = vmatpush.bf16.msra.mxu0 %v1713
  %2491 = vmatpush.bf16.msra.mxu0 %v1711
  %2492 = vmatpush.bf16.msra.mxu0 %v1709
  %2493 = vmatpush.bf16.msra.mxu0 %v1707
  %2494 = vmatpush.bf16.msra.mxu0 %v1705
  %2495 = vmatpush.bf16.msra.mxu0 %v1703
  %2496 = vmatpush.bf16.msra.mxu0 %v1701
  %2497 = vmatmul.bf16.gmra.mxu0 %v476
  %v2498 = vpop.f32.mrf.mxu0
  %v2499 = vadd.f32 %v434, %v2498
  %v2500 = vpop.f32.mrf.mxu0
  %2501 = vdwg.mxu0
  %2502 = vmatpush.bf16.msra.mxu0 %v1731
  %2503 = vmatpush.bf16.msra.mxu0 %v1729
  %2504 = vmatpush.bf16.msra.mxu0 %v1727
  %2505 = vmatpush.bf16.msra.mxu0 %v1725
  %2506 = vmatpush.bf16.msra.mxu0 %v1723
  %2507 = vmatpush.bf16.msra.mxu0 %v1721
  %2508 = vmatpush.bf16.msra.mxu0 %v1719
  %2509 = vmatpush.bf16.msra.mxu0 %v1717
  %2510 = vmatmul.bf16.gmra.mxu0 %v477
  %v2511 = vpop.f32.mrf.mxu0
  %v2512 = vadd.f32 %v2499, %v2511
  %v2513 = vpop.f32.mrf.mxu0
  %2514 = vdwg.mxu0
  %2515 = vmatpush.bf16.msra.mxu0 %v1747
  %2516 = vmatpush.bf16.msra.mxu0 %v1745
  %2517 = vmatpush.bf16.msra.mxu0 %v1743
  %2518 = vmatpush.bf16.msra.mxu0 %v1741
  %2519 = vmatpush.bf16.msra.mxu0 %v1739
  %2520 = vmatpush.bf16.msra.mxu0 %v1737
  %2521 = vmatpush.bf16.msra.mxu0 %v1735
  %2522 = vmatpush.bf16.msra.mxu0 %v1733
  %2523 = vmatmul.bf16.gmra.mxu0 %v478
  %v2524 = vpop.f32.mrf.mxu0
  %v2525 = vadd.f32 %v2512, %v2524
  %v2526 = vpop.f32.mrf.mxu0
  %2527 = vdwg.mxu0
  %2528 = vmatpush.bf16.msra.mxu0 %v1763
  %2529 = vmatpush.bf16.msra.mxu0 %v1761
  %2530 = vmatpush.bf16.msra.mxu0 %v1759
  %2531 = vmatpush.bf16.msra.mxu0 %v1757
  %2532 = vmatpush.bf16.msra.mxu0 %v1755
  %2533 = vmatpush.bf16.msra.mxu0 %v1753
  %2534 = vmatpush.bf16.msra.mxu0 %v1751
  %2535 = vmatpush.bf16.msra.mxu0 %v1749
  %2536 = vmatmul.bf16.gmra.mxu0 %v479
  %v2537 = vpop.f32.mrf.mxu0
  %v2538 = vadd.f32 %v2525, %v2537
  %v2539 = vpop.f32.mrf.mxu0
  %2540 = vdwg.mxu0
  %2541 = vmatpush.bf16.msra.mxu0 %v1779
  %2542 = vmatpush.bf16.msra.mxu0 %v1777
  %2543 = vmatpush.bf16.msra.mxu0 %v1775
  %2544 = vmatpush.bf16.msra.mxu0 %v1773
  %2545 = vmatpush.bf16.msra.mxu0 %v1771
  %2546 = vmatpush.bf16.msra.mxu0 %v1769
  %2547 = vmatpush.bf16.msra.mxu0 %v1767
  %2548 = vmatpush.bf16.msra.mxu0 %v1765
  %2549 = vmatmul.bf16.gmra.mxu0 %v480
  %v2550 = vpop.f32.mrf.mxu0
  %v2551 = vadd.f32 %v2538, %v2550
  %v2552 = vpop.f32.mrf.mxu0
  %2553 = vdwg.mxu0
  %2554 = vmatpush.bf16.msra.mxu0 %v1795
  %2555 = vmatpush.bf16.msra.mxu0 %v1793
  %2556 = vmatpush.bf16.msra.mxu0 %v1791
  %2557 = vmatpush.bf16.msra.mxu0 %v1789
  %2558 = vmatpush.bf16.msra.mxu0 %v1787
  %2559 = vmatpush.bf16.msra.mxu0 %v1785
  %2560 = vmatpush.bf16.msra.mxu0 %v1783
  %2561 = vmatpush.bf16.msra.mxu0 %v1781
  %2562 = vmatmul.bf16.gmra.mxu0 %v481
  %v2563 = vpop.f32.mrf.mxu0
  %v2564 = vadd.f32 %v2551, %v2563
  %v2565 = vpop.f32.mrf.mxu0
  %2566 = vdwg.mxu0
  %2567 = vmatpush.bf16.msra.mxu0 %v1811
  %2568 = vmatpush.bf16.msra.mxu0 %v1809
  %2569 = vmatpush.bf16.msra.mxu0 %v1807
  %2570 = vmatpush.bf16.msra.mxu0 %v1805
  %2571 = vmatpush.bf16.msra.mxu0 %v1803
  %2572 = vmatpush.bf16.msra.mxu0 %v1801
  %2573 = vmatpush.bf16.msra.mxu0 %v1799
  %2574 = vmatpush.bf16.msra.mxu0 %v1797
  %2575 = vmatmul.bf16.gmra.mxu0 %v482
  %v2576 = vpop.f32.mrf.mxu0
  %v2577 = vadd.f32 %v2564, %v2576
  %v2578 = vpop.f32.mrf.mxu0
  %2579 = vdwg.mxu0
  %2580 = vmatpush.bf16.msra.mxu0 %v1827
  %2581 = vmatpush.bf16.msra.mxu0 %v1825
  %2582 = vmatpush.bf16.msra.mxu0 %v1823
  %2583 = vmatpush.bf16.msra.mxu0 %v1821
  %2584 = vmatpush.bf16.msra.mxu0 %v1819
  %2585 = vmatpush.bf16.msra.mxu0 %v1817
  %2586 = vmatpush.bf16.msra.mxu0 %v1815
  %2587 = vmatpush.bf16.msra.mxu0 %v1813
  %2588 = vmatmul.bf16.gmra.mxu0 %v483
  %v2589 = vpop.f32.mrf.mxu0
  %v2590 = vadd.f32 %v2577, %v2589
  %v2591 = vpop.f32.mrf.mxu0
  %2592 = vdwg.mxu0
  %2593 = vmatpush.bf16.msra.mxu0 %v1843
  %2594 = vmatpush.bf16.msra.mxu0 %v1841
  %2595 = vmatpush.bf16.msra.mxu0 %v1839
  %2596 = vmatpush.bf16.msra.mxu0 %v1837
  %2597 = vmatpush.bf16.msra.mxu0 %v1835
  %2598 = vmatpush.bf16.msra.mxu0 %v1833
  %2599 = vmatpush.bf16.msra.mxu0 %v1831
  %2600 = vmatpush.bf16.msra.mxu0 %v1829
  %2601 = vmatmul.bf16.gmra.mxu0 %v484
  %v2602 = vpop.f32.mrf.mxu0
  %v2603 = vadd.f32 %v2590, %v2602
  %v2604 = vpop.f32.mrf.mxu0
  %2605 = vdwg.mxu0
  %2606 = vmatpush.bf16.msra.mxu0 %v1859
  %2607 = vmatpush.bf16.msra.mxu0 %v1857
  %2608 = vmatpush.bf16.msra.mxu0 %v1855
  %2609 = vmatpush.bf16.msra.mxu0 %v1853
  %2610 = vmatpush.bf16.msra.mxu0 %v1851
  %2611 = vmatpush.bf16.msra.mxu0 %v1849
  %2612 = vmatpush.bf16.msra.mxu0 %v1847
  %2613 = vmatpush.bf16.msra.mxu0 %v1845
  %2614 = vmatmul.bf16.gmra.mxu0 %v485
  %v2615 = vpop.f32.mrf.mxu0
  %v2616 = vadd.f32 %v2603, %v2615
  %v2617 = vpop.f32.mrf.mxu0
  %2618 = vdwg.mxu0
  %2619 = vmatpush.bf16.msra.mxu0 %v1875
  %2620 = vmatpush.bf16.msra.mxu0 %v1873
  %2621 = vmatpush.bf16.msra.mxu0 %v1871
  %2622 = vmatpush.bf16.msra.mxu0 %v1869
  %2623 = vmatpush.bf16.msra.mxu0 %v1867
  %2624 = vmatpush.bf16.msra.mxu0 %v1865
  %2625 = vmatpush.bf16.msra.mxu0 %v1863
  %2626 = vmatpush.bf16.msra.mxu0 %v1861
  %2627 = vmatmul.bf16.gmra.mxu0 %v486
  %v2628 = vpop.f32.mrf.mxu0
  %v2629 = vadd.f32 %v2616, %v2628
  %v2630 = vpop.f32.mrf.mxu0
  %2631 = vdwg.mxu0
  %2632 = vmatpush.bf16.msra.mxu0 %v1891
  %2633 = vmatpush.bf16.msra.mxu0 %v1889
  %2634 = vmatpush.bf16.msra.mxu0 %v1887
  %2635 = vmatpush.bf16.msra.mxu0 %v1885
  %2636 = vmatpush.bf16.msra.mxu0 %v1883
  %2637 = vmatpush.bf16.msra.mxu0 %v1881
  %2638 = vmatpush.bf16.msra.mxu0 %v1879
  %2639 = vmatpush.bf16.msra.mxu0 %v1877
  %2640 = vmatmul.bf16.gmra.mxu0 %v487
  %v2641 = vpop.f32.mrf.mxu0
  %v2642 = vadd.f32 %v2629, %v2641
  %v2643 = vpop.f32.mrf.mxu0
  %2644 = vdwg.mxu0
  %2645 = vmatpush.bf16.msra.mxu0 %v1907
  %2646 = vmatpush.bf16.msra.mxu0 %v1905
  %2647 = vmatpush.bf16.msra.mxu0 %v1903
  %2648 = vmatpush.bf16.msra.mxu0 %v1901
  %2649 = vmatpush.bf16.msra.mxu0 %v1899
  %2650 = vmatpush.bf16.msra.mxu0 %v1897
  %2651 = vmatpush.bf16.msra.mxu0 %v1895
  %2652 = vmatpush.bf16.msra.mxu0 %v1893
  %2653 = vmatmul.bf16.gmra.mxu0 %v488
  %v2654 = vpop.f32.mrf.mxu0
  %v2655 = vadd.f32 %v2642, %v2654
  %v2656 = vpop.f32.mrf.mxu0
  %2657 = vdwg.mxu0
  %2658 = vmatpush.bf16.msra.mxu0 %v1923
  %2659 = vmatpush.bf16.msra.mxu0 %v1921
  %2660 = vmatpush.bf16.msra.mxu0 %v1919
  %2661 = vmatpush.bf16.msra.mxu0 %v1917
  %2662 = vmatpush.bf16.msra.mxu0 %v1915
  %2663 = vmatpush.bf16.msra.mxu0 %v1913
  %2664 = vmatpush.bf16.msra.mxu0 %v1911
  %2665 = vmatpush.bf16.msra.mxu0 %v1909
  %2666 = vmatmul.bf16.gmra.mxu0 %v489
  %v2667 = vpop.f32.mrf.mxu0
  %v2668 = vadd.f32 %v2655, %v2667
  %v2669 = vpop.f32.mrf.mxu0
  %2670 = vdwg.mxu0
  %2671 = vmatpush.bf16.msra.mxu0 %v1939
  %2672 = vmatpush.bf16.msra.mxu0 %v1937
  %2673 = vmatpush.bf16.msra.mxu0 %v1935
  %2674 = vmatpush.bf16.msra.mxu0 %v1933
  %2675 = vmatpush.bf16.msra.mxu0 %v1931
  %2676 = vmatpush.bf16.msra.mxu0 %v1929
  %2677 = vmatpush.bf16.msra.mxu0 %v1927
  %2678 = vmatpush.bf16.msra.mxu0 %v1925
  %2679 = vmatmul.bf16.gmra.mxu0 %v490
  %v2680 = vpop.f32.mrf.mxu0
  %v2681 = vadd.f32 %v2668, %v2680
  %v2682 = vpop.f32.mrf.mxu0
  %2683 = vdwg.mxu0
  %2684 = vmatpush.bf16.msra.mxu0 %v1955
  %2685 = vmatpush.bf16.msra.mxu0 %v1953
  %2686 = vmatpush.bf16.msra.mxu0 %v1951
  %2687 = vmatpush.bf16.msra.mxu0 %v1949
  %2688 = vmatpush.bf16.msra.mxu0 %v1947
  %2689 = vmatpush.bf16.msra.mxu0 %v1945
  %2690 = vmatpush.bf16.msra.mxu0 %v1943
  %2691 = vmatpush.bf16.msra.mxu0 %v1941
  %2692 = vmatmul.bf16.gmra.mxu0 %v491
  %v2693 = vpop.f32.mrf.mxu0
  %v2694 = vadd.f32 %v2681, %v2693
  %v2695 = vpop.f32.mrf.mxu0
  %2696 = vdwg.mxu0
  %2697 = vmatpush.bf16.msra.mxu0 %v1971
  %2698 = vmatpush.bf16.msra.mxu0 %v1969
  %2699 = vmatpush.bf16.msra.mxu0 %v1967
  %2700 = vmatpush.bf16.msra.mxu0 %v1965
  %2701 = vmatpush.bf16.msra.mxu0 %v1963
  %2702 = vmatpush.bf16.msra.mxu0 %v1961
  %2703 = vmatpush.bf16.msra.mxu0 %v1959
  %2704 = vmatpush.bf16.msra.mxu0 %v1957
  %2705 = vmatmul.bf16.gmra.mxu0 %v492
  %v2706 = vpop.f32.mrf.mxu0
  %v2707 = vadd.f32 %v2694, %v2706
  %v2708 = vpop.f32.mrf.mxu0
  %2709 = vdwg.mxu0
  %2710 = vmatpush.bf16.msra.mxu0 %v1987
  %2711 = vmatpush.bf16.msra.mxu0 %v1985
  %2712 = vmatpush.bf16.msra.mxu0 %v1983
  %2713 = vmatpush.bf16.msra.mxu0 %v1981
  %2714 = vmatpush.bf16.msra.mxu0 %v1979
  %2715 = vmatpush.bf16.msra.mxu0 %v1977
  %2716 = vmatpush.bf16.msra.mxu0 %v1975
  %2717 = vmatpush.bf16.msra.mxu0 %v1973
  %2718 = vmatmul.bf16.gmra.mxu0 %v493
  %v2719 = vpop.f32.mrf.mxu0
  %v2720 = vadd.f32 %v2707, %v2719
  %v2721 = vpop.f32.mrf.mxu0
  %2722 = vdwg.mxu0
  %2723 = vmatpush.bf16.msra.mxu0 %v2003
  %2724 = vmatpush.bf16.msra.mxu0 %v2001
  %2725 = vmatpush.bf16.msra.mxu0 %v1999
  %2726 = vmatpush.bf16.msra.mxu0 %v1997
  %2727 = vmatpush.bf16.msra.mxu0 %v1995
  %2728 = vmatpush.bf16.msra.mxu0 %v1993
  %2729 = vmatpush.bf16.msra.mxu0 %v1991
  %2730 = vmatpush.bf16.msra.mxu0 %v1989
  %2731 = vmatmul.bf16.gmra.mxu0 %v494
  %v2732 = vpop.f32.mrf.mxu0
  %v2733 = vadd.f32 %v2720, %v2732
  %v2734 = vpop.f32.mrf.mxu0
  %2735 = vdwg.mxu0
  %2736 = vmatpush.bf16.msra.mxu0 %v2019
  %2737 = vmatpush.bf16.msra.mxu0 %v2017
  %2738 = vmatpush.bf16.msra.mxu0 %v2015
  %2739 = vmatpush.bf16.msra.mxu0 %v2013
  %2740 = vmatpush.bf16.msra.mxu0 %v2011
  %2741 = vmatpush.bf16.msra.mxu0 %v2009
  %2742 = vmatpush.bf16.msra.mxu0 %v2007
  %2743 = vmatpush.bf16.msra.mxu0 %v2005
  %2744 = vmatmul.bf16.gmra.mxu0 %v495
  %v2745 = vpop.f32.mrf.mxu0
  %v2746 = vadd.f32 %v2733, %v2745
  %v2747 = vpop.f32.mrf.mxu0
  %2748 = vdwg.mxu0
  %2749 = vmatpush.bf16.msra.mxu0 %v2035
  %2750 = vmatpush.bf16.msra.mxu0 %v2033
  %2751 = vmatpush.bf16.msra.mxu0 %v2031
  %2752 = vmatpush.bf16.msra.mxu0 %v2029
  %2753 = vmatpush.bf16.msra.mxu0 %v2027
  %2754 = vmatpush.bf16.msra.mxu0 %v2025
  %2755 = vmatpush.bf16.msra.mxu0 %v2023
  %2756 = vmatpush.bf16.msra.mxu0 %v2021
  %2757 = vmatmul.bf16.gmra.mxu0 %v496
  %v2758 = vpop.f32.mrf.mxu0
  %v2759 = vadd.f32 %v2746, %v2758
  %v2760 = vpop.f32.mrf.mxu0
  %2761 = vdwg.mxu0
  %2762 = vmatpush.bf16.msra.mxu0 %v2051
  %2763 = vmatpush.bf16.msra.mxu0 %v2049
  %2764 = vmatpush.bf16.msra.mxu0 %v2047
  %2765 = vmatpush.bf16.msra.mxu0 %v2045
  %2766 = vmatpush.bf16.msra.mxu0 %v2043
  %2767 = vmatpush.bf16.msra.mxu0 %v2041
  %2768 = vmatpush.bf16.msra.mxu0 %v2039
  %2769 = vmatpush.bf16.msra.mxu0 %v2037
  %2770 = vmatmul.bf16.gmra.mxu0 %v497
  %v2771 = vpop.f32.mrf.mxu0
  %v2772 = vadd.f32 %v2759, %v2771
  %v2773 = vpop.f32.mrf.mxu0
  %2774 = vdwg.mxu0
  %2775 = vmatpush.bf16.msra.mxu0 %v2067
  %2776 = vmatpush.bf16.msra.mxu0 %v2065
  %2777 = vmatpush.bf16.msra.mxu0 %v2063
  %2778 = vmatpush.bf16.msra.mxu0 %v2061
  %2779 = vmatpush.bf16.msra.mxu0 %v2059
  %2780 = vmatpush.bf16.msra.mxu0 %v2057
  %2781 = vmatpush.bf16.msra.mxu0 %v2055
  %2782 = vmatpush.bf16.msra.mxu0 %v2053
  %2783 = vmatmul.bf16.gmra.mxu0 %v498
  %v2784 = vpop.f32.mrf.mxu0
  %v2785 = vadd.f32 %v2772, %v2784
  %v2786 = vpop.f32.mrf.mxu0
  %2787 = vdwg.mxu0
  %2788 = vmatpush.bf16.msra.mxu0 %v2083
  %2789 = vmatpush.bf16.msra.mxu0 %v2081
  %2790 = vmatpush.bf16.msra.mxu0 %v2079
  %2791 = vmatpush.bf16.msra.mxu0 %v2077
  %2792 = vmatpush.bf16.msra.mxu0 %v2075
  %2793 = vmatpush.bf16.msra.mxu0 %v2073
  %2794 = vmatpush.bf16.msra.mxu0 %v2071
  %2795 = vmatpush.bf16.msra.mxu0 %v2069
  %2796 = vmatmul.bf16.gmra.mxu0 %v499
  %v2797 = vpop.f32.mrf.mxu0
  %v2798 = vadd.f32 %v2785, %v2797
  %v2799 = vpop.f32.mrf.mxu0
  %2800 = vdwg.mxu0
  %2801 = vmatpush.bf16.msra.mxu0 0
  %2802 = vmatpush.bf16.msra.mxu0 0
  %2803 = vmatpush.bf16.msra.mxu0 0
  %2804 = vmatpush.bf16.msra.mxu0 0
  %2805 = vmatpush.bf16.msra.mxu0 %v2091
  %2806 = vmatpush.bf16.msra.mxu0 %v2089
  %2807 = vmatpush.bf16.msra.mxu0 %v2087
  %2808 = vmatpush.bf16.msra.mxu0 %v2085
  %2809 = vmatmul.bf16.gmra.mxu0 %v2487
  %v2810 = vpop.f32.mrf.mxu0
  %v2811 = vadd.f32 %v2798, %v2810
  %v2812 = vpop.f32.mrf.mxu0
  %2813 = vdwg.mxu0
  %2814 = vmatpush.bf16.msra.mxu0 %v1716
  %2815 = vmatpush.bf16.msra.mxu0 %v1714
  %2816 = vmatpush.bf16.msra.mxu0 %v1712
  %2817 = vmatpush.bf16.msra.mxu0 %v1710
  %2818 = vmatpush.bf16.msra.mxu0 %v1708
  %2819 = vmatpush.bf16.msra.mxu0 %v1706
  %2820 = vmatpush.bf16.msra.mxu0 %v1704
  %2821 = vmatpush.bf16.msra.mxu0 %v1702
  %2822 = vmatmul.bf16.gmra.mxu0 %v476
  %v2823 = vpop.f32.mrf.mxu0
  %v2824 = vadd.f32 %v435, %v2823
  %v2825 = vpop.f32.mrf.mxu0
  %2826 = vdwg.mxu0
  %2827 = vmatpush.bf16.msra.mxu0 %v1732
  %2828 = vmatpush.bf16.msra.mxu0 %v1730
  %2829 = vmatpush.bf16.msra.mxu0 %v1728
  %2830 = vmatpush.bf16.msra.mxu0 %v1726
  %2831 = vmatpush.bf16.msra.mxu0 %v1724
  %2832 = vmatpush.bf16.msra.mxu0 %v1722
  %2833 = vmatpush.bf16.msra.mxu0 %v1720
  %2834 = vmatpush.bf16.msra.mxu0 %v1718
  %2835 = vmatmul.bf16.gmra.mxu0 %v477
  %v2836 = vpop.f32.mrf.mxu0
  %v2837 = vadd.f32 %v2824, %v2836
  %v2838 = vpop.f32.mrf.mxu0
  %2839 = vdwg.mxu0
  %2840 = vmatpush.bf16.msra.mxu0 %v1748
  %2841 = vmatpush.bf16.msra.mxu0 %v1746
  %2842 = vmatpush.bf16.msra.mxu0 %v1744
  %2843 = vmatpush.bf16.msra.mxu0 %v1742
  %2844 = vmatpush.bf16.msra.mxu0 %v1740
  %2845 = vmatpush.bf16.msra.mxu0 %v1738
  %2846 = vmatpush.bf16.msra.mxu0 %v1736
  %2847 = vmatpush.bf16.msra.mxu0 %v1734
  %2848 = vmatmul.bf16.gmra.mxu0 %v478
  %v2849 = vpop.f32.mrf.mxu0
  %v2850 = vadd.f32 %v2837, %v2849
  %v2851 = vpop.f32.mrf.mxu0
  %2852 = vdwg.mxu0
  %2853 = vmatpush.bf16.msra.mxu0 %v1764
  %2854 = vmatpush.bf16.msra.mxu0 %v1762
  %2855 = vmatpush.bf16.msra.mxu0 %v1760
  %2856 = vmatpush.bf16.msra.mxu0 %v1758
  %2857 = vmatpush.bf16.msra.mxu0 %v1756
  %2858 = vmatpush.bf16.msra.mxu0 %v1754
  %2859 = vmatpush.bf16.msra.mxu0 %v1752
  %2860 = vmatpush.bf16.msra.mxu0 %v1750
  %2861 = vmatmul.bf16.gmra.mxu0 %v479
  %v2862 = vpop.f32.mrf.mxu0
  %v2863 = vadd.f32 %v2850, %v2862
  %v2864 = vpop.f32.mrf.mxu0
  %2865 = vdwg.mxu0
  %2866 = vmatpush.bf16.msra.mxu0 %v1780
  %2867 = vmatpush.bf16.msra.mxu0 %v1778
  %2868 = vmatpush.bf16.msra.mxu0 %v1776
  %2869 = vmatpush.bf16.msra.mxu0 %v1774
  %2870 = vmatpush.bf16.msra.mxu0 %v1772
  %2871 = vmatpush.bf16.msra.mxu0 %v1770
  %2872 = vmatpush.bf16.msra.mxu0 %v1768
  %2873 = vmatpush.bf16.msra.mxu0 %v1766
  %2874 = vmatmul.bf16.gmra.mxu0 %v480
  %v2875 = vpop.f32.mrf.mxu0
  %v2876 = vadd.f32 %v2863, %v2875
  %v2877 = vpop.f32.mrf.mxu0
  %2878 = vdwg.mxu0
  %2879 = vmatpush.bf16.msra.mxu0 %v1796
  %2880 = vmatpush.bf16.msra.mxu0 %v1794
  %2881 = vmatpush.bf16.msra.mxu0 %v1792
  %2882 = vmatpush.bf16.msra.mxu0 %v1790
  %2883 = vmatpush.bf16.msra.mxu0 %v1788
  %2884 = vmatpush.bf16.msra.mxu0 %v1786
  %2885 = vmatpush.bf16.msra.mxu0 %v1784
  %2886 = vmatpush.bf16.msra.mxu0 %v1782
  %2887 = vmatmul.bf16.gmra.mxu0 %v481
  %v2888 = vpop.f32.mrf.mxu0
  %v2889 = vadd.f32 %v2876, %v2888
  %v2890 = vpop.f32.mrf.mxu0
  %2891 = vdwg.mxu0
  %2892 = vmatpush.bf16.msra.mxu0 %v1812
  %2893 = vmatpush.bf16.msra.mxu0 %v1810
  %2894 = vmatpush.bf16.msra.mxu0 %v1808
  %2895 = vmatpush.bf16.msra.mxu0 %v1806
  %2896 = vmatpush.bf16.msra.mxu0 %v1804
  %2897 = vmatpush.bf16.msra.mxu0 %v1802
  %2898 = vmatpush.bf16.msra.mxu0 %v1800
  %2899 = vmatpush.bf16.msra.mxu0 %v1798
  %2900 = vmatmul.bf16.gmra.mxu0 %v482
  %v2901 = vpop.f32.mrf.mxu0
  %v2902 = vadd.f32 %v2889, %v2901
  %v2903 = vpop.f32.mrf.mxu0
  %2904 = vdwg.mxu0
  %2905 = vmatpush.bf16.msra.mxu0 %v1828
  %2906 = vmatpush.bf16.msra.mxu0 %v1826
  %2907 = vmatpush.bf16.msra.mxu0 %v1824
  %2908 = vmatpush.bf16.msra.mxu0 %v1822
  %2909 = vmatpush.bf16.msra.mxu0 %v1820
  %2910 = vmatpush.bf16.msra.mxu0 %v1818
  %2911 = vmatpush.bf16.msra.mxu0 %v1816
  %2912 = vmatpush.bf16.msra.mxu0 %v1814
  %2913 = vmatmul.bf16.gmra.mxu0 %v483
  %v2914 = vpop.f32.mrf.mxu0
  %v2915 = vadd.f32 %v2902, %v2914
  %v2916 = vpop.f32.mrf.mxu0
  %2917 = vdwg.mxu0
  %2918 = vmatpush.bf16.msra.mxu0 %v1844
  %2919 = vmatpush.bf16.msra.mxu0 %v1842
  %2920 = vmatpush.bf16.msra.mxu0 %v1840
  %2921 = vmatpush.bf16.msra.mxu0 %v1838
  %2922 = vmatpush.bf16.msra.mxu0 %v1836
  %2923 = vmatpush.bf16.msra.mxu0 %v1834
  %2924 = vmatpush.bf16.msra.mxu0 %v1832
  %2925 = vmatpush.bf16.msra.mxu0 %v1830
  %2926 = vmatmul.bf16.gmra.mxu0 %v484
  %v2927 = vpop.f32.mrf.mxu0
  %v2928 = vadd.f32 %v2915, %v2927
  %v2929 = vpop.f32.mrf.mxu0
  %2930 = vdwg.mxu0
  %2931 = vmatpush.bf16.msra.mxu0 %v1860
  %2932 = vmatpush.bf16.msra.mxu0 %v1858
  %2933 = vmatpush.bf16.msra.mxu0 %v1856
  %2934 = vmatpush.bf16.msra.mxu0 %v1854
  %2935 = vmatpush.bf16.msra.mxu0 %v1852
  %2936 = vmatpush.bf16.msra.mxu0 %v1850
  %2937 = vmatpush.bf16.msra.mxu0 %v1848
  %2938 = vmatpush.bf16.msra.mxu0 %v1846
  %2939 = vmatmul.bf16.gmra.mxu0 %v485
  %v2940 = vpop.f32.mrf.mxu0
  %v2941 = vadd.f32 %v2928, %v2940
  %v2942 = vpop.f32.mrf.mxu0
  %2943 = vdwg.mxu0
  %2944 = vmatpush.bf16.msra.mxu0 %v1876
  %2945 = vmatpush.bf16.msra.mxu0 %v1874
  %2946 = vmatpush.bf16.msra.mxu0 %v1872
  %2947 = vmatpush.bf16.msra.mxu0 %v1870
  %2948 = vmatpush.bf16.msra.mxu0 %v1868
  %2949 = vmatpush.bf16.msra.mxu0 %v1866
  %2950 = vmatpush.bf16.msra.mxu0 %v1864
  %2951 = vmatpush.bf16.msra.mxu0 %v1862
  %2952 = vmatmul.bf16.gmra.mxu0 %v486
  %v2953 = vpop.f32.mrf.mxu0
  %v2954 = vadd.f32 %v2941, %v2953
  %v2955 = vpop.f32.mrf.mxu0
  %2956 = vdwg.mxu0
  %2957 = vmatpush.bf16.msra.mxu0 %v1892
  %2958 = vmatpush.bf16.msra.mxu0 %v1890
  %2959 = vmatpush.bf16.msra.mxu0 %v1888
  %2960 = vmatpush.bf16.msra.mxu0 %v1886
  %2961 = vmatpush.bf16.msra.mxu0 %v1884
  %2962 = vmatpush.bf16.msra.mxu0 %v1882
  %2963 = vmatpush.bf16.msra.mxu0 %v1880
  %2964 = vmatpush.bf16.msra.mxu0 %v1878
  %2965 = vmatmul.bf16.gmra.mxu0 %v487
  %v2966 = vpop.f32.mrf.mxu0
  %v2967 = vadd.f32 %v2954, %v2966
  %v2968 = vpop.f32.mrf.mxu0
  %2969 = vdwg.mxu0
  %2970 = vmatpush.bf16.msra.mxu0 %v1908
  %2971 = vmatpush.bf16.msra.mxu0 %v1906
  %2972 = vmatpush.bf16.msra.mxu0 %v1904
  %2973 = vmatpush.bf16.msra.mxu0 %v1902
  %2974 = vmatpush.bf16.msra.mxu0 %v1900
  %2975 = vmatpush.bf16.msra.mxu0 %v1898
  %2976 = vmatpush.bf16.msra.mxu0 %v1896
  %2977 = vmatpush.bf16.msra.mxu0 %v1894
  %2978 = vmatmul.bf16.gmra.mxu0 %v488
  %v2979 = vpop.f32.mrf.mxu0
  %v2980 = vadd.f32 %v2967, %v2979
  %v2981 = vpop.f32.mrf.mxu0
  %2982 = vdwg.mxu0
  %2983 = vmatpush.bf16.msra.mxu0 %v1924
  %2984 = vmatpush.bf16.msra.mxu0 %v1922
  %2985 = vmatpush.bf16.msra.mxu0 %v1920
  %2986 = vmatpush.bf16.msra.mxu0 %v1918
  %2987 = vmatpush.bf16.msra.mxu0 %v1916
  %2988 = vmatpush.bf16.msra.mxu0 %v1914
  %2989 = vmatpush.bf16.msra.mxu0 %v1912
  %2990 = vmatpush.bf16.msra.mxu0 %v1910
  %2991 = vmatmul.bf16.gmra.mxu0 %v489
  %v2992 = vpop.f32.mrf.mxu0
  %v2993 = vadd.f32 %v2980, %v2992
  %v2994 = vpop.f32.mrf.mxu0
  %2995 = vdwg.mxu0
  %2996 = vmatpush.bf16.msra.mxu0 %v1940
  %2997 = vmatpush.bf16.msra.mxu0 %v1938
  %2998 = vmatpush.bf16.msra.mxu0 %v1936
  %2999 = vmatpush.bf16.msra.mxu0 %v1934
  %3000 = vmatpush.bf16.msra.mxu0 %v1932
  %3001 = vmatpush.bf16.msra.mxu0 %v1930
  %3002 = vmatpush.bf16.msra.mxu0 %v1928
  %3003 = vmatpush.bf16.msra.mxu0 %v1926
  %3004 = vmatmul.bf16.gmra.mxu0 %v490
  %v3005 = vpop.f32.mrf.mxu0
  %v3006 = vadd.f32 %v2993, %v3005
  %v3007 = vpop.f32.mrf.mxu0
  %3008 = vdwg.mxu0
  %3009 = vmatpush.bf16.msra.mxu0 %v1956
  %3010 = vmatpush.bf16.msra.mxu0 %v1954
  %3011 = vmatpush.bf16.msra.mxu0 %v1952
  %3012 = vmatpush.bf16.msra.mxu0 %v1950
  %3013 = vmatpush.bf16.msra.mxu0 %v1948
  %3014 = vmatpush.bf16.msra.mxu0 %v1946
  %3015 = vmatpush.bf16.msra.mxu0 %v1944
  %3016 = vmatpush.bf16.msra.mxu0 %v1942
  %3017 = vmatmul.bf16.gmra.mxu0 %v491
  %v3018 = vpop.f32.mrf.mxu0
  %v3019 = vadd.f32 %v3006, %v3018
  %v3020 = vpop.f32.mrf.mxu0
  %3021 = vdwg.mxu0
  %3022 = vmatpush.bf16.msra.mxu0 %v1972
  %3023 = vmatpush.bf16.msra.mxu0 %v1970
  %3024 = vmatpush.bf16.msra.mxu0 %v1968
  %3025 = vmatpush.bf16.msra.mxu0 %v1966
  %3026 = vmatpush.bf16.msra.mxu0 %v1964
  %3027 = vmatpush.bf16.msra.mxu0 %v1962
  %3028 = vmatpush.bf16.msra.mxu0 %v1960
  %3029 = vmatpush.bf16.msra.mxu0 %v1958
  %3030 = vmatmul.bf16.gmra.mxu0 %v492
  %v3031 = vpop.f32.mrf.mxu0
  %v3032 = vadd.f32 %v3019, %v3031
  %v3033 = vpop.f32.mrf.mxu0
  %3034 = vdwg.mxu0
  %3035 = vmatpush.bf16.msra.mxu0 %v1988
  %3036 = vmatpush.bf16.msra.mxu0 %v1986
  %3037 = vmatpush.bf16.msra.mxu0 %v1984
  %3038 = vmatpush.bf16.msra.mxu0 %v1982
  %3039 = vmatpush.bf16.msra.mxu0 %v1980
  %3040 = vmatpush.bf16.msra.mxu0 %v1978
  %3041 = vmatpush.bf16.msra.mxu0 %v1976
  %3042 = vmatpush.bf16.msra.mxu0 %v1974
  %3043 = vmatmul.bf16.gmra.mxu0 %v493
  %v3044 = vpop.f32.mrf.mxu0
  %v3045 = vadd.f32 %v3032, %v3044
  %v3046 = vpop.f32.mrf.mxu0
  %3047 = vdwg.mxu0
  %3048 = vmatpush.bf16.msra.mxu0 %v2004
  %3049 = vmatpush.bf16.msra.mxu0 %v2002
  %3050 = vmatpush.bf16.msra.mxu0 %v2000
  %3051 = vmatpush.bf16.msra.mxu0 %v1998
  %3052 = vmatpush.bf16.msra.mxu0 %v1996
  %3053 = vmatpush.bf16.msra.mxu0 %v1994
  %3054 = vmatpush.bf16.msra.mxu0 %v1992
  %3055 = vmatpush.bf16.msra.mxu0 %v1990
  %3056 = vmatmul.bf16.gmra.mxu0 %v494
  %v3057 = vpop.f32.mrf.mxu0
  %v3058 = vadd.f32 %v3045, %v3057
  %v3059 = vpop.f32.mrf.mxu0
  %3060 = vdwg.mxu0
  %3061 = vmatpush.bf16.msra.mxu0 %v2020
  %3062 = vmatpush.bf16.msra.mxu0 %v2018
  %3063 = vmatpush.bf16.msra.mxu0 %v2016
  %3064 = vmatpush.bf16.msra.mxu0 %v2014
  %3065 = vmatpush.bf16.msra.mxu0 %v2012
  %3066 = vmatpush.bf16.msra.mxu0 %v2010
  %3067 = vmatpush.bf16.msra.mxu0 %v2008
  %3068 = vmatpush.bf16.msra.mxu0 %v2006
  %3069 = vmatmul.bf16.gmra.mxu0 %v495
  %v3070 = vpop.f32.mrf.mxu0
  %v3071 = vadd.f32 %v3058, %v3070
  %v3072 = vpop.f32.mrf.mxu0
  %3073 = vdwg.mxu0
  %3074 = vmatpush.bf16.msra.mxu0 %v2036
  %3075 = vmatpush.bf16.msra.mxu0 %v2034
  %3076 = vmatpush.bf16.msra.mxu0 %v2032
  %3077 = vmatpush.bf16.msra.mxu0 %v2030
  %3078 = vmatpush.bf16.msra.mxu0 %v2028
  %3079 = vmatpush.bf16.msra.mxu0 %v2026
  %3080 = vmatpush.bf16.msra.mxu0 %v2024
  %3081 = vmatpush.bf16.msra.mxu0 %v2022
  %3082 = vmatmul.bf16.gmra.mxu0 %v496
  %v3083 = vpop.f32.mrf.mxu0
  %v3084 = vadd.f32 %v3071, %v3083
  %v3085 = vpop.f32.mrf.mxu0
  %3086 = vdwg.mxu0
  %3087 = vmatpush.bf16.msra.mxu0 %v2052
  %3088 = vmatpush.bf16.msra.mxu0 %v2050
  %3089 = vmatpush.bf16.msra.mxu0 %v2048
  %3090 = vmatpush.bf16.msra.mxu0 %v2046
  %3091 = vmatpush.bf16.msra.mxu0 %v2044
  %3092 = vmatpush.bf16.msra.mxu0 %v2042
  %3093 = vmatpush.bf16.msra.mxu0 %v2040
  %3094 = vmatpush.bf16.msra.mxu0 %v2038
  %3095 = vmatmul.bf16.gmra.mxu0 %v497
  %v3096 = vpop.f32.mrf.mxu0
  %v3097 = vadd.f32 %v3084, %v3096
  %v3098 = vpop.f32.mrf.mxu0
  %3099 = vdwg.mxu0
  %3100 = vmatpush.bf16.msra.mxu0 %v2068
  %3101 = vmatpush.bf16.msra.mxu0 %v2066
  %3102 = vmatpush.bf16.msra.mxu0 %v2064
  %3103 = vmatpush.bf16.msra.mxu0 %v2062
  %3104 = vmatpush.bf16.msra.mxu0 %v2060
  %3105 = vmatpush.bf16.msra.mxu0 %v2058
  %3106 = vmatpush.bf16.msra.mxu0 %v2056
  %3107 = vmatpush.bf16.msra.mxu0 %v2054
  %3108 = vmatmul.bf16.gmra.mxu0 %v498
  %v3109 = vpop.f32.mrf.mxu0
  %v3110 = vadd.f32 %v3097, %v3109
  %v3111 = vpop.f32.mrf.mxu0
  %3112 = vdwg.mxu0
  %3113 = vmatpush.bf16.msra.mxu0 %v2084
  %3114 = vmatpush.bf16.msra.mxu0 %v2082
  %3115 = vmatpush.bf16.msra.mxu0 %v2080
  %3116 = vmatpush.bf16.msra.mxu0 %v2078
  %3117 = vmatpush.bf16.msra.mxu0 %v2076
  %3118 = vmatpush.bf16.msra.mxu0 %v2074
  %3119 = vmatpush.bf16.msra.mxu0 %v2072
  %3120 = vmatpush.bf16.msra.mxu0 %v2070
  %3121 = vmatmul.bf16.gmra.mxu0 %v499
  %v3122 = vpop.f32.mrf.mxu0
  %v3123 = vadd.f32 %v3110, %v3122
  %v3124 = vpop.f32.mrf.mxu0
  %3125 = vdwg.mxu0
  %3126 = vmatpush.bf16.msra.mxu0 0
  %3127 = vmatpush.bf16.msra.mxu0 0
  %3128 = vmatpush.bf16.msra.mxu0 0
  %3129 = vmatpush.bf16.msra.mxu0 0
  %3130 = vmatpush.bf16.msra.mxu0 %v2092
  %3131 = vmatpush.bf16.msra.mxu0 %v2090
  %3132 = vmatpush.bf16.msra.mxu0 %v2088
  %3133 = vmatpush.bf16.msra.mxu0 %v2086
  %3134 = vmatmul.bf16.gmra.mxu0 %v2487
  %v3135 = vpop.f32.mrf.mxu0
  %v3136 = vadd.f32 %v3123, %v3135
  %v3137 = vpop.f32.mrf.mxu0
  %3138 = vdwg.mxu0
  %v3139 = vmax.f32 %v2811, 0.0
  %v3140 = vmax.f32 %v3136, 0.0
  %v3141 = vpack.c.bf16 %v3139, %v3139
  %v3142 = vpack.c.bf16 %v3140, %v3140
  %v3143 = vld [vmem:[%s3] sm:$0xf]
  %v3144 = vld [vmem:[%s3 + $0x4] sm:$0xf]
  %v3145 = vld [vmem:[%s3 + $0x8] sm:$0xf]
  %v3146 = vld [vmem:[%s3 + $0xc] sm:$0xf]
  %v3147 = vld [vmem:[%s3 + $0x10] sm:$0xf]
  %v3148 = vld [vmem:[%s3 + $0x14] sm:$0xf]
  %v3149 = vld [vmem:[%s3 + $0x18] sm:$0xf]
  %v3150 = vld [vmem:[%s3 + $0x1c] sm:$0xf]
  %v3151 = vld [vmem:[%s3 + $0x20] sm:$0xf]
  %v3152 = vld [vmem:[%s3 + $0x24] sm:$0xf]
  %v3153 = vld [vmem:[%s3 + $0x28] sm:$0xf]
  %v3154 = vld [vmem:[%s3 + $0x2c] sm:$0xf]
  %v3155 = vld [vmem:[%s3 + $0x30] sm:$0xf]
  %v3156 = vld [vmem:[%s3 + $0x34] sm:$0xf]
  %v3157 = vld [vmem:[%s3 + $0x38] sm:$0xf]
  %v3158 = vld [vmem:[%s3 + $0x3c] sm:$0xf]
  %v3159 = vld [vmem:[%s3 + $0x40] sm:$0xf]
  %v3160 = vld [vmem:[%s3 + $0x44] sm:$0xf]
  %v3161 = vld [vmem:[%s3 + $0x48] sm:$0xf]
  %v3162 = vld [vmem:[%s3 + $0x4c] sm:$0xf]
  %v3163 = vld [vmem:[%s3 + $0x50] sm:$0xf]
  %v3164 = vld [vmem:[%s3 + $0x54] sm:$0xf]
  %v3165 = vld [vmem:[%s3 + $0x58] sm:$0xf]
  %v3166 = vld [vmem:[%s3 + $0x5c] sm:$0xf]
  %v3167 = vld [vmem:[%s3 + $0x60] sm:$0xf]
  %v3168 = vld [vmem:[%s3 + $0x64] sm:$0xf]
  %v3169 = vld [vmem:[%s3 + $0x68] sm:$0xf]
  %v3170 = vld [vmem:[%s3 + $0x6c] sm:$0xf]
  %v3171 = vld [vmem:[%s3 + $0x70] sm:$0xf]
  %v3172 = vld [vmem:[%s3 + $0x74] sm:$0xf]
  %v3173 = vld [vmem:[%s3 + $0x78] sm:$0xf]
  %v3174 = vld [vmem:[%s3 + $0x7c] sm:$0xf]
  %v3175 = vld [vmem:[%s4] sm:$0x1]
  %v3177 = vperm.slane %v3175, 0
  %v3211 = vunpack.c.l.b16 %v3143
  %v3212 = vunpack.c.l.b16 %v3144
  %v3213 = vunpack.c.l.b16 %v3145
  %v3214 = vunpack.c.l.b16 %v3146
  %v3215 = vunpack.c.l.b16 %v3147
  %v3216 = vunpack.c.l.b16 %v3148
  %v3217 = vunpack.c.l.b16 %v3149
  %v3218 = vunpack.c.l.b16 %v3150
  %v3219 = vunpack.c.l.b16 %v3151
  %v3220 = vunpack.c.l.b16 %v3152
  %v3221 = vunpack.c.l.b16 %v3153
  %v3222 = vunpack.c.l.b16 %v3154
  %v3223 = vunpack.c.l.b16 %v3155
  %v3224 = vunpack.c.l.b16 %v3156
  %v3225 = vunpack.c.l.b16 %v3157
  %v3226 = vunpack.c.l.b16 %v3158
  %v3227 = vunpack.c.l.b16 %v3159
  %v3228 = vunpack.c.l.b16 %v3160
  %v3229 = vunpack.c.l.b16 %v3161
  %v3230 = vunpack.c.l.b16 %v3162
  %v3231 = vunpack.c.l.b16 %v3163
  %v3232 = vunpack.c.l.b16 %v3164
  %v3233 = vunpack.c.l.b16 %v3165
  %v3234 = vunpack.c.l.b16 %v3166
  %v3235 = vunpack.c.l.b16 %v3167
  %v3236 = vunpack.c.l.b16 %v3168
  %v3237 = vunpack.c.l.b16 %v3169
  %v3238 = vunpack.c.l.b16 %v3170
  %v3239 = vunpack.c.l.b16 %v3171
  %v3240 = vunpack.c.l.b16 %v3172
  %v3241 = vunpack.c.l.b16 %v3173
  %v3242 = vunpack.c.l.b16 %v3174
  %v3243 = vpack.c.b16 %v3212, %v3211
  %v3244 = vpack.c.b16 %v3214, %v3213
  %v3245 = vpack.c.b16 %v3216, %v3215
  %v3246 = vpack.c.b16 %v3218, %v3217
  %v3247 = vpack.c.b16 %v3220, %v3219
  %v3248 = vpack.c.b16 %v3222, %v3221
  %v3249 = vpack.c.b16 %v3224, %v3223
  %v3250 = vpack.c.b16 %v3226, %v3225
  %v3251 = vpack.c.b16 %v3228, %v3227
  %v3252 = vpack.c.b16 %v3230, %v3229
  %v3253 = vpack.c.b16 %v3232, %v3231
  %v3254 = vpack.c.b16 %v3234, %v3233
  %v3255 = vpack.c.b16 %v3236, %v3235
  %v3256 = vpack.c.b16 %v3238, %v3237
  %v3257 = vpack.c.b16 %v3240, %v3239
  %v3258 = vpack.c.b16 %v3242, %v3241
  %3275 = vmatpush.bf16.msra.mxu0 %v3250
  %3276 = vmatpush.bf16.msra.mxu0 %v3249
  %3277 = vmatpush.bf16.msra.mxu0 %v3248
  %3278 = vmatpush.bf16.msra.mxu0 %v3247
  %3279 = vmatpush.bf16.msra.mxu0 %v3246
  %3280 = vmatpush.bf16.msra.mxu0 %v3245
  %3281 = vmatpush.bf16.msra.mxu0 %v3244
  %3282 = vmatpush.bf16.msra.mxu0 %v3243
  %3283 = vmatmul.bf16.gmra.mxu0 %v3141
  %v3284 = vpop.f32.mrf.mxu0
  %v3285 = vadd.f32 %v3177, %v3284
  %v3286 = vpop.f32.mrf.mxu0
  %3287 = vdwg.mxu0
  %3288 = vmatpush.bf16.msra.mxu0 %v3258
  %3289 = vmatpush.bf16.msra.mxu0 %v3257
  %3290 = vmatpush.bf16.msra.mxu0 %v3256
  %3291 = vmatpush.bf16.msra.mxu0 %v3255
  %3292 = vmatpush.bf16.msra.mxu0 %v3254
  %3293 = vmatpush.bf16.msra.mxu0 %v3253
  %3294 = vmatpush.bf16.msra.mxu0 %v3252
  %3295 = vmatpush.bf16.msra.mxu0 %v3251
  %3296 = vmatmul.bf16.gmra.mxu0 %v3142
  %v3297 = vpop.f32.mrf.mxu0
  %v3298 = vadd.f32 %v3285, %v3297
  %v3299 = vpop.f32.mrf.mxu0
  %3300 = vdwg.mxu0
  %v3301 = vmax.f32 %v3298, 0.0
  %v3302 = vpack.c.bf16 %v3301, %v3301
  %v3303 = vld [vmem:[%s5] sm:$0xf]
  %v3304 = vld [vmem:[%s5 + $0x4] sm:$0xf]
  %v3305 = vld [vmem:[%s5 + $0x8] sm:$0xf]
  %v3306 = vld [vmem:[%s5 + $0xc] sm:$0xf]
  %v3307 = vld [vmem:[%s5 + $0x10] sm:$0xf]
  %v3308 = vld [vmem:[%s5 + $0x14] sm:$0xf]
  %v3309 = vld [vmem:[%s5 + $0x18] sm:$0xf]
  %v3310 = vld [vmem:[%s5 + $0x1c] sm:$0xf]
  %v3311 = vld [vmem:[%s6] sm:$0x1]
  %v3313 = vperm.slane %v3311, 0
  %v3323 = vunpack.c.l.b16 %v3303
  %v3324 = vunpack.c.l.b16 %v3304
  %v3325 = vunpack.c.l.b16 %v3305
  %v3326 = vunpack.c.l.b16 %v3306
  %v3327 = vunpack.c.l.b16 %v3307
  %v3328 = vunpack.c.l.b16 %v3308
  %v3329 = vunpack.c.l.b16 %v3309
  %v3330 = vunpack.c.l.b16 %v3310
  %v3331 = vpack.c.b16 %v3324, %v3323
  %v3332 = vpack.c.b16 %v3326, %v3325
  %v3333 = vpack.c.b16 %v3328, %v3327
  %v3334 = vpack.c.b16 %v3330, %v3329
  %v3340 = vsel %vm2485, %v3302, 0
  %3342 = vmatpush.bf16.msra.mxu0 0
  %3343 = vmatpush.bf16.msra.mxu0 0
  %3344 = vmatpush.bf16.msra.mxu0 0
  %3345 = vmatpush.bf16.msra.mxu0 0
  %3346 = vmatpush.bf16.msra.mxu0 %v3334
  %3347 = vmatpush.bf16.msra.mxu0 %v3333
  %3348 = vmatpush.bf16.msra.mxu0 %v3332
  %3349 = vmatpush.bf16.msra.mxu0 %v3331
  %3350 = vmatmul.bf16.gmra.mxu0 %v3340
  %v3351 = vpop.f32.mrf.mxu0
  %v3352 = vadd.f32 %v3313, %v3351
  %v3353 = vpop.f32.mrf.mxu0
  %3354 = vdwg.mxu0
  %3355 = vmax.xlane.f32.xlu0 %v3352
  %v3356 = vpop.xlane.xlu0 %3355
  %v3357 = vsub.f32 %v3352, %v3356
  %v3358 = vmul.f32 %v3357, 1.442695
  %v3359 = vpow.pop %v3358
  %3360 = vadd.xlane.f32.xlu0 %v3359
  %v3361 = vpop.xlane.xlu0 %3360
  %v3362 = vlog2.pop %v3361
  %v3363 = vmul.f32 %v3362, 0.6931472
  %v3364 = vsub.f32 %v3357, %v3363
  %3365 = vst [vmem:[%s7] sm:$0xff] %v3364
  // Predicated region
  $region30: #{cnn_forward.3} parent=0 // pred_check
    _
  $region31: #{cnn_forward.3} parent=0 // pred_check_branch
    %3367 = sbr.rel (0) target = $region33
  $region32: #{cnn_forward.3} parent=0 // pred_region
    _
  $region33: #{cnn_forward.3} parent=0 // pred_fallthru
    _
  // Predicated region
  $region34: #{cnn_forward.3} parent=0 // pred_check
    _
  $region35: #{cnn_forward.3} parent=0 // pred_check_branch
    %3369 = sbr.rel (0) target = $region37
  $region36: #{cnn_forward.3} parent=0 // pred_region
    _
  $region37: #{cnn_forward.3} parent=0 // pred_fallthru
    _

// kernel: cnn_forward.2
$region0: #{cnn_forward.2}
  #allocation0 [shape = 'u32[]', space=smem, size = 0x4, offset = 0x4, fixed_abs, tag = 'smem constant byte address 0x4 - core index']
  #allocation1 [shape = 'u32[72,128]{1,0:T(1,128)}', space=vmem, size = 0x9000, scoped, tag = 'internal scratch']
  #allocation2 [shape = 'bf16[400,64]{1,0:T(8,128)(2,1)}', space=vmem, size = 0x19000, scoped, tag = 'scratch operand']
  #allocation3 [shape = 'f32[324,64]{1,0:T(8,128)}', space=vmem, size = 0x29000, scoped, tag = 'scratch operand']
  %s0 = inlined_call_operand.vmem [shape: bf16[32,336,64], index: 0, kind: input, shape index: {}]
  %s1 = inlined_call_operand.vmem [shape: bf16[64,256], index: 1, kind: input, shape index: {}]
  %s2 = inlined_call_operand.vmem [shape: bf16[5,320,64], index: 2, kind: input, shape index: {}]
  %s3 = inlined_call_operand.vmem [shape: f32[1,64], index: 3, kind: input, shape index: {}]
  %s4 = inlined_call_operand.vmem [shape: bf16[49,248], index: 4, kind: input, shape index: {}]
  %s5 = inlined_call_operand.vmem [shape: bf16[32,49,64], index: 5, kind: output, shape index: {}]
  %s6 = sld [smem:[#allocation0]]
  $region37: #{cnn_forward.2} parent=0
    _
  %s8 = ssub.s32 1, %s6
  %s9 = scalar_select 0, %s8, %s6
  // Predicated region
  $region2: #{cnn_forward.2} parent=0 // pred_check
    _
  $region3: #{cnn_forward.2} parent=0 // pred_check_branch
    %11 = sbr.rel (0) target = $region5
  $region4: #{cnn_forward.2} parent=0 // pred_region
    _
  $region5: #{cnn_forward.2} parent=0 // pred_fallthru
    _
  // Predicated region
  $region6: #{cnn_forward.2} parent=0 // pred_check
    _
  $region7: #{cnn_forward.2} parent=0 // pred_check_branch
    %13 = sbr.rel (0) target = $region9
  $region8: #{cnn_forward.2} parent=0 // pred_region
    _
  $region9: #{cnn_forward.2} parent=0 // pred_fallthru
    _
  // Predicated region
  $region10: #{cnn_forward.2} parent=0 // pred_check
    _
  $region11: #{cnn_forward.2} parent=0 // pred_check_branch
    %15 = sbr.rel (0) target = $region13
  $region12: #{cnn_forward.2} parent=0 // pred_region
    _
  $region13: #{cnn_forward.2} parent=0 // pred_fallthru
    _
  // Predicated region
  $region14: #{cnn_forward.2} parent=0 // pred_check
    _
  $region15: #{cnn_forward.2} parent=0 // pred_check_branch
    %17 = sbr.rel (0) target = $region17
  $region16: #{cnn_forward.2} parent=0 // pred_region
    _
  $region17: #{cnn_forward.2} parent=0 // pred_fallthru
    _
  // Predicated region
  $region18: #{cnn_forward.2} parent=0 // pred_check
    _
  $region19: #{cnn_forward.2} parent=0 // pred_check_branch
    %19 = sbr.rel (0) target = $region21
  $region20: #{cnn_forward.2} parent=0 // pred_region
    _
  $region21: #{cnn_forward.2} parent=0 // pred_fallthru
    _
  %vm21 = vcmask 519168
  %22 = vst.msk [vmem:[#allocation2 + $0xa8] sm:$0xf] %vm21, 0
  %23 = vst.msk [vmem:[#allocation2 + $0xac] sm:$0xf] %vm21, 0
  %24 = vst.msk [vmem:[#allocation2 + $0xb0] sm:$0xf] %vm21, 0
  %25 = vst.msk [vmem:[#allocation2 + $0xb4] sm:$0xf] %vm21, 0
  %26 = vst.msk [vmem:[#allocation2 + $0xb8] sm:$0xf] %vm21, 0
  %27 = vst.msk [vmem:[#allocation2 + $0xbc] sm:$0xf] %vm21, 0
  %28 = vst.msk [vmem:[#allocation2 + $0xc0] sm:$0xf] %vm21, 0
  %29 = vst.msk [vmem:[#allocation2 + $0xc4] sm:$0xf] %vm21, 0
  %v30 = vld [vmem:[%s1] sm:$0xff]
  %v31 = vld [vmem:[%s1 + $0x8] sm:$0xff]
  %v32 = vld [vmem:[%s1 + $0x10] sm:$0xff]
  %v33 = vld [vmem:[%s1 + $0x18] sm:$0xff]
  %v34 = vld [vmem:[%s1 + $0x20] sm:$0xff]
  %v35 = vld [vmem:[%s1 + $0x28] sm:$0xff]
  %v36 = vld [vmem:[%s1 + $0x30] sm:$0xff]
  %v37 = vld [vmem:[%s1 + $0x38] sm:$0xff]
  %v38 = vld [vmem:[%s3] sm:$0x1]
  %v39 = vld [vmem:[%s4] sm:$0xff]
  %v40 = vld [vmem:[%s4 + $0x8] sm:$0xff]
  %v41 = vld [vmem:[%s4 + $0x10] sm:$0xff]
  %v42 = vld [vmem:[%s4 + $0x18] sm:$0xff]
  %v43 = vld [vmem:[%s4 + $0x20] sm:$0xff]
  %v44 = vld [vmem:[%s4 + $0x28] sm:$0xff]
  %v45 = vld [vmem:[%s4 + $0x30] sm:$0x11]
  loop: start=0, step=1, limit=32
  $region22: #{cnn_forward.2} parent=0 // loop_pre_header
    _
  $region23: #{cnn_forward.2} parent=0 // loop_header
    %s47 = sphi 0, %s51
    %p48 = scmp.ge.s32.totalorder %s47, 32
  $region24: #{cnn_forward.2} parent=0 // loop_header_branch
    %50 = sbr.rel (%p48) target = $region28
  $region25: #{cnn_forward.2} parent=0 // loop_body
    %s52 = smul.u32 %s47, 42
    %s53 = smul.addr %s52, 4
    %s54 = scalar_lea.vmem %s0, %s53
    %v55 = vld [vmem:[%s54] sm:$0xf]
    %v56 = vld [vmem:[%s54 + $0x4] sm:$0xf]
    %v57 = vld [vmem:[%s54 + $0x8] sm:$0xf]
    %v58 = vld [vmem:[%s54 + $0xc] sm:$0xf]
    %v59 = vld [vmem:[%s54 + $0x10] sm:$0xf]
    %v60 = vld [vmem:[%s54 + $0x14] sm:$0xf]
    %v61 = vld [vmem:[%s54 + $0x18] sm:$0xf]
    %v62 = vld [vmem:[%s54 + $0x1c] sm:$0xf]
    %v63 = vld [vmem:[%s54 + $0x20] sm:$0xf]
    %v64 = vld [vmem:[%s54 + $0x24] sm:$0xf]
    %v65 = vld [vmem:[%s54 + $0x28] sm:$0xf]
    %v66 = vld [vmem:[%s54 + $0x2c] sm:$0xf]
    %v67 = vld [vmem:[%s54 + $0x30] sm:$0xf]
    %v68 = vld [vmem:[%s54 + $0x34] sm:$0xf]
    %v69 = vld [vmem:[%s54 + $0x38] sm:$0xf]
    %v70 = vld [vmem:[%s54 + $0x3c] sm:$0xf]
    %v71 = vld [vmem:[%s54 + $0x40] sm:$0xf]
    %v72 = vld [vmem:[%s54 + $0x44] sm:$0xf]
    %v73 = vld [vmem:[%s54 + $0x48] sm:$0xf]
    %v74 = vld [vmem:[%s54 + $0x4c] sm:$0xf]
    %v75 = vld [vmem:[%s54 + $0x50] sm:$0xf]
    %v76 = vld [vmem:[%s54 + $0x54] sm:$0xf]
    %v77 = vld [vmem:[%s54 + $0x58] sm:$0xf]
    %v78 = vld [vmem:[%s54 + $0x5c] sm:$0xf]
    %v79 = vld [vmem:[%s54 + $0x60] sm:$0xf]
    %v80 = vld [vmem:[%s54 + $0x64] sm:$0xf]
    %v81 = vld [vmem:[%s54 + $0x68] sm:$0xf]
    %v82 = vld [vmem:[%s54 + $0x6c] sm:$0xf]
    %v83 = vld [vmem:[%s54 + $0x70] sm:$0xf]
    %v84 = vld [vmem:[%s54 + $0x74] sm:$0xf]
    %v85 = vld [vmem:[%s54 + $0x78] sm:$0xf]
    %v86 = vld [vmem:[%s54 + $0x7c] sm:$0xf]
    %v87 = vld [vmem:[%s54 + $0x80] sm:$0xf]
    %v88 = vld [vmem:[%s54 + $0x84] sm:$0xf]
    %v89 = vld [vmem:[%s54 + $0x88] sm:$0xf]
    %v90 = vld [vmem:[%s54 + $0x8c] sm:$0xf]
    %v91 = vld [vmem:[%s54 + $0x90] sm:$0xf]
    %v92 = vld [vmem:[%s54 + $0x94] sm:$0xf]
    %v93 = vld [vmem:[%s54 + $0x98] sm:$0xf]
    %v94 = vld [vmem:[%s54 + $0x9c] sm:$0xf]
    %v95 = vld [vmem:[%s54 + $0xa0] sm:$0xf]
    %v96 = vld [vmem:[%s54 + $0xa4] sm:$0xf]
    %v139 = vunpack.c.l.b16 %v55
    %v140 = vunpack.c.l.b16 %v56
    %v141 = vunpack.c.l.b16 %v57
    %v142 = vunpack.c.l.b16 %v58
    %v143 = vunpack.c.l.b16 %v59
    %v144 = vunpack.c.l.b16 %v60
    %v145 = vunpack.c.l.b16 %v61
    %v146 = vunpack.c.l.b16 %v62
    %v147 = vunpack.c.l.b16 %v63
    %v148 = vunpack.c.l.b16 %v64
    %v149 = vunpack.c.l.b16 %v65
    %v150 = vunpack.c.l.b16 %v66
    %v151 = vunpack.c.l.b16 %v67
    %v152 = vunpack.c.l.b16 %v68
    %v153 = vunpack.c.l.b16 %v69
    %v154 = vunpack.c.l.b16 %v70
    %v155 = vunpack.c.l.b16 %v71
    %v156 = vunpack.c.l.b16 %v72
    %v157 = vunpack.c.l.b16 %v73
    %v158 = vunpack.c.l.b16 %v74
    %v159 = vunpack.c.l.b16 %v75
    %v160 = vunpack.c.l.b16 %v76
    %v161 = vunpack.c.l.b16 %v77
    %v162 = vunpack.c.l.b16 %v78
    %v163 = vunpack.c.l.b16 %v79
    %v164 = vunpack.c.l.b16 %v80
    %v165 = vunpack.c.l.b16 %v81
    %v166 = vunpack.c.l.b16 %v82
    %v167 = vunpack.c.l.b16 %v83
    %v168 = vunpack.c.l.b16 %v84
    %v169 = vunpack.c.l.b16 %v85
    %v170 = vunpack.c.l.b16 %v86
    %v171 = vunpack.c.l.b16 %v87
    %v172 = vunpack.c.l.b16 %v88
    %v173 = vunpack.c.l.b16 %v89
    %v174 = vunpack.c.l.b16 %v90
    %v175 = vunpack.c.l.b16 %v91
    %v176 = vunpack.c.l.b16 %v92
    %v177 = vunpack.c.l.b16 %v93
    %v178 = vunpack.c.l.b16 %v94
    %v179 = vunpack.c.l.b16 %v95
    %v180 = vunpack.c.l.b16 %v96
    %v181 = vpack.c.b16 %v140, %v139
    %v182 = vpack.c.b16 %v142, %v141
    %v183 = vpack.c.b16 %v144, %v143
    %v184 = vpack.c.b16 %v146, %v145
    %v185 = vpack.c.b16 %v148, %v147
    %v186 = vpack.c.b16 %v150, %v149
    %v187 = vpack.c.b16 %v152, %v151
    %v188 = vpack.c.b16 %v154, %v153
    %v189 = vpack.c.b16 %v156, %v155
    %v190 = vpack.c.b16 %v158, %v157
    %v191 = vpack.c.b16 %v160, %v159
    %v192 = vpack.c.b16 %v162, %v161
    %v193 = vpack.c.b16 %v164, %v163
    %v194 = vpack.c.b16 %v166, %v165
    %v195 = vpack.c.b16 %v168, %v167
    %v196 = vpack.c.b16 %v170, %v169
    %v197 = vpack.c.b16 %v172, %v171
    %v198 = vpack.c.b16 %v174, %v173
    %v199 = vpack.c.b16 %v176, %v175
    %v200 = vpack.c.b16 %v178, %v177
    %v201 = vpack.c.b16 %v180, %v179
    %v210 = vunpack.c.l.b16 %v30
    %v211 = vunpack.c.h.b16 %v30
    %v212 = vunpack.c.l.b16 %v31
    %v213 = vunpack.c.h.b16 %v31
    %v214 = vunpack.c.l.b16 %v32
    %v215 = vunpack.c.h.b16 %v32
    %v216 = vunpack.c.l.b16 %v33
    %v217 = vunpack.c.h.b16 %v33
    %v218 = vunpack.c.l.b16 %v34
    %v219 = vunpack.c.h.b16 %v34
    %v220 = vunpack.c.l.b16 %v35
    %v221 = vunpack.c.h.b16 %v35
    %v222 = vunpack.c.l.b16 %v36
    %v223 = vunpack.c.h.b16 %v36
    %v224 = vunpack.c.l.b16 %v37
    %v225 = vunpack.c.h.b16 %v37
    %v226 = vpack.c.b16 %v212, %v210
    %v227 = vpack.c.b16 %v213, %v211
    %v228 = vpack.c.b16 %v216, %v214
    %v229 = vpack.c.b16 %v217, %v215
    %v230 = vpack.c.b16 %v220, %v218
    %v231 = vpack.c.b16 %v221, %v219
    %v232 = vpack.c.b16 %v224, %v222
    %v233 = vpack.c.b16 %v225, %v223
    %vm242 = vcmask 523264
    %v244 = vsel %vm242, %v181, 0
    %v247 = vsel %vm242, %v182, 0
    %v250 = vsel %vm242, %v183, 0
    %v253 = vsel %vm242, %v184, 0
    %v256 = vsel %vm242, %v185, 0
    %v259 = vsel %vm242, %v186, 0
    %v262 = vsel %vm242, %v187, 0
    %v265 = vsel %vm242, %v188, 0
    %v268 = vsel %vm242, %v189, 0
    %v271 = vsel %vm242, %v190, 0
    %v274 = vsel %vm242, %v191, 0
    %v277 = vsel %vm242, %v192, 0
    %v280 = vsel %vm242, %v193, 0
    %v283 = vsel %vm242, %v194, 0
    %v286 = vsel %vm242, %v195, 0
    %v289 = vsel %vm242, %v196, 0
    %v292 = vsel %vm242, %v197, 0
    %v295 = vsel %vm242, %v198, 0
    %v298 = vsel %vm242, %v199, 0
    %v301 = vsel %vm242, %v200, 0
    %v304 = vsel %vm242, %v201, 0
    %306 = vmatpush.bf16.msra.mxu0 0
    %307 = vmatpush.bf16.msra.mxu0 0
    %308 = vmatpush.bf16.msra.mxu0 0
    %309 = vmatpush.bf16.msra.mxu0 0
    %310 = vmatpush.bf16.msra.mxu0 %v232
    %311 = vmatpush.bf16.msra.mxu0 %v230
    %312 = vmatpush.bf16.msra.mxu0 %v228
    %313 = vmatpush.bf16.msra.mxu0 %v226
    %314 = vmatmul.bf16.gmra.mxu0 %v244
    %v315 = vpop.f32.mrf.mxu0
    %v316 = vadd.f32 0.0, %v315
    %v317 = vpop.f32.mrf.mxu0
    %v318 = vadd.f32 0.0, %v317
    %319 = vmatmul.bf16.gmra.mxu0 %v247
    %v320 = vpop.f32.mrf.mxu0
    %v321 = vadd.f32 0.0, %v320
    %v322 = vpop.f32.mrf.mxu0
    %v323 = vadd.f32 0.0, %v322
    %324 = vmatmul.bf16.gmra.mxu0 %v250
    %v325 = vpop.f32.mrf.mxu0
    %v326 = vadd.f32 0.0, %v325
    %v327 = vpop.f32.mrf.mxu0
    %v328 = vadd.f32 0.0, %v327
    %329 = vmatmul.bf16.gmra.mxu0 %v253
    %v330 = vpop.f32.mrf.mxu0
    %v331 = vadd.f32 0.0, %v330
    %v332 = vpop.f32.mrf.mxu0
    %v333 = vadd.f32 0.0, %v332
    %334 = vmatmul.bf16.gmra.mxu0 %v256
    %v335 = vpop.f32.mrf.mxu0
    %v336 = vadd.f32 0.0, %v335
    %v337 = vpop.f32.mrf.mxu0
    %v338 = vadd.f32 0.0, %v337
    %339 = vmatmul.bf16.gmra.mxu0 %v259
    %v340 = vpop.f32.mrf.mxu0
    %v341 = vadd.f32 0.0, %v340
    %v342 = vpop.f32.mrf.mxu0
    %v343 = vadd.f32 0.0, %v342
    %344 = vmatmul.bf16.gmra.mxu0 %v262
    %v345 = vpop.f32.mrf.mxu0
    %v346 = vadd.f32 0.0, %v345
    %v347 = vpop.f32.mrf.mxu0
    %v348 = vadd.f32 0.0, %v347
    %349 = vmatmul.bf16.gmra.mxu0 %v265
    %v350 = vpop.f32.mrf.mxu0
    %v351 = vadd.f32 0.0, %v350
    %v352 = vpop.f32.mrf.mxu0
    %v353 = vadd.f32 0.0, %v352
    %354 = vmatmul.bf16.gmra.mxu0 %v268
    %v355 = vpop.f32.mrf.mxu0
    %v356 = vadd.f32 0.0, %v355
    %v357 = vpop.f32.mrf.mxu0
    %v358 = vadd.f32 0.0, %v357
    %359 = vmatmul.bf16.gmra.mxu0 %v271
    %v360 = vpop.f32.mrf.mxu0
    %v361 = vadd.f32 0.0, %v360
    %v362 = vpop.f32.mrf.mxu0
    %v363 = vadd.f32 0.0, %v362
    %364 = vmatmul.bf16.gmra.mxu0 %v274
    %v365 = vpop.f32.mrf.mxu0
    %v366 = vadd.f32 0.0, %v365
    %v367 = vpop.f32.mrf.mxu0
    %v368 = vadd.f32 0.0, %v367
    %369 = vmatmul.bf16.gmra.mxu0 %v277
    %v370 = vpop.f32.mrf.mxu0
    %v371 = vadd.f32 0.0, %v370
    %v372 = vpop.f32.mrf.mxu0
    %v373 = vadd.f32 0.0, %v372
    %374 = vmatmul.bf16.gmra.mxu0 %v280
    %v375 = vpop.f32.mrf.mxu0
    %v376 = vadd.f32 0.0, %v375
    %v377 = vpop.f32.mrf.mxu0
    %v378 = vadd.f32 0.0, %v377
    %379 = vmatmul.bf16.gmra.mxu0 %v283
    %v380 = vpop.f32.mrf.mxu0
    %v381 = vadd.f32 0.0, %v380
    %v382 = vpop.f32.mrf.mxu0
    %v383 = vadd.f32 0.0, %v382
    %384 = vmatmul.bf16.gmra.mxu0 %v286
    %v385 = vpop.f32.mrf.mxu0
    %v386 = vadd.f32 0.0, %v385
    %v387 = vpop.f32.mrf.mxu0
    %v388 = vadd.f32 0.0, %v387
    %389 = vmatmul.bf16.gmra.mxu0 %v289
    %v390 = vpop.f32.mrf.mxu0
    %v391 = vadd.f32 0.0, %v390
    %v392 = vpop.f32.mrf.mxu0
    %v393 = vadd.f32 0.0, %v392
    %394 = vmatmul.bf16.gmra.mxu0 %v292
    %v395 = vpop.f32.mrf.mxu0
    %v396 = vadd.f32 0.0, %v395
    %v397 = vpop.f32.mrf.mxu0
    %v398 = vadd.f32 0.0, %v397
    %399 = vmatmul.bf16.gmra.mxu0 %v295
    %v400 = vpop.f32.mrf.mxu0
    %v401 = vadd.f32 0.0, %v400
    %v402 = vpop.f32.mrf.mxu0
    %v403 = vadd.f32 0.0, %v402
    %404 = vmatmul.bf16.gmra.mxu0 %v298
    %v405 = vpop.f32.mrf.mxu0
    %v406 = vadd.f32 0.0, %v405
    %v407 = vpop.f32.mrf.mxu0
    %v408 = vadd.f32 0.0, %v407
    %409 = vmatmul.bf16.gmra.mxu0 %v301
    %v410 = vpop.f32.mrf.mxu0
    %v411 = vadd.f32 0.0, %v410
    %v412 = vpop.f32.mrf.mxu0
    %v413 = vadd.f32 0.0, %v412
    %414 = vmatmul.bf16.gmra.mxu0 %v304
    %v415 = vpop.f32.mrf.mxu0
    %v416 = vadd.f32 0.0, %v415
    %v417 = vpop.f32.mrf.mxu0
    %v418 = vadd.f32 0.0, %v417
    %419 = vdwg.mxu0
    %420 = vmatpush.bf16.msra.mxu0 0
    %421 = vmatpush.bf16.msra.mxu0 0
    %422 = vmatpush.bf16.msra.mxu0 0
    %423 = vmatpush.bf16.msra.mxu0 0
    %424 = vmatpush.bf16.msra.mxu0 %v233
    %425 = vmatpush.bf16.msra.mxu0 %v231
    %426 = vmatpush.bf16.msra.mxu0 %v229
    %427 = vmatpush.bf16.msra.mxu0 %v227
    %428 = vmatmul.bf16.gmra.mxu0 %v244
    %v429 = vpop.f32.mrf.mxu0
    %v430 = vadd.f32 0.0, %v429
    %v431 = vpop.f32.mrf.mxu0
    %v432 = vadd.f32 0.0, %v431
    %433 = vmatmul.bf16.gmra.mxu0 %v247
    %v434 = vpop.f32.mrf.mxu0
    %v435 = vadd.f32 0.0, %v434
    %v436 = vpop.f32.mrf.mxu0
    %v437 = vadd.f32 0.0, %v436
    %438 = vmatmul.bf16.gmra.mxu0 %v250
    %v439 = vpop.f32.mrf.mxu0
    %v440 = vadd.f32 0.0, %v439
    %v441 = vpop.f32.mrf.mxu0
    %v442 = vadd.f32 0.0, %v441
    %443 = vmatmul.bf16.gmra.mxu0 %v253
    %v444 = vpop.f32.mrf.mxu0
    %v445 = vadd.f32 0.0, %v444
    %v446 = vpop.f32.mrf.mxu0
    %v447 = vadd.f32 0.0, %v446
    %448 = vmatmul.bf16.gmra.mxu0 %v256
    %v449 = vpop.f32.mrf.mxu0
    %v450 = vadd.f32 0.0, %v449
    %v451 = vpop.f32.mrf.mxu0
    %v452 = vadd.f32 0.0, %v451
    %453 = vmatmul.bf16.gmra.mxu0 %v259
    %v454 = vpop.f32.mrf.mxu0
    %v455 = vadd.f32 0.0, %v454
    %v456 = vpop.f32.mrf.mxu0
    %v457 = vadd.f32 0.0, %v456
    %458 = vmatmul.bf16.gmra.mxu0 %v262
    %v459 = vpop.f32.mrf.mxu0
    %v460 = vadd.f32 0.0, %v459
    %v461 = vpop.f32.mrf.mxu0
    %v462 = vadd.f32 0.0, %v461
    %463 = vmatmul.bf16.gmra.mxu0 %v265
    %v464 = vpop.f32.mrf.mxu0
    %v465 = vadd.f32 0.0, %v464
    %v466 = vpop.f32.mrf.mxu0
    %v467 = vadd.f32 0.0, %v466
    %468 = vmatmul.bf16.gmra.mxu0 %v268
    %v469 = vpop.f32.mrf.mxu0
    %v470 = vadd.f32 0.0, %v469
    %v471 = vpop.f32.mrf.mxu0
    %v472 = vadd.f32 0.0, %v471
    %473 = vmatmul.bf16.gmra.mxu0 %v271
    %v474 = vpop.f32.mrf.mxu0
    %v475 = vadd.f32 0.0, %v474
    %v476 = vpop.f32.mrf.mxu0
    %v477 = vadd.f32 0.0, %v476
    %478 = vmatmul.bf16.gmra.mxu0 %v274
    %v479 = vpop.f32.mrf.mxu0
    %v480 = vadd.f32 0.0, %v479
    %v481 = vpop.f32.mrf.mxu0
    %v482 = vadd.f32 0.0, %v481
    %483 = vmatmul.bf16.gmra.mxu0 %v277
    %v484 = vpop.f32.mrf.mxu0
    %v485 = vadd.f32 0.0, %v484
    %v486 = vpop.f32.mrf.mxu0
    %v487 = vadd.f32 0.0, %v486
    %488 = vmatmul.bf16.gmra.mxu0 %v280
    %v489 = vpop.f32.mrf.mxu0
    %v490 = vadd.f32 0.0, %v489
    %v491 = vpop.f32.mrf.mxu0
    %v492 = vadd.f32 0.0, %v491
    %493 = vmatmul.bf16.gmra.mxu0 %v283
    %v494 = vpop.f32.mrf.mxu0
    %v495 = vadd.f32 0.0, %v494
    %v496 = vpop.f32.mrf.mxu0
    %v497 = vadd.f32 0.0, %v496
    %498 = vmatmul.bf16.gmra.mxu0 %v286
    %v499 = vpop.f32.mrf.mxu0
    %v500 = vadd.f32 0.0, %v499
    %v501 = vpop.f32.mrf.mxu0
    %v502 = vadd.f32 0.0, %v501
    %503 = vmatmul.bf16.gmra.mxu0 %v289
    %v504 = vpop.f32.mrf.mxu0
    %v505 = vadd.f32 0.0, %v504
    %v506 = vpop.f32.mrf.mxu0
    %v507 = vadd.f32 0.0, %v506
    %508 = vmatmul.bf16.gmra.mxu0 %v292
    %v509 = vpop.f32.mrf.mxu0
    %v510 = vadd.f32 0.0, %v509
    %v511 = vpop.f32.mrf.mxu0
    %v512 = vadd.f32 0.0, %v511
    %513 = vmatmul.bf16.gmra.mxu0 %v295
    %v514 = vpop.f32.mrf.mxu0
    %v515 = vadd.f32 0.0, %v514
    %v516 = vpop.f32.mrf.mxu0
    %v517 = vadd.f32 0.0, %v516
    %518 = vmatmul.bf16.gmra.mxu0 %v298
    %v519 = vpop.f32.mrf.mxu0
    %v520 = vadd.f32 0.0, %v519
    %v521 = vpop.f32.mrf.mxu0
    %v522 = vadd.f32 0.0, %v521
    %523 = vmatmul.bf16.gmra.mxu0 %v301
    %v524 = vpop.f32.mrf.mxu0
    %v525 = vadd.f32 0.0, %v524
    %v526 = vpop.f32.mrf.mxu0
    %v527 = vadd.f32 0.0, %v526
    %528 = vmatmul.bf16.gmra.mxu0 %v304
    %v529 = vpop.f32.mrf.mxu0
    %v530 = vadd.f32 0.0, %v529
    %v531 = vpop.f32.mrf.mxu0
    %v532 = vadd.f32 0.0, %v531
    %533 = vdwg.mxu0
    %v534 = vmax.f32 %v316, 0.0
    %v535 = vmax.f32 %v430, 0.0
    %v536 = vmax.f32 %v318, 0.0
    %v537 = vmax.f32 %v432, 0.0
    %v538 = vmax.f32 %v321, 0.0
    %v539 = vmax.f32 %v435, 0.0
    %v540 = vmax.f32 %v323, 0.0
    %v541 = vmax.f32 %v437, 0.0
    %v542 = vmax.f32 %v326, 0.0
    %v543 = vmax.f32 %v440, 0.0
    %v544 = vmax.f32 %v328, 0.0
    %v545 = vmax.f32 %v442, 0.0
    %v546 = vmax.f32 %v331, 0.0
    %v547 = vmax.f32 %v445, 0.0
    %v548 = vmax.f32 %v333, 0.0
    %v549 = vmax.f32 %v447, 0.0
    %v550 = vmax.f32 %v336, 0.0
    %v551 = vmax.f32 %v450, 0.0
    %v552 = vmax.f32 %v338, 0.0
    %v553 = vmax.f32 %v452, 0.0
    %v554 = vmax.f32 %v341, 0.0
    %v555 = vmax.f32 %v455, 0.0
    %v556 = vmax.f32 %v343, 0.0
    %v557 = vmax.f32 %v457, 0.0
    %v558 = vmax.f32 %v346, 0.0
    %v559 = vmax.f32 %v460, 0.0
    %v560 = vmax.f32 %v348, 0.0
    %v561 = vmax.f32 %v462, 0.0
    %v562 = vmax.f32 %v351, 0.0
    %v563 = vmax.f32 %v465, 0.0
    %v564 = vmax.f32 %v353, 0.0
    %v565 = vmax.f32 %v467, 0.0
    %v566 = vmax.f32 %v356, 0.0
    %v567 = vmax.f32 %v470, 0.0
    %v568 = vmax.f32 %v358, 0.0
    %v569 = vmax.f32 %v472, 0.0
    %v570 = vmax.f32 %v361, 0.0
    %v571 = vmax.f32 %v475, 0.0
    %v572 = vmax.f32 %v363, 0.0
    %v573 = vmax.f32 %v477, 0.0
    %v574 = vmax.f32 %v366, 0.0
    %v575 = vmax.f32 %v480, 0.0
    %v576 = vmax.f32 %v368, 0.0
    %v577 = vmax.f32 %v482, 0.0
    %v578 = vmax.f32 %v371, 0.0
    %v579 = vmax.f32 %v485, 0.0
    %v580 = vmax.f32 %v373, 0.0
    %v581 = vmax.f32 %v487, 0.0
    %v582 = vmax.f32 %v376, 0.0
    %v583 = vmax.f32 %v490, 0.0
    %v584 = vmax.f32 %v378, 0.0
    %v585 = vmax.f32 %v492, 0.0
    %v586 = vmax.f32 %v381, 0.0
    %v587 = vmax.f32 %v495, 0.0
    %v588 = vmax.f32 %v383, 0.0
    %v589 = vmax.f32 %v497, 0.0
    %v590 = vmax.f32 %v386, 0.0
    %v591 = vmax.f32 %v500, 0.0
    %v592 = vmax.f32 %v388, 0.0
    %v593 = vmax.f32 %v502, 0.0
    %v594 = vmax.f32 %v391, 0.0
    %v595 = vmax.f32 %v505, 0.0
    %v596 = vmax.f32 %v393, 0.0
    %v597 = vmax.f32 %v507, 0.0
    %v598 = vmax.f32 %v396, 0.0
    %v599 = vmax.f32 %v510, 0.0
    %v600 = vmax.f32 %v398, 0.0
    %v601 = vmax.f32 %v512, 0.0
    %v602 = vmax.f32 %v401, 0.0
    %v603 = vmax.f32 %v515, 0.0
    %v604 = vmax.f32 %v403, 0.0
    %v605 = vmax.f32 %v517, 0.0
    %v606 = vmax.f32 %v406, 0.0
    %v607 = vmax.f32 %v520, 0.0
    %v608 = vmax.f32 %v408, 0.0
    %v609 = vmax.f32 %v522, 0.0
    %v610 = vmax.f32 %v411, 0.0
    %v611 = vmax.f32 %v525, 0.0
    %v612 = vmax.f32 %v413, 0.0
    %v613 = vmax.f32 %v527, 0.0
    %v614 = vmax.f32 %v416, 0.0
    %v615 = vmax.f32 %v530, 0.0
    %v616 = vmax.f32 %v418, 0.0
    %v617 = vmax.f32 %v532, 0.0
    %660 = vrot.lane.b32.xlu0 %v534, 64
    %v661 = vpop.permute.xlu0 %660
    %662 = vrot.lane.b32.xlu0 %v536, 64
    %v663 = vpop.permute.xlu0 %662
    %664 = vrot.lane.b32.xlu0 %v538, 64
    %v665 = vpop.permute.xlu0 %664
    %666 = vrot.lane.b32.xlu0 %v540, 64
    %v667 = vpop.permute.xlu0 %666
    %668 = vrot.lane.b32.xlu0 %v542, 64
    %v669 = vpop.permute.xlu0 %668
    %670 = vrot.lane.b32.xlu0 %v544, 64
    %v671 = vpop.permute.xlu0 %670
    %672 = vrot.lane.b32.xlu0 %v546, 64
    %v673 = vpop.permute.xlu0 %672
    %674 = vrot.lane.b32.xlu0 %v548, 64
    %v675 = vpop.permute.xlu0 %674
    %676 = vrot.lane.b32.xlu0 %v550, 64
    %v677 = vpop.permute.xlu0 %676
    %678 = vrot.lane.b32.xlu0 %v552, 64
    %v679 = vpop.permute.xlu0 %678
    %680 = vrot.lane.b32.xlu0 %v554, 64
    %v681 = vpop.permute.xlu0 %680
    %682 = vrot.lane.b32.xlu0 %v556, 64
    %v683 = vpop.permute.xlu0 %682
    %684 = vrot.lane.b32.xlu0 %v558, 64
    %v685 = vpop.permute.xlu0 %684
    %686 = vrot.lane.b32.xlu0 %v560, 64
    %v687 = vpop.permute.xlu0 %686
    %688 = vrot.lane.b32.xlu0 %v562, 64
    %v689 = vpop.permute.xlu0 %688
    %690 = vrot.lane.b32.xlu0 %v564, 64
    %v691 = vpop.permute.xlu0 %690
    %692 = vrot.lane.b32.xlu0 %v566, 64
    %v693 = vpop.permute.xlu0 %692
    %694 = vrot.lane.b32.xlu0 %v568, 64
    %v695 = vpop.permute.xlu0 %694
    %696 = vrot.lane.b32.xlu0 %v570, 64
    %v697 = vpop.permute.xlu0 %696
    %698 = vrot.lane.b32.xlu0 %v572, 64
    %v699 = vpop.permute.xlu0 %698
    %700 = vrot.lane.b32.xlu0 %v574, 64
    %v701 = vpop.permute.xlu0 %700
    %702 = vrot.lane.b32.xlu0 %v576, 64
    %v703 = vpop.permute.xlu0 %702
    %704 = vrot.lane.b32.xlu0 %v578, 64
    %v705 = vpop.permute.xlu0 %704
    %706 = vrot.lane.b32.xlu0 %v580, 64
    %v707 = vpop.permute.xlu0 %706
    %708 = vrot.lane.b32.xlu0 %v582, 64
    %v709 = vpop.permute.xlu0 %708
    %710 = vrot.lane.b32.xlu0 %v584, 64
    %v711 = vpop.permute.xlu0 %710
    %712 = vrot.lane.b32.xlu0 %v586, 64
    %v713 = vpop.permute.xlu0 %712
    %714 = vrot.lane.b32.xlu0 %v588, 64
    %v715 = vpop.permute.xlu0 %714
    %716 = vrot.lane.b32.xlu0 %v590, 64
    %v717 = vpop.permute.xlu0 %716
    %718 = vrot.lane.b32.xlu0 %v592, 64
    %v719 = vpop.permute.xlu0 %718
    %720 = vrot.lane.b32.xlu0 %v594, 64
    %v721 = vpop.permute.xlu0 %720
    %722 = vrot.lane.b32.xlu0 %v596, 64
    %v723 = vpop.permute.xlu0 %722
    %724 = vrot.lane.b32.xlu0 %v598, 64
    %v725 = vpop.permute.xlu0 %724
    %726 = vrot.lane.b32.xlu0 %v600, 64
    %v727 = vpop.permute.xlu0 %726
    %728 = vrot.lane.b32.xlu0 %v602, 64
    %v729 = vpop.permute.xlu0 %728
    %730 = vrot.lane.b32.xlu0 %v604, 64
    %v731 = vpop.permute.xlu0 %730
    %732 = vrot.lane.b32.xlu0 %v606, 64
    %v733 = vpop.permute.xlu0 %732
    %734 = vrot.lane.b32.xlu0 %v608, 64
    %v735 = vpop.permute.xlu0 %734
    %736 = vrot.lane.b32.xlu0 %v610, 64
    %v737 = vpop.permute.xlu0 %736
    %738 = vrot.lane.b32.xlu0 %v612, 64
    %v739 = vpop.permute.xlu0 %738
    %740 = vrot.lane.b32.xlu0 %v614, 64
    %v741 = vpop.permute.xlu0 %740
    %742 = vrot.lane.b32.xlu0 %v616, 64
    %v743 = vpop.permute.xlu0 %742
    %v786 = vmax.f32 %v534, %v661
    %v787 = vmax.f32 %v536, %v663
    %v788 = vmax.f32 %v538, %v665
    %v789 = vmax.f32 %v540, %v667
    %v790 = vmax.f32 %v542, %v669
    %v791 = vmax.f32 %v544, %v671
    %v792 = vmax.f32 %v546, %v673
    %v793 = vmax.f32 %v548, %v675
    %v794 = vmax.f32 %v550, %v677
    %v795 = vmax.f32 %v552, %v679
    %v796 = vmax.f32 %v554, %v681
    %v797 = vmax.f32 %v556, %v683
    %v798 = vmax.f32 %v558, %v685
    %v799 = vmax.f32 %v560, %v687
    %v800 = vmax.f32 %v562, %v689
    %v801 = vmax.f32 %v564, %v691
    %v802 = vmax.f32 %v566, %v693
    %v803 = vmax.f32 %v568, %v695
    %v804 = vmax.f32 %v570, %v697
    %v805 = vmax.f32 %v572, %v699
    %v806 = vmax.f32 %v574, %v701
    %v807 = vmax.f32 %v576, %v703
    %v808 = vmax.f32 %v578, %v705
    %v809 = vmax.f32 %v580, %v707
    %v810 = vmax.f32 %v582, %v709
    %v811 = vmax.f32 %v584, %v711
    %v812 = vmax.f32 %v586, %v713
    %v813 = vmax.f32 %v588, %v715
    %v814 = vmax.f32 %v590, %v717
    %v815 = vmax.f32 %v592, %v719
    %v816 = vmax.f32 %v594, %v721
    %v817 = vmax.f32 %v596, %v723
    %v818 = vmax.f32 %v598, %v725
    %v819 = vmax.f32 %v600, %v727
    %v820 = vmax.f32 %v602, %v729
    %v821 = vmax.f32 %v604, %v731
    %v822 = vmax.f32 %v606, %v733
    %v823 = vmax.f32 %v608, %v735
    %v824 = vmax.f32 %v610, %v737
    %v825 = vmax.f32 %v612, %v739
    %v826 = vmax.f32 %v614, %v741
    %v827 = vmax.f32 %v616, %v743
    %870 = vrot.lane.b32.xlu0 %v535, 64
    %v871 = vpop.permute.xlu0 %870
    %872 = vrot.lane.b32.xlu0 %v537, 64
    %v873 = vpop.permute.xlu0 %872
    %874 = vrot.lane.b32.xlu0 %v539, 64
    %v875 = vpop.permute.xlu0 %874
    %876 = vrot.lane.b32.xlu0 %v541, 64
    %v877 = vpop.permute.xlu0 %876
    %878 = vrot.lane.b32.xlu0 %v543, 64
    %v879 = vpop.permute.xlu0 %878
    %880 = vrot.lane.b32.xlu0 %v545, 64
    %v881 = vpop.permute.xlu0 %880
    %882 = vrot.lane.b32.xlu0 %v547, 64
    %v883 = vpop.permute.xlu0 %882
    %884 = vrot.lane.b32.xlu0 %v549, 64
    %v885 = vpop.permute.xlu0 %884
    %886 = vrot.lane.b32.xlu0 %v551, 64
    %v887 = vpop.permute.xlu0 %886
    %888 = vrot.lane.b32.xlu0 %v553, 64
    %v889 = vpop.permute.xlu0 %888
    %890 = vrot.lane.b32.xlu0 %v555, 64
    %v891 = vpop.permute.xlu0 %890
    %892 = vrot.lane.b32.xlu0 %v557, 64
    %v893 = vpop.permute.xlu0 %892
    %894 = vrot.lane.b32.xlu0 %v559, 64
    %v895 = vpop.permute.xlu0 %894
    %896 = vrot.lane.b32.xlu0 %v561, 64
    %v897 = vpop.permute.xlu0 %896
    %898 = vrot.lane.b32.xlu0 %v563, 64
    %v899 = vpop.permute.xlu0 %898
    %900 = vrot.lane.b32.xlu0 %v565, 64
    %v901 = vpop.permute.xlu0 %900
    %902 = vrot.lane.b32.xlu0 %v567, 64
    %v903 = vpop.permute.xlu0 %902
    %904 = vrot.lane.b32.xlu0 %v569, 64
    %v905 = vpop.permute.xlu0 %904
    %906 = vrot.lane.b32.xlu0 %v571, 64
    %v907 = vpop.permute.xlu0 %906
    %908 = vrot.lane.b32.xlu0 %v573, 64
    %v909 = vpop.permute.xlu0 %908
    %910 = vrot.lane.b32.xlu0 %v575, 64
    %v911 = vpop.permute.xlu0 %910
    %912 = vrot.lane.b32.xlu0 %v577, 64
    %v913 = vpop.permute.xlu0 %912
    %914 = vrot.lane.b32.xlu0 %v579, 64
    %v915 = vpop.permute.xlu0 %914
    %916 = vrot.lane.b32.xlu0 %v581, 64
    %v917 = vpop.permute.xlu0 %916
    %918 = vrot.lane.b32.xlu0 %v583, 64
    %v919 = vpop.permute.xlu0 %918
    %920 = vrot.lane.b32.xlu0 %v585, 64
    %v921 = vpop.permute.xlu0 %920
    %922 = vrot.lane.b32.xlu0 %v587, 64
    %v923 = vpop.permute.xlu0 %922
    %924 = vrot.lane.b32.xlu0 %v589, 64
    %v925 = vpop.permute.xlu0 %924
    %926 = vrot.lane.b32.xlu0 %v591, 64
    %v927 = vpop.permute.xlu0 %926
    %928 = vrot.lane.b32.xlu0 %v593, 64
    %v929 = vpop.permute.xlu0 %928
    %930 = vrot.lane.b32.xlu0 %v595, 64
    %v931 = vpop.permute.xlu0 %930
    %932 = vrot.lane.b32.xlu0 %v597, 64
    %v933 = vpop.permute.xlu0 %932
    %934 = vrot.lane.b32.xlu0 %v599, 64
    %v935 = vpop.permute.xlu0 %934
    %936 = vrot.lane.b32.xlu0 %v601, 64
    %v937 = vpop.permute.xlu0 %936
    %938 = vrot.lane.b32.xlu0 %v603, 64
    %v939 = vpop.permute.xlu0 %938
    %940 = vrot.lane.b32.xlu0 %v605, 64
    %v941 = vpop.permute.xlu0 %940
    %942 = vrot.lane.b32.xlu0 %v607, 64
    %v943 = vpop.permute.xlu0 %942
    %944 = vrot.lane.b32.xlu0 %v609, 64
    %v945 = vpop.permute.xlu0 %944
    %946 = vrot.lane.b32.xlu0 %v611, 64
    %v947 = vpop.permute.xlu0 %946
    %948 = vrot.lane.b32.xlu0 %v613, 64
    %v949 = vpop.permute.xlu0 %948
    %950 = vrot.lane.b32.xlu0 %v615, 64
    %v951 = vpop.permute.xlu0 %950
    %952 = vrot.lane.b32.xlu0 %v617, 64
    %v953 = vpop.permute.xlu0 %952
    %v996 = vmax.f32 %v535, %v871
    %v997 = vmax.f32 %v537, %v873
    %v998 = vmax.f32 %v539, %v875
    %v999 = vmax.f32 %v541, %v877
    %v1000 = vmax.f32 %v543, %v879
    %v1001 = vmax.f32 %v545, %v881
    %v1002 = vmax.f32 %v547, %v883
    %v1003 = vmax.f32 %v549, %v885
    %v1004 = vmax.f32 %v551, %v887
    %v1005 = vmax.f32 %v553, %v889
    %v1006 = vmax.f32 %v555, %v891
    %v1007 = vmax.f32 %v557, %v893
    %v1008 = vmax.f32 %v559, %v895
    %v1009 = vmax.f32 %v561, %v897
    %v1010 = vmax.f32 %v563, %v899
    %v1011 = vmax.f32 %v565, %v901
    %v1012 = vmax.f32 %v567, %v903
    %v1013 = vmax.f32 %v569, %v905
    %v1014 = vmax.f32 %v571, %v907
    %v1015 = vmax.f32 %v573, %v909
    %v1016 = vmax.f32 %v575, %v911
    %v1017 = vmax.f32 %v577, %v913
    %v1018 = vmax.f32 %v579, %v915
    %v1019 = vmax.f32 %v581, %v917
    %v1020 = vmax.f32 %v583, %v919
    %v1021 = vmax.f32 %v585, %v921
    %v1022 = vmax.f32 %v587, %v923
    %v1023 = vmax.f32 %v589, %v925
    %v1024 = vmax.f32 %v591, %v927
    %v1025 = vmax.f32 %v593, %v929
    %v1026 = vmax.f32 %v595, %v931
    %v1027 = vmax.f32 %v597, %v933
    %v1028 = vmax.f32 %v599, %v935
    %v1029 = vmax.f32 %v601, %v937
    %v1030 = vmax.f32 %v603, %v939
    %v1031 = vmax.f32 %v605, %v941
    %v1032 = vmax.f32 %v607, %v943
    %v1033 = vmax.f32 %v609, %v945
    %v1034 = vmax.f32 %v611, %v947
    %v1035 = vmax.f32 %v613, %v949
    %v1036 = vmax.f32 %v615, %v951
    %v1037 = vmax.f32 %v617, %v953
    %v1038 = vmax.f32 %v786, %v996
    %v1039 = vmax.f32 %v787, %v997
    %v1040 = vmax.f32 %v788, %v998
    %v1041 = vmax.f32 %v789, %v999
    %v1042 = vmax.f32 %v790, %v1000
    %v1043 = vmax.f32 %v791, %v1001
    %v1044 = vmax.f32 %v792, %v1002
    %v1045 = vmax.f32 %v793, %v1003
    %v1046 = vmax.f32 %v794, %v1004
    %v1047 = vmax.f32 %v795, %v1005
    %v1048 = vmax.f32 %v796, %v1006
    %v1049 = vmax.f32 %v797, %v1007
    %v1050 = vmax.f32 %v798, %v1008
    %v1051 = vmax.f32 %v799, %v1009
    %v1052 = vmax.f32 %v800, %v1010
    %v1053 = vmax.f32 %v801, %v1011
    %v1054 = vmax.f32 %v802, %v1012
    %v1055 = vmax.f32 %v803, %v1013
    %v1056 = vmax.f32 %v804, %v1014
    %v1057 = vmax.f32 %v805, %v1015
    %v1058 = vmax.f32 %v806, %v1016
    %v1059 = vmax.f32 %v807, %v1017
    %v1060 = vmax.f32 %v808, %v1018
    %v1061 = vmax.f32 %v809, %v1019
    %v1062 = vmax.f32 %v810, %v1020
    %v1063 = vmax.f32 %v811, %v1021
    %v1064 = vmax.f32 %v812, %v1022
    %v1065 = vmax.f32 %v813, %v1023
    %v1066 = vmax.f32 %v814, %v1024
    %v1067 = vmax.f32 %v815, %v1025
    %v1068 = vmax.f32 %v816, %v1026
    %v1069 = vmax.f32 %v817, %v1027
    %v1070 = vmax.f32 %v818, %v1028
    %v1071 = vmax.f32 %v819, %v1029
    %v1072 = vmax.f32 %v820, %v1030
    %v1073 = vmax.f32 %v821, %v1031
    %v1074 = vmax.f32 %v822, %v1032
    %v1075 = vmax.f32 %v823, %v1033
    %v1076 = vmax.f32 %v824, %v1034
    %v1077 = vmax.f32 %v825, %v1035
    %v1078 = vmax.f32 %v826, %v1036
    %v1079 = vmax.f32 %v827, %v1037
    %v1080 = vpack.c.bf16 %v1038, %v1038
    %v1081 = vpack.c.bf16 %v1039, %v1039
    %v1082 = vpack.c.bf16 %v1040, %v1040
    %v1083 = vpack.c.bf16 %v1041, %v1041
    %v1084 = vpack.c.bf16 %v1042, %v1042
    %v1085 = vpack.c.bf16 %v1043, %v1043
    %v1086 = vpack.c.bf16 %v1044, %v1044
    %v1087 = vpack.c.bf16 %v1045, %v1045
    %v1088 = vpack.c.bf16 %v1046, %v1046
    %v1089 = vpack.c.bf16 %v1047, %v1047
    %v1090 = vpack.c.bf16 %v1048, %v1048
    %v1091 = vpack.c.bf16 %v1049, %v1049
    %v1092 = vpack.c.bf16 %v1050, %v1050
    %v1093 = vpack.c.bf16 %v1051, %v1051
    %v1094 = vpack.c.bf16 %v1052, %v1052
    %v1095 = vpack.c.bf16 %v1053, %v1053
    %v1096 = vpack.c.bf16 %v1054, %v1054
    %v1097 = vpack.c.bf16 %v1055, %v1055
    %v1098 = vpack.c.bf16 %v1056, %v1056
    %v1099 = vpack.c.bf16 %v1057, %v1057
    %v1100 = vpack.c.bf16 %v1058, %v1058
    %v1101 = vpack.c.bf16 %v1059, %v1059
    %v1102 = vpack.c.bf16 %v1060, %v1060
    %v1103 = vpack.c.bf16 %v1061, %v1061
    %v1104 = vpack.c.bf16 %v1062, %v1062
    %v1105 = vpack.c.bf16 %v1063, %v1063
    %v1106 = vpack.c.bf16 %v1064, %v1064
    %v1107 = vpack.c.bf16 %v1065, %v1065
    %v1108 = vpack.c.bf16 %v1066, %v1066
    %v1109 = vpack.c.bf16 %v1067, %v1067
    %v1110 = vpack.c.bf16 %v1068, %v1068
    %v1111 = vpack.c.bf16 %v1069, %v1069
    %v1112 = vpack.c.bf16 %v1070, %v1070
    %v1113 = vpack.c.bf16 %v1071, %v1071
    %v1114 = vpack.c.bf16 %v1072, %v1072
    %v1115 = vpack.c.bf16 %v1073, %v1073
    %v1116 = vpack.c.bf16 %v1074, %v1074
    %v1117 = vpack.c.bf16 %v1075, %v1075
    %v1118 = vpack.c.bf16 %v1076, %v1076
    %v1119 = vpack.c.bf16 %v1077, %v1077
    %v1120 = vpack.c.bf16 %v1078, %v1078
    %v1121 = vpack.c.bf16 %v1079, %v1079
    %1122 = vst.msk [vmem:[#allocation2] sm:$0xf] %vm21, %v1080
    %1123 = vst.msk [vmem:[#allocation2 + $0x4] sm:$0xf] %vm21, %v1081
    %1124 = vst.msk [vmem:[#allocation2 + $0x8] sm:$0xf] %vm21, %v1082
    %1125 = vst.msk [vmem:[#allocation2 + $0xc] sm:$0xf] %vm21, %v1083
    %1126 = vst.msk [vmem:[#allocation2 + $0x10] sm:$0xf] %vm21, %v1084
    %1127 = vst.msk [vmem:[#allocation2 + $0x14] sm:$0xf] %vm21, %v1085
    %1128 = vst.msk [vmem:[#allocation2 + $0x18] sm:$0xf] %vm21, %v1086
    %1129 = vst.msk [vmem:[#allocation2 + $0x1c] sm:$0xf] %vm21, %v1087
    %1130 = vst.msk [vmem:[#allocation2 + $0x20] sm:$0xf] %vm21, %v1088
    %1131 = vst.msk [vmem:[#allocation2 + $0x24] sm:$0xf] %vm21, %v1089
    %1132 = vst.msk [vmem:[#allocation2 + $0x28] sm:$0xf] %vm21, %v1090
    %1133 = vst.msk [vmem:[#allocation2 + $0x2c] sm:$0xf] %vm21, %v1091
    %1134 = vst.msk [vmem:[#allocation2 + $0x30] sm:$0xf] %vm21, %v1092
    %1135 = vst.msk [vmem:[#allocation2 + $0x34] sm:$0xf] %vm21, %v1093
    %1136 = vst.msk [vmem:[#allocation2 + $0x38] sm:$0xf] %vm21, %v1094
    %1137 = vst.msk [vmem:[#allocation2 + $0x3c] sm:$0xf] %vm21, %v1095
    %1138 = vst.msk [vmem:[#allocation2 + $0x40] sm:$0xf] %vm21, %v1096
    %1139 = vst.msk [vmem:[#allocation2 + $0x44] sm:$0xf] %vm21, %v1097
    %1140 = vst.msk [vmem:[#allocation2 + $0x48] sm:$0xf] %vm21, %v1098
    %1141 = vst.msk [vmem:[#allocation2 + $0x4c] sm:$0xf] %vm21, %v1099
    %1142 = vst.msk [vmem:[#allocation2 + $0x50] sm:$0xf] %vm21, %v1100
    %1143 = vst.msk [vmem:[#allocation2 + $0x54] sm:$0xf] %vm21, %v1101
    %1144 = vst.msk [vmem:[#allocation2 + $0x58] sm:$0xf] %vm21, %v1102
    %1145 = vst.msk [vmem:[#allocation2 + $0x5c] sm:$0xf] %vm21, %v1103
    %1146 = vst.msk [vmem:[#allocation2 + $0x60] sm:$0xf] %vm21, %v1104
    %1147 = vst.msk [vmem:[#allocation2 + $0x64] sm:$0xf] %vm21, %v1105
    %1148 = vst.msk [vmem:[#allocation2 + $0x68] sm:$0xf] %vm21, %v1106
    %1149 = vst.msk [vmem:[#allocation2 + $0x6c] sm:$0xf] %vm21, %v1107
    %1150 = vst.msk [vmem:[#allocation2 + $0x70] sm:$0xf] %vm21, %v1108
    %1151 = vst.msk [vmem:[#allocation2 + $0x74] sm:$0xf] %vm21, %v1109
    %1152 = vst.msk [vmem:[#allocation2 + $0x78] sm:$0xf] %vm21, %v1110
    %1153 = vst.msk [vmem:[#allocation2 + $0x7c] sm:$0xf] %vm21, %v1111
    %1154 = vst.msk [vmem:[#allocation2 + $0x80] sm:$0xf] %vm21, %v1112
    %1155 = vst.msk [vmem:[#allocation2 + $0x84] sm:$0xf] %vm21, %v1113
    %1156 = vst.msk [vmem:[#allocation2 + $0x88] sm:$0xf] %vm21, %v1114
    %1157 = vst.msk [vmem:[#allocation2 + $0x8c] sm:$0xf] %vm21, %v1115
    %1158 = vst.msk [vmem:[#allocation2 + $0x90] sm:$0xf] %vm21, %v1116
    %1159 = vst.msk [vmem:[#allocation2 + $0x94] sm:$0xf] %vm21, %v1117
    %1160 = vst.msk [vmem:[#allocation2 + $0x98] sm:$0xf] %vm21, %v1118
    %1161 = vst.msk [vmem:[#allocation2 + $0x9c] sm:$0xf] %vm21, %v1119
    %1162 = vst.msk [vmem:[#allocation2 + $0xa0] sm:$0xf] %vm21, %v1120
    %1163 = vst.msk [vmem:[#allocation2 + $0xa4] sm:$0xf] %vm21, %v1121
    %v1164 = vld [vmem:[#allocation2] sm:$0xf]
    %v1165 = vld [vmem:[#allocation2 + $0x4] sm:$0xf]
    %v1166 = vld [vmem:[#allocation2 + $0x8] sm:$0xf]
    %v1167 = vld [vmem:[#allocation2 + $0xc] sm:$0xf]
    %v1168 = vld [vmem:[#allocation2 + $0x10] sm:$0xf]
    %v1169 = vld [vmem:[#allocation2 + $0x14] sm:$0xf]
    %v1170 = vld [vmem:[#allocation2 + $0x18] sm:$0xf]
    %v1171 = vld [vmem:[#allocation2 + $0x1c] sm:$0xf]
    %v1172 = vld [vmem:[#allocation2 + $0x20] sm:$0xf]
    %v1173 = vld [vmem:[#allocation2 + $0x24] sm:$0xf]
    %v1174 = vld [vmem:[#allocation2 + $0x28] sm:$0xf]
    %v1175 = vld [vmem:[#allocation2 + $0x2c] sm:$0xf]
    %v1176 = vld [vmem:[#allocation2 + $0x30] sm:$0xf]
    %v1177 = vld [vmem:[#allocation2 + $0x34] sm:$0xf]
    %v1178 = vld [vmem:[#allocation2 + $0x38] sm:$0xf]
    %v1179 = vld [vmem:[#allocation2 + $0x3c] sm:$0xf]
    %v1180 = vld [vmem:[#allocation2 + $0x40] sm:$0xf]
    %v1181 = vld [vmem:[#allocation2 + $0x44] sm:$0xf]
    %v1182 = vld [vmem:[#allocation2 + $0x48] sm:$0xf]
    %v1183 = vld [vmem:[#allocation2 + $0x4c] sm:$0xf]
    %v1184 = vld [vmem:[#allocation2 + $0x50] sm:$0xf]
    %v1185 = vld [vmem:[#allocation2 + $0x54] sm:$0xf]
    %v1186 = vld [vmem:[#allocation2 + $0x58] sm:$0xf]
    %v1187 = vld [vmem:[#allocation2 + $0x5c] sm:$0xf]
    %v1188 = vld [vmem:[#allocation2 + $0x60] sm:$0xf]
    %v1189 = vld [vmem:[#allocation2 + $0x64] sm:$0xf]
    %v1190 = vld [vmem:[#allocation2 + $0x68] sm:$0xf]
    %v1191 = vld [vmem:[#allocation2 + $0x6c] sm:$0xf]
    %v1192 = vld [vmem:[#allocation2 + $0x70] sm:$0xf]
    %v1193 = vld [vmem:[#allocation2 + $0x74] sm:$0xf]
    %v1194 = vld [vmem:[#allocation2 + $0x78] sm:$0xf]
    %v1195 = vld [vmem:[#allocation2 + $0x7c] sm:$0xf]
    %v1196 = vld [vmem:[#allocation2 + $0x80] sm:$0xf]
    %v1197 = vld [vmem:[#allocation2 + $0x84] sm:$0xf]
    %v1198 = vld [vmem:[#allocation2 + $0x88] sm:$0xf]
    %v1199 = vld [vmem:[#allocation2 + $0x8c] sm:$0xf]
    %v1200 = vld [vmem:[#allocation2 + $0x90] sm:$0xf]
    %v1201 = vld [vmem:[#allocation2 + $0x94] sm:$0xf]
    %v1202 = vld [vmem:[#allocation2 + $0x98] sm:$0xf]
    %v1203 = vld [vmem:[#allocation2 + $0x9c] sm:$0xf]
    %v1204 = vld [vmem:[#allocation2 + $0xa0] sm:$0x3]
    %v1205 = vld [vmem:[#allocation2 + $0xa0] sm:$0x7]
    %v1206 = vld [vmem:[#allocation2] sm:$0xe]
    %v1207 = vld [vmem:[#allocation2 + $0xa0] sm:$0xf]
    %v1208 = vld [vmem:[#allocation2] sm:$0xc]
    %v1250 = vunpack.c.l.b16 %v1164
    %v1251 = vunpack.c.l.b16 %v1165
    %v1252 = vunpack.c.l.b16 %v1166
    %v1253 = vunpack.c.l.b16 %v1167
    %v1254 = vunpack.c.l.b16 %v1168
    %v1255 = vunpack.c.l.b16 %v1169
    %v1256 = vunpack.c.l.b16 %v1170
    %v1257 = vunpack.c.l.b16 %v1171
    %v1258 = vunpack.c.l.b16 %v1172
    %v1259 = vunpack.c.l.b16 %v1173
    %v1260 = vunpack.c.l.b16 %v1174
    %v1261 = vunpack.c.l.b16 %v1175
    %v1262 = vunpack.c.l.b16 %v1176
    %v1263 = vunpack.c.l.b16 %v1177
    %v1264 = vunpack.c.l.b16 %v1178
    %v1265 = vunpack.c.l.b16 %v1179
    %v1266 = vunpack.c.l.b16 %v1180
    %v1267 = vunpack.c.l.b16 %v1181
    %v1268 = vunpack.c.l.b16 %v1182
    %v1269 = vunpack.c.l.b16 %v1183
    %v1270 = vunpack.c.l.b16 %v1184
    %v1271 = vunpack.c.l.b16 %v1185
    %v1272 = vunpack.c.l.b16 %v1186
    %v1273 = vunpack.c.l.b16 %v1187
    %v1274 = vunpack.c.l.b16 %v1188
    %v1275 = vunpack.c.l.b16 %v1189
    %v1276 = vunpack.c.l.b16 %v1190
    %v1277 = vunpack.c.l.b16 %v1191
    %v1278 = vunpack.c.l.b16 %v1192
    %v1279 = vunpack.c.l.b16 %v1193
    %v1280 = vunpack.c.l.b16 %v1194
    %v1281 = vunpack.c.l.b16 %v1195
    %v1282 = vunpack.c.l.b16 %v1196
    %v1283 = vunpack.c.l.b16 %v1197
    %v1284 = vunpack.c.l.b16 %v1198
    %v1285 = vunpack.c.l.b16 %v1199
    %v1286 = vunpack.c.l.b16 %v1200
    %v1287 = vunpack.c.l.b16 %v1201
    %v1288 = vunpack.c.l.b16 %v1202
    %v1289 = vunpack.c.l.b16 %v1203
    %v1290 = vunpack.c.l.b16 %v1204
    %v1291 = vpack.c.b16 %v1251, %v1250
    %v1292 = vpack.c.b16 %v1253, %v1252
    %v1293 = vpack.c.b16 %v1255, %v1254
    %v1294 = vpack.c.b16 %v1257, %v1256
    %v1295 = vpack.c.b16 %v1259, %v1258
    %v1296 = vpack.c.b16 %v1261, %v1260
    %v1297 = vpack.c.b16 %v1263, %v1262
    %v1298 = vpack.c.b16 %v1265, %v1264
    %v1299 = vpack.c.b16 %v1267, %v1266
    %v1300 = vpack.c.b16 %v1269, %v1268
    %v1301 = vpack.c.b16 %v1271, %v1270
    %v1302 = vpack.c.b16 %v1273, %v1272
    %v1303 = vpack.c.b16 %v1275, %v1274
    %v1304 = vpack.c.b16 %v1277, %v1276
    %v1305 = vpack.c.b16 %v1279, %v1278
    %v1306 = vpack.c.b16 %v1281, %v1280
    %v1307 = vpack.c.b16 %v1283, %v1282
    %v1308 = vpack.c.b16 %v1285, %v1284
    %v1309 = vpack.c.b16 %v1287, %v1286
    %v1310 = vpack.c.b16 %v1289, %v1288
    %v1311 = vpack.c.b16 %v1290, %v1290
    %v1313 = vunpack.c.l.b16 %v1205
    %v1314 = vpack.c.b16 %v1313, %v1313
    %vm1315 = vsmask.f32 7424
    %v1317 = vshrl.u32 %v1291, 16
    %v1319 = vshll.u32 %v1291, 16
    %v1321 = vrot.slane %v1319, 1
    %v1322 = vor.u32 %v1317, %v1321
    %v1324 = vshll.u32 %v1292, 16
    %v1326 = vrot.slane %v1324, 1
    %v1327 = vsel %vm1315, %v1322, %v1326
    %v1328 = vshrl.u32 %v1292, 16
    %v1330 = vor.u32 %v1328, %v1326
    %v1332 = vshll.u32 %v1293, 16
    %v1334 = vrot.slane %v1332, 1
    %v1335 = vsel %vm1315, %v1330, %v1334
    %v1336 = vshrl.u32 %v1293, 16
    %v1338 = vor.u32 %v1336, %v1334
    %v1340 = vshll.u32 %v1294, 16
    %v1342 = vrot.slane %v1340, 1
    %v1343 = vsel %vm1315, %v1338, %v1342
    %v1344 = vshrl.u32 %v1294, 16
    %v1346 = vor.u32 %v1344, %v1342
    %v1348 = vshll.u32 %v1295, 16
    %v1350 = vrot.slane %v1348, 1
    %v1351 = vsel %vm1315, %v1346, %v1350
    %v1352 = vshrl.u32 %v1295, 16
    %v1354 = vor.u32 %v1352, %v1350
    %v1356 = vshll.u32 %v1296, 16
    %v1358 = vrot.slane %v1356, 1
    %v1359 = vsel %vm1315, %v1354, %v1358
    %v1360 = vshrl.u32 %v1296, 16
    %v1362 = vor.u32 %v1360, %v1358
    %v1364 = vshll.u32 %v1297, 16
    %v1366 = vrot.slane %v1364, 1
    %v1367 = vsel %vm1315, %v1362, %v1366
    %v1368 = vshrl.u32 %v1297, 16
    %v1370 = vor.u32 %v1368, %v1366
    %v1372 = vshll.u32 %v1298, 16
    %v1374 = vrot.slane %v1372, 1
    %v1375 = vsel %vm1315, %v1370, %v1374
    %v1376 = vshrl.u32 %v1298, 16
    %v1378 = vor.u32 %v1376, %v1374
    %v1380 = vshll.u32 %v1299, 16
    %v1382 = vrot.slane %v1380, 1
    %v1383 = vsel %vm1315, %v1378, %v1382
    %v1384 = vshrl.u32 %v1299, 16
    %v1386 = vor.u32 %v1384, %v1382
    %v1388 = vshll.u32 %v1300, 16
    %v1390 = vrot.slane %v1388, 1
    %v1391 = vsel %vm1315, %v1386, %v1390
    %v1392 = vshrl.u32 %v1300, 16
    %v1394 = vor.u32 %v1392, %v1390
    %v1396 = vshll.u32 %v1301, 16
    %v1398 = vrot.slane %v1396, 1
    %v1399 = vsel %vm1315, %v1394, %v1398
    %v1400 = vshrl.u32 %v1301, 16
    %v1402 = vor.u32 %v1400, %v1398
    %v1404 = vshll.u32 %v1302, 16
    %v1406 = vrot.slane %v1404, 1
    %v1407 = vsel %vm1315, %v1402, %v1406
    %v1408 = vshrl.u32 %v1302, 16
    %v1410 = vor.u32 %v1408, %v1406
    %v1412 = vshll.u32 %v1303, 16
    %v1414 = vrot.slane %v1412, 1
    %v1415 = vsel %vm1315, %v1410, %v1414
    %v1416 = vshrl.u32 %v1303, 16
    %v1418 = vor.u32 %v1416, %v1414
    %v1420 = vshll.u32 %v1304, 16
    %v1422 = vrot.slane %v1420, 1
    %v1423 = vsel %vm1315, %v1418, %v1422
    %v1424 = vshrl.u32 %v1304, 16
    %v1426 = vor.u32 %v1424, %v1422
    %v1428 = vshll.u32 %v1305, 16
    %v1430 = vrot.slane %v1428, 1
    %v1431 = vsel %vm1315, %v1426, %v1430
    %v1432 = vshrl.u32 %v1305, 16
    %v1434 = vor.u32 %v1432, %v1430
    %v1436 = vshll.u32 %v1306, 16
    %v1438 = vrot.slane %v1436, 1
    %v1439 = vsel %vm1315, %v1434, %v1438
    %v1440 = vshrl.u32 %v1306, 16
    %v1442 = vor.u32 %v1440, %v1438
    %v1444 = vshll.u32 %v1307, 16
    %v1446 = vrot.slane %v1444, 1
    %v1447 = vsel %vm1315, %v1442, %v1446
    %v1448 = vshrl.u32 %v1307, 16
    %v1450 = vor.u32 %v1448, %v1446
    %v1452 = vshll.u32 %v1308, 16
    %v1454 = vrot.slane %v1452, 1
    %v1455 = vsel %vm1315, %v1450, %v1454
    %v1456 = vshrl.u32 %v1308, 16
    %v1458 = vor.u32 %v1456, %v1454
    %v1460 = vshll.u32 %v1309, 16
    %v1462 = vrot.slane %v1460, 1
    %v1463 = vsel %vm1315, %v1458, %v1462
    %v1464 = vshrl.u32 %v1309, 16
    %v1466 = vor.u32 %v1464, %v1462
    %v1468 = vshll.u32 %v1310, 16
    %v1470 = vrot.slane %v1468, 1
    %v1471 = vsel %vm1315, %v1466, %v1470
    %v1472 = vshrl.u32 %v1310, 16
    %v1474 = vor.u32 %v1472, %v1470
    %v1476 = vshll.u32 %v1314, 16
    %v1478 = vrot.slane %v1476, 1
    %v1479 = vsel %vm1315, %v1474, %v1478
    %v1480 = vshrl.u32 %v1314, 16
    %v1482 = vor.u32 %v1480, %v1478
    %1483 = vrot.lane.b32.xlu0 %v1327, 64
    %v1484 = vpop.permute.xlu0 %1483
    %1485 = vrot.lane.b32.xlu0 %v1335, 64
    %v1486 = vpop.permute.xlu0 %1485
    %1487 = vrot.lane.b32.xlu0 %v1343, 64
    %v1488 = vpop.permute.xlu0 %1487
    %1489 = vrot.lane.b32.xlu0 %v1351, 64
    %v1490 = vpop.permute.xlu0 %1489
    %1491 = vrot.lane.b32.xlu0 %v1359, 64
    %v1492 = vpop.permute.xlu0 %1491
    %1493 = vrot.lane.b32.xlu0 %v1367, 64
    %v1494 = vpop.permute.xlu0 %1493
    %1495 = vrot.lane.b32.xlu0 %v1375, 64
    %v1496 = vpop.permute.xlu0 %1495
    %1497 = vrot.lane.b32.xlu0 %v1383, 64
    %v1498 = vpop.permute.xlu0 %1497
    %1499 = vrot.lane.b32.xlu0 %v1391, 64
    %v1500 = vpop.permute.xlu0 %1499
    %1501 = vrot.lane.b32.xlu0 %v1399, 64
    %v1502 = vpop.permute.xlu0 %1501
    %1503 = vrot.lane.b32.xlu0 %v1407, 64
    %v1504 = vpop.permute.xlu0 %1503
    %1505 = vrot.lane.b32.xlu0 %v1415, 64
    %v1506 = vpop.permute.xlu0 %1505
    %1507 = vrot.lane.b32.xlu0 %v1423, 64
    %v1508 = vpop.permute.xlu0 %1507
    %1509 = vrot.lane.b32.xlu0 %v1431, 64
    %v1510 = vpop.permute.xlu0 %1509
    %1511 = vrot.lane.b32.xlu0 %v1439, 64
    %v1512 = vpop.permute.xlu0 %1511
    %1513 = vrot.lane.b32.xlu0 %v1447, 64
    %v1514 = vpop.permute.xlu0 %1513
    %1515 = vrot.lane.b32.xlu0 %v1455, 64
    %v1516 = vpop.permute.xlu0 %1515
    %1517 = vrot.lane.b32.xlu0 %v1463, 64
    %v1518 = vpop.permute.xlu0 %1517
    %1519 = vrot.lane.b32.xlu0 %v1471, 64
    %v1520 = vpop.permute.xlu0 %1519
    %1521 = vrot.lane.b32.xlu0 %v1479, 64
    %v1522 = vpop.permute.xlu0 %1521
    %1523 = vrot.lane.b32.xlu0 %v1482, 64
    %v1524 = vpop.permute.xlu0 %1523
    %v1526 = vunpack.c.l.b16 %v1206
    %v1527 = vpack.c.b16 %v1251, %v1526
    %vm1528 = vcmask 1046528
    %v1529 = vrot.slane %v1527, 1
    %v1530 = vrot.slane %v1292, 1
    %v1531 = vsel %vm1528, %v1529, %v1530
    %v1532 = vrot.slane %v1293, 1
    %v1533 = vsel %vm1528, %v1530, %v1532
    %v1534 = vrot.slane %v1294, 1
    %v1535 = vsel %vm1528, %v1532, %v1534
    %v1536 = vrot.slane %v1295, 1
    %v1537 = vsel %vm1528, %v1534, %v1536
    %v1538 = vrot.slane %v1296, 1
    %v1539 = vsel %vm1528, %v1536, %v1538
    %v1540 = vrot.slane %v1297, 1
    %v1541 = vsel %vm1528, %v1538, %v1540
    %v1542 = vrot.slane %v1298, 1
    %v1543 = vsel %vm1528, %v1540, %v1542
    %v1544 = vrot.slane %v1299, 1
    %v1545 = vsel %vm1528, %v1542, %v1544
    %v1546 = vrot.slane %v1300, 1
    %v1547 = vsel %vm1528, %v1544, %v1546
    %v1548 = vrot.slane %v1301, 1
    %v1549 = vsel %vm1528, %v1546, %v1548
    %v1550 = vrot.slane %v1302, 1
    %v1551 = vsel %vm1528, %v1548, %v1550
    %v1552 = vrot.slane %v1303, 1
    %v1553 = vsel %vm1528, %v1550, %v1552
    %v1554 = vrot.slane %v1304, 1
    %v1555 = vsel %vm1528, %v1552, %v1554
    %v1556 = vrot.slane %v1305, 1
    %v1557 = vsel %vm1528, %v1554, %v1556
    %v1558 = vrot.slane %v1306, 1
    %v1559 = vsel %vm1528, %v1556, %v1558
    %v1560 = vrot.slane %v1307, 1
    %v1561 = vsel %vm1528, %v1558, %v1560
    %v1562 = vrot.slane %v1308, 1
    %v1563 = vsel %vm1528, %v1560, %v1562
    %v1564 = vrot.slane %v1309, 1
    %v1565 = vsel %vm1528, %v1562, %v1564
    %v1566 = vrot.slane %v1310, 1
    %v1567 = vsel %vm1528, %v1564, %v1566
    %v1568 = vrot.slane %v1314, 1
    %v1569 = vsel %vm1528, %v1566, %v1568
    %v1571 = vunpack.c.l.b16 %v1207
    %v1572 = vpack.c.b16 %v1571, %v1571
    %vm1573 = vsmask.f32 6400
    %v1575 = vshrl.u32 %v1527, 16
    %v1577 = vrot.slane %v1575, 1
    %v1578 = vshll.u32 %v1527, 16
    %v1580 = vrot.slane %v1578, 2
    %v1581 = vor.u32 %v1577, %v1580
    %v1582 = vrot.slane %v1328, 1
    %v1583 = vrot.slane %v1324, 2
    %v1584 = vor.u32 %v1582, %v1583
    %v1585 = vsel %vm1573, %v1581, %v1584
    %v1586 = vrot.slane %v1336, 1
    %v1587 = vrot.slane %v1332, 2
    %v1588 = vor.u32 %v1586, %v1587
    %v1589 = vsel %vm1573, %v1584, %v1588
    %v1590 = vrot.slane %v1344, 1
    %v1591 = vrot.slane %v1340, 2
    %v1592 = vor.u32 %v1590, %v1591
    %v1593 = vsel %vm1573, %v1588, %v1592
    %v1594 = vrot.slane %v1352, 1
    %v1595 = vrot.slane %v1348, 2
    %v1596 = vor.u32 %v1594, %v1595
    %v1597 = vsel %vm1573, %v1592, %v1596
    %v1598 = vrot.slane %v1360, 1
    %v1599 = vrot.slane %v1356, 2
    %v1600 = vor.u32 %v1598, %v1599
    %v1601 = vsel %vm1573, %v1596, %v1600
    %v1602 = vrot.slane %v1368, 1
    %v1603 = vrot.slane %v1364, 2
    %v1604 = vor.u32 %v1602, %v1603
    %v1605 = vsel %vm1573, %v1600, %v1604
    %v1606 = vrot.slane %v1376, 1
    %v1607 = vrot.slane %v1372, 2
    %v1608 = vor.u32 %v1606, %v1607
    %v1609 = vsel %vm1573, %v1604, %v1608
    %v1610 = vrot.slane %v1384, 1
    %v1611 = vrot.slane %v1380, 2
    %v1612 = vor.u32 %v1610, %v1611
    %v1613 = vsel %vm1573, %v1608, %v1612
    %v1614 = vrot.slane %v1392, 1
    %v1615 = vrot.slane %v1388, 2
    %v1616 = vor.u32 %v1614, %v1615
    %v1617 = vsel %vm1573, %v1612, %v1616
    %v1618 = vrot.slane %v1400, 1
    %v1619 = vrot.slane %v1396, 2
    %v1620 = vor.u32 %v1618, %v1619
    %v1621 = vsel %vm1573, %v1616, %v1620
    %v1622 = vrot.slane %v1408, 1
    %v1623 = vrot.slane %v1404, 2
    %v1624 = vor.u32 %v1622, %v1623
    %v1625 = vsel %vm1573, %v1620, %v1624
    %v1626 = vrot.slane %v1416, 1
    %v1627 = vrot.slane %v1412, 2
    %v1628 = vor.u32 %v1626, %v1627
    %v1629 = vsel %vm1573, %v1624, %v1628
    %v1630 = vrot.slane %v1424, 1
    %v1631 = vrot.slane %v1420, 2
    %v1632 = vor.u32 %v1630, %v1631
    %v1633 = vsel %vm1573, %v1628, %v1632
    %v1634 = vrot.slane %v1432, 1
    %v1635 = vrot.slane %v1428, 2
    %v1636 = vor.u32 %v1634, %v1635
    %v1637 = vsel %vm1573, %v1632, %v1636
    %v1638 = vrot.slane %v1440, 1
    %v1639 = vrot.slane %v1436, 2
    %v1640 = vor.u32 %v1638, %v1639
    %v1641 = vsel %vm1573, %v1636, %v1640
    %v1642 = vrot.slane %v1448, 1
    %v1643 = vrot.slane %v1444, 2
    %v1644 = vor.u32 %v1642, %v1643
    %v1645 = vsel %vm1573, %v1640, %v1644
    %v1646 = vrot.slane %v1456, 1
    %v1647 = vrot.slane %v1452, 2
    %v1648 = vor.u32 %v1646, %v1647
    %v1649 = vsel %vm1573, %v1644, %v1648
    %v1650 = vrot.slane %v1464, 1
    %v1651 = vrot.slane %v1460, 2
    %v1652 = vor.u32 %v1650, %v1651
    %v1653 = vsel %vm1573, %v1648, %v1652
    %v1654 = vrot.slane %v1472, 1
    %v1655 = vrot.slane %v1468, 2
    %v1656 = vor.u32 %v1654, %v1655
    %v1657 = vsel %vm1573, %v1652, %v1656
    %v1659 = vshrl.u32 %v1572, 16
    %v1661 = vrot.slane %v1659, 1
    %v1662 = vshll.u32 %v1572, 16
    %v1664 = vrot.slane %v1662, 2
    %v1665 = vor.u32 %v1661, %v1664
    %v1666 = vsel %vm1573, %v1656, %v1665
    %1667 = vrot.lane.b32.xlu0 %v1585, 64
    %v1668 = vpop.permute.xlu0 %1667
    %1669 = vrot.lane.b32.xlu0 %v1589, 64
    %v1670 = vpop.permute.xlu0 %1669
    %1671 = vrot.lane.b32.xlu0 %v1593, 64
    %v1672 = vpop.permute.xlu0 %1671
    %1673 = vrot.lane.b32.xlu0 %v1597, 64
    %v1674 = vpop.permute.xlu0 %1673
    %1675 = vrot.lane.b32.xlu0 %v1601, 64
    %v1676 = vpop.permute.xlu0 %1675
    %1677 = vrot.lane.b32.xlu0 %v1605, 64
    %v1678 = vpop.permute.xlu0 %1677
    %1679 = vrot.lane.b32.xlu0 %v1609, 64
    %v1680 = vpop.permute.xlu0 %1679
    %1681 = vrot.lane.b32.xlu0 %v1613, 64
    %v1682 = vpop.permute.xlu0 %1681
    %1683 = vrot.lane.b32.xlu0 %v1617, 64
    %v1684 = vpop.permute.xlu0 %1683
    %1685 = vrot.lane.b32.xlu0 %v1621, 64
    %v1686 = vpop.permute.xlu0 %1685
    %1687 = vrot.lane.b32.xlu0 %v1625, 64
    %v1688 = vpop.permute.xlu0 %1687
    %1689 = vrot.lane.b32.xlu0 %v1629, 64
    %v1690 = vpop.permute.xlu0 %1689
    %1691 = vrot.lane.b32.xlu0 %v1633, 64
    %v1692 = vpop.permute.xlu0 %1691
    %1693 = vrot.lane.b32.xlu0 %v1637, 64
    %v1694 = vpop.permute.xlu0 %1693
    %1695 = vrot.lane.b32.xlu0 %v1641, 64
    %v1696 = vpop.permute.xlu0 %1695
    %1697 = vrot.lane.b32.xlu0 %v1645, 64
    %v1698 = vpop.permute.xlu0 %1697
    %1699 = vrot.lane.b32.xlu0 %v1649, 64
    %v1700 = vpop.permute.xlu0 %1699
    %1701 = vrot.lane.b32.xlu0 %v1653, 64
    %v1702 = vpop.permute.xlu0 %1701
    %1703 = vrot.lane.b32.xlu0 %v1657, 64
    %v1704 = vpop.permute.xlu0 %1703
    %1705 = vrot.lane.b32.xlu0 %v1666, 64
    %v1706 = vpop.permute.xlu0 %1705
    %1707 = vrot.lane.b32.xlu0 %v1665, 64
    %v1708 = vpop.permute.xlu0 %1707
    %v1710 = vunpack.c.l.b16 %v1208
    %v1711 = vpack.c.b16 %v1251, %v1710
    %vm1712 = vcmask 1045504
    %v1713 = vrot.slane %v1711, 2
    %v1714 = vrot.slane %v1292, 2
    %v1715 = vsel %vm1712, %v1713, %v1714
    %v1716 = vrot.slane %v1293, 2
    %v1717 = vsel %vm1712, %v1714, %v1716
    %v1718 = vrot.slane %v1294, 2
    %v1719 = vsel %vm1712, %v1716, %v1718
    %v1720 = vrot.slane %v1295, 2
    %v1721 = vsel %vm1712, %v1718, %v1720
    %v1722 = vrot.slane %v1296, 2
    %v1723 = vsel %vm1712, %v1720, %v1722
    %v1724 = vrot.slane %v1297, 2
    %v1725 = vsel %vm1712, %v1722, %v1724
    %v1726 = vrot.slane %v1298, 2
    %v1727 = vsel %vm1712, %v1724, %v1726
    %v1728 = vrot.slane %v1299, 2
    %v1729 = vsel %vm1712, %v1726, %v1728
    %v1730 = vrot.slane %v1300, 2
    %v1731 = vsel %vm1712, %v1728, %v1730
    %v1732 = vrot.slane %v1301, 2
    %v1733 = vsel %vm1712, %v1730, %v1732
    %v1734 = vrot.slane %v1302, 2
    %v1735 = vsel %vm1712, %v1732, %v1734
    %v1736 = vrot.slane %v1303, 2
    %v1737 = vsel %vm1712, %v1734, %v1736
    %v1738 = vrot.slane %v1304, 2
    %v1739 = vsel %vm1712, %v1736, %v1738
    %v1740 = vrot.slane %v1305, 2
    %v1741 = vsel %vm1712, %v1738, %v1740
    %v1742 = vrot.slane %v1306, 2
    %v1743 = vsel %vm1712, %v1740, %v1742
    %v1744 = vrot.slane %v1307, 2
    %v1745 = vsel %vm1712, %v1742, %v1744
    %v1746 = vrot.slane %v1308, 2
    %v1747 = vsel %vm1712, %v1744, %v1746
    %v1748 = vrot.slane %v1309, 2
    %v1749 = vsel %vm1712, %v1746, %v1748
    %v1750 = vrot.slane %v1310, 2
    %v1751 = vsel %vm1712, %v1748, %v1750
    %v1752 = vrot.slane %v1572, 2
    %v1753 = vsel %vm1712, %v1750, %v1752
    %v1755 = vsel %vm242, %v1291, %v1484
    %v1758 = vsel %vm242, %v1292, %v1486
    %v1761 = vsel %vm242, %v1293, %v1488
    %v1764 = vsel %vm242, %v1294, %v1490
    %v1767 = vsel %vm242, %v1295, %v1492
    %v1770 = vsel %vm242, %v1296, %v1494
    %v1773 = vsel %vm242, %v1297, %v1496
    %v1776 = vsel %vm242, %v1298, %v1498
    %v1779 = vsel %vm242, %v1299, %v1500
    %v1782 = vsel %vm242, %v1300, %v1502
    %v1785 = vsel %vm242, %v1301, %v1504
    %v1788 = vsel %vm242, %v1302, %v1506
    %v1791 = vsel %vm242, %v1303, %v1508
    %v1794 = vsel %vm242, %v1304, %v1510
    %v1797 = vsel %vm242, %v1305, %v1512
    %v1800 = vsel %vm242, %v1306, %v1514
    %v1803 = vsel %vm242, %v1307, %v1516
    %v1806 = vsel %vm242, %v1308, %v1518
    %v1809 = vsel %vm242, %v1309, %v1520
    %v1812 = vsel %vm242, %v1310, %v1522
    %v1816 = vsel %vm242, %v1311, %v1524
    %v1820 = vsel %vm242, %v1531, %v1668
    %v1824 = vsel %vm242, %v1533, %v1670
    %v1828 = vsel %vm242, %v1535, %v1672
    %v1832 = vsel %vm242, %v1537, %v1674
    %v1836 = vsel %vm242, %v1539, %v1676
    %v1840 = vsel %vm242, %v1541, %v1678
    %v1844 = vsel %vm242, %v1543, %v1680
    %v1848 = vsel %vm242, %v1545, %v1682
    %v1852 = vsel %vm242, %v1547, %v1684
    %v1856 = vsel %vm242, %v1549, %v1686
    %v1860 = vsel %vm242, %v1551, %v1688
    %v1864 = vsel %vm242, %v1553, %v1690
    %v1868 = vsel %vm242, %v1555, %v1692
    %v1872 = vsel %vm242, %v1557, %v1694
    %v1876 = vsel %vm242, %v1559, %v1696
    %v1880 = vsel %vm242, %v1561, %v1698
    %v1884 = vsel %vm242, %v1563, %v1700
    %v1888 = vsel %vm242, %v1565, %v1702
    %v1892 = vsel %vm242, %v1567, %v1704
    %v1896 = vsel %vm242, %v1569, %v1706
    %v1900 = vsel %vm242, %v1568, %v1708
    %v1902 = vld [vmem:[%s2] sm:$0xf]
    %v1903 = vld [vmem:[%s2 + $0x4] sm:$0xf]
    %v1904 = vld [vmem:[%s2 + $0x8] sm:$0xf]
    %v1905 = vld [vmem:[%s2 + $0xc] sm:$0xf]
    %v1906 = vld [vmem:[%s2 + $0x10] sm:$0xf]
    %v1907 = vld [vmem:[%s2 + $0x14] sm:$0xf]
    %v1908 = vld [vmem:[%s2 + $0x18] sm:$0xf]
    %v1909 = vld [vmem:[%s2 + $0x1c] sm:$0xf]
    %v1910 = vld [vmem:[%s2 + $0x20] sm:$0xf]
    %v1911 = vld [vmem:[%s2 + $0x24] sm:$0xf]
    %v1912 = vld [vmem:[%s2 + $0x28] sm:$0xf]
    %v1913 = vld [vmem:[%s2 + $0x2c] sm:$0xf]
    %v1914 = vld [vmem:[%s2 + $0x30] sm:$0xf]
    %v1915 = vld [vmem:[%s2 + $0x34] sm:$0xf]
    %v1916 = vld [vmem:[%s2 + $0x38] sm:$0xf]
    %v1917 = vld [vmem:[%s2 + $0x3c] sm:$0xf]
    %v1918 = vld [vmem:[%s2 + $0x40] sm:$0xf]
    %v1919 = vld [vmem:[%s2 + $0x44] sm:$0xf]
    %v1920 = vld [vmem:[%s2 + $0x48] sm:$0xf]
    %v1921 = vld [vmem:[%s2 + $0x4c] sm:$0xf]
    %v1922 = vld [vmem:[%s2 + $0x50] sm:$0xf]
    %v1923 = vld [vmem:[%s2 + $0x54] sm:$0xf]
    %v1924 = vld [vmem:[%s2 + $0x58] sm:$0xf]
    %v1925 = vld [vmem:[%s2 + $0x5c] sm:$0xf]
    %v1926 = vld [vmem:[%s2 + $0x60] sm:$0xf]
    %v1927 = vld [vmem:[%s2 + $0x64] sm:$0xf]
    %v1928 = vld [vmem:[%s2 + $0x68] sm:$0xf]
    %v1929 = vld [vmem:[%s2 + $0x6c] sm:$0xf]
    %v1930 = vld [vmem:[%s2 + $0x70] sm:$0xf]
    %v1931 = vld [vmem:[%s2 + $0x74] sm:$0xf]
    %v1932 = vld [vmem:[%s2 + $0x78] sm:$0xf]
    %v1933 = vld [vmem:[%s2 + $0x7c] sm:$0xf]
    %v1934 = vld [vmem:[%s2 + $0x80] sm:$0xf]
    %v1935 = vld [vmem:[%s2 + $0x84] sm:$0xf]
    %v1936 = vld [vmem:[%s2 + $0x88] sm:$0xf]
    %v1937 = vld [vmem:[%s2 + $0x8c] sm:$0xf]
    %v1938 = vld [vmem:[%s2 + $0x90] sm:$0xf]
    %v1939 = vld [vmem:[%s2 + $0x94] sm:$0xf]
    %v1940 = vld [vmem:[%s2 + $0x98] sm:$0xf]
    %v1941 = vld [vmem:[%s2 + $0x9c] sm:$0xf]
    %v1942 = vld [vmem:[#allocation2 + $0x8] sm:$0xe]
    %v1943 = vld [vmem:[#allocation2 + $0xa4] sm:$0xf]
    %v1944 = vld [vmem:[#allocation2 + $0xa8] sm:$0x7]
    %v1945 = vld [vmem:[#allocation2 + $0xa8] sm:$0xf]
    %v1946 = vld [vmem:[#allocation2 + $0x8] sm:$0xc]
    %v1947 = vld [vmem:[#allocation2 + $0xac] sm:$0x1]
    %v1948 = vld [vmem:[#allocation2 + $0x8] sm:$0x8]
    %v1952 = vunpack.c.l.b16 %v1942
    %v1953 = vunpack.c.l.b16 %v1943
    %v1954 = vunpack.c.l.b16 %v1944
    %v1955 = vpack.c.b16 %v1253, %v1952
    %v1956 = vpack.c.b16 %v1953, %v1571
    %v1957 = vpack.c.b16 %v1954, %v1954
    %v1959 = vunpack.c.l.b16 %v1945
    %v1960 = vpack.c.b16 %v1959, %v1959
    %v1962 = vshrl.u32 %v1955, 16
    %v1964 = vshll.u32 %v1955, 16
    %v1966 = vrot.slane %v1964, 1
    %v1967 = vor.u32 %v1962, %v1966
    %v1968 = vsel %vm1315, %v1967, %v1334
    %v1970 = vshll.u32 %v1956, 16
    %v1972 = vrot.slane %v1970, 1
    %v1973 = vsel %vm1315, %v1474, %v1972
    %v1974 = vshrl.u32 %v1956, 16
    %v1976 = vor.u32 %v1974, %v1972
    %v1978 = vshll.u32 %v1960, 16
    %v1980 = vrot.slane %v1978, 1
    %v1981 = vsel %vm1315, %v1976, %v1980
    %v1982 = vshrl.u32 %v1960, 16
    %v1984 = vor.u32 %v1982, %v1980
    %1985 = vrot.lane.b32.xlu0 %v1968, 64
    %v1986 = vpop.permute.xlu0 %1985
    %1987 = vrot.lane.b32.xlu0 %v1973, 64
    %v1988 = vpop.permute.xlu0 %1987
    %1989 = vrot.lane.b32.xlu0 %v1981, 64
    %v1990 = vpop.permute.xlu0 %1989
    %1991 = vrot.lane.b32.xlu0 %v1984, 64
    %v1992 = vpop.permute.xlu0 %1991
    %v1994 = vunpack.c.l.b16 %v1946
    %v1995 = vpack.c.b16 %v1253, %v1994
    %v1996 = vrot.slane %v1995, 1
    %v1997 = vsel %vm1528, %v1996, %v1532
    %v1998 = vrot.slane %v1956, 1
    %v1999 = vsel %vm1528, %v1566, %v1998
    %v2000 = vrot.slane %v1960, 1
    %v2001 = vsel %vm1528, %v1998, %v2000
    %v2003 = vunpack.c.l.b16 %v1947
    %v2004 = vpack.c.b16 %v2003, %v1959
    %v2006 = vshrl.u32 %v1995, 16
    %v2008 = vrot.slane %v2006, 1
    %v2009 = vshll.u32 %v1995, 16
    %v2011 = vrot.slane %v2009, 2
    %v2012 = vor.u32 %v2008, %v2011
    %v2013 = vsel %vm1573, %v2012, %v1588
    %v2014 = vrot.slane %v1974, 1
    %v2015 = vrot.slane %v1970, 2
    %v2016 = vor.u32 %v2014, %v2015
    %v2017 = vsel %vm1573, %v1656, %v2016
    %v2019 = vshrl.u32 %v2004, 16
    %v2021 = vrot.slane %v2019, 1
    %v2022 = vshll.u32 %v2004, 16
    %v2024 = vrot.slane %v2022, 2
    %v2025 = vor.u32 %v2021, %v2024
    %v2026 = vsel %vm1573, %v2016, %v2025
    %2027 = vrot.lane.b32.xlu0 %v2013, 64
    %v2028 = vpop.permute.xlu0 %2027
    %2029 = vrot.lane.b32.xlu0 %v2017, 64
    %v2030 = vpop.permute.xlu0 %2029
    %2031 = vrot.lane.b32.xlu0 %v2026, 64
    %v2032 = vpop.permute.xlu0 %2031
    %2033 = vrot.lane.b32.xlu0 %v2025, 64
    %v2034 = vpop.permute.xlu0 %2033
    %v2036 = vunpack.c.l.b16 %v1948
    %v2037 = vpack.c.b16 %v1253, %v2036
    %v2038 = vrot.slane %v2037, 2
    %v2039 = vsel %vm1712, %v2038, %v1716
    %v2040 = vrot.slane %v1956, 2
    %v2041 = vsel %vm1712, %v1750, %v2040
    %v2042 = vrot.slane %v2004, 2
    %v2043 = vsel %vm1712, %v2040, %v2042
    %v2045 = vsel %vm242, %v1955, %v1986
    %v2047 = vsel %vm242, %v1310, %v1988
    %v2049 = vsel %vm242, %v1956, %v1990
    %v2052 = vsel %vm242, %v1957, %v1992
    %v2055 = vsel %vm242, %v1997, %v2028
    %v2058 = vsel %vm242, %v1999, %v2030
    %v2061 = vsel %vm242, %v2001, %v2032
    %v2064 = vsel %vm242, %v2000, %v2034
    %s2065 = scalar_lea.vmem %s2, 160
    %v2066 = vld [vmem:[%s2065] sm:$0xf]
    %v2067 = vld [vmem:[%s2065 + $0x4] sm:$0xf]
    %v2068 = vld [vmem:[%s2065 + $0x8] sm:$0xf]
    %v2069 = vld [vmem:[%s2065 + $0xc] sm:$0xf]
    %v2070 = vld [vmem:[%s2065 + $0x10] sm:$0xf]
    %v2071 = vld [vmem:[%s2065 + $0x14] sm:$0xf]
    %v2072 = vld [vmem:[%s2065 + $0x18] sm:$0xf]
    %v2073 = vld [vmem:[%s2065 + $0x1c] sm:$0xf]
    %v2074 = vld [vmem:[%s2065 + $0x20] sm:$0xf]
    %v2075 = vld [vmem:[%s2065 + $0x24] sm:$0xf]
    %v2076 = vld [vmem:[%s2065 + $0x28] sm:$0xf]
    %v2077 = vld [vmem:[%s2065 + $0x2c] sm:$0xf]
    %v2078 = vld [vmem:[%s2065 + $0x30] sm:$0xf]
    %v2079 = vld [vmem:[%s2065 + $0x34] sm:$0xf]
    %v2080 = vld [vmem:[%s2065 + $0x38] sm:$0xf]
    %v2081 = vld [vmem:[%s2065 + $0x3c] sm:$0xf]
    %v2082 = vld [vmem:[%s2065 + $0x40] sm:$0xf]
    %v2083 = vld [vmem:[%s2065 + $0x44] sm:$0xf]
    %v2084 = vld [vmem:[%s2065 + $0x48] sm:$0xf]
    %v2085 = vld [vmem:[%s2065 + $0x4c] sm:$0xf]
    %v2086 = vld [vmem:[%s2065 + $0x50] sm:$0xf]
    %v2087 = vld [vmem:[%s2065 + $0x54] sm:$0xf]
    %v2088 = vld [vmem:[%s2065 + $0x58] sm:$0xf]
    %v2089 = vld [vmem:[%s2065 + $0x5c] sm:$0xf]
    %v2090 = vld [vmem:[%s2065 + $0x60] sm:$0xf]
    %v2091 = vld [vmem:[%s2065 + $0x64] sm:$0xf]
    %v2092 = vld [vmem:[%s2065 + $0x68] sm:$0xf]
    %v2093 = vld [vmem:[%s2065 + $0x6c] sm:$0xf]
    %v2094 = vld [vmem:[%s2065 + $0x70] sm:$0xf]
    %v2095 = vld [vmem:[%s2065 + $0x74] sm:$0xf]
    %v2096 = vld [vmem:[%s2065 + $0x78] sm:$0xf]
    %v2097 = vld [vmem:[%s2065 + $0x7c] sm:$0xf]
    %v2098 = vld [vmem:[%s2065 + $0x80] sm:$0xf]
    %v2099 = vld [vmem:[%s2065 + $0x84] sm:$0xf]
    %v2100 = vld [vmem:[%s2065 + $0x88] sm:$0xf]
    %v2101 = vld [vmem:[%s2065 + $0x8c] sm:$0xf]
    %v2102 = vld [vmem:[%s2065 + $0x90] sm:$0xf]
    %v2103 = vld [vmem:[%s2065 + $0x94] sm:$0xf]
    %v2104 = vld [vmem:[%s2065 + $0x98] sm:$0xf]
    %v2105 = vld [vmem:[%s2065 + $0x9c] sm:$0xf]
    %v2148 = vrot.slane %v2045, 1
    %v2149 = vrot.slane %v1761, 1
    %v2150 = vsel %vm1528, %v2148, %v2149
    %v2151 = vrot.slane %v2055, 1
    %v2152 = vrot.slane %v1828, 1
    %v2153 = vsel %vm1528, %v2151, %v2152
    %v2154 = vrot.slane %v2039, 1
    %v2155 = vrot.slane %v1719, 1
    %v2156 = vsel %vm1528, %v2154, %v2155
    %v2157 = vrot.slane %v1764, 1
    %v2158 = vsel %vm1528, %v2149, %v2157
    %v2159 = vrot.slane %v1832, 1
    %v2160 = vsel %vm1528, %v2152, %v2159
    %v2161 = vrot.slane %v1721, 1
    %v2162 = vsel %vm1528, %v2155, %v2161
    %v2163 = vrot.slane %v1767, 1
    %v2164 = vsel %vm1528, %v2157, %v2163
    %v2165 = vrot.slane %v1836, 1
    %v2166 = vsel %vm1528, %v2159, %v2165
    %v2167 = vrot.slane %v1723, 1
    %v2168 = vsel %vm1528, %v2161, %v2167
    %v2169 = vrot.slane %v1770, 1
    %v2170 = vsel %vm1528, %v2163, %v2169
    %v2171 = vrot.slane %v1840, 1
    %v2172 = vsel %vm1528, %v2165, %v2171
    %v2173 = vrot.slane %v1725, 1
    %v2174 = vsel %vm1528, %v2167, %v2173
    %v2175 = vrot.slane %v1773, 1
    %v2176 = vsel %vm1528, %v2169, %v2175
    %v2177 = vrot.slane %v1844, 1
    %v2178 = vsel %vm1528, %v2171, %v2177
    %v2179 = vrot.slane %v1727, 1
    %v2180 = vsel %vm1528, %v2173, %v2179
    %v2181 = vrot.slane %v1776, 1
    %v2182 = vsel %vm1528, %v2175, %v2181
    %v2183 = vrot.slane %v1848, 1
    %v2184 = vsel %vm1528, %v2177, %v2183
    %v2185 = vrot.slane %v1729, 1
    %v2186 = vsel %vm1528, %v2179, %v2185
    %v2187 = vrot.slane %v1779, 1
    %v2188 = vsel %vm1528, %v2181, %v2187
    %v2189 = vrot.slane %v1852, 1
    %v2190 = vsel %vm1528, %v2183, %v2189
    %v2191 = vrot.slane %v1731, 1
    %v2192 = vsel %vm1528, %v2185, %v2191
    %v2193 = vrot.slane %v1782, 1
    %v2194 = vsel %vm1528, %v2187, %v2193
    %v2195 = vrot.slane %v1856, 1
    %v2196 = vsel %vm1528, %v2189, %v2195
    %v2197 = vrot.slane %v1733, 1
    %v2198 = vsel %vm1528, %v2191, %v2197
    %v2199 = vrot.slane %v1785, 1
    %v2200 = vsel %vm1528, %v2193, %v2199
    %v2201 = vrot.slane %v1860, 1
    %v2202 = vsel %vm1528, %v2195, %v2201
    %v2203 = vrot.slane %v1735, 1
    %v2204 = vsel %vm1528, %v2197, %v2203
    %v2205 = vrot.slane %v1788, 1
    %v2206 = vsel %vm1528, %v2199, %v2205
    %v2207 = vrot.slane %v1864, 1
    %v2208 = vsel %vm1528, %v2201, %v2207
    %v2209 = vrot.slane %v1737, 1
    %v2210 = vsel %vm1528, %v2203, %v2209
    %v2211 = vrot.slane %v1791, 1
    %v2212 = vsel %vm1528, %v2205, %v2211
    %v2213 = vrot.slane %v1868, 1
    %v2214 = vsel %vm1528, %v2207, %v2213
    %v2215 = vrot.slane %v1739, 1
    %v2216 = vsel %vm1528, %v2209, %v2215
    %v2217 = vrot.slane %v1794, 1
    %v2218 = vsel %vm1528, %v2211, %v2217
    %v2219 = vrot.slane %v1872, 1
    %v2220 = vsel %vm1528, %v2213, %v2219
    %v2221 = vrot.slane %v1741, 1
    %v2222 = vsel %vm1528, %v2215, %v2221
    %v2223 = vrot.slane %v1797, 1
    %v2224 = vsel %vm1528, %v2217, %v2223
    %v2225 = vrot.slane %v1876, 1
    %v2226 = vsel %vm1528, %v2219, %v2225
    %v2227 = vrot.slane %v1743, 1
    %v2228 = vsel %vm1528, %v2221, %v2227
    %v2229 = vrot.slane %v1800, 1
    %v2230 = vsel %vm1528, %v2223, %v2229
    %v2231 = vrot.slane %v1880, 1
    %v2232 = vsel %vm1528, %v2225, %v2231
    %v2233 = vrot.slane %v1745, 1
    %v2234 = vsel %vm1528, %v2227, %v2233
    %v2235 = vrot.slane %v1803, 1
    %v2236 = vsel %vm1528, %v2229, %v2235
    %v2237 = vrot.slane %v1884, 1
    %v2238 = vsel %vm1528, %v2231, %v2237
    %v2239 = vrot.slane %v1747, 1
    %v2240 = vsel %vm1528, %v2233, %v2239
    %v2241 = vrot.slane %v1806, 1
    %v2242 = vsel %vm1528, %v2235, %v2241
    %v2243 = vrot.slane %v1888, 1
    %v2244 = vsel %vm1528, %v2237, %v2243
    %v2245 = vrot.slane %v1749, 1
    %v2246 = vsel %vm1528, %v2239, %v2245
    %v2247 = vrot.slane %v1809, 1
    %v2248 = vsel %vm1528, %v2241, %v2247
    %v2249 = vrot.slane %v1892, 1
    %v2250 = vsel %vm1528, %v2243, %v2249
    %v2251 = vrot.slane %v1751, 1
    %v2252 = vsel %vm1528, %v2245, %v2251
    %v2253 = vrot.slane %v2047, 1
    %v2254 = vsel %vm1528, %v2247, %v2253
    %v2255 = vrot.slane %v2058, 1
    %v2256 = vsel %vm1528, %v2249, %v2255
    %v2257 = vrot.slane %v2041, 1
    %v2258 = vsel %vm1528, %v2251, %v2257
    %v2259 = vrot.slane %v2049, 1
    %v2260 = vsel %vm1528, %v2253, %v2259
    %v2261 = vrot.slane %v2061, 1
    %v2262 = vsel %vm1528, %v2255, %v2261
    %v2263 = vrot.slane %v2043, 1
    %v2264 = vsel %vm1528, %v2257, %v2263
    %v2265 = vrot.slane %v2052, 1
    %v2266 = vsel %vm1528, %v2259, %v2265
    %v2267 = vrot.slane %v2064, 1
    %v2268 = vsel %vm1528, %v2261, %v2267
    %v2269 = vrot.slane %v2042, 1
    %v2270 = vsel %vm1528, %v2263, %v2269
    %v2353 = vunpack.c.l.b16 %v2066
    %v2354 = vunpack.c.l.b16 %v2067
    %v2355 = vunpack.c.l.b16 %v2068
    %v2356 = vunpack.c.l.b16 %v2069
    %v2357 = vunpack.c.l.b16 %v2070
    %v2358 = vunpack.c.l.b16 %v2071
    %v2359 = vunpack.c.l.b16 %v2072
    %v2360 = vunpack.c.l.b16 %v2073
    %v2361 = vunpack.c.l.b16 %v2074
    %v2362 = vunpack.c.l.b16 %v2075
    %v2363 = vunpack.c.l.b16 %v2076
    %v2364 = vunpack.c.l.b16 %v2077
    %v2365 = vunpack.c.l.b16 %v2078
    %v2366 = vunpack.c.l.b16 %v2079
    %v2367 = vunpack.c.l.b16 %v2080
    %v2368 = vunpack.c.l.b16 %v2081
    %v2369 = vunpack.c.l.b16 %v2082
    %v2370 = vunpack.c.l.b16 %v2083
    %v2371 = vunpack.c.l.b16 %v2084
    %v2372 = vunpack.c.l.b16 %v2085
    %v2373 = vunpack.c.l.b16 %v2086
    %v2374 = vunpack.c.l.b16 %v2087
    %v2375 = vunpack.c.l.b16 %v2088
    %v2376 = vunpack.c.l.b16 %v2089
    %v2377 = vunpack.c.l.b16 %v2090
    %v2378 = vunpack.c.l.b16 %v2091
    %v2379 = vunpack.c.l.b16 %v2092
    %v2380 = vunpack.c.l.b16 %v2093
    %v2381 = vunpack.c.l.b16 %v2094
    %v2382 = vunpack.c.l.b16 %v2095
    %v2383 = vunpack.c.l.b16 %v2096
    %v2384 = vunpack.c.l.b16 %v2097
    %v2385 = vunpack.c.l.b16 %v2098
    %v2386 = vunpack.c.l.b16 %v2099
    %v2387 = vunpack.c.l.b16 %v2100
    %v2388 = vunpack.c.l.b16 %v2101
    %v2389 = vunpack.c.l.b16 %v2102
    %v2390 = vunpack.c.l.b16 %v2103
    %v2391 = vunpack.c.l.b16 %v2104
    %v2392 = vunpack.c.l.b16 %v2105
    %v2393 = vpack.c.b16 %v2354, %v2353
    %v2394 = vpack.c.b16 %v2356, %v2355
    %v2395 = vpack.c.b16 %v2358, %v2357
    %v2396 = vpack.c.b16 %v2360, %v2359
    %v2397 = vpack.c.b16 %v2362, %v2361
    %v2398 = vpack.c.b16 %v2364, %v2363
    %v2399 = vpack.c.b16 %v2366, %v2365
    %v2400 = vpack.c.b16 %v2368, %v2367
    %v2401 = vpack.c.b16 %v2370, %v2369
    %v2402 = vpack.c.b16 %v2372, %v2371
    %v2403 = vpack.c.b16 %v2374, %v2373
    %v2404 = vpack.c.b16 %v2376, %v2375
    %v2405 = vpack.c.b16 %v2378, %v2377
    %v2406 = vpack.c.b16 %v2380, %v2379
    %v2407 = vpack.c.b16 %v2382, %v2381
    %v2408 = vpack.c.b16 %v2384, %v2383
    %v2409 = vpack.c.b16 %v2386, %v2385
    %v2410 = vpack.c.b16 %v2388, %v2387
    %v2411 = vpack.c.b16 %v2390, %v2389
    %v2412 = vpack.c.b16 %v2392, %v2391
    %v2434 = vsel %vm242, %v2156, 0
    %v2437 = vsel %vm242, %v2162, 0
    %v2440 = vsel %vm242, %v2168, 0
    %v2443 = vsel %vm242, %v2174, 0
    %v2446 = vsel %vm242, %v2180, 0
    %v2449 = vsel %vm242, %v2186, 0
    %v2452 = vsel %vm242, %v2192, 0
    %v2455 = vsel %vm242, %v2198, 0
    %v2458 = vsel %vm242, %v2204, 0
    %v2461 = vsel %vm242, %v2210, 0
    %v2464 = vsel %vm242, %v2216, 0
    %v2467 = vsel %vm242, %v2222, 0
    %v2470 = vsel %vm242, %v2228, 0
    %v2473 = vsel %vm242, %v2234, 0
    %v2476 = vsel %vm242, %v2240, 0
    %v2479 = vsel %vm242, %v2246, 0
    %v2482 = vsel %vm242, %v2252, 0
    %v2485 = vsel %vm242, %v2258, 0
    %v2488 = vsel %vm242, %v2264, 0
    %v2491 = vsel %vm242, %v2270, 0
    %v2494 = vsel %vm242, %v2269, 0
    %2496 = vmatpush.bf16.msra.mxu0 %v2400
    %2497 = vmatpush.bf16.msra.mxu0 %v2399
    %2498 = vmatpush.bf16.msra.mxu0 %v2398
    %2499 = vmatpush.bf16.msra.mxu0 %v2397
    %2500 = vmatpush.bf16.msra.mxu0 %v2396
    %2501 = vmatpush.bf16.msra.mxu0 %v2395
    %2502 = vmatpush.bf16.msra.mxu0 %v2394
    %2503 = vmatpush.bf16.msra.mxu0 %v2393
    %2504 = vmatmul.bf16.gmra.mxu0 %v2150
    %v2505 = vpop.f32.mrf.mxu0
    %v2506 = vadd.f32 0.0, %v2505
    %v2507 = vpop.f32.mrf.mxu0
    %v2508 = vadd.f32 0.0, %v2507
    %2509 = vmatmul.bf16.gmra.mxu0 %v2158
    %v2510 = vpop.f32.mrf.mxu0
    %v2511 = vadd.f32 0.0, %v2510
    %v2512 = vpop.f32.mrf.mxu0
    %v2513 = vadd.f32 0.0, %v2512
    %2514 = vmatmul.bf16.gmra.mxu0 %v2164
    %v2515 = vpop.f32.mrf.mxu0
    %v2516 = vadd.f32 0.0, %v2515
    %v2517 = vpop.f32.mrf.mxu0
    %v2518 = vadd.f32 0.0, %v2517
    %2519 = vmatmul.bf16.gmra.mxu0 %v2170
    %v2520 = vpop.f32.mrf.mxu0
    %v2521 = vadd.f32 0.0, %v2520
    %v2522 = vpop.f32.mrf.mxu0
    %v2523 = vadd.f32 0.0, %v2522
    %2524 = vmatmul.bf16.gmra.mxu0 %v2176
    %v2525 = vpop.f32.mrf.mxu0
    %v2526 = vadd.f32 0.0, %v2525
    %v2527 = vpop.f32.mrf.mxu0
    %v2528 = vadd.f32 0.0, %v2527
    %2529 = vmatmul.bf16.gmra.mxu0 %v2182
    %v2530 = vpop.f32.mrf.mxu0
    %v2531 = vadd.f32 0.0, %v2530
    %v2532 = vpop.f32.mrf.mxu0
    %v2533 = vadd.f32 0.0, %v2532
    %2534 = vmatmul.bf16.gmra.mxu0 %v2188
    %v2535 = vpop.f32.mrf.mxu0
    %v2536 = vadd.f32 0.0, %v2535
    %v2537 = vpop.f32.mrf.mxu0
    %v2538 = vadd.f32 0.0, %v2537
    %2539 = vmatmul.bf16.gmra.mxu0 %v2194
    %v2540 = vpop.f32.mrf.mxu0
    %v2541 = vadd.f32 0.0, %v2540
    %v2542 = vpop.f32.mrf.mxu0
    %v2543 = vadd.f32 0.0, %v2542
    %2544 = vmatmul.bf16.gmra.mxu0 %v2200
    %v2545 = vpop.f32.mrf.mxu0
    %v2546 = vadd.f32 0.0, %v2545
    %v2547 = vpop.f32.mrf.mxu0
    %v2548 = vadd.f32 0.0, %v2547
    %2549 = vmatmul.bf16.gmra.mxu0 %v2206
    %v2550 = vpop.f32.mrf.mxu0
    %v2551 = vadd.f32 0.0, %v2550
    %v2552 = vpop.f32.mrf.mxu0
    %v2553 = vadd.f32 0.0, %v2552
    %2554 = vmatmul.bf16.gmra.mxu0 %v2212
    %v2555 = vpop.f32.mrf.mxu0
    %v2556 = vadd.f32 0.0, %v2555
    %v2557 = vpop.f32.mrf.mxu0
    %v2558 = vadd.f32 0.0, %v2557
    %2559 = vmatmul.bf16.gmra.mxu0 %v2218
    %v2560 = vpop.f32.mrf.mxu0
    %v2561 = vadd.f32 0.0, %v2560
    %v2562 = vpop.f32.mrf.mxu0
    %v2563 = vadd.f32 0.0, %v2562
    %2564 = vmatmul.bf16.gmra.mxu0 %v2224
    %v2565 = vpop.f32.mrf.mxu0
    %v2566 = vadd.f32 0.0, %v2565
    %v2567 = vpop.f32.mrf.mxu0
    %v2568 = vadd.f32 0.0, %v2567
    %2569 = vmatmul.bf16.gmra.mxu0 %v2230
    %v2570 = vpop.f32.mrf.mxu0
    %v2571 = vadd.f32 0.0, %v2570
    %v2572 = vpop.f32.mrf.mxu0
    %v2573 = vadd.f32 0.0, %v2572
    %2574 = vmatmul.bf16.gmra.mxu0 %v2236
    %v2575 = vpop.f32.mrf.mxu0
    %v2576 = vadd.f32 0.0, %v2575
    %v2577 = vpop.f32.mrf.mxu0
    %v2578 = vadd.f32 0.0, %v2577
    %2579 = vmatmul.bf16.gmra.mxu0 %v2242
    %v2580 = vpop.f32.mrf.mxu0
    %v2581 = vadd.f32 0.0, %v2580
    %v2582 = vpop.f32.mrf.mxu0
    %v2583 = vadd.f32 0.0, %v2582
    %2584 = vmatmul.bf16.gmra.mxu0 %v2248
    %v2585 = vpop.f32.mrf.mxu0
    %v2586 = vadd.f32 0.0, %v2585
    %v2587 = vpop.f32.mrf.mxu0
    %v2588 = vadd.f32 0.0, %v2587
    %2589 = vmatmul.bf16.gmra.mxu0 %v2254
    %v2590 = vpop.f32.mrf.mxu0
    %v2591 = vadd.f32 0.0, %v2590
    %v2592 = vpop.f32.mrf.mxu0
    %v2593 = vadd.f32 0.0, %v2592
    %2594 = vmatmul.bf16.gmra.mxu0 %v2260
    %v2595 = vpop.f32.mrf.mxu0
    %v2596 = vadd.f32 0.0, %v2595
    %v2597 = vpop.f32.mrf.mxu0
    %v2598 = vadd.f32 0.0, %v2597
    %2599 = vmatmul.bf16.gmra.mxu0 %v2266
    %v2600 = vpop.f32.mrf.mxu0
    %v2601 = vadd.f32 0.0, %v2600
    %v2602 = vpop.f32.mrf.mxu0
    %v2603 = vadd.f32 0.0, %v2602
    %2604 = vmatmul.bf16.gmra.mxu0 %v2265
    %v2605 = vpop.f32.mrf.mxu0
    %v2606 = vadd.f32 0.0, %v2605
    %v2607 = vpop.f32.mrf.mxu0
    %2608 = vdwg.mxu0
    %2609 = vmatpush.bf16.msra.mxu0 %v2408
    %2610 = vmatpush.bf16.msra.mxu0 %v2407
    %2611 = vmatpush.bf16.msra.mxu0 %v2406
    %2612 = vmatpush.bf16.msra.mxu0 %v2405
    %2613 = vmatpush.bf16.msra.mxu0 %v2404
    %2614 = vmatpush.bf16.msra.mxu0 %v2403
    %2615 = vmatpush.bf16.msra.mxu0 %v2402
    %2616 = vmatpush.bf16.msra.mxu0 %v2401
    %2617 = vmatmul.bf16.gmra.mxu0 %v2153
    %v2618 = vpop.f32.mrf.mxu0
    %v2619 = vadd.f32 %v2506, %v2618
    %v2620 = vpop.f32.mrf.mxu0
    %v2621 = vadd.f32 %v2508, %v2620
    %2622 = vmatmul.bf16.gmra.mxu0 %v2160
    %v2623 = vpop.f32.mrf.mxu0
    %v2624 = vadd.f32 %v2511, %v2623
    %v2625 = vpop.f32.mrf.mxu0
    %v2626 = vadd.f32 %v2513, %v2625
    %2627 = vmatmul.bf16.gmra.mxu0 %v2166
    %v2628 = vpop.f32.mrf.mxu0
    %v2629 = vadd.f32 %v2516, %v2628
    %v2630 = vpop.f32.mrf.mxu0
    %v2631 = vadd.f32 %v2518, %v2630
    %2632 = vmatmul.bf16.gmra.mxu0 %v2172
    %v2633 = vpop.f32.mrf.mxu0
    %v2634 = vadd.f32 %v2521, %v2633
    %v2635 = vpop.f32.mrf.mxu0
    %v2636 = vadd.f32 %v2523, %v2635
    %2637 = vmatmul.bf16.gmra.mxu0 %v2178
    %v2638 = vpop.f32.mrf.mxu0
    %v2639 = vadd.f32 %v2526, %v2638
    %v2640 = vpop.f32.mrf.mxu0
    %v2641 = vadd.f32 %v2528, %v2640
    %2642 = vmatmul.bf16.gmra.mxu0 %v2184
    %v2643 = vpop.f32.mrf.mxu0
    %v2644 = vadd.f32 %v2531, %v2643
    %v2645 = vpop.f32.mrf.mxu0
    %v2646 = vadd.f32 %v2533, %v2645
    %2647 = vmatmul.bf16.gmra.mxu0 %v2190
    %v2648 = vpop.f32.mrf.mxu0
    %v2649 = vadd.f32 %v2536, %v2648
    %v2650 = vpop.f32.mrf.mxu0
    %v2651 = vadd.f32 %v2538, %v2650
    %2652 = vmatmul.bf16.gmra.mxu0 %v2196
    %v2653 = vpop.f32.mrf.mxu0
    %v2654 = vadd.f32 %v2541, %v2653
    %v2655 = vpop.f32.mrf.mxu0
    %v2656 = vadd.f32 %v2543, %v2655
    %2657 = vmatmul.bf16.gmra.mxu0 %v2202
    %v2658 = vpop.f32.mrf.mxu0
    %v2659 = vadd.f32 %v2546, %v2658
    %v2660 = vpop.f32.mrf.mxu0
    %v2661 = vadd.f32 %v2548, %v2660
    %2662 = vmatmul.bf16.gmra.mxu0 %v2208
    %v2663 = vpop.f32.mrf.mxu0
    %v2664 = vadd.f32 %v2551, %v2663
    %v2665 = vpop.f32.mrf.mxu0
    %v2666 = vadd.f32 %v2553, %v2665
    %2667 = vmatmul.bf16.gmra.mxu0 %v2214
    %v2668 = vpop.f32.mrf.mxu0
    %v2669 = vadd.f32 %v2556, %v2668
    %v2670 = vpop.f32.mrf.mxu0
    %v2671 = vadd.f32 %v2558, %v2670
    %2672 = vmatmul.bf16.gmra.mxu0 %v2220
    %v2673 = vpop.f32.mrf.mxu0
    %v2674 = vadd.f32 %v2561, %v2673
    %v2675 = vpop.f32.mrf.mxu0
    %v2676 = vadd.f32 %v2563, %v2675
    %2677 = vmatmul.bf16.gmra.mxu0 %v2226
    %v2678 = vpop.f32.mrf.mxu0
    %v2679 = vadd.f32 %v2566, %v2678
    %v2680 = vpop.f32.mrf.mxu0
    %v2681 = vadd.f32 %v2568, %v2680
    %2682 = vmatmul.bf16.gmra.mxu0 %v2232
    %v2683 = vpop.f32.mrf.mxu0
    %v2684 = vadd.f32 %v2571, %v2683
    %v2685 = vpop.f32.mrf.mxu0
    %v2686 = vadd.f32 %v2573, %v2685
    %2687 = vmatmul.bf16.gmra.mxu0 %v2238
    %v2688 = vpop.f32.mrf.mxu0
    %v2689 = vadd.f32 %v2576, %v2688
    %v2690 = vpop.f32.mrf.mxu0
    %v2691 = vadd.f32 %v2578, %v2690
    %2692 = vmatmul.bf16.gmra.mxu0 %v2244
    %v2693 = vpop.f32.mrf.mxu0
    %v2694 = vadd.f32 %v2581, %v2693
    %v2695 = vpop.f32.mrf.mxu0
    %v2696 = vadd.f32 %v2583, %v2695
    %2697 = vmatmul.bf16.gmra.mxu0 %v2250
    %v2698 = vpop.f32.mrf.mxu0
    %v2699 = vadd.f32 %v2586, %v2698
    %v2700 = vpop.f32.mrf.mxu0
    %v2701 = vadd.f32 %v2588, %v2700
    %2702 = vmatmul.bf16.gmra.mxu0 %v2256
    %v2703 = vpop.f32.mrf.mxu0
    %v2704 = vadd.f32 %v2591, %v2703
    %v2705 = vpop.f32.mrf.mxu0
    %v2706 = vadd.f32 %v2593, %v2705
    %2707 = vmatmul.bf16.gmra.mxu0 %v2262
    %v2708 = vpop.f32.mrf.mxu0
    %v2709 = vadd.f32 %v2596, %v2708
    %v2710 = vpop.f32.mrf.mxu0
    %v2711 = vadd.f32 %v2598, %v2710
    %2712 = vmatmul.bf16.gmra.mxu0 %v2268
    %v2713 = vpop.f32.mrf.mxu0
    %v2714 = vadd.f32 %v2601, %v2713
    %v2715 = vpop.f32.mrf.mxu0
    %v2716 = vadd.f32 %v2603, %v2715
    %2717 = vmatmul.bf16.gmra.mxu0 %v2267
    %v2718 = vpop.f32.mrf.mxu0
    %v2719 = vadd.f32 %v2606, %v2718
    %v2720 = vpop.f32.mrf.mxu0
    %2721 = vdwg.mxu0
    %2722 = vmatpush.bf16.msra.mxu0 0
    %2723 = vmatpush.bf16.msra.mxu0 0
    %2724 = vmatpush.bf16.msra.mxu0 0
    %2725 = vmatpush.bf16.msra.mxu0 0
    %2726 = vmatpush.bf16.msra.mxu0 %v2412
    %2727 = vmatpush.bf16.msra.mxu0 %v2411
    %2728 = vmatpush.bf16.msra.mxu0 %v2410
    %2729 = vmatpush.bf16.msra.mxu0 %v2409
    %2730 = vmatmul.bf16.gmra.mxu0 %v2434
    %v2731 = vpop.f32.mrf.mxu0
    %v2732 = vadd.f32 %v2619, %v2731
    %v2733 = vpop.f32.mrf.mxu0
    %v2734 = vadd.f32 %v2621, %v2733
    %2735 = vmatmul.bf16.gmra.mxu0 %v2437
    %v2736 = vpop.f32.mrf.mxu0
    %v2737 = vadd.f32 %v2624, %v2736
    %v2738 = vpop.f32.mrf.mxu0
    %v2739 = vadd.f32 %v2626, %v2738
    %2740 = vmatmul.bf16.gmra.mxu0 %v2440
    %v2741 = vpop.f32.mrf.mxu0
    %v2742 = vadd.f32 %v2629, %v2741
    %v2743 = vpop.f32.mrf.mxu0
    %v2744 = vadd.f32 %v2631, %v2743
    %2745 = vmatmul.bf16.gmra.mxu0 %v2443
    %v2746 = vpop.f32.mrf.mxu0
    %v2747 = vadd.f32 %v2634, %v2746
    %v2748 = vpop.f32.mrf.mxu0
    %v2749 = vadd.f32 %v2636, %v2748
    %2750 = vmatmul.bf16.gmra.mxu0 %v2446
    %v2751 = vpop.f32.mrf.mxu0
    %v2752 = vadd.f32 %v2639, %v2751
    %v2753 = vpop.f32.mrf.mxu0
    %v2754 = vadd.f32 %v2641, %v2753
    %2755 = vmatmul.bf16.gmra.mxu0 %v2449
    %v2756 = vpop.f32.mrf.mxu0
    %v2757 = vadd.f32 %v2644, %v2756
    %v2758 = vpop.f32.mrf.mxu0
    %v2759 = vadd.f32 %v2646, %v2758
    %2760 = vmatmul.bf16.gmra.mxu0 %v2452
    %v2761 = vpop.f32.mrf.mxu0
    %v2762 = vadd.f32 %v2649, %v2761
    %v2763 = vpop.f32.mrf.mxu0
    %v2764 = vadd.f32 %v2651, %v2763
    %2765 = vmatmul.bf16.gmra.mxu0 %v2455
    %v2766 = vpop.f32.mrf.mxu0
    %v2767 = vadd.f32 %v2654, %v2766
    %v2768 = vpop.f32.mrf.mxu0
    %v2769 = vadd.f32 %v2656, %v2768
    %2770 = vmatmul.bf16.gmra.mxu0 %v2458
    %v2771 = vpop.f32.mrf.mxu0
    %v2772 = vadd.f32 %v2659, %v2771
    %v2773 = vpop.f32.mrf.mxu0
    %v2774 = vadd.f32 %v2661, %v2773
    %2775 = vmatmul.bf16.gmra.mxu0 %v2461
    %v2776 = vpop.f32.mrf.mxu0
    %v2777 = vadd.f32 %v2664, %v2776
    %v2778 = vpop.f32.mrf.mxu0
    %v2779 = vadd.f32 %v2666, %v2778
    %2780 = vmatmul.bf16.gmra.mxu0 %v2464
    %v2781 = vpop.f32.mrf.mxu0
    %v2782 = vadd.f32 %v2669, %v2781
    %v2783 = vpop.f32.mrf.mxu0
    %v2784 = vadd.f32 %v2671, %v2783
    %2785 = vmatmul.bf16.gmra.mxu0 %v2467
    %v2786 = vpop.f32.mrf.mxu0
    %v2787 = vadd.f32 %v2674, %v2786
    %v2788 = vpop.f32.mrf.mxu0
    %v2789 = vadd.f32 %v2676, %v2788
    %2790 = vmatmul.bf16.gmra.mxu0 %v2470
    %v2791 = vpop.f32.mrf.mxu0
    %v2792 = vadd.f32 %v2679, %v2791
    %v2793 = vpop.f32.mrf.mxu0
    %v2794 = vadd.f32 %v2681, %v2793
    %2795 = vmatmul.bf16.gmra.mxu0 %v2473
    %v2796 = vpop.f32.mrf.mxu0
    %v2797 = vadd.f32 %v2684, %v2796
    %v2798 = vpop.f32.mrf.mxu0
    %v2799 = vadd.f32 %v2686, %v2798
    %2800 = vmatmul.bf16.gmra.mxu0 %v2476
    %v2801 = vpop.f32.mrf.mxu0
    %v2802 = vadd.f32 %v2689, %v2801
    %v2803 = vpop.f32.mrf.mxu0
    %v2804 = vadd.f32 %v2691, %v2803
    %2805 = vmatmul.bf16.gmra.mxu0 %v2479
    %v2806 = vpop.f32.mrf.mxu0
    %v2807 = vadd.f32 %v2694, %v2806
    %v2808 = vpop.f32.mrf.mxu0
    %v2809 = vadd.f32 %v2696, %v2808
    %2810 = vmatmul.bf16.gmra.mxu0 %v2482
    %v2811 = vpop.f32.mrf.mxu0
    %v2812 = vadd.f32 %v2699, %v2811
    %v2813 = vpop.f32.mrf.mxu0
    %v2814 = vadd.f32 %v2701, %v2813
    %2815 = vmatmul.bf16.gmra.mxu0 %v2485
    %v2816 = vpop.f32.mrf.mxu0
    %v2817 = vadd.f32 %v2704, %v2816
    %v2818 = vpop.f32.mrf.mxu0
    %v2819 = vadd.f32 %v2706, %v2818
    %2820 = vmatmul.bf16.gmra.mxu0 %v2488
    %v2821 = vpop.f32.mrf.mxu0
    %v2822 = vadd.f32 %v2709, %v2821
    %v2823 = vpop.f32.mrf.mxu0
    %v2824 = vadd.f32 %v2711, %v2823
    %2825 = vmatmul.bf16.gmra.mxu0 %v2491
    %v2826 = vpop.f32.mrf.mxu0
    %v2827 = vadd.f32 %v2714, %v2826
    %v2828 = vpop.f32.mrf.mxu0
    %v2829 = vadd.f32 %v2716, %v2828
    %2830 = vmatmul.bf16.gmra.mxu0 %v2494
    %v2831 = vpop.f32.mrf.mxu0
    %v2832 = vadd.f32 %v2719, %v2831
    %v2833 = vpop.f32.mrf.mxu0
    %2834 = vdwg.mxu0
    %v2875 = vunpack.c.l.b16 %v1902
    %v2876 = vunpack.c.l.b16 %v1903
    %v2877 = vunpack.c.l.b16 %v1904
    %v2878 = vunpack.c.l.b16 %v1905
    %v2879 = vunpack.c.l.b16 %v1906
    %v2880 = vunpack.c.l.b16 %v1907
    %v2881 = vunpack.c.l.b16 %v1908
    %v2882 = vunpack.c.l.b16 %v1909
    %v2883 = vunpack.c.l.b16 %v1910
    %v2884 = vunpack.c.l.b16 %v1911
    %v2885 = vunpack.c.l.b16 %v1912
    %v2886 = vunpack.c.l.b16 %v1913
    %v2887 = vunpack.c.l.b16 %v1914
    %v2888 = vunpack.c.l.b16 %v1915
    %v2889 = vunpack.c.l.b16 %v1916
    %v2890 = vunpack.c.l.b16 %v1917
    %v2891 = vunpack.c.l.b16 %v1918
    %v2892 = vunpack.c.l.b16 %v1919
    %v2893 = vunpack.c.l.b16 %v1920
    %v2894 = vunpack.c.l.b16 %v1921
    %v2895 = vunpack.c.l.b16 %v1922
    %v2896 = vunpack.c.l.b16 %v1923
    %v2897 = vunpack.c.l.b16 %v1924
    %v2898 = vunpack.c.l.b16 %v1925
    %v2899 = vunpack.c.l.b16 %v1926
    %v2900 = vunpack.c.l.b16 %v1927
    %v2901 = vunpack.c.l.b16 %v1928
    %v2902 = vunpack.c.l.b16 %v1929
    %v2903 = vunpack.c.l.b16 %v1930
    %v2904 = vunpack.c.l.b16 %v1931
    %v2905 = vunpack.c.l.b16 %v1932
    %v2906 = vunpack.c.l.b16 %v1933
    %v2907 = vunpack.c.l.b16 %v1934
    %v2908 = vunpack.c.l.b16 %v1935
    %v2909 = vunpack.c.l.b16 %v1936
    %v2910 = vunpack.c.l.b16 %v1937
    %v2911 = vunpack.c.l.b16 %v1938
    %v2912 = vunpack.c.l.b16 %v1939
    %v2913 = vunpack.c.l.b16 %v1940
    %v2914 = vunpack.c.l.b16 %v1941
    %v2915 = vpack.c.b16 %v2876, %v2875
    %v2916 = vpack.c.b16 %v2878, %v2877
    %v2917 = vpack.c.b16 %v2880, %v2879
    %v2918 = vpack.c.b16 %v2882, %v2881
    %v2919 = vpack.c.b16 %v2884, %v2883
    %v2920 = vpack.c.b16 %v2886, %v2885
    %v2921 = vpack.c.b16 %v2888, %v2887
    %v2922 = vpack.c.b16 %v2890, %v2889
    %v2923 = vpack.c.b16 %v2892, %v2891
    %v2924 = vpack.c.b16 %v2894, %v2893
    %v2925 = vpack.c.b16 %v2896, %v2895
    %v2926 = vpack.c.b16 %v2898, %v2897
    %v2927 = vpack.c.b16 %v2900, %v2899
    %v2928 = vpack.c.b16 %v2902, %v2901
    %v2929 = vpack.c.b16 %v2904, %v2903
    %v2930 = vpack.c.b16 %v2906, %v2905
    %v2931 = vpack.c.b16 %v2908, %v2907
    %v2932 = vpack.c.b16 %v2910, %v2909
    %v2933 = vpack.c.b16 %v2912, %v2911
    %v2934 = vpack.c.b16 %v2914, %v2913
    %v2956 = vsel %vm242, %v1715, 0
    %v2959 = vsel %vm242, %v1717, 0
    %v2962 = vsel %vm242, %v1719, 0
    %v2965 = vsel %vm242, %v1721, 0
    %v2968 = vsel %vm242, %v1723, 0
    %v2971 = vsel %vm242, %v1725, 0
    %v2974 = vsel %vm242, %v1727, 0
    %v2977 = vsel %vm242, %v1729, 0
    %v2980 = vsel %vm242, %v1731, 0
    %v2983 = vsel %vm242, %v1733, 0
    %v2986 = vsel %vm242, %v1735, 0
    %v2989 = vsel %vm242, %v1737, 0
    %v2992 = vsel %vm242, %v1739, 0
    %v2995 = vsel %vm242, %v1741, 0
    %v2998 = vsel %vm242, %v1743, 0
    %v3001 = vsel %vm242, %v1745, 0
    %v3004 = vsel %vm242, %v1747, 0
    %v3007 = vsel %vm242, %v1749, 0
    %v3010 = vsel %vm242, %v1751, 0
    %v3013 = vsel %vm242, %v1753, 0
    %v3016 = vsel %vm242, %v1752, 0
    %3018 = vmatpush.bf16.msra.mxu0 %v2922
    %3019 = vmatpush.bf16.msra.mxu0 %v2921
    %3020 = vmatpush.bf16.msra.mxu0 %v2920
    %3021 = vmatpush.bf16.msra.mxu0 %v2919
    %3022 = vmatpush.bf16.msra.mxu0 %v2918
    %3023 = vmatpush.bf16.msra.mxu0 %v2917
    %3024 = vmatpush.bf16.msra.mxu0 %v2916
    %3025 = vmatpush.bf16.msra.mxu0 %v2915
    %3026 = vmatmul.bf16.gmra.mxu0 %v1755
    %v3027 = vpop.f32.mrf.mxu0
    %v3028 = vadd.f32 %v2732, %v3027
    %v3029 = vpop.f32.mrf.mxu0
    %v3030 = vadd.f32 %v2734, %v3029
    %3031 = vmatmul.bf16.gmra.mxu0 %v1758
    %v3032 = vpop.f32.mrf.mxu0
    %v3033 = vadd.f32 %v2737, %v3032
    %v3034 = vpop.f32.mrf.mxu0
    %v3035 = vadd.f32 %v2739, %v3034
    %3036 = vmatmul.bf16.gmra.mxu0 %v1761
    %v3037 = vpop.f32.mrf.mxu0
    %v3038 = vadd.f32 %v2742, %v3037
    %v3039 = vpop.f32.mrf.mxu0
    %v3040 = vadd.f32 %v2744, %v3039
    %3041 = vmatmul.bf16.gmra.mxu0 %v1764
    %v3042 = vpop.f32.mrf.mxu0
    %v3043 = vadd.f32 %v2747, %v3042
    %v3044 = vpop.f32.mrf.mxu0
    %v3045 = vadd.f32 %v2749, %v3044
    %3046 = vmatmul.bf16.gmra.mxu0 %v1767
    %v3047 = vpop.f32.mrf.mxu0
    %v3048 = vadd.f32 %v2752, %v3047
    %v3049 = vpop.f32.mrf.mxu0
    %v3050 = vadd.f32 %v2754, %v3049
    %3051 = vmatmul.bf16.gmra.mxu0 %v1770
    %v3052 = vpop.f32.mrf.mxu0
    %v3053 = vadd.f32 %v2757, %v3052
    %v3054 = vpop.f32.mrf.mxu0
    %v3055 = vadd.f32 %v2759, %v3054
    %3056 = vmatmul.bf16.gmra.mxu0 %v1773
    %v3057 = vpop.f32.mrf.mxu0
    %v3058 = vadd.f32 %v2762, %v3057
    %v3059 = vpop.f32.mrf.mxu0
    %v3060 = vadd.f32 %v2764, %v3059
    %3061 = vmatmul.bf16.gmra.mxu0 %v1776
    %v3062 = vpop.f32.mrf.mxu0
    %v3063 = vadd.f32 %v2767, %v3062
    %v3064 = vpop.f32.mrf.mxu0
    %v3065 = vadd.f32 %v2769, %v3064
    %3066 = vmatmul.bf16.gmra.mxu0 %v1779
    %v3067 = vpop.f32.mrf.mxu0
    %v3068 = vadd.f32 %v2772, %v3067
    %v3069 = vpop.f32.mrf.mxu0
    %v3070 = vadd.f32 %v2774, %v3069
    %3071 = vmatmul.bf16.gmra.mxu0 %v1782
    %v3072 = vpop.f32.mrf.mxu0
    %v3073 = vadd.f32 %v2777, %v3072
    %v3074 = vpop.f32.mrf.mxu0
    %v3075 = vadd.f32 %v2779, %v3074
    %3076 = vmatmul.bf16.gmra.mxu0 %v1785
    %v3077 = vpop.f32.mrf.mxu0
    %v3078 = vadd.f32 %v2782, %v3077
    %v3079 = vpop.f32.mrf.mxu0
    %v3080 = vadd.f32 %v2784, %v3079
    %3081 = vmatmul.bf16.gmra.mxu0 %v1788
    %v3082 = vpop.f32.mrf.mxu0
    %v3083 = vadd.f32 %v2787, %v3082
    %v3084 = vpop.f32.mrf.mxu0
    %v3085 = vadd.f32 %v2789, %v3084
    %3086 = vmatmul.bf16.gmra.mxu0 %v1791
    %v3087 = vpop.f32.mrf.mxu0
    %v3088 = vadd.f32 %v2792, %v3087
    %v3089 = vpop.f32.mrf.mxu0
    %v3090 = vadd.f32 %v2794, %v3089
    %3091 = vmatmul.bf16.gmra.mxu0 %v1794
    %v3092 = vpop.f32.mrf.mxu0
    %v3093 = vadd.f32 %v2797, %v3092
    %v3094 = vpop.f32.mrf.mxu0
    %v3095 = vadd.f32 %v2799, %v3094
    %3096 = vmatmul.bf16.gmra.mxu0 %v1797
    %v3097 = vpop.f32.mrf.mxu0
    %v3098 = vadd.f32 %v2802, %v3097
    %v3099 = vpop.f32.mrf.mxu0
    %v3100 = vadd.f32 %v2804, %v3099
    %3101 = vmatmul.bf16.gmra.mxu0 %v1800
    %v3102 = vpop.f32.mrf.mxu0
    %v3103 = vadd.f32 %v2807, %v3102
    %v3104 = vpop.f32.mrf.mxu0
    %v3105 = vadd.f32 %v2809, %v3104
    %3106 = vmatmul.bf16.gmra.mxu0 %v1803
    %v3107 = vpop.f32.mrf.mxu0
    %v3108 = vadd.f32 %v2812, %v3107
    %v3109 = vpop.f32.mrf.mxu0
    %v3110 = vadd.f32 %v2814, %v3109
    %3111 = vmatmul.bf16.gmra.mxu0 %v1806
    %v3112 = vpop.f32.mrf.mxu0
    %v3113 = vadd.f32 %v2817, %v3112
    %v3114 = vpop.f32.mrf.mxu0
    %v3115 = vadd.f32 %v2819, %v3114
    %3116 = vmatmul.bf16.gmra.mxu0 %v1809
    %v3117 = vpop.f32.mrf.mxu0
    %v3118 = vadd.f32 %v2822, %v3117
    %v3119 = vpop.f32.mrf.mxu0
    %v3120 = vadd.f32 %v2824, %v3119
    %3121 = vmatmul.bf16.gmra.mxu0 %v1812
    %v3122 = vpop.f32.mrf.mxu0
    %v3123 = vadd.f32 %v2827, %v3122
    %v3124 = vpop.f32.mrf.mxu0
    %v3125 = vadd.f32 %v2829, %v3124
    %3126 = vmatmul.bf16.gmra.mxu0 %v1816
    %v3127 = vpop.f32.mrf.mxu0
    %v3128 = vadd.f32 %v2832, %v3127
    %v3129 = vpop.f32.mrf.mxu0
    %3130 = vdwg.mxu0
    %3131 = vmatpush.bf16.msra.mxu0 %v2930
    %3132 = vmatpush.bf16.msra.mxu0 %v2929
    %3133 = vmatpush.bf16.msra.mxu0 %v2928
    %3134 = vmatpush.bf16.msra.mxu0 %v2927
    %3135 = vmatpush.bf16.msra.mxu0 %v2926
    %3136 = vmatpush.bf16.msra.mxu0 %v2925
    %3137 = vmatpush.bf16.msra.mxu0 %v2924
    %3138 = vmatpush.bf16.msra.mxu0 %v2923
    %3139 = vmatmul.bf16.gmra.mxu0 %v1820
    %v3140 = vpop.f32.mrf.mxu0
    %v3141 = vadd.f32 %v3028, %v3140
    %v3142 = vpop.f32.mrf.mxu0
    %v3143 = vadd.f32 %v3030, %v3142
    %3144 = vmatmul.bf16.gmra.mxu0 %v1824
    %v3145 = vpop.f32.mrf.mxu0
    %v3146 = vadd.f32 %v3033, %v3145
    %v3147 = vpop.f32.mrf.mxu0
    %v3148 = vadd.f32 %v3035, %v3147
    %3149 = vmatmul.bf16.gmra.mxu0 %v1828
    %v3150 = vpop.f32.mrf.mxu0
    %v3151 = vadd.f32 %v3038, %v3150
    %v3152 = vpop.f32.mrf.mxu0
    %v3153 = vadd.f32 %v3040, %v3152
    %3154 = vmatmul.bf16.gmra.mxu0 %v1832
    %v3155 = vpop.f32.mrf.mxu0
    %v3156 = vadd.f32 %v3043, %v3155
    %v3157 = vpop.f32.mrf.mxu0
    %v3158 = vadd.f32 %v3045, %v3157
    %3159 = vmatmul.bf16.gmra.mxu0 %v1836
    %v3160 = vpop.f32.mrf.mxu0
    %v3161 = vadd.f32 %v3048, %v3160
    %v3162 = vpop.f32.mrf.mxu0
    %v3163 = vadd.f32 %v3050, %v3162
    %3164 = vmatmul.bf16.gmra.mxu0 %v1840
    %v3165 = vpop.f32.mrf.mxu0
    %v3166 = vadd.f32 %v3053, %v3165
    %v3167 = vpop.f32.mrf.mxu0
    %v3168 = vadd.f32 %v3055, %v3167
    %3169 = vmatmul.bf16.gmra.mxu0 %v1844
    %v3170 = vpop.f32.mrf.mxu0
    %v3171 = vadd.f32 %v3058, %v3170
    %v3172 = vpop.f32.mrf.mxu0
    %v3173 = vadd.f32 %v3060, %v3172
    %3174 = vmatmul.bf16.gmra.mxu0 %v1848
    %v3175 = vpop.f32.mrf.mxu0
    %v3176 = vadd.f32 %v3063, %v3175
    %v3177 = vpop.f32.mrf.mxu0
    %v3178 = vadd.f32 %v3065, %v3177
    %3179 = vmatmul.bf16.gmra.mxu0 %v1852
    %v3180 = vpop.f32.mrf.mxu0
    %v3181 = vadd.f32 %v3068, %v3180
    %v3182 = vpop.f32.mrf.mxu0
    %v3183 = vadd.f32 %v3070, %v3182
    %3184 = vmatmul.bf16.gmra.mxu0 %v1856
    %v3185 = vpop.f32.mrf.mxu0
    %v3186 = vadd.f32 %v3073, %v3185
    %v3187 = vpop.f32.mrf.mxu0
    %v3188 = vadd.f32 %v3075, %v3187
    %3189 = vmatmul.bf16.gmra.mxu0 %v1860
    %v3190 = vpop.f32.mrf.mxu0
    %v3191 = vadd.f32 %v3078, %v3190
    %v3192 = vpop.f32.mrf.mxu0
    %v3193 = vadd.f32 %v3080, %v3192
    %3194 = vmatmul.bf16.gmra.mxu0 %v1864
    %v3195 = vpop.f32.mrf.mxu0
    %v3196 = vadd.f32 %v3083, %v3195
    %v3197 = vpop.f32.mrf.mxu0
    %v3198 = vadd.f32 %v3085, %v3197
    %3199 = vmatmul.bf16.gmra.mxu0 %v1868
    %v3200 = vpop.f32.mrf.mxu0
    %v3201 = vadd.f32 %v3088, %v3200
    %v3202 = vpop.f32.mrf.mxu0
    %v3203 = vadd.f32 %v3090, %v3202
    %3204 = vmatmul.bf16.gmra.mxu0 %v1872
    %v3205 = vpop.f32.mrf.mxu0
    %v3206 = vadd.f32 %v3093, %v3205
    %v3207 = vpop.f32.mrf.mxu0
    %v3208 = vadd.f32 %v3095, %v3207
    %3209 = vmatmul.bf16.gmra.mxu0 %v1876
    %v3210 = vpop.f32.mrf.mxu0
    %v3211 = vadd.f32 %v3098, %v3210
    %v3212 = vpop.f32.mrf.mxu0
    %v3213 = vadd.f32 %v3100, %v3212
    %3214 = vmatmul.bf16.gmra.mxu0 %v1880
    %v3215 = vpop.f32.mrf.mxu0
    %v3216 = vadd.f32 %v3103, %v3215
    %v3217 = vpop.f32.mrf.mxu0
    %v3218 = vadd.f32 %v3105, %v3217
    %3219 = vmatmul.bf16.gmra.mxu0 %v1884
    %v3220 = vpop.f32.mrf.mxu0
    %v3221 = vadd.f32 %v3108, %v3220
    %v3222 = vpop.f32.mrf.mxu0
    %v3223 = vadd.f32 %v3110, %v3222
    %3224 = vmatmul.bf16.gmra.mxu0 %v1888
    %v3225 = vpop.f32.mrf.mxu0
    %v3226 = vadd.f32 %v3113, %v3225
    %v3227 = vpop.f32.mrf.mxu0
    %v3228 = vadd.f32 %v3115, %v3227
    %3229 = vmatmul.bf16.gmra.mxu0 %v1892
    %v3230 = vpop.f32.mrf.mxu0
    %v3231 = vadd.f32 %v3118, %v3230
    %v3232 = vpop.f32.mrf.mxu0
    %v3233 = vadd.f32 %v3120, %v3232
    %3234 = vmatmul.bf16.gmra.mxu0 %v1896
    %v3235 = vpop.f32.mrf.mxu0
    %v3236 = vadd.f32 %v3123, %v3235
    %v3237 = vpop.f32.mrf.mxu0
    %v3238 = vadd.f32 %v3125, %v3237
    %3239 = vmatmul.bf16.gmra.mxu0 %v1900
    %v3240 = vpop.f32.mrf.mxu0
    %v3241 = vadd.f32 %v3128, %v3240
    %v3242 = vpop.f32.mrf.mxu0
    %3243 = vdwg.mxu0
    %3244 = vmatpush.bf16.msra.mxu0 0
    %3245 = vmatpush.bf16.msra.mxu0 0
    %3246 = vmatpush.bf16.msra.mxu0 0
    %3247 = vmatpush.bf16.msra.mxu0 0
    %3248 = vmatpush.bf16.msra.mxu0 %v2934
    %3249 = vmatpush.bf16.msra.mxu0 %v2933
    %3250 = vmatpush.bf16.msra.mxu0 %v2932
    %3251 = vmatpush.bf16.msra.mxu0 %v2931
    %3252 = vmatmul.bf16.gmra.mxu0 %v2956
    %v3253 = vpop.f32.mrf.mxu0
    %v3254 = vadd.f32 %v3141, %v3253
    %v3255 = vpop.f32.mrf.mxu0
    %v3256 = vadd.f32 %v3143, %v3255
    %3257 = vmatmul.bf16.gmra.mxu0 %v2959
    %v3258 = vpop.f32.mrf.mxu0
    %v3259 = vadd.f32 %v3146, %v3258
    %v3260 = vpop.f32.mrf.mxu0
    %v3261 = vadd.f32 %v3148, %v3260
    %3262 = vmatmul.bf16.gmra.mxu0 %v2962
    %v3263 = vpop.f32.mrf.mxu0
    %v3264 = vadd.f32 %v3151, %v3263
    %v3265 = vpop.f32.mrf.mxu0
    %v3266 = vadd.f32 %v3153, %v3265
    %3267 = vmatmul.bf16.gmra.mxu0 %v2965
    %v3268 = vpop.f32.mrf.mxu0
    %v3269 = vadd.f32 %v3156, %v3268
    %v3270 = vpop.f32.mrf.mxu0
    %v3271 = vadd.f32 %v3158, %v3270
    %3272 = vmatmul.bf16.gmra.mxu0 %v2968
    %v3273 = vpop.f32.mrf.mxu0
    %v3274 = vadd.f32 %v3161, %v3273
    %v3275 = vpop.f32.mrf.mxu0
    %v3276 = vadd.f32 %v3163, %v3275
    %3277 = vmatmul.bf16.gmra.mxu0 %v2971
    %v3278 = vpop.f32.mrf.mxu0
    %v3279 = vadd.f32 %v3166, %v3278
    %v3280 = vpop.f32.mrf.mxu0
    %v3281 = vadd.f32 %v3168, %v3280
    %3282 = vmatmul.bf16.gmra.mxu0 %v2974
    %v3283 = vpop.f32.mrf.mxu0
    %v3284 = vadd.f32 %v3171, %v3283
    %v3285 = vpop.f32.mrf.mxu0
    %v3286 = vadd.f32 %v3173, %v3285
    %3287 = vmatmul.bf16.gmra.mxu0 %v2977
    %v3288 = vpop.f32.mrf.mxu0
    %v3289 = vadd.f32 %v3176, %v3288
    %v3290 = vpop.f32.mrf.mxu0
    %v3291 = vadd.f32 %v3178, %v3290
    %3292 = vmatmul.bf16.gmra.mxu0 %v2980
    %v3293 = vpop.f32.mrf.mxu0
    %v3294 = vadd.f32 %v3181, %v3293
    %v3295 = vpop.f32.mrf.mxu0
    %v3296 = vadd.f32 %v3183, %v3295
    %3297 = vmatmul.bf16.gmra.mxu0 %v2983
    %v3298 = vpop.f32.mrf.mxu0
    %v3299 = vadd.f32 %v3186, %v3298
    %v3300 = vpop.f32.mrf.mxu0
    %v3301 = vadd.f32 %v3188, %v3300
    %3302 = vmatmul.bf16.gmra.mxu0 %v2986
    %v3303 = vpop.f32.mrf.mxu0
    %v3304 = vadd.f32 %v3191, %v3303
    %v3305 = vpop.f32.mrf.mxu0
    %v3306 = vadd.f32 %v3193, %v3305
    %3307 = vmatmul.bf16.gmra.mxu0 %v2989
    %v3308 = vpop.f32.mrf.mxu0
    %v3309 = vadd.f32 %v3196, %v3308
    %v3310 = vpop.f32.mrf.mxu0
    %v3311 = vadd.f32 %v3198, %v3310
    %3312 = vmatmul.bf16.gmra.mxu0 %v2992
    %v3313 = vpop.f32.mrf.mxu0
    %v3314 = vadd.f32 %v3201, %v3313
    %v3315 = vpop.f32.mrf.mxu0
    %v3316 = vadd.f32 %v3203, %v3315
    %3317 = vmatmul.bf16.gmra.mxu0 %v2995
    %v3318 = vpop.f32.mrf.mxu0
    %v3319 = vadd.f32 %v3206, %v3318
    %v3320 = vpop.f32.mrf.mxu0
    %v3321 = vadd.f32 %v3208, %v3320
    %3322 = vmatmul.bf16.gmra.mxu0 %v2998
    %v3323 = vpop.f32.mrf.mxu0
    %v3324 = vadd.f32 %v3211, %v3323
    %v3325 = vpop.f32.mrf.mxu0
    %v3326 = vadd.f32 %v3213, %v3325
    %3327 = vmatmul.bf16.gmra.mxu0 %v3001
    %v3328 = vpop.f32.mrf.mxu0
    %v3329 = vadd.f32 %v3216, %v3328
    %v3330 = vpop.f32.mrf.mxu0
    %v3331 = vadd.f32 %v3218, %v3330
    %3332 = vmatmul.bf16.gmra.mxu0 %v3004
    %v3333 = vpop.f32.mrf.mxu0
    %v3334 = vadd.f32 %v3221, %v3333
    %v3335 = vpop.f32.mrf.mxu0
    %v3336 = vadd.f32 %v3223, %v3335
    %3337 = vmatmul.bf16.gmra.mxu0 %v3007
    %v3338 = vpop.f32.mrf.mxu0
    %v3339 = vadd.f32 %v3226, %v3338
    %v3340 = vpop.f32.mrf.mxu0
    %v3341 = vadd.f32 %v3228, %v3340
    %3342 = vmatmul.bf16.gmra.mxu0 %v3010
    %v3343 = vpop.f32.mrf.mxu0
    %v3344 = vadd.f32 %v3231, %v3343
    %v3345 = vpop.f32.mrf.mxu0
    %v3346 = vadd.f32 %v3233, %v3345
    %3347 = vmatmul.bf16.gmra.mxu0 %v3013
    %v3348 = vpop.f32.mrf.mxu0
    %v3349 = vadd.f32 %v3236, %v3348
    %v3350 = vpop.f32.mrf.mxu0
    %v3351 = vadd.f32 %v3238, %v3350
    %3352 = vmatmul.bf16.gmra.mxu0 %v3016
    %v3353 = vpop.f32.mrf.mxu0
    %v3354 = vadd.f32 %v3241, %v3353
    %v3355 = vpop.f32.mrf.mxu0
    %3356 = vdwg.mxu0
    %v3357 = vld [vmem:[#allocation2 + $0x10] sm:$0xc]
    %v3358 = vld [vmem:[#allocation2 + $0x14] sm:$0xf]
    %v3359 = vld [vmem:[#allocation2 + $0x18] sm:$0xf]
    %v3360 = vld [vmem:[#allocation2 + $0x1c] sm:$0xf]
    %v3361 = vld [vmem:[#allocation2 + $0x20] sm:$0xf]
    %v3362 = vld [vmem:[#allocation2 + $0x24] sm:$0xf]
    %v3363 = vld [vmem:[#allocation2 + $0x28] sm:$0xf]
    %v3364 = vld [vmem:[#allocation2 + $0x2c] sm:$0xf]
    %v3365 = vld [vmem:[#allocation2 + $0x30] sm:$0xf]
    %v3366 = vld [vmem:[#allocation2 + $0x34] sm:$0xf]
    %v3367 = vld [vmem:[#allocation2 + $0x38] sm:$0xf]
    %v3368 = vld [vmem:[#allocation2 + $0x3c] sm:$0xf]
    %v3369 = vld [vmem:[#allocation2 + $0x40] sm:$0xf]
    %v3370 = vld [vmem:[#allocation2 + $0x44] sm:$0xf]
    %v3371 = vld [vmem:[#allocation2 + $0x48] sm:$0xf]
    %v3372 = vld [vmem:[#allocation2 + $0x4c] sm:$0xf]
    %v3373 = vld [vmem:[#allocation2 + $0x50] sm:$0xf]
    %v3374 = vld [vmem:[#allocation2 + $0x54] sm:$0xf]
    %v3375 = vld [vmem:[#allocation2 + $0x58] sm:$0xf]
    %v3376 = vld [vmem:[#allocation2 + $0x5c] sm:$0xf]
    %v3377 = vld [vmem:[#allocation2 + $0x60] sm:$0xf]
    %v3378 = vld [vmem:[#allocation2 + $0x64] sm:$0xf]
    %v3379 = vld [vmem:[#allocation2 + $0x68] sm:$0xf]
    %v3380 = vld [vmem:[#allocation2 + $0x6c] sm:$0xf]
    %v3381 = vld [vmem:[#allocation2 + $0x70] sm:$0xf]
    %v3382 = vld [vmem:[#allocation2 + $0x74] sm:$0xf]
    %v3383 = vld [vmem:[#allocation2 + $0x78] sm:$0xf]
    %v3384 = vld [vmem:[#allocation2 + $0x7c] sm:$0xf]
    %v3385 = vld [vmem:[#allocation2 + $0x80] sm:$0xf]
    %v3386 = vld [vmem:[#allocation2 + $0x84] sm:$0xf]
    %v3387 = vld [vmem:[#allocation2 + $0x88] sm:$0xf]
    %v3388 = vld [vmem:[#allocation2 + $0x8c] sm:$0xf]
    %v3389 = vld [vmem:[#allocation2 + $0x90] sm:$0xf]
    %v3390 = vld [vmem:[#allocation2 + $0x94] sm:$0xf]
    %v3391 = vld [vmem:[#allocation2 + $0x98] sm:$0xf]
    %v3392 = vld [vmem:[#allocation2 + $0x9c] sm:$0xf]
    %v3393 = vld [vmem:[#allocation2 + $0xa0] sm:$0xf]
    %v3394 = vld [vmem:[#allocation2 + $0xa4] sm:$0xf]
    %v3395 = vld [vmem:[#allocation2 + $0xa8] sm:$0xf]
    %v3396 = vld [vmem:[#allocation2 + $0xac] sm:$0xf]
    %v3397 = vld [vmem:[#allocation2 + $0xb0] sm:$0xf]
    %v3398 = vld [vmem:[#allocation2 + $0xb4] sm:$0x1]
    %v3399 = vld [vmem:[#allocation2 + $0x10] sm:$0x8]
    %v3400 = vld [vmem:[#allocation2 + $0xb4] sm:$0x3]
    %v3442 = vunpack.c.l.b16 %v3357
    %v3443 = vunpack.c.l.b16 %v3358
    %v3444 = vunpack.c.l.b16 %v3359
    %v3445 = vunpack.c.l.b16 %v3360
    %v3446 = vunpack.c.l.b16 %v3361
    %v3447 = vunpack.c.l.b16 %v3362
    %v3448 = vunpack.c.l.b16 %v3363
    %v3449 = vunpack.c.l.b16 %v3364
    %v3450 = vunpack.c.l.b16 %v3365
    %v3451 = vunpack.c.l.b16 %v3366
    %v3452 = vunpack.c.l.b16 %v3367
    %v3453 = vunpack.c.l.b16 %v3368
    %v3454 = vunpack.c.l.b16 %v3369
    %v3455 = vunpack.c.l.b16 %v3370
    %v3456 = vunpack.c.l.b16 %v3371
    %v3457 = vunpack.c.l.b16 %v3372
    %v3458 = vunpack.c.l.b16 %v3373
    %v3459 = vunpack.c.l.b16 %v3374
    %v3460 = vunpack.c.l.b16 %v3375
    %v3461 = vunpack.c.l.b16 %v3376
    %v3462 = vunpack.c.l.b16 %v3377
    %v3463 = vunpack.c.l.b16 %v3378
    %v3464 = vunpack.c.l.b16 %v3379
    %v3465 = vunpack.c.l.b16 %v3380
    %v3466 = vunpack.c.l.b16 %v3381
    %v3467 = vunpack.c.l.b16 %v3382
    %v3468 = vunpack.c.l.b16 %v3383
    %v3469 = vunpack.c.l.b16 %v3384
    %v3470 = vunpack.c.l.b16 %v3385
    %v3471 = vunpack.c.l.b16 %v3386
    %v3472 = vunpack.c.l.b16 %v3387
    %v3473 = vunpack.c.l.b16 %v3388
    %v3474 = vunpack.c.l.b16 %v3389
    %v3475 = vunpack.c.l.b16 %v3390
    %v3476 = vunpack.c.l.b16 %v3391
    %v3477 = vunpack.c.l.b16 %v3392
    %v3478 = vunpack.c.l.b16 %v3393
    %v3479 = vunpack.c.l.b16 %v3394
    %v3480 = vunpack.c.l.b16 %v3395
    %v3481 = vunpack.c.l.b16 %v3396
    %v3482 = vunpack.c.l.b16 %v3397
    %v3483 = vpack.c.b16 %v3443, %v3442
    %v3484 = vpack.c.b16 %v3445, %v3444
    %v3485 = vpack.c.b16 %v3447, %v3446
    %v3486 = vpack.c.b16 %v3449, %v3448
    %v3487 = vpack.c.b16 %v3451, %v3450
    %v3488 = vpack.c.b16 %v3453, %v3452
    %v3489 = vpack.c.b16 %v3455, %v3454
    %v3490 = vpack.c.b16 %v3457, %v3456
    %v3491 = vpack.c.b16 %v3459, %v3458
    %v3492 = vpack.c.b16 %v3461, %v3460
    %v3493 = vpack.c.b16 %v3463, %v3462
    %v3494 = vpack.c.b16 %v3465, %v3464
    %v3495 = vpack.c.b16 %v3467, %v3466
    %v3496 = vpack.c.b16 %v3469, %v3468
    %v3497 = vpack.c.b16 %v3471, %v3470
    %v3498 = vpack.c.b16 %v3473, %v3472
    %v3499 = vpack.c.b16 %v3475, %v3474
    %v3500 = vpack.c.b16 %v3477, %v3476
    %v3501 = vpack.c.b16 %v3479, %v3478
    %v3502 = vpack.c.b16 %v3481, %v3480
    %v3503 = vpack.c.b16 %v3482, %v3482
    %v3505 = vunpack.c.l.b16 %v3398
    %v3506 = vpack.c.b16 %v3505, %v3482
    %v3508 = vshrl.u32 %v3483, 16
    %v3510 = vshll.u32 %v3483, 16
    %v3512 = vrot.slane %v3510, 1
    %v3513 = vor.u32 %v3508, %v3512
    %v3515 = vshll.u32 %v3484, 16
    %v3517 = vrot.slane %v3515, 1
    %v3518 = vsel %vm1315, %v3513, %v3517
    %v3519 = vshrl.u32 %v3484, 16
    %v3521 = vor.u32 %v3519, %v3517
    %v3523 = vshll.u32 %v3485, 16
    %v3525 = vrot.slane %v3523, 1
    %v3526 = vsel %vm1315, %v3521, %v3525
    %v3527 = vshrl.u32 %v3485, 16
    %v3529 = vor.u32 %v3527, %v3525
    %v3531 = vshll.u32 %v3486, 16
    %v3533 = vrot.slane %v3531, 1
    %v3534 = vsel %vm1315, %v3529, %v3533
    %v3535 = vshrl.u32 %v3486, 16
    %v3537 = vor.u32 %v3535, %v3533
    %v3539 = vshll.u32 %v3487, 16
    %v3541 = vrot.slane %v3539, 1
    %v3542 = vsel %vm1315, %v3537, %v3541
    %v3543 = vshrl.u32 %v3487, 16
    %v3545 = vor.u32 %v3543, %v3541
    %v3547 = vshll.u32 %v3488, 16
    %v3549 = vrot.slane %v3547, 1
    %v3550 = vsel %vm1315, %v3545, %v3549
    %v3551 = vshrl.u32 %v3488, 16
    %v3553 = vor.u32 %v3551, %v3549
    %v3555 = vshll.u32 %v3489, 16
    %v3557 = vrot.slane %v3555, 1
    %v3558 = vsel %vm1315, %v3553, %v3557
    %v3559 = vshrl.u32 %v3489, 16
    %v3561 = vor.u32 %v3559, %v3557
    %v3563 = vshll.u32 %v3490, 16
    %v3565 = vrot.slane %v3563, 1
    %v3566 = vsel %vm1315, %v3561, %v3565
    %v3567 = vshrl.u32 %v3490, 16
    %v3569 = vor.u32 %v3567, %v3565
    %v3571 = vshll.u32 %v3491, 16
    %v3573 = vrot.slane %v3571, 1
    %v3574 = vsel %vm1315, %v3569, %v3573
    %v3575 = vshrl.u32 %v3491, 16
    %v3577 = vor.u32 %v3575, %v3573
    %v3579 = vshll.u32 %v3492, 16
    %v3581 = vrot.slane %v3579, 1
    %v3582 = vsel %vm1315, %v3577, %v3581
    %v3583 = vshrl.u32 %v3492, 16
    %v3585 = vor.u32 %v3583, %v3581
    %v3587 = vshll.u32 %v3493, 16
    %v3589 = vrot.slane %v3587, 1
    %v3590 = vsel %vm1315, %v3585, %v3589
    %v3591 = vshrl.u32 %v3493, 16
    %v3593 = vor.u32 %v3591, %v3589
    %v3595 = vshll.u32 %v3494, 16
    %v3597 = vrot.slane %v3595, 1
    %v3598 = vsel %vm1315, %v3593, %v3597
    %v3599 = vshrl.u32 %v3494, 16
    %v3601 = vor.u32 %v3599, %v3597
    %v3603 = vshll.u32 %v3495, 16
    %v3605 = vrot.slane %v3603, 1
    %v3606 = vsel %vm1315, %v3601, %v3605
    %v3607 = vshrl.u32 %v3495, 16
    %v3609 = vor.u32 %v3607, %v3605
    %v3611 = vshll.u32 %v3496, 16
    %v3613 = vrot.slane %v3611, 1
    %v3614 = vsel %vm1315, %v3609, %v3613
    %v3615 = vshrl.u32 %v3496, 16
    %v3617 = vor.u32 %v3615, %v3613
    %v3619 = vshll.u32 %v3497, 16
    %v3621 = vrot.slane %v3619, 1
    %v3622 = vsel %vm1315, %v3617, %v3621
    %v3623 = vshrl.u32 %v3497, 16
    %v3625 = vor.u32 %v3623, %v3621
    %v3627 = vshll.u32 %v3498, 16
    %v3629 = vrot.slane %v3627, 1
    %v3630 = vsel %vm1315, %v3625, %v3629
    %v3631 = vshrl.u32 %v3498, 16
    %v3633 = vor.u32 %v3631, %v3629
    %v3635 = vshll.u32 %v3499, 16
    %v3637 = vrot.slane %v3635, 1
    %v3638 = vsel %vm1315, %v3633, %v3637
    %v3639 = vshrl.u32 %v3499, 16
    %v3641 = vor.u32 %v3639, %v3637
    %v3643 = vshll.u32 %v3500, 16
    %v3645 = vrot.slane %v3643, 1
    %v3646 = vsel %vm1315, %v3641, %v3645
    %v3647 = vshrl.u32 %v3500, 16
    %v3649 = vor.u32 %v3647, %v3645
    %v3651 = vshll.u32 %v3501, 16
    %v3653 = vrot.slane %v3651, 1
    %v3654 = vsel %vm1315, %v3649, %v3653
    %v3655 = vshrl.u32 %v3501, 16
    %v3657 = vor.u32 %v3655, %v3653
    %v3659 = vshll.u32 %v3502, 16
    %v3661 = vrot.slane %v3659, 1
    %v3662 = vsel %vm1315, %v3657, %v3661
    %v3663 = vshrl.u32 %v3502, 16
    %v3665 = vor.u32 %v3663, %v3661
    %v3667 = vshll.u32 %v3506, 16
    %v3669 = vrot.slane %v3667, 1
    %v3670 = vsel %vm1315, %v3665, %v3669
    %v3671 = vshrl.u32 %v3506, 16
    %v3673 = vor.u32 %v3671, %v3669
    %3674 = vrot.lane.b32.xlu0 %v3518, 64
    %v3675 = vpop.permute.xlu0 %3674
    %3676 = vrot.lane.b32.xlu0 %v3526, 64
    %v3677 = vpop.permute.xlu0 %3676
    %3678 = vrot.lane.b32.xlu0 %v3534, 64
    %v3679 = vpop.permute.xlu0 %3678
    %3680 = vrot.lane.b32.xlu0 %v3542, 64
    %v3681 = vpop.permute.xlu0 %3680
    %3682 = vrot.lane.b32.xlu0 %v3550, 64
    %v3683 = vpop.permute.xlu0 %3682
    %3684 = vrot.lane.b32.xlu0 %v3558, 64
    %v3685 = vpop.permute.xlu0 %3684
    %3686 = vrot.lane.b32.xlu0 %v3566, 64
    %v3687 = vpop.permute.xlu0 %3686
    %3688 = vrot.lane.b32.xlu0 %v3574, 64
    %v3689 = vpop.permute.xlu0 %3688
    %3690 = vrot.lane.b32.xlu0 %v3582, 64
    %v3691 = vpop.permute.xlu0 %3690
    %3692 = vrot.lane.b32.xlu0 %v3590, 64
    %v3693 = vpop.permute.xlu0 %3692
    %3694 = vrot.lane.b32.xlu0 %v3598, 64
    %v3695 = vpop.permute.xlu0 %3694
    %3696 = vrot.lane.b32.xlu0 %v3606, 64
    %v3697 = vpop.permute.xlu0 %3696
    %3698 = vrot.lane.b32.xlu0 %v3614, 64
    %v3699 = vpop.permute.xlu0 %3698
    %3700 = vrot.lane.b32.xlu0 %v3622, 64
    %v3701 = vpop.permute.xlu0 %3700
    %3702 = vrot.lane.b32.xlu0 %v3630, 64
    %v3703 = vpop.permute.xlu0 %3702
    %3704 = vrot.lane.b32.xlu0 %v3638, 64
    %v3705 = vpop.permute.xlu0 %3704
    %3706 = vrot.lane.b32.xlu0 %v3646, 64
    %v3707 = vpop.permute.xlu0 %3706
    %3708 = vrot.lane.b32.xlu0 %v3654, 64
    %v3709 = vpop.permute.xlu0 %3708
    %3710 = vrot.lane.b32.xlu0 %v3662, 64
    %v3711 = vpop.permute.xlu0 %3710
    %3712 = vrot.lane.b32.xlu0 %v3670, 64
    %v3713 = vpop.permute.xlu0 %3712
    %3714 = vrot.lane.b32.xlu0 %v3673, 64
    %v3715 = vpop.permute.xlu0 %3714
    %v3717 = vunpack.c.l.b16 %v3399
    %v3718 = vpack.c.b16 %v3443, %v3717
    %v3719 = vrot.slane %v3718, 1
    %v3720 = vrot.slane %v3484, 1
    %v3721 = vsel %vm1528, %v3719, %v3720
    %v3722 = vrot.slane %v3485, 1
    %v3723 = vsel %vm1528, %v3720, %v3722
    %v3724 = vrot.slane %v3486, 1
    %v3725 = vsel %vm1528, %v3722, %v3724
    %v3726 = vrot.slane %v3487, 1
    %v3727 = vsel %vm1528, %v3724, %v3726
    %v3728 = vrot.slane %v3488, 1
    %v3729 = vsel %vm1528, %v3726, %v3728
    %v3730 = vrot.slane %v3489, 1
    %v3731 = vsel %vm1528, %v3728, %v3730
    %v3732 = vrot.slane %v3490, 1
    %v3733 = vsel %vm1528, %v3730, %v3732
    %v3734 = vrot.slane %v3491, 1
    %v3735 = vsel %vm1528, %v3732, %v3734
    %v3736 = vrot.slane %v3492, 1
    %v3737 = vsel %vm1528, %v3734, %v3736
    %v3738 = vrot.slane %v3493, 1
    %v3739 = vsel %vm1528, %v3736, %v3738
    %v3740 = vrot.slane %v3494, 1
    %v3741 = vsel %vm1528, %v3738, %v3740
    %v3742 = vrot.slane %v3495, 1
    %v3743 = vsel %vm1528, %v3740, %v3742
    %v3744 = vrot.slane %v3496, 1
    %v3745 = vsel %vm1528, %v3742, %v3744
    %v3746 = vrot.slane %v3497, 1
    %v3747 = vsel %vm1528, %v3744, %v3746
    %v3748 = vrot.slane %v3498, 1
    %v3749 = vsel %vm1528, %v3746, %v3748
    %v3750 = vrot.slane %v3499, 1
    %v3751 = vsel %vm1528, %v3748, %v3750
    %v3752 = vrot.slane %v3500, 1
    %v3753 = vsel %vm1528, %v3750, %v3752
    %v3754 = vrot.slane %v3501, 1
    %v3755 = vsel %vm1528, %v3752, %v3754
    %v3756 = vrot.slane %v3502, 1
    %v3757 = vsel %vm1528, %v3754, %v3756
    %v3758 = vrot.slane %v3506, 1
    %v3759 = vsel %vm1528, %v3756, %v3758
    %v3761 = vunpack.c.l.b16 %v3400
    %v3762 = vpack.c.b16 %v3761, %v3482
    %v3764 = vshrl.u32 %v3718, 16
    %v3766 = vrot.slane %v3764, 1
    %v3767 = vshll.u32 %v3718, 16
    %v3769 = vrot.slane %v3767, 2
    %v3770 = vor.u32 %v3766, %v3769
    %v3771 = vrot.slane %v3519, 1
    %v3772 = vrot.slane %v3515, 2
    %v3773 = vor.u32 %v3771, %v3772
    %v3774 = vsel %vm1573, %v3770, %v3773
    %v3775 = vrot.slane %v3527, 1
    %v3776 = vrot.slane %v3523, 2
    %v3777 = vor.u32 %v3775, %v3776
    %v3778 = vsel %vm1573, %v3773, %v3777
    %v3779 = vrot.slane %v3535, 1
    %v3780 = vrot.slane %v3531, 2
    %v3781 = vor.u32 %v3779, %v3780
    %v3782 = vsel %vm1573, %v3777, %v3781
    %v3783 = vrot.slane %v3543, 1
    %v3784 = vrot.slane %v3539, 2
    %v3785 = vor.u32 %v3783, %v3784
    %v3786 = vsel %vm1573, %v3781, %v3785
    %v3787 = vrot.slane %v3551, 1
    %v3788 = vrot.slane %v3547, 2
    %v3789 = vor.u32 %v3787, %v3788
    %v3790 = vsel %vm1573, %v3785, %v3789
    %v3791 = vrot.slane %v3559, 1
    %v3792 = vrot.slane %v3555, 2
    %v3793 = vor.u32 %v3791, %v3792
    %v3794 = vsel %vm1573, %v3789, %v3793
    %v3795 = vrot.slane %v3567, 1
    %v3796 = vrot.slane %v3563, 2
    %v3797 = vor.u32 %v3795, %v3796
    %v3798 = vsel %vm1573, %v3793, %v3797
    %v3799 = vrot.slane %v3575, 1
    %v3800 = vrot.slane %v3571, 2
    %v3801 = vor.u32 %v3799, %v3800
    %v3802 = vsel %vm1573, %v3797, %v3801
    %v3803 = vrot.slane %v3583, 1
    %v3804 = vrot.slane %v3579, 2
    %v3805 = vor.u32 %v3803, %v3804
    %v3806 = vsel %vm1573, %v3801, %v3805
    %v3807 = vrot.slane %v3591, 1
    %v3808 = vrot.slane %v3587, 2
    %v3809 = vor.u32 %v3807, %v3808
    %v3810 = vsel %vm1573, %v3805, %v3809
    %v3811 = vrot.slane %v3599, 1
    %v3812 = vrot.slane %v3595, 2
    %v3813 = vor.u32 %v3811, %v3812
    %v3814 = vsel %vm1573, %v3809, %v3813
    %v3815 = vrot.slane %v3607, 1
    %v3816 = vrot.slane %v3603, 2
    %v3817 = vor.u32 %v3815, %v3816
    %v3818 = vsel %vm1573, %v3813, %v3817
    %v3819 = vrot.slane %v3615, 1
    %v3820 = vrot.slane %v3611, 2
    %v3821 = vor.u32 %v3819, %v3820
    %v3822 = vsel %vm1573, %v3817, %v3821
    %v3823 = vrot.slane %v3623, 1
    %v3824 = vrot.slane %v3619, 2
    %v3825 = vor.u32 %v3823, %v3824
    %v3826 = vsel %vm1573, %v3821, %v3825
    %v3827 = vrot.slane %v3631, 1
    %v3828 = vrot.slane %v3627, 2
    %v3829 = vor.u32 %v3827, %v3828
    %v3830 = vsel %vm1573, %v3825, %v3829
    %v3831 = vrot.slane %v3639, 1
    %v3832 = vrot.slane %v3635, 2
    %v3833 = vor.u32 %v3831, %v3832
    %v3834 = vsel %vm1573, %v3829, %v3833
    %v3835 = vrot.slane %v3647, 1
    %v3836 = vrot.slane %v3643, 2
    %v3837 = vor.u32 %v3835, %v3836
    %v3838 = vsel %vm1573, %v3833, %v3837
    %v3839 = vrot.slane %v3655, 1
    %v3840 = vrot.slane %v3651, 2
    %v3841 = vor.u32 %v3839, %v3840
    %v3842 = vsel %vm1573, %v3837, %v3841
    %v3843 = vrot.slane %v3663, 1
    %v3844 = vrot.slane %v3659, 2
    %v3845 = vor.u32 %v3843, %v3844
    %v3846 = vsel %vm1573, %v3841, %v3845
    %v3848 = vshrl.u32 %v3762, 16
    %v3850 = vrot.slane %v3848, 1
    %v3851 = vshll.u32 %v3762, 16
    %v3853 = vrot.slane %v3851, 2
    %v3854 = vor.u32 %v3850, %v3853
    %v3855 = vsel %vm1573, %v3845, %v3854
    %3856 = vrot.lane.b32.xlu0 %v3774, 64
    %v3857 = vpop.permute.xlu0 %3856
    %3858 = vrot.lane.b32.xlu0 %v3778, 64
    %v3859 = vpop.permute.xlu0 %3858
    %3860 = vrot.lane.b32.xlu0 %v3782, 64
    %v3861 = vpop.permute.xlu0 %3860
    %3862 = vrot.lane.b32.xlu0 %v3786, 64
    %v3863 = vpop.permute.xlu0 %3862
    %3864 = vrot.lane.b32.xlu0 %v3790, 64
    %v3865 = vpop.permute.xlu0 %3864
    %3866 = vrot.lane.b32.xlu0 %v3794, 64
    %v3867 = vpop.permute.xlu0 %3866
    %3868 = vrot.lane.b32.xlu0 %v3798, 64
    %v3869 = vpop.permute.xlu0 %3868
    %3870 = vrot.lane.b32.xlu0 %v3802, 64
    %v3871 = vpop.permute.xlu0 %3870
    %3872 = vrot.lane.b32.xlu0 %v3806, 64
    %v3873 = vpop.permute.xlu0 %3872
    %3874 = vrot.lane.b32.xlu0 %v3810, 64
    %v3875 = vpop.permute.xlu0 %3874
    %3876 = vrot.lane.b32.xlu0 %v3814, 64
    %v3877 = vpop.permute.xlu0 %3876
    %3878 = vrot.lane.b32.xlu0 %v3818, 64
    %v3879 = vpop.permute.xlu0 %3878
    %3880 = vrot.lane.b32.xlu0 %v3822, 64
    %v3881 = vpop.permute.xlu0 %3880
    %3882 = vrot.lane.b32.xlu0 %v3826, 64
    %v3883 = vpop.permute.xlu0 %3882
    %3884 = vrot.lane.b32.xlu0 %v3830, 64
    %v3885 = vpop.permute.xlu0 %3884
    %3886 = vrot.lane.b32.xlu0 %v3834, 64
    %v3887 = vpop.permute.xlu0 %3886
    %3888 = vrot.lane.b32.xlu0 %v3838, 64
    %v3889 = vpop.permute.xlu0 %3888
    %3890 = vrot.lane.b32.xlu0 %v3842, 64
    %v3891 = vpop.permute.xlu0 %3890
    %3892 = vrot.lane.b32.xlu0 %v3846, 64
    %v3893 = vpop.permute.xlu0 %3892
    %3894 = vrot.lane.b32.xlu0 %v3855, 64
    %v3895 = vpop.permute.xlu0 %3894
    %3896 = vrot.lane.b32.xlu0 %v3854, 64
    %v3897 = vpop.permute.xlu0 %3896
    %v3898 = vpack.c.b16 %v3444, %v3443
    %v3899 = vpack.c.b16 %v3446, %v3445
    %v3900 = vpack.c.b16 %v3448, %v3447
    %v3901 = vpack.c.b16 %v3450, %v3449
    %v3902 = vpack.c.b16 %v3452, %v3451
    %v3903 = vpack.c.b16 %v3454, %v3453
    %v3904 = vpack.c.b16 %v3456, %v3455
    %v3905 = vpack.c.b16 %v3458, %v3457
    %v3906 = vpack.c.b16 %v3460, %v3459
    %v3907 = vpack.c.b16 %v3462, %v3461
    %v3908 = vpack.c.b16 %v3464, %v3463
    %v3909 = vpack.c.b16 %v3466, %v3465
    %v3910 = vpack.c.b16 %v3468, %v3467
    %v3911 = vpack.c.b16 %v3470, %v3469
    %v3912 = vpack.c.b16 %v3472, %v3471
    %v3913 = vpack.c.b16 %v3474, %v3473
    %v3914 = vpack.c.b16 %v3476, %v3475
    %v3915 = vpack.c.b16 %v3478, %v3477
    %v3916 = vpack.c.b16 %v3480, %v3479
    %v3917 = vpack.c.b16 %v3482, %v3481
    %v3918 = vpack.c.b16 %v3761, %v3761
    %vm3919 = vcmask 1041408
    %v3920 = vrot.slane %v3898, 6
    %v3921 = vrot.slane %v3899, 6
    %v3922 = vsel %vm3919, %v3920, %v3921
    %v3923 = vrot.slane %v3900, 6
    %v3924 = vsel %vm3919, %v3921, %v3923
    %v3925 = vrot.slane %v3901, 6
    %v3926 = vsel %vm3919, %v3923, %v3925
    %v3927 = vrot.slane %v3902, 6
    %v3928 = vsel %vm3919, %v3925, %v3927
    %v3929 = vrot.slane %v3903, 6
    %v3930 = vsel %vm3919, %v3927, %v3929
    %v3931 = vrot.slane %v3904, 6
    %v3932 = vsel %vm3919, %v3929, %v3931
    %v3933 = vrot.slane %v3905, 6
    %v3934 = vsel %vm3919, %v3931, %v3933
    %v3935 = vrot.slane %v3906, 6
    %v3936 = vsel %vm3919, %v3933, %v3935
    %v3937 = vrot.slane %v3907, 6
    %v3938 = vsel %vm3919, %v3935, %v3937
    %v3939 = vrot.slane %v3908, 6
    %v3940 = vsel %vm3919, %v3937, %v3939
    %v3941 = vrot.slane %v3909, 6
    %v3942 = vsel %vm3919, %v3939, %v3941
    %v3943 = vrot.slane %v3910, 6
    %v3944 = vsel %vm3919, %v3941, %v3943
    %v3945 = vrot.slane %v3911, 6
    %v3946 = vsel %vm3919, %v3943, %v3945
    %v3947 = vrot.slane %v3912, 6
    %v3948 = vsel %vm3919, %v3945, %v3947
    %v3949 = vrot.slane %v3913, 6
    %v3950 = vsel %vm3919, %v3947, %v3949
    %v3951 = vrot.slane %v3914, 6
    %v3952 = vsel %vm3919, %v3949, %v3951
    %v3953 = vrot.slane %v3915, 6
    %v3954 = vsel %vm3919, %v3951, %v3953
    %v3955 = vrot.slane %v3916, 6
    %v3956 = vsel %vm3919, %v3953, %v3955
    %v3957 = vrot.slane %v3917, 6
    %v3958 = vsel %vm3919, %v3955, %v3957
    %v3959 = vrot.slane %v3918, 6
    %v3960 = vsel %vm3919, %v3957, %v3959
    %v3962 = vsel %vm242, %v3483, %v3675
    %v3964 = vsel %vm242, %v3484, %v3677
    %v3966 = vsel %vm242, %v3485, %v3679
    %v3968 = vsel %vm242, %v3486, %v3681
    %v3970 = vsel %vm242, %v3487, %v3683
    %v3972 = vsel %vm242, %v3488, %v3685
    %v3974 = vsel %vm242, %v3489, %v3687
    %v3976 = vsel %vm242, %v3490, %v3689
    %v3978 = vsel %vm242, %v3491, %v3691
    %v3980 = vsel %vm242, %v3492, %v3693
    %v3982 = vsel %vm242, %v3493, %v3695
    %v3984 = vsel %vm242, %v3494, %v3697
    %v3986 = vsel %vm242, %v3495, %v3699
    %v3988 = vsel %vm242, %v3496, %v3701
    %v3990 = vsel %vm242, %v3497, %v3703
    %v3992 = vsel %vm242, %v3498, %v3705
    %v3994 = vsel %vm242, %v3499, %v3707
    %v3996 = vsel %vm242, %v3500, %v3709
    %v3998 = vsel %vm242, %v3501, %v3711
    %v4000 = vsel %vm242, %v3502, %v3713
    %v4003 = vsel %vm242, %v3503, %v3715
    %v4006 = vsel %vm242, %v3721, %v3857
    %v4009 = vsel %vm242, %v3723, %v3859
    %v4012 = vsel %vm242, %v3725, %v3861
    %v4015 = vsel %vm242, %v3727, %v3863
    %v4018 = vsel %vm242, %v3729, %v3865
    %v4021 = vsel %vm242, %v3731, %v3867
    %v4024 = vsel %vm242, %v3733, %v3869
    %v4027 = vsel %vm242, %v3735, %v3871
    %v4030 = vsel %vm242, %v3737, %v3873
    %v4033 = vsel %vm242, %v3739, %v3875
    %v4036 = vsel %vm242, %v3741, %v3877
    %v4039 = vsel %vm242, %v3743, %v3879
    %v4042 = vsel %vm242, %v3745, %v3881
    %v4045 = vsel %vm242, %v3747, %v3883
    %v4048 = vsel %vm242, %v3749, %v3885
    %v4051 = vsel %vm242, %v3751, %v3887
    %v4054 = vsel %vm242, %v3753, %v3889
    %v4057 = vsel %vm242, %v3755, %v3891
    %v4060 = vsel %vm242, %v3757, %v3893
    %v4063 = vsel %vm242, %v3759, %v3895
    %v4066 = vsel %vm242, %v3758, %v3897
    %s4067 = scalar_lea.vmem %s2, 320
    %v4068 = vld [vmem:[%s4067] sm:$0xf]
    %v4069 = vld [vmem:[%s4067 + $0x4] sm:$0xf]
    %v4070 = vld [vmem:[%s4067 + $0x8] sm:$0xf]
    %v4071 = vld [vmem:[%s4067 + $0xc] sm:$0xf]
    %v4072 = vld [vmem:[%s4067 + $0x10] sm:$0xf]
    %v4073 = vld [vmem:[%s4067 + $0x14] sm:$0xf]
    %v4074 = vld [vmem:[%s4067 + $0x18] sm:$0xf]
    %v4075 = vld [vmem:[%s4067 + $0x1c] sm:$0xf]
    %v4076 = vld [vmem:[%s4067 + $0x20] sm:$0xf]
    %v4077 = vld [vmem:[%s4067 + $0x24] sm:$0xf]
    %v4078 = vld [vmem:[%s4067 + $0x28] sm:$0xf]
    %v4079 = vld [vmem:[%s4067 + $0x2c] sm:$0xf]
    %v4080 = vld [vmem:[%s4067 + $0x30] sm:$0xf]
    %v4081 = vld [vmem:[%s4067 + $0x34] sm:$0xf]
    %v4082 = vld [vmem:[%s4067 + $0x38] sm:$0xf]
    %v4083 = vld [vmem:[%s4067 + $0x3c] sm:$0xf]
    %v4084 = vld [vmem:[%s4067 + $0x40] sm:$0xf]
    %v4085 = vld [vmem:[%s4067 + $0x44] sm:$0xf]
    %v4086 = vld [vmem:[%s4067 + $0x48] sm:$0xf]
    %v4087 = vld [vmem:[%s4067 + $0x4c] sm:$0xf]
    %v4088 = vld [vmem:[%s4067 + $0x50] sm:$0xf]
    %v4089 = vld [vmem:[%s4067 + $0x54] sm:$0xf]
    %v4090 = vld [vmem:[%s4067 + $0x58] sm:$0xf]
    %v4091 = vld [vmem:[%s4067 + $0x5c] sm:$0xf]
    %v4092 = vld [vmem:[%s4067 + $0x60] sm:$0xf]
    %v4093 = vld [vmem:[%s4067 + $0x64] sm:$0xf]
    %v4094 = vld [vmem:[%s4067 + $0x68] sm:$0xf]
    %v4095 = vld [vmem:[%s4067 + $0x6c] sm:$0xf]
    %v4096 = vld [vmem:[%s4067 + $0x70] sm:$0xf]
    %v4097 = vld [vmem:[%s4067 + $0x74] sm:$0xf]
    %v4098 = vld [vmem:[%s4067 + $0x78] sm:$0xf]
    %v4099 = vld [vmem:[%s4067 + $0x7c] sm:$0xf]
    %v4100 = vld [vmem:[%s4067 + $0x80] sm:$0xf]
    %v4101 = vld [vmem:[%s4067 + $0x84] sm:$0xf]
    %v4102 = vld [vmem:[%s4067 + $0x88] sm:$0xf]
    %v4103 = vld [vmem:[%s4067 + $0x8c] sm:$0xf]
    %v4104 = vld [vmem:[%s4067 + $0x90] sm:$0xf]
    %v4105 = vld [vmem:[%s4067 + $0x94] sm:$0xf]
    %v4106 = vld [vmem:[%s4067 + $0x98] sm:$0xf]
    %v4107 = vld [vmem:[%s4067 + $0x9c] sm:$0xf]
    %v4150 = vrot.slane %v3962, 2
    %v4151 = vrot.slane %v3964, 2
    %v4152 = vsel %vm1712, %v4150, %v4151
    %v4153 = vrot.slane %v4006, 2
    %v4154 = vrot.slane %v4009, 2
    %v4155 = vsel %vm1712, %v4153, %v4154
    %v4156 = vrot.slane %v3920, 2
    %v4157 = vrot.slane %v3922, 2
    %v4158 = vsel %vm1712, %v4156, %v4157
    %v4159 = vrot.slane %v3966, 2
    %v4160 = vsel %vm1712, %v4151, %v4159
    %v4161 = vrot.slane %v4012, 2
    %v4162 = vsel %vm1712, %v4154, %v4161
    %v4163 = vrot.slane %v3924, 2
    %v4164 = vsel %vm1712, %v4157, %v4163
    %v4165 = vrot.slane %v3968, 2
    %v4166 = vsel %vm1712, %v4159, %v4165
    %v4167 = vrot.slane %v4015, 2
    %v4168 = vsel %vm1712, %v4161, %v4167
    %v4169 = vrot.slane %v3926, 2
    %v4170 = vsel %vm1712, %v4163, %v4169
    %v4171 = vrot.slane %v3970, 2
    %v4172 = vsel %vm1712, %v4165, %v4171
    %v4173 = vrot.slane %v4018, 2
    %v4174 = vsel %vm1712, %v4167, %v4173
    %v4175 = vrot.slane %v3928, 2
    %v4176 = vsel %vm1712, %v4169, %v4175
    %v4177 = vrot.slane %v3972, 2
    %v4178 = vsel %vm1712, %v4171, %v4177
    %v4179 = vrot.slane %v4021, 2
    %v4180 = vsel %vm1712, %v4173, %v4179
    %v4181 = vrot.slane %v3930, 2
    %v4182 = vsel %vm1712, %v4175, %v4181
    %v4183 = vrot.slane %v3974, 2
    %v4184 = vsel %vm1712, %v4177, %v4183
    %v4185 = vrot.slane %v4024, 2
    %v4186 = vsel %vm1712, %v4179, %v4185
    %v4187 = vrot.slane %v3932, 2
    %v4188 = vsel %vm1712, %v4181, %v4187
    %v4189 = vrot.slane %v3976, 2
    %v4190 = vsel %vm1712, %v4183, %v4189
    %v4191 = vrot.slane %v4027, 2
    %v4192 = vsel %vm1712, %v4185, %v4191
    %v4193 = vrot.slane %v3934, 2
    %v4194 = vsel %vm1712, %v4187, %v4193
    %v4195 = vrot.slane %v3978, 2
    %v4196 = vsel %vm1712, %v4189, %v4195
    %v4197 = vrot.slane %v4030, 2
    %v4198 = vsel %vm1712, %v4191, %v4197
    %v4199 = vrot.slane %v3936, 2
    %v4200 = vsel %vm1712, %v4193, %v4199
    %v4201 = vrot.slane %v3980, 2
    %v4202 = vsel %vm1712, %v4195, %v4201
    %v4203 = vrot.slane %v4033, 2
    %v4204 = vsel %vm1712, %v4197, %v4203
    %v4205 = vrot.slane %v3938, 2
    %v4206 = vsel %vm1712, %v4199, %v4205
    %v4207 = vrot.slane %v3982, 2
    %v4208 = vsel %vm1712, %v4201, %v4207
    %v4209 = vrot.slane %v4036, 2
    %v4210 = vsel %vm1712, %v4203, %v4209
    %v4211 = vrot.slane %v3940, 2
    %v4212 = vsel %vm1712, %v4205, %v4211
    %v4213 = vrot.slane %v3984, 2
    %v4214 = vsel %vm1712, %v4207, %v4213
    %v4215 = vrot.slane %v4039, 2
    %v4216 = vsel %vm1712, %v4209, %v4215
    %v4217 = vrot.slane %v3942, 2
    %v4218 = vsel %vm1712, %v4211, %v4217
    %v4219 = vrot.slane %v3986, 2
    %v4220 = vsel %vm1712, %v4213, %v4219
    %v4221 = vrot.slane %v4042, 2
    %v4222 = vsel %vm1712, %v4215, %v4221
    %v4223 = vrot.slane %v3944, 2
    %v4224 = vsel %vm1712, %v4217, %v4223
    %v4225 = vrot.slane %v3988, 2
    %v4226 = vsel %vm1712, %v4219, %v4225
    %v4227 = vrot.slane %v4045, 2
    %v4228 = vsel %vm1712, %v4221, %v4227
    %v4229 = vrot.slane %v3946, 2
    %v4230 = vsel %vm1712, %v4223, %v4229
    %v4231 = vrot.slane %v3990, 2
    %v4232 = vsel %vm1712, %v4225, %v4231
    %v4233 = vrot.slane %v4048, 2
    %v4234 = vsel %vm1712, %v4227, %v4233
    %v4235 = vrot.slane %v3948, 2
    %v4236 = vsel %vm1712, %v4229, %v4235
    %v4237 = vrot.slane %v3992, 2
    %v4238 = vsel %vm1712, %v4231, %v4237
    %v4239 = vrot.slane %v4051, 2
    %v4240 = vsel %vm1712, %v4233, %v4239
    %v4241 = vrot.slane %v3950, 2
    %v4242 = vsel %vm1712, %v4235, %v4241
    %v4243 = vrot.slane %v3994, 2
    %v4244 = vsel %vm1712, %v4237, %v4243
    %v4245 = vrot.slane %v4054, 2
    %v4246 = vsel %vm1712, %v4239, %v4245
    %v4247 = vrot.slane %v3952, 2
    %v4248 = vsel %vm1712, %v4241, %v4247
    %v4249 = vrot.slane %v3996, 2
    %v4250 = vsel %vm1712, %v4243, %v4249
    %v4251 = vrot.slane %v4057, 2
    %v4252 = vsel %vm1712, %v4245, %v4251
    %v4253 = vrot.slane %v3954, 2
    %v4254 = vsel %vm1712, %v4247, %v4253
    %v4255 = vrot.slane %v3998, 2
    %v4256 = vsel %vm1712, %v4249, %v4255
    %v4257 = vrot.slane %v4060, 2
    %v4258 = vsel %vm1712, %v4251, %v4257
    %v4259 = vrot.slane %v3956, 2
    %v4260 = vsel %vm1712, %v4253, %v4259
    %v4261 = vrot.slane %v4000, 2
    %v4262 = vsel %vm1712, %v4255, %v4261
    %v4263 = vrot.slane %v4063, 2
    %v4264 = vsel %vm1712, %v4257, %v4263
    %v4265 = vrot.slane %v3958, 2
    %v4266 = vsel %vm1712, %v4259, %v4265
    %v4267 = vrot.slane %v4003, 2
    %v4268 = vsel %vm1712, %v4261, %v4267
    %v4269 = vrot.slane %v4066, 2
    %v4270 = vsel %vm1712, %v4263, %v4269
    %v4271 = vrot.slane %v3960, 2
    %v4272 = vsel %vm1712, %v4265, %v4271
    %v4355 = vunpack.c.l.b16 %v4068
    %v4356 = vunpack.c.l.b16 %v4069
    %v4357 = vunpack.c.l.b16 %v4070
    %v4358 = vunpack.c.l.b16 %v4071
    %v4359 = vunpack.c.l.b16 %v4072
    %v4360 = vunpack.c.l.b16 %v4073
    %v4361 = vunpack.c.l.b16 %v4074
    %v4362 = vunpack.c.l.b16 %v4075
    %v4363 = vunpack.c.l.b16 %v4076
    %v4364 = vunpack.c.l.b16 %v4077
    %v4365 = vunpack.c.l.b16 %v4078
    %v4366 = vunpack.c.l.b16 %v4079
    %v4367 = vunpack.c.l.b16 %v4080
    %v4368 = vunpack.c.l.b16 %v4081
    %v4369 = vunpack.c.l.b16 %v4082
    %v4370 = vunpack.c.l.b16 %v4083
    %v4371 = vunpack.c.l.b16 %v4084
    %v4372 = vunpack.c.l.b16 %v4085
    %v4373 = vunpack.c.l.b16 %v4086
    %v4374 = vunpack.c.l.b16 %v4087
    %v4375 = vunpack.c.l.b16 %v4088
    %v4376 = vunpack.c.l.b16 %v4089
    %v4377 = vunpack.c.l.b16 %v4090
    %v4378 = vunpack.c.l.b16 %v4091
    %v4379 = vunpack.c.l.b16 %v4092
    %v4380 = vunpack.c.l.b16 %v4093
    %v4381 = vunpack.c.l.b16 %v4094
    %v4382 = vunpack.c.l.b16 %v4095
    %v4383 = vunpack.c.l.b16 %v4096
    %v4384 = vunpack.c.l.b16 %v4097
    %v4385 = vunpack.c.l.b16 %v4098
    %v4386 = vunpack.c.l.b16 %v4099
    %v4387 = vunpack.c.l.b16 %v4100
    %v4388 = vunpack.c.l.b16 %v4101
    %v4389 = vunpack.c.l.b16 %v4102
    %v4390 = vunpack.c.l.b16 %v4103
    %v4391 = vunpack.c.l.b16 %v4104
    %v4392 = vunpack.c.l.b16 %v4105
    %v4393 = vunpack.c.l.b16 %v4106
    %v4394 = vunpack.c.l.b16 %v4107
    %v4395 = vpack.c.b16 %v4356, %v4355
    %v4396 = vpack.c.b16 %v4358, %v4357
    %v4397 = vpack.c.b16 %v4360, %v4359
    %v4398 = vpack.c.b16 %v4362, %v4361
    %v4399 = vpack.c.b16 %v4364, %v4363
    %v4400 = vpack.c.b16 %v4366, %v4365
    %v4401 = vpack.c.b16 %v4368, %v4367
    %v4402 = vpack.c.b16 %v4370, %v4369
    %v4403 = vpack.c.b16 %v4372, %v4371
    %v4404 = vpack.c.b16 %v4374, %v4373
    %v4405 = vpack.c.b16 %v4376, %v4375
    %v4406 = vpack.c.b16 %v4378, %v4377
    %v4407 = vpack.c.b16 %v4380, %v4379
    %v4408 = vpack.c.b16 %v4382, %v4381
    %v4409 = vpack.c.b16 %v4384, %v4383
    %v4410 = vpack.c.b16 %v4386, %v4385
    %v4411 = vpack.c.b16 %v4388, %v4387
    %v4412 = vpack.c.b16 %v4390, %v4389
    %v4413 = vpack.c.b16 %v4392, %v4391
    %v4414 = vpack.c.b16 %v4394, %v4393
    %v4436 = vsel %vm242, %v4158, 0
    %v4439 = vsel %vm242, %v4164, 0
    %v4442 = vsel %vm242, %v4170, 0
    %v4445 = vsel %vm242, %v4176, 0
    %v4448 = vsel %vm242, %v4182, 0
    %v4451 = vsel %vm242, %v4188, 0
    %v4454 = vsel %vm242, %v4194, 0
    %v4457 = vsel %vm242, %v4200, 0
    %v4460 = vsel %vm242, %v4206, 0
    %v4463 = vsel %vm242, %v4212, 0
    %v4466 = vsel %vm242, %v4218, 0
    %v4469 = vsel %vm242, %v4224, 0
    %v4472 = vsel %vm242, %v4230, 0
    %v4475 = vsel %vm242, %v4236, 0
    %v4478 = vsel %vm242, %v4242, 0
    %v4481 = vsel %vm242, %v4248, 0
    %v4484 = vsel %vm242, %v4254, 0
    %v4487 = vsel %vm242, %v4260, 0
    %v4490 = vsel %vm242, %v4266, 0
    %v4493 = vsel %vm242, %v4272, 0
    %v4496 = vsel %vm242, %v4271, 0
    %4498 = vmatpush.bf16.msra.mxu0 %v4402
    %4499 = vmatpush.bf16.msra.mxu0 %v4401
    %4500 = vmatpush.bf16.msra.mxu0 %v4400
    %4501 = vmatpush.bf16.msra.mxu0 %v4399
    %4502 = vmatpush.bf16.msra.mxu0 %v4398
    %4503 = vmatpush.bf16.msra.mxu0 %v4397
    %4504 = vmatpush.bf16.msra.mxu0 %v4396
    %4505 = vmatpush.bf16.msra.mxu0 %v4395
    %4506 = vmatmul.bf16.gmra.mxu0 %v4152
    %v4507 = vpop.f32.mrf.mxu0
    %v4508 = vadd.f32 0.0, %v4507
    %v4509 = vpop.f32.mrf.mxu0
    %v4510 = vadd.f32 0.0, %v4509
    %4511 = vmatmul.bf16.gmra.mxu0 %v4160
    %v4512 = vpop.f32.mrf.mxu0
    %v4513 = vadd.f32 0.0, %v4512
    %v4514 = vpop.f32.mrf.mxu0
    %v4515 = vadd.f32 0.0, %v4514
    %4516 = vmatmul.bf16.gmra.mxu0 %v4166
    %v4517 = vpop.f32.mrf.mxu0
    %v4518 = vadd.f32 0.0, %v4517
    %v4519 = vpop.f32.mrf.mxu0
    %v4520 = vadd.f32 0.0, %v4519
    %4521 = vmatmul.bf16.gmra.mxu0 %v4172
    %v4522 = vpop.f32.mrf.mxu0
    %v4523 = vadd.f32 0.0, %v4522
    %v4524 = vpop.f32.mrf.mxu0
    %v4525 = vadd.f32 0.0, %v4524
    %4526 = vmatmul.bf16.gmra.mxu0 %v4178
    %v4527 = vpop.f32.mrf.mxu0
    %v4528 = vadd.f32 0.0, %v4527
    %v4529 = vpop.f32.mrf.mxu0
    %v4530 = vadd.f32 0.0, %v4529
    %4531 = vmatmul.bf16.gmra.mxu0 %v4184
    %v4532 = vpop.f32.mrf.mxu0
    %v4533 = vadd.f32 0.0, %v4532
    %v4534 = vpop.f32.mrf.mxu0
    %v4535 = vadd.f32 0.0, %v4534
    %4536 = vmatmul.bf16.gmra.mxu0 %v4190
    %v4537 = vpop.f32.mrf.mxu0
    %v4538 = vadd.f32 0.0, %v4537
    %v4539 = vpop.f32.mrf.mxu0
    %v4540 = vadd.f32 0.0, %v4539
    %4541 = vmatmul.bf16.gmra.mxu0 %v4196
    %v4542 = vpop.f32.mrf.mxu0
    %v4543 = vadd.f32 0.0, %v4542
    %v4544 = vpop.f32.mrf.mxu0
    %v4545 = vadd.f32 0.0, %v4544
    %4546 = vmatmul.bf16.gmra.mxu0 %v4202
    %v4547 = vpop.f32.mrf.mxu0
    %v4548 = vadd.f32 0.0, %v4547
    %v4549 = vpop.f32.mrf.mxu0
    %v4550 = vadd.f32 0.0, %v4549
    %4551 = vmatmul.bf16.gmra.mxu0 %v4208
    %v4552 = vpop.f32.mrf.mxu0
    %v4553 = vadd.f32 0.0, %v4552
    %v4554 = vpop.f32.mrf.mxu0
    %v4555 = vadd.f32 0.0, %v4554
    %4556 = vmatmul.bf16.gmra.mxu0 %v4214
    %v4557 = vpop.f32.mrf.mxu0
    %v4558 = vadd.f32 0.0, %v4557
    %v4559 = vpop.f32.mrf.mxu0
    %v4560 = vadd.f32 0.0, %v4559
    %4561 = vmatmul.bf16.gmra.mxu0 %v4220
    %v4562 = vpop.f32.mrf.mxu0
    %v4563 = vadd.f32 0.0, %v4562
    %v4564 = vpop.f32.mrf.mxu0
    %v4565 = vadd.f32 0.0, %v4564
    %4566 = vmatmul.bf16.gmra.mxu0 %v4226
    %v4567 = vpop.f32.mrf.mxu0
    %v4568 = vadd.f32 0.0, %v4567
    %v4569 = vpop.f32.mrf.mxu0
    %v4570 = vadd.f32 0.0, %v4569
    %4571 = vmatmul.bf16.gmra.mxu0 %v4232
    %v4572 = vpop.f32.mrf.mxu0
    %v4573 = vadd.f32 0.0, %v4572
    %v4574 = vpop.f32.mrf.mxu0
    %v4575 = vadd.f32 0.0, %v4574
    %4576 = vmatmul.bf16.gmra.mxu0 %v4238
    %v4577 = vpop.f32.mrf.mxu0
    %v4578 = vadd.f32 0.0, %v4577
    %v4579 = vpop.f32.mrf.mxu0
    %v4580 = vadd.f32 0.0, %v4579
    %4581 = vmatmul.bf16.gmra.mxu0 %v4244
    %v4582 = vpop.f32.mrf.mxu0
    %v4583 = vadd.f32 0.0, %v4582
    %v4584 = vpop.f32.mrf.mxu0
    %v4585 = vadd.f32 0.0, %v4584
    %4586 = vmatmul.bf16.gmra.mxu0 %v4250
    %v4587 = vpop.f32.mrf.mxu0
    %v4588 = vadd.f32 0.0, %v4587
    %v4589 = vpop.f32.mrf.mxu0
    %v4590 = vadd.f32 0.0, %v4589
    %4591 = vmatmul.bf16.gmra.mxu0 %v4256
    %v4592 = vpop.f32.mrf.mxu0
    %v4593 = vadd.f32 0.0, %v4592
    %v4594 = vpop.f32.mrf.mxu0
    %v4595 = vadd.f32 0.0, %v4594
    %4596 = vmatmul.bf16.gmra.mxu0 %v4262
    %v4597 = vpop.f32.mrf.mxu0
    %v4598 = vadd.f32 0.0, %v4597
    %v4599 = vpop.f32.mrf.mxu0
    %v4600 = vadd.f32 0.0, %v4599
    %4601 = vmatmul.bf16.gmra.mxu0 %v4268
    %v4602 = vpop.f32.mrf.mxu0
    %v4603 = vadd.f32 0.0, %v4602
    %v4604 = vpop.f32.mrf.mxu0
    %v4605 = vadd.f32 0.0, %v4604
    %4606 = vmatmul.bf16.gmra.mxu0 %v4267
    %v4607 = vpop.f32.mrf.mxu0
    %v4608 = vadd.f32 0.0, %v4607
    %v4609 = vpop.f32.mrf.mxu0
    %4610 = vdwg.mxu0
    %4611 = vmatpush.bf16.msra.mxu0 %v4410
    %4612 = vmatpush.bf16.msra.mxu0 %v4409
    %4613 = vmatpush.bf16.msra.mxu0 %v4408
    %4614 = vmatpush.bf16.msra.mxu0 %v4407
    %4615 = vmatpush.bf16.msra.mxu0 %v4406
    %4616 = vmatpush.bf16.msra.mxu0 %v4405
    %4617 = vmatpush.bf16.msra.mxu0 %v4404
    %4618 = vmatpush.bf16.msra.mxu0 %v4403
    %4619 = vmatmul.bf16.gmra.mxu0 %v4155
    %v4620 = vpop.f32.mrf.mxu0
    %v4621 = vadd.f32 %v4508, %v4620
    %v4622 = vpop.f32.mrf.mxu0
    %v4623 = vadd.f32 %v4510, %v4622
    %4624 = vmatmul.bf16.gmra.mxu0 %v4162
    %v4625 = vpop.f32.mrf.mxu0
    %v4626 = vadd.f32 %v4513, %v4625
    %v4627 = vpop.f32.mrf.mxu0
    %v4628 = vadd.f32 %v4515, %v4627
    %4629 = vmatmul.bf16.gmra.mxu0 %v4168
    %v4630 = vpop.f32.mrf.mxu0
    %v4631 = vadd.f32 %v4518, %v4630
    %v4632 = vpop.f32.mrf.mxu0
    %v4633 = vadd.f32 %v4520, %v4632
    %4634 = vmatmul.bf16.gmra.mxu0 %v4174
    %v4635 = vpop.f32.mrf.mxu0
    %v4636 = vadd.f32 %v4523, %v4635
    %v4637 = vpop.f32.mrf.mxu0
    %v4638 = vadd.f32 %v4525, %v4637
    %4639 = vmatmul.bf16.gmra.mxu0 %v4180
    %v4640 = vpop.f32.mrf.mxu0
    %v4641 = vadd.f32 %v4528, %v4640
    %v4642 = vpop.f32.mrf.mxu0
    %v4643 = vadd.f32 %v4530, %v4642
    %4644 = vmatmul.bf16.gmra.mxu0 %v4186
    %v4645 = vpop.f32.mrf.mxu0
    %v4646 = vadd.f32 %v4533, %v4645
    %v4647 = vpop.f32.mrf.mxu0
    %v4648 = vadd.f32 %v4535, %v4647
    %4649 = vmatmul.bf16.gmra.mxu0 %v4192
    %v4650 = vpop.f32.mrf.mxu0
    %v4651 = vadd.f32 %v4538, %v4650
    %v4652 = vpop.f32.mrf.mxu0
    %v4653 = vadd.f32 %v4540, %v4652
    %4654 = vmatmul.bf16.gmra.mxu0 %v4198
    %v4655 = vpop.f32.mrf.mxu0
    %v4656 = vadd.f32 %v4543, %v4655
    %v4657 = vpop.f32.mrf.mxu0
    %v4658 = vadd.f32 %v4545, %v4657
    %4659 = vmatmul.bf16.gmra.mxu0 %v4204
    %v4660 = vpop.f32.mrf.mxu0
    %v4661 = vadd.f32 %v4548, %v4660
    %v4662 = vpop.f32.mrf.mxu0
    %v4663 = vadd.f32 %v4550, %v4662
    %4664 = vmatmul.bf16.gmra.mxu0 %v4210
    %v4665 = vpop.f32.mrf.mxu0
    %v4666 = vadd.f32 %v4553, %v4665
    %v4667 = vpop.f32.mrf.mxu0
    %v4668 = vadd.f32 %v4555, %v4667
    %4669 = vmatmul.bf16.gmra.mxu0 %v4216
    %v4670 = vpop.f32.mrf.mxu0
    %v4671 = vadd.f32 %v4558, %v4670
    %v4672 = vpop.f32.mrf.mxu0
    %v4673 = vadd.f32 %v4560, %v4672
    %4674 = vmatmul.bf16.gmra.mxu0 %v4222
    %v4675 = vpop.f32.mrf.mxu0
    %v4676 = vadd.f32 %v4563, %v4675
    %v4677 = vpop.f32.mrf.mxu0
    %v4678 = vadd.f32 %v4565, %v4677
    %4679 = vmatmul.bf16.gmra.mxu0 %v4228
    %v4680 = vpop.f32.mrf.mxu0
    %v4681 = vadd.f32 %v4568, %v4680
    %v4682 = vpop.f32.mrf.mxu0
    %v4683 = vadd.f32 %v4570, %v4682
    %4684 = vmatmul.bf16.gmra.mxu0 %v4234
    %v4685 = vpop.f32.mrf.mxu0
    %v4686 = vadd.f32 %v4573, %v4685
    %v4687 = vpop.f32.mrf.mxu0
    %v4688 = vadd.f32 %v4575, %v4687
    %4689 = vmatmul.bf16.gmra.mxu0 %v4240
    %v4690 = vpop.f32.mrf.mxu0
    %v4691 = vadd.f32 %v4578, %v4690
    %v4692 = vpop.f32.mrf.mxu0
    %v4693 = vadd.f32 %v4580, %v4692
    %4694 = vmatmul.bf16.gmra.mxu0 %v4246
    %v4695 = vpop.f32.mrf.mxu0
    %v4696 = vadd.f32 %v4583, %v4695
    %v4697 = vpop.f32.mrf.mxu0
    %v4698 = vadd.f32 %v4585, %v4697
    %4699 = vmatmul.bf16.gmra.mxu0 %v4252
    %v4700 = vpop.f32.mrf.mxu0
    %v4701 = vadd.f32 %v4588, %v4700
    %v4702 = vpop.f32.mrf.mxu0
    %v4703 = vadd.f32 %v4590, %v4702
    %4704 = vmatmul.bf16.gmra.mxu0 %v4258
    %v4705 = vpop.f32.mrf.mxu0
    %v4706 = vadd.f32 %v4593, %v4705
    %v4707 = vpop.f32.mrf.mxu0
    %v4708 = vadd.f32 %v4595, %v4707
    %4709 = vmatmul.bf16.gmra.mxu0 %v4264
    %v4710 = vpop.f32.mrf.mxu0
    %v4711 = vadd.f32 %v4598, %v4710
    %v4712 = vpop.f32.mrf.mxu0
    %v4713 = vadd.f32 %v4600, %v4712
    %4714 = vmatmul.bf16.gmra.mxu0 %v4270
    %v4715 = vpop.f32.mrf.mxu0
    %v4716 = vadd.f32 %v4603, %v4715
    %v4717 = vpop.f32.mrf.mxu0
    %v4718 = vadd.f32 %v4605, %v4717
    %4719 = vmatmul.bf16.gmra.mxu0 %v4269
    %v4720 = vpop.f32.mrf.mxu0
    %v4721 = vadd.f32 %v4608, %v4720
    %v4722 = vpop.f32.mrf.mxu0
    %4723 = vdwg.mxu0
    %4724 = vmatpush.bf16.msra.mxu0 0
    %4725 = vmatpush.bf16.msra.mxu0 0
    %4726 = vmatpush.bf16.msra.mxu0 0
    %4727 = vmatpush.bf16.msra.mxu0 0
    %4728 = vmatpush.bf16.msra.mxu0 %v4414
    %4729 = vmatpush.bf16.msra.mxu0 %v4413
    %4730 = vmatpush.bf16.msra.mxu0 %v4412
    %4731 = vmatpush.bf16.msra.mxu0 %v4411
    %4732 = vmatmul.bf16.gmra.mxu0 %v4436
    %v4733 = vpop.f32.mrf.mxu0
    %v4734 = vadd.f32 %v4621, %v4733
    %v4735 = vpop.f32.mrf.mxu0
    %v4736 = vadd.f32 %v4623, %v4735
    %4737 = vmatmul.bf16.gmra.mxu0 %v4439
    %v4738 = vpop.f32.mrf.mxu0
    %v4739 = vadd.f32 %v4626, %v4738
    %v4740 = vpop.f32.mrf.mxu0
    %v4741 = vadd.f32 %v4628, %v4740
    %4742 = vmatmul.bf16.gmra.mxu0 %v4442
    %v4743 = vpop.f32.mrf.mxu0
    %v4744 = vadd.f32 %v4631, %v4743
    %v4745 = vpop.f32.mrf.mxu0
    %v4746 = vadd.f32 %v4633, %v4745
    %4747 = vmatmul.bf16.gmra.mxu0 %v4445
    %v4748 = vpop.f32.mrf.mxu0
    %v4749 = vadd.f32 %v4636, %v4748
    %v4750 = vpop.f32.mrf.mxu0
    %v4751 = vadd.f32 %v4638, %v4750
    %4752 = vmatmul.bf16.gmra.mxu0 %v4448
    %v4753 = vpop.f32.mrf.mxu0
    %v4754 = vadd.f32 %v4641, %v4753
    %v4755 = vpop.f32.mrf.mxu0
    %v4756 = vadd.f32 %v4643, %v4755
    %4757 = vmatmul.bf16.gmra.mxu0 %v4451
    %v4758 = vpop.f32.mrf.mxu0
    %v4759 = vadd.f32 %v4646, %v4758
    %v4760 = vpop.f32.mrf.mxu0
    %v4761 = vadd.f32 %v4648, %v4760
    %4762 = vmatmul.bf16.gmra.mxu0 %v4454
    %v4763 = vpop.f32.mrf.mxu0
    %v4764 = vadd.f32 %v4651, %v4763
    %v4765 = vpop.f32.mrf.mxu0
    %v4766 = vadd.f32 %v4653, %v4765
    %4767 = vmatmul.bf16.gmra.mxu0 %v4457
    %v4768 = vpop.f32.mrf.mxu0
    %v4769 = vadd.f32 %v4656, %v4768
    %v4770 = vpop.f32.mrf.mxu0
    %v4771 = vadd.f32 %v4658, %v4770
    %4772 = vmatmul.bf16.gmra.mxu0 %v4460
    %v4773 = vpop.f32.mrf.mxu0
    %v4774 = vadd.f32 %v4661, %v4773
    %v4775 = vpop.f32.mrf.mxu0
    %v4776 = vadd.f32 %v4663, %v4775
    %4777 = vmatmul.bf16.gmra.mxu0 %v4463
    %v4778 = vpop.f32.mrf.mxu0
    %v4779 = vadd.f32 %v4666, %v4778
    %v4780 = vpop.f32.mrf.mxu0
    %v4781 = vadd.f32 %v4668, %v4780
    %4782 = vmatmul.bf16.gmra.mxu0 %v4466
    %v4783 = vpop.f32.mrf.mxu0
    %v4784 = vadd.f32 %v4671, %v4783
    %v4785 = vpop.f32.mrf.mxu0
    %v4786 = vadd.f32 %v4673, %v4785
    %4787 = vmatmul.bf16.gmra.mxu0 %v4469
    %v4788 = vpop.f32.mrf.mxu0
    %v4789 = vadd.f32 %v4676, %v4788
    %v4790 = vpop.f32.mrf.mxu0
    %v4791 = vadd.f32 %v4678, %v4790
    %4792 = vmatmul.bf16.gmra.mxu0 %v4472
    %v4793 = vpop.f32.mrf.mxu0
    %v4794 = vadd.f32 %v4681, %v4793
    %v4795 = vpop.f32.mrf.mxu0
    %v4796 = vadd.f32 %v4683, %v4795
    %4797 = vmatmul.bf16.gmra.mxu0 %v4475
    %v4798 = vpop.f32.mrf.mxu0
    %v4799 = vadd.f32 %v4686, %v4798
    %v4800 = vpop.f32.mrf.mxu0
    %v4801 = vadd.f32 %v4688, %v4800
    %4802 = vmatmul.bf16.gmra.mxu0 %v4478
    %v4803 = vpop.f32.mrf.mxu0
    %v4804 = vadd.f32 %v4691, %v4803
    %v4805 = vpop.f32.mrf.mxu0
    %v4806 = vadd.f32 %v4693, %v4805
    %4807 = vmatmul.bf16.gmra.mxu0 %v4481
    %v4808 = vpop.f32.mrf.mxu0
    %v4809 = vadd.f32 %v4696, %v4808
    %v4810 = vpop.f32.mrf.mxu0
    %v4811 = vadd.f32 %v4698, %v4810
    %4812 = vmatmul.bf16.gmra.mxu0 %v4484
    %v4813 = vpop.f32.mrf.mxu0
    %v4814 = vadd.f32 %v4701, %v4813
    %v4815 = vpop.f32.mrf.mxu0
    %v4816 = vadd.f32 %v4703, %v4815
    %4817 = vmatmul.bf16.gmra.mxu0 %v4487
    %v4818 = vpop.f32.mrf.mxu0
    %v4819 = vadd.f32 %v4706, %v4818
    %v4820 = vpop.f32.mrf.mxu0
    %v4821 = vadd.f32 %v4708, %v4820
    %4822 = vmatmul.bf16.gmra.mxu0 %v4490
    %v4823 = vpop.f32.mrf.mxu0
    %v4824 = vadd.f32 %v4711, %v4823
    %v4825 = vpop.f32.mrf.mxu0
    %v4826 = vadd.f32 %v4713, %v4825
    %4827 = vmatmul.bf16.gmra.mxu0 %v4493
    %v4828 = vpop.f32.mrf.mxu0
    %v4829 = vadd.f32 %v4716, %v4828
    %v4830 = vpop.f32.mrf.mxu0
    %v4831 = vadd.f32 %v4718, %v4830
    %4832 = vmatmul.bf16.gmra.mxu0 %v4496
    %v4833 = vpop.f32.mrf.mxu0
    %v4834 = vadd.f32 %v4721, %v4833
    %v4835 = vpop.f32.mrf.mxu0
    %4836 = vdwg.mxu0
    %v4837 = vadd.f32 %v3254, %v4734
    %v4838 = vadd.f32 %v3256, %v4736
    %v4839 = vadd.f32 %v3259, %v4739
    %v4840 = vadd.f32 %v3261, %v4741
    %v4841 = vadd.f32 %v3264, %v4744
    %v4842 = vadd.f32 %v3266, %v4746
    %v4843 = vadd.f32 %v3269, %v4749
    %v4844 = vadd.f32 %v3271, %v4751
    %v4845 = vadd.f32 %v3274, %v4754
    %v4846 = vadd.f32 %v3276, %v4756
    %v4847 = vadd.f32 %v3279, %v4759
    %v4848 = vadd.f32 %v3281, %v4761
    %v4849 = vadd.f32 %v3284, %v4764
    %v4850 = vadd.f32 %v3286, %v4766
    %v4851 = vadd.f32 %v3289, %v4769
    %v4852 = vadd.f32 %v3291, %v4771
    %v4853 = vadd.f32 %v3294, %v4774
    %v4854 = vadd.f32 %v3296, %v4776
    %v4855 = vadd.f32 %v3299, %v4779
    %v4856 = vadd.f32 %v3301, %v4781
    %v4857 = vadd.f32 %v3304, %v4784
    %v4858 = vadd.f32 %v3306, %v4786
    %v4859 = vadd.f32 %v3309, %v4789
    %v4860 = vadd.f32 %v3311, %v4791
    %v4861 = vadd.f32 %v3314, %v4794
    %v4862 = vadd.f32 %v3316, %v4796
    %v4863 = vadd.f32 %v3319, %v4799
    %v4864 = vadd.f32 %v3321, %v4801
    %v4865 = vadd.f32 %v3324, %v4804
    %v4866 = vadd.f32 %v3326, %v4806
    %v4867 = vadd.f32 %v3329, %v4809
    %v4868 = vadd.f32 %v3331, %v4811
    %v4869 = vadd.f32 %v3334, %v4814
    %v4870 = vadd.f32 %v3336, %v4816
    %v4871 = vadd.f32 %v3339, %v4819
    %v4872 = vadd.f32 %v3341, %v4821
    %v4873 = vadd.f32 %v3344, %v4824
    %v4874 = vadd.f32 %v3346, %v4826
    %v4875 = vadd.f32 %v3349, %v4829
    %v4876 = vadd.f32 %v3351, %v4831
    %v4877 = vadd.f32 %v3354, %v4834
    %v4878 = vld [vmem:[#allocation2 + $0x18] sm:$0x8]
    %v4879 = vld [vmem:[#allocation2 + $0x1c] sm:$0xf]
    %v4880 = vld [vmem:[#allocation2 + $0x20] sm:$0xf]
    %v4881 = vld [vmem:[#allocation2 + $0x24] sm:$0xf]
    %v4882 = vld [vmem:[#allocation2 + $0x28] sm:$0xf]
    %v4883 = vld [vmem:[#allocation2 + $0x2c] sm:$0xf]
    %v4884 = vld [vmem:[#allocation2 + $0x30] sm:$0xf]
    %v4885 = vld [vmem:[#allocation2 + $0x34] sm:$0xf]
    %v4886 = vld [vmem:[#allocation2 + $0x38] sm:$0xf]
    %v4887 = vld [vmem:[#allocation2 + $0x3c] sm:$0xf]
    %v4888 = vld [vmem:[#allocation2 + $0x40] sm:$0xf]
    %v4889 = vld [vmem:[#allocation2 + $0x44] sm:$0xf]
    %v4890 = vld [vmem:[#allocation2 + $0x48] sm:$0xf]
    %v4891 = vld [vmem:[#allocation2 + $0x4c] sm:$0xf]
    %v4892 = vld [vmem:[#allocation2 + $0x50] sm:$0xf]
    %v4893 = vld [vmem:[#allocation2 + $0x54] sm:$0xf]
    %v4894 = vld [vmem:[#allocation2 + $0x58] sm:$0xf]
    %v4895 = vld [vmem:[#allocation2 + $0x5c] sm:$0xf]
    %v4896 = vld [vmem:[#allocation2 + $0x60] sm:$0xf]
    %v4897 = vld [vmem:[#allocation2 + $0x64] sm:$0xf]
    %v4898 = vld [vmem:[#allocation2 + $0x68] sm:$0xf]
    %v4899 = vld [vmem:[#allocation2 + $0x6c] sm:$0xf]
    %v4900 = vld [vmem:[#allocation2 + $0x70] sm:$0xf]
    %v4901 = vld [vmem:[#allocation2 + $0x74] sm:$0xf]
    %v4902 = vld [vmem:[#allocation2 + $0x78] sm:$0xf]
    %v4903 = vld [vmem:[#allocation2 + $0x7c] sm:$0xf]
    %v4904 = vld [vmem:[#allocation2 + $0x80] sm:$0xf]
    %v4905 = vld [vmem:[#allocation2 + $0x84] sm:$0xf]
    %v4906 = vld [vmem:[#allocation2 + $0x88] sm:$0xf]
    %v4907 = vld [vmem:[#allocation2 + $0x8c] sm:$0xf]
    %v4908 = vld [vmem:[#allocation2 + $0x90] sm:$0xf]
    %v4909 = vld [vmem:[#allocation2 + $0x94] sm:$0xf]
    %v4910 = vld [vmem:[#allocation2 + $0x98] sm:$0xf]
    %v4911 = vld [vmem:[#allocation2 + $0x9c] sm:$0xf]
    %v4912 = vld [vmem:[#allocation2 + $0xa0] sm:$0xf]
    %v4913 = vld [vmem:[#allocation2 + $0xa4] sm:$0xf]
    %v4914 = vld [vmem:[#allocation2 + $0xa8] sm:$0xf]
    %v4915 = vld [vmem:[#allocation2 + $0xac] sm:$0xf]
    %v4916 = vld [vmem:[#allocation2 + $0xb0] sm:$0xf]
    %v4917 = vld [vmem:[#allocation2 + $0xb4] sm:$0xf]
    %v4918 = vld [vmem:[#allocation2 + $0xb8] sm:$0xf]
    %v4919 = vld [vmem:[#allocation2 + $0xbc] sm:$0x1]
    %v4920 = vld [vmem:[#allocation2 + $0xbc] sm:$0x3]
    %v4921 = vld [vmem:[#allocation2 + $0xbc] sm:$0x7]
    %v4922 = vld [vmem:[#allocation2 + $0x1c] sm:$0xe]
    %v4965 = vunpack.c.l.b16 %v4878
    %v4966 = vunpack.c.l.b16 %v4879
    %v4967 = vunpack.c.l.b16 %v4880
    %v4968 = vunpack.c.l.b16 %v4881
    %v4969 = vunpack.c.l.b16 %v4882
    %v4970 = vunpack.c.l.b16 %v4883
    %v4971 = vunpack.c.l.b16 %v4884
    %v4972 = vunpack.c.l.b16 %v4885
    %v4973 = vunpack.c.l.b16 %v4886
    %v4974 = vunpack.c.l.b16 %v4887
    %v4975 = vunpack.c.l.b16 %v4888
    %v4976 = vunpack.c.l.b16 %v4889
    %v4977 = vunpack.c.l.b16 %v4890
    %v4978 = vunpack.c.l.b16 %v4891
    %v4979 = vunpack.c.l.b16 %v4892
    %v4980 = vunpack.c.l.b16 %v4893
    %v4981 = vunpack.c.l.b16 %v4894
    %v4982 = vunpack.c.l.b16 %v4895
    %v4983 = vunpack.c.l.b16 %v4896
    %v4984 = vunpack.c.l.b16 %v4897
    %v4985 = vunpack.c.l.b16 %v4898
    %v4986 = vunpack.c.l.b16 %v4899
    %v4987 = vunpack.c.l.b16 %v4900
    %v4988 = vunpack.c.l.b16 %v4901
    %v4989 = vunpack.c.l.b16 %v4902
    %v4990 = vunpack.c.l.b16 %v4903
    %v4991 = vunpack.c.l.b16 %v4904
    %v4992 = vunpack.c.l.b16 %v4905
    %v4993 = vunpack.c.l.b16 %v4906
    %v4994 = vunpack.c.l.b16 %v4907
    %v4995 = vunpack.c.l.b16 %v4908
    %v4996 = vunpack.c.l.b16 %v4909
    %v4997 = vunpack.c.l.b16 %v4910
    %v4998 = vunpack.c.l.b16 %v4911
    %v4999 = vunpack.c.l.b16 %v4912
    %v5000 = vunpack.c.l.b16 %v4913
    %v5001 = vunpack.c.l.b16 %v4914
    %v5002 = vunpack.c.l.b16 %v4915
    %v5003 = vunpack.c.l.b16 %v4916
    %v5004 = vunpack.c.l.b16 %v4917
    %v5005 = vunpack.c.l.b16 %v4918
    %v5006 = vunpack.c.l.b16 %v4919
    %v5007 = vpack.c.b16 %v4966, %v4965
    %v5008 = vpack.c.b16 %v4968, %v4967
    %v5009 = vpack.c.b16 %v4970, %v4969
    %v5010 = vpack.c.b16 %v4972, %v4971
    %v5011 = vpack.c.b16 %v4974, %v4973
    %v5012 = vpack.c.b16 %v4976, %v4975
    %v5013 = vpack.c.b16 %v4978, %v4977
    %v5014 = vpack.c.b16 %v4980, %v4979
    %v5015 = vpack.c.b16 %v4982, %v4981
    %v5016 = vpack.c.b16 %v4984, %v4983
    %v5017 = vpack.c.b16 %v4986, %v4985
    %v5018 = vpack.c.b16 %v4988, %v4987
    %v5019 = vpack.c.b16 %v4990, %v4989
    %v5020 = vpack.c.b16 %v4992, %v4991
    %v5021 = vpack.c.b16 %v4994, %v4993
    %v5022 = vpack.c.b16 %v4996, %v4995
    %v5023 = vpack.c.b16 %v4998, %v4997
    %v5024 = vpack.c.b16 %v5000, %v4999
    %v5025 = vpack.c.b16 %v5002, %v5001
    %v5026 = vpack.c.b16 %v5004, %v5003
    %v5027 = vpack.c.b16 %v5006, %v5005
    %v5029 = vunpack.c.l.b16 %v4920
    %v5030 = vpack.c.b16 %v5029, %v5005
    %v5032 = vshrl.u32 %v5007, 16
    %v5034 = vshll.u32 %v5007, 16
    %v5036 = vrot.slane %v5034, 1
    %v5037 = vor.u32 %v5032, %v5036
    %v5039 = vshll.u32 %v5008, 16
    %v5041 = vrot.slane %v5039, 1
    %v5042 = vsel %vm1315, %v5037, %v5041
    %v5043 = vshrl.u32 %v5008, 16
    %v5045 = vor.u32 %v5043, %v5041
    %v5047 = vshll.u32 %v5009, 16
    %v5049 = vrot.slane %v5047, 1
    %v5050 = vsel %vm1315, %v5045, %v5049
    %v5051 = vshrl.u32 %v5009, 16
    %v5053 = vor.u32 %v5051, %v5049
    %v5055 = vshll.u32 %v5010, 16
    %v5057 = vrot.slane %v5055, 1
    %v5058 = vsel %vm1315, %v5053, %v5057
    %v5059 = vshrl.u32 %v5010, 16
    %v5061 = vor.u32 %v5059, %v5057
    %v5063 = vshll.u32 %v5011, 16
    %v5065 = vrot.slane %v5063, 1
    %v5066 = vsel %vm1315, %v5061, %v5065
    %v5067 = vshrl.u32 %v5011, 16
    %v5069 = vor.u32 %v5067, %v5065
    %v5071 = vshll.u32 %v5012, 16
    %v5073 = vrot.slane %v5071, 1
    %v5074 = vsel %vm1315, %v5069, %v5073
    %v5075 = vshrl.u32 %v5012, 16
    %v5077 = vor.u32 %v5075, %v5073
    %v5079 = vshll.u32 %v5013, 16
    %v5081 = vrot.slane %v5079, 1
    %v5082 = vsel %vm1315, %v5077, %v5081
    %v5083 = vshrl.u32 %v5013, 16
    %v5085 = vor.u32 %v5083, %v5081
    %v5087 = vshll.u32 %v5014, 16
    %v5089 = vrot.slane %v5087, 1
    %v5090 = vsel %vm1315, %v5085, %v5089
    %v5091 = vshrl.u32 %v5014, 16
    %v5093 = vor.u32 %v5091, %v5089
    %v5095 = vshll.u32 %v5015, 16
    %v5097 = vrot.slane %v5095, 1
    %v5098 = vsel %vm1315, %v5093, %v5097
    %v5099 = vshrl.u32 %v5015, 16
    %v5101 = vor.u32 %v5099, %v5097
    %v5103 = vshll.u32 %v5016, 16
    %v5105 = vrot.slane %v5103, 1
    %v5106 = vsel %vm1315, %v5101, %v5105
    %v5107 = vshrl.u32 %v5016, 16
    %v5109 = vor.u32 %v5107, %v5105
    %v5111 = vshll.u32 %v5017, 16
    %v5113 = vrot.slane %v5111, 1
    %v5114 = vsel %vm1315, %v5109, %v5113
    %v5115 = vshrl.u32 %v5017, 16
    %v5117 = vor.u32 %v5115, %v5113
    %v5119 = vshll.u32 %v5018, 16
    %v5121 = vrot.slane %v5119, 1
    %v5122 = vsel %vm1315, %v5117, %v5121
    %v5123 = vshrl.u32 %v5018, 16
    %v5125 = vor.u32 %v5123, %v5121
    %v5127 = vshll.u32 %v5019, 16
    %v5129 = vrot.slane %v5127, 1
    %v5130 = vsel %vm1315, %v5125, %v5129
    %v5131 = vshrl.u32 %v5019, 16
    %v5133 = vor.u32 %v5131, %v5129
    %v5135 = vshll.u32 %v5020, 16
    %v5137 = vrot.slane %v5135, 1
    %v5138 = vsel %vm1315, %v5133, %v5137
    %v5139 = vshrl.u32 %v5020, 16
    %v5141 = vor.u32 %v5139, %v5137
    %v5143 = vshll.u32 %v5021, 16
    %v5145 = vrot.slane %v5143, 1
    %v5146 = vsel %vm1315, %v5141, %v5145
    %v5147 = vshrl.u32 %v5021, 16
    %v5149 = vor.u32 %v5147, %v5145
    %v5151 = vshll.u32 %v5022, 16
    %v5153 = vrot.slane %v5151, 1
    %v5154 = vsel %vm1315, %v5149, %v5153
    %v5155 = vshrl.u32 %v5022, 16
    %v5157 = vor.u32 %v5155, %v5153
    %v5159 = vshll.u32 %v5023, 16
    %v5161 = vrot.slane %v5159, 1
    %v5162 = vsel %vm1315, %v5157, %v5161
    %v5163 = vshrl.u32 %v5023, 16
    %v5165 = vor.u32 %v5163, %v5161
    %v5167 = vshll.u32 %v5024, 16
    %v5169 = vrot.slane %v5167, 1
    %v5170 = vsel %vm1315, %v5165, %v5169
    %v5171 = vshrl.u32 %v5024, 16
    %v5173 = vor.u32 %v5171, %v5169
    %v5175 = vshll.u32 %v5025, 16
    %v5177 = vrot.slane %v5175, 1
    %v5178 = vsel %vm1315, %v5173, %v5177
    %v5179 = vshrl.u32 %v5025, 16
    %v5181 = vor.u32 %v5179, %v5177
    %v5183 = vshll.u32 %v5026, 16
    %v5185 = vrot.slane %v5183, 1
    %v5186 = vsel %vm1315, %v5181, %v5185
    %v5187 = vshrl.u32 %v5026, 16
    %v5189 = vor.u32 %v5187, %v5185
    %v5191 = vshll.u32 %v5030, 16
    %v5193 = vrot.slane %v5191, 1
    %v5194 = vsel %vm1315, %v5189, %v5193
    %v5195 = vshrl.u32 %v5030, 16
    %v5197 = vor.u32 %v5195, %v5193
    %5198 = vrot.lane.b32.xlu0 %v5042, 64
    %v5199 = vpop.permute.xlu0 %5198
    %5200 = vrot.lane.b32.xlu0 %v5050, 64
    %v5201 = vpop.permute.xlu0 %5200
    %5202 = vrot.lane.b32.xlu0 %v5058, 64
    %v5203 = vpop.permute.xlu0 %5202
    %5204 = vrot.lane.b32.xlu0 %v5066, 64
    %v5205 = vpop.permute.xlu0 %5204
    %5206 = vrot.lane.b32.xlu0 %v5074, 64
    %v5207 = vpop.permute.xlu0 %5206
    %5208 = vrot.lane.b32.xlu0 %v5082, 64
    %v5209 = vpop.permute.xlu0 %5208
    %5210 = vrot.lane.b32.xlu0 %v5090, 64
    %v5211 = vpop.permute.xlu0 %5210
    %5212 = vrot.lane.b32.xlu0 %v5098, 64
    %v5213 = vpop.permute.xlu0 %5212
    %5214 = vrot.lane.b32.xlu0 %v5106, 64
    %v5215 = vpop.permute.xlu0 %5214
    %5216 = vrot.lane.b32.xlu0 %v5114, 64
    %v5217 = vpop.permute.xlu0 %5216
    %5218 = vrot.lane.b32.xlu0 %v5122, 64
    %v5219 = vpop.permute.xlu0 %5218
    %5220 = vrot.lane.b32.xlu0 %v5130, 64
    %v5221 = vpop.permute.xlu0 %5220
    %5222 = vrot.lane.b32.xlu0 %v5138, 64
    %v5223 = vpop.permute.xlu0 %5222
    %5224 = vrot.lane.b32.xlu0 %v5146, 64
    %v5225 = vpop.permute.xlu0 %5224
    %5226 = vrot.lane.b32.xlu0 %v5154, 64
    %v5227 = vpop.permute.xlu0 %5226
    %5228 = vrot.lane.b32.xlu0 %v5162, 64
    %v5229 = vpop.permute.xlu0 %5228
    %5230 = vrot.lane.b32.xlu0 %v5170, 64
    %v5231 = vpop.permute.xlu0 %5230
    %5232 = vrot.lane.b32.xlu0 %v5178, 64
    %v5233 = vpop.permute.xlu0 %5232
    %5234 = vrot.lane.b32.xlu0 %v5186, 64
    %v5235 = vpop.permute.xlu0 %5234
    %5236 = vrot.lane.b32.xlu0 %v5194, 64
    %v5237 = vpop.permute.xlu0 %5236
    %5238 = vrot.lane.b32.xlu0 %v5197, 64
    %v5239 = vpop.permute.xlu0 %5238
    %v5240 = vpack.c.b16 %v4967, %v4966
    %v5241 = vpack.c.b16 %v4969, %v4968
    %v5242 = vpack.c.b16 %v4971, %v4970
    %v5243 = vpack.c.b16 %v4973, %v4972
    %v5244 = vpack.c.b16 %v4975, %v4974
    %v5245 = vpack.c.b16 %v4977, %v4976
    %v5246 = vpack.c.b16 %v4979, %v4978
    %v5247 = vpack.c.b16 %v4981, %v4980
    %v5248 = vpack.c.b16 %v4983, %v4982
    %v5249 = vpack.c.b16 %v4985, %v4984
    %v5250 = vpack.c.b16 %v4987, %v4986
    %v5251 = vpack.c.b16 %v4989, %v4988
    %v5252 = vpack.c.b16 %v4991, %v4990
    %v5253 = vpack.c.b16 %v4993, %v4992
    %v5254 = vpack.c.b16 %v4995, %v4994
    %v5255 = vpack.c.b16 %v4997, %v4996
    %v5256 = vpack.c.b16 %v4999, %v4998
    %v5257 = vpack.c.b16 %v5001, %v5000
    %v5258 = vpack.c.b16 %v5003, %v5002
    %v5259 = vpack.c.b16 %v5005, %v5004
    %v5260 = vpack.c.b16 %v5029, %v5029
    %vm5261 = vcmask 1042432
    %v5262 = vrot.slane %v5240, 5
    %v5263 = vrot.slane %v5241, 5
    %v5264 = vsel %vm5261, %v5262, %v5263
    %v5265 = vrot.slane %v5242, 5
    %v5266 = vsel %vm5261, %v5263, %v5265
    %v5267 = vrot.slane %v5243, 5
    %v5268 = vsel %vm5261, %v5265, %v5267
    %v5269 = vrot.slane %v5244, 5
    %v5270 = vsel %vm5261, %v5267, %v5269
    %v5271 = vrot.slane %v5245, 5
    %v5272 = vsel %vm5261, %v5269, %v5271
    %v5273 = vrot.slane %v5246, 5
    %v5274 = vsel %vm5261, %v5271, %v5273
    %v5275 = vrot.slane %v5247, 5
    %v5276 = vsel %vm5261, %v5273, %v5275
    %v5277 = vrot.slane %v5248, 5
    %v5278 = vsel %vm5261, %v5275, %v5277
    %v5279 = vrot.slane %v5249, 5
    %v5280 = vsel %vm5261, %v5277, %v5279
    %v5281 = vrot.slane %v5250, 5
    %v5282 = vsel %vm5261, %v5279, %v5281
    %v5283 = vrot.slane %v5251, 5
    %v5284 = vsel %vm5261, %v5281, %v5283
    %v5285 = vrot.slane %v5252, 5
    %v5286 = vsel %vm5261, %v5283, %v5285
    %v5287 = vrot.slane %v5253, 5
    %v5288 = vsel %vm5261, %v5285, %v5287
    %v5289 = vrot.slane %v5254, 5
    %v5290 = vsel %vm5261, %v5287, %v5289
    %v5291 = vrot.slane %v5255, 5
    %v5292 = vsel %vm5261, %v5289, %v5291
    %v5293 = vrot.slane %v5256, 5
    %v5294 = vsel %vm5261, %v5291, %v5293
    %v5295 = vrot.slane %v5257, 5
    %v5296 = vsel %vm5261, %v5293, %v5295
    %v5297 = vrot.slane %v5258, 5
    %v5298 = vsel %vm5261, %v5295, %v5297
    %v5299 = vrot.slane %v5259, 5
    %v5300 = vsel %vm5261, %v5297, %v5299
    %v5301 = vrot.slane %v5260, 5
    %v5302 = vsel %vm5261, %v5299, %v5301
    %v5304 = vunpack.c.l.b16 %v4921
    %v5305 = vpack.c.b16 %v5304, %v5304
    %vm5306 = vsmask.f32 2304
    %v5308 = vshrl.u32 %v5240, 16
    %v5310 = vrot.slane %v5308, 5
    %v5311 = vshll.u32 %v5240, 16
    %v5313 = vrot.slane %v5311, 6
    %v5314 = vor.u32 %v5310, %v5313
    %v5316 = vshrl.u32 %v5241, 16
    %v5318 = vrot.slane %v5316, 5
    %v5319 = vshll.u32 %v5241, 16
    %v5321 = vrot.slane %v5319, 6
    %v5322 = vor.u32 %v5318, %v5321
    %v5323 = vsel %vm5306, %v5314, %v5322
    %v5325 = vshrl.u32 %v5242, 16
    %v5327 = vrot.slane %v5325, 5
    %v5328 = vshll.u32 %v5242, 16
    %v5330 = vrot.slane %v5328, 6
    %v5331 = vor.u32 %v5327, %v5330
    %v5332 = vsel %vm5306, %v5322, %v5331
    %v5334 = vshrl.u32 %v5243, 16
    %v5336 = vrot.slane %v5334, 5
    %v5337 = vshll.u32 %v5243, 16
    %v5339 = vrot.slane %v5337, 6
    %v5340 = vor.u32 %v5336, %v5339
    %v5341 = vsel %vm5306, %v5331, %v5340
    %v5343 = vshrl.u32 %v5244, 16
    %v5345 = vrot.slane %v5343, 5
    %v5346 = vshll.u32 %v5244, 16
    %v5348 = vrot.slane %v5346, 6
    %v5349 = vor.u32 %v5345, %v5348
    %v5350 = vsel %vm5306, %v5340, %v5349
    %v5352 = vshrl.u32 %v5245, 16
    %v5354 = vrot.slane %v5352, 5
    %v5355 = vshll.u32 %v5245, 16
    %v5357 = vrot.slane %v5355, 6
    %v5358 = vor.u32 %v5354, %v5357
    %v5359 = vsel %vm5306, %v5349, %v5358
    %v5361 = vshrl.u32 %v5246, 16
    %v5363 = vrot.slane %v5361, 5
    %v5364 = vshll.u32 %v5246, 16
    %v5366 = vrot.slane %v5364, 6
    %v5367 = vor.u32 %v5363, %v5366
    %v5368 = vsel %vm5306, %v5358, %v5367
    %v5370 = vshrl.u32 %v5247, 16
    %v5372 = vrot.slane %v5370, 5
    %v5373 = vshll.u32 %v5247, 16
    %v5375 = vrot.slane %v5373, 6
    %v5376 = vor.u32 %v5372, %v5375
    %v5377 = vsel %vm5306, %v5367, %v5376
    %v5379 = vshrl.u32 %v5248, 16
    %v5381 = vrot.slane %v5379, 5
    %v5382 = vshll.u32 %v5248, 16
    %v5384 = vrot.slane %v5382, 6
    %v5385 = vor.u32 %v5381, %v5384
    %v5386 = vsel %vm5306, %v5376, %v5385
    %v5388 = vshrl.u32 %v5249, 16
    %v5390 = vrot.slane %v5388, 5
    %v5391 = vshll.u32 %v5249, 16
    %v5393 = vrot.slane %v5391, 6
    %v5394 = vor.u32 %v5390, %v5393
    %v5395 = vsel %vm5306, %v5385, %v5394
    %v5397 = vshrl.u32 %v5250, 16
    %v5399 = vrot.slane %v5397, 5
    %v5400 = vshll.u32 %v5250, 16
    %v5402 = vrot.slane %v5400, 6
    %v5403 = vor.u32 %v5399, %v5402
    %v5404 = vsel %vm5306, %v5394, %v5403
    %v5406 = vshrl.u32 %v5251, 16
    %v5408 = vrot.slane %v5406, 5
    %v5409 = vshll.u32 %v5251, 16
    %v5411 = vrot.slane %v5409, 6
    %v5412 = vor.u32 %v5408, %v5411
    %v5413 = vsel %vm5306, %v5403, %v5412
    %v5415 = vshrl.u32 %v5252, 16
    %v5417 = vrot.slane %v5415, 5
    %v5418 = vshll.u32 %v5252, 16
    %v5420 = vrot.slane %v5418, 6
    %v5421 = vor.u32 %v5417, %v5420
    %v5422 = vsel %vm5306, %v5412, %v5421
    %v5424 = vshrl.u32 %v5253, 16
    %v5426 = vrot.slane %v5424, 5
    %v5427 = vshll.u32 %v5253, 16
    %v5429 = vrot.slane %v5427, 6
    %v5430 = vor.u32 %v5426, %v5429
    %v5431 = vsel %vm5306, %v5421, %v5430
    %v5433 = vshrl.u32 %v5254, 16
    %v5435 = vrot.slane %v5433, 5
    %v5436 = vshll.u32 %v5254, 16
    %v5438 = vrot.slane %v5436, 6
    %v5439 = vor.u32 %v5435, %v5438
    %v5440 = vsel %vm5306, %v5430, %v5439
    %v5442 = vshrl.u32 %v5255, 16
    %v5444 = vrot.slane %v5442, 5
    %v5445 = vshll.u32 %v5255, 16
    %v5447 = vrot.slane %v5445, 6
    %v5448 = vor.u32 %v5444, %v5447
    %v5449 = vsel %vm5306, %v5439, %v5448
    %v5451 = vshrl.u32 %v5256, 16
    %v5453 = vrot.slane %v5451, 5
    %v5454 = vshll.u32 %v5256, 16
    %v5456 = vrot.slane %v5454, 6
    %v5457 = vor.u32 %v5453, %v5456
    %v5458 = vsel %vm5306, %v5448, %v5457
    %v5460 = vshrl.u32 %v5257, 16
    %v5462 = vrot.slane %v5460, 5
    %v5463 = vshll.u32 %v5257, 16
    %v5465 = vrot.slane %v5463, 6
    %v5466 = vor.u32 %v5462, %v5465
    %v5467 = vsel %vm5306, %v5457, %v5466
    %v5469 = vshrl.u32 %v5258, 16
    %v5471 = vrot.slane %v5469, 5
    %v5472 = vshll.u32 %v5258, 16
    %v5474 = vrot.slane %v5472, 6
    %v5475 = vor.u32 %v5471, %v5474
    %v5476 = vsel %vm5306, %v5466, %v5475
    %v5478 = vshrl.u32 %v5259, 16
    %v5480 = vrot.slane %v5478, 5
    %v5481 = vshll.u32 %v5259, 16
    %v5483 = vrot.slane %v5481, 6
    %v5484 = vor.u32 %v5480, %v5483
    %v5485 = vsel %vm5306, %v5475, %v5484
    %v5487 = vshrl.u32 %v5305, 16
    %v5489 = vrot.slane %v5487, 5
    %v5490 = vshll.u32 %v5305, 16
    %v5492 = vrot.slane %v5490, 6
    %v5493 = vor.u32 %v5489, %v5492
    %v5494 = vsel %vm5306, %v5484, %v5493
    %5495 = vrot.lane.b32.xlu0 %v5314, 64
    %v5496 = vpop.permute.xlu0 %5495
    %5497 = vrot.lane.b32.xlu0 %v5323, 64
    %v5498 = vpop.permute.xlu0 %5497
    %5499 = vrot.lane.b32.xlu0 %v5332, 64
    %v5500 = vpop.permute.xlu0 %5499
    %5501 = vrot.lane.b32.xlu0 %v5341, 64
    %v5502 = vpop.permute.xlu0 %5501
    %5503 = vrot.lane.b32.xlu0 %v5350, 64
    %v5504 = vpop.permute.xlu0 %5503
    %5505 = vrot.lane.b32.xlu0 %v5359, 64
    %v5506 = vpop.permute.xlu0 %5505
    %5507 = vrot.lane.b32.xlu0 %v5368, 64
    %v5508 = vpop.permute.xlu0 %5507
    %5509 = vrot.lane.b32.xlu0 %v5377, 64
    %v5510 = vpop.permute.xlu0 %5509
    %5511 = vrot.lane.b32.xlu0 %v5386, 64
    %v5512 = vpop.permute.xlu0 %5511
    %5513 = vrot.lane.b32.xlu0 %v5395, 64
    %v5514 = vpop.permute.xlu0 %5513
    %5515 = vrot.lane.b32.xlu0 %v5404, 64
    %v5516 = vpop.permute.xlu0 %5515
    %5517 = vrot.lane.b32.xlu0 %v5413, 64
    %v5518 = vpop.permute.xlu0 %5517
    %5519 = vrot.lane.b32.xlu0 %v5422, 64
    %v5520 = vpop.permute.xlu0 %5519
    %5521 = vrot.lane.b32.xlu0 %v5431, 64
    %v5522 = vpop.permute.xlu0 %5521
    %5523 = vrot.lane.b32.xlu0 %v5440, 64
    %v5524 = vpop.permute.xlu0 %5523
    %5525 = vrot.lane.b32.xlu0 %v5449, 64
    %v5526 = vpop.permute.xlu0 %5525
    %5527 = vrot.lane.b32.xlu0 %v5458, 64
    %v5528 = vpop.permute.xlu0 %5527
    %5529 = vrot.lane.b32.xlu0 %v5467, 64
    %v5530 = vpop.permute.xlu0 %5529
    %5531 = vrot.lane.b32.xlu0 %v5476, 64
    %v5532 = vpop.permute.xlu0 %5531
    %5533 = vrot.lane.b32.xlu0 %v5485, 64
    %v5534 = vpop.permute.xlu0 %5533
    %5535 = vrot.lane.b32.xlu0 %v5494, 64
    %v5536 = vpop.permute.xlu0 %5535
    %v5538 = vunpack.c.l.b16 %v4922
    %v5539 = vpack.c.b16 %v4967, %v5538
    %v5540 = vrot.slane %v5539, 6
    %v5541 = vrot.slane %v5241, 6
    %v5542 = vsel %vm3919, %v5540, %v5541
    %v5543 = vrot.slane %v5242, 6
    %v5544 = vsel %vm3919, %v5541, %v5543
    %v5545 = vrot.slane %v5243, 6
    %v5546 = vsel %vm3919, %v5543, %v5545
    %v5547 = vrot.slane %v5244, 6
    %v5548 = vsel %vm3919, %v5545, %v5547
    %v5549 = vrot.slane %v5245, 6
    %v5550 = vsel %vm3919, %v5547, %v5549
    %v5551 = vrot.slane %v5246, 6
    %v5552 = vsel %vm3919, %v5549, %v5551
    %v5553 = vrot.slane %v5247, 6
    %v5554 = vsel %vm3919, %v5551, %v5553
    %v5555 = vrot.slane %v5248, 6
    %v5556 = vsel %vm3919, %v5553, %v5555
    %v5557 = vrot.slane %v5249, 6
    %v5558 = vsel %vm3919, %v5555, %v5557
    %v5559 = vrot.slane %v5250, 6
    %v5560 = vsel %vm3919, %v5557, %v5559
    %v5561 = vrot.slane %v5251, 6
    %v5562 = vsel %vm3919, %v5559, %v5561
    %v5563 = vrot.slane %v5252, 6
    %v5564 = vsel %vm3919, %v5561, %v5563
    %v5565 = vrot.slane %v5253, 6
    %v5566 = vsel %vm3919, %v5563, %v5565
    %v5567 = vrot.slane %v5254, 6
    %v5568 = vsel %vm3919, %v5565, %v5567
    %v5569 = vrot.slane %v5255, 6
    %v5570 = vsel %vm3919, %v5567, %v5569
    %v5571 = vrot.slane %v5256, 6
    %v5572 = vsel %vm3919, %v5569, %v5571
    %v5573 = vrot.slane %v5257, 6
    %v5574 = vsel %vm3919, %v5571, %v5573
    %v5575 = vrot.slane %v5258, 6
    %v5576 = vsel %vm3919, %v5573, %v5575
    %v5577 = vrot.slane %v5259, 6
    %v5578 = vsel %vm3919, %v5575, %v5577
    %v5579 = vrot.slane %v5305, 6
    %v5580 = vsel %vm3919, %v5577, %v5579
    %v5582 = vsel %vm242, %v5007, %v5199
    %v5584 = vsel %vm242, %v5008, %v5201
    %v5586 = vsel %vm242, %v5009, %v5203
    %v5588 = vsel %vm242, %v5010, %v5205
    %v5590 = vsel %vm242, %v5011, %v5207
    %v5592 = vsel %vm242, %v5012, %v5209
    %v5594 = vsel %vm242, %v5013, %v5211
    %v5596 = vsel %vm242, %v5014, %v5213
    %v5598 = vsel %vm242, %v5015, %v5215
    %v5600 = vsel %vm242, %v5016, %v5217
    %v5602 = vsel %vm242, %v5017, %v5219
    %v5604 = vsel %vm242, %v5018, %v5221
    %v5606 = vsel %vm242, %v5019, %v5223
    %v5608 = vsel %vm242, %v5020, %v5225
    %v5610 = vsel %vm242, %v5021, %v5227
    %v5612 = vsel %vm242, %v5022, %v5229
    %v5614 = vsel %vm242, %v5023, %v5231
    %v5616 = vsel %vm242, %v5024, %v5233
    %v5618 = vsel %vm242, %v5025, %v5235
    %v5620 = vsel %vm242, %v5026, %v5237
    %v5623 = vsel %vm242, %v5027, %v5239
    %v5626 = vsel %vm242, %v5262, %v5496
    %v5629 = vsel %vm242, %v5264, %v5498
    %v5632 = vsel %vm242, %v5266, %v5500
    %v5635 = vsel %vm242, %v5268, %v5502
    %v5638 = vsel %vm242, %v5270, %v5504
    %v5641 = vsel %vm242, %v5272, %v5506
    %v5644 = vsel %vm242, %v5274, %v5508
    %v5647 = vsel %vm242, %v5276, %v5510
    %v5650 = vsel %vm242, %v5278, %v5512
    %v5653 = vsel %vm242, %v5280, %v5514
    %v5656 = vsel %vm242, %v5282, %v5516
    %v5659 = vsel %vm242, %v5284, %v5518
    %v5662 = vsel %vm242, %v5286, %v5520
    %v5665 = vsel %vm242, %v5288, %v5522
    %v5668 = vsel %vm242, %v5290, %v5524
    %v5671 = vsel %vm242, %v5292, %v5526
    %v5674 = vsel %vm242, %v5294, %v5528
    %v5677 = vsel %vm242, %v5296, %v5530
    %v5680 = vsel %vm242, %v5298, %v5532
    %v5683 = vsel %vm242, %v5300, %v5534
    %v5686 = vsel %vm242, %v5302, %v5536
    %s5687 = scalar_lea.vmem %s2, 480
    %v5688 = vld [vmem:[%s5687] sm:$0xf]
    %v5689 = vld [vmem:[%s5687 + $0x4] sm:$0xf]
    %v5690 = vld [vmem:[%s5687 + $0x8] sm:$0xf]
    %v5691 = vld [vmem:[%s5687 + $0xc] sm:$0xf]
    %v5692 = vld [vmem:[%s5687 + $0x10] sm:$0xf]
    %v5693 = vld [vmem:[%s5687 + $0x14] sm:$0xf]
    %v5694 = vld [vmem:[%s5687 + $0x18] sm:$0xf]
    %v5695 = vld [vmem:[%s5687 + $0x1c] sm:$0xf]
    %v5696 = vld [vmem:[%s5687 + $0x20] sm:$0xf]
    %v5697 = vld [vmem:[%s5687 + $0x24] sm:$0xf]
    %v5698 = vld [vmem:[%s5687 + $0x28] sm:$0xf]
    %v5699 = vld [vmem:[%s5687 + $0x2c] sm:$0xf]
    %v5700 = vld [vmem:[%s5687 + $0x30] sm:$0xf]
    %v5701 = vld [vmem:[%s5687 + $0x34] sm:$0xf]
    %v5702 = vld [vmem:[%s5687 + $0x38] sm:$0xf]
    %v5703 = vld [vmem:[%s5687 + $0x3c] sm:$0xf]
    %v5704 = vld [vmem:[%s5687 + $0x40] sm:$0xf]
    %v5705 = vld [vmem:[%s5687 + $0x44] sm:$0xf]
    %v5706 = vld [vmem:[%s5687 + $0x48] sm:$0xf]
    %v5707 = vld [vmem:[%s5687 + $0x4c] sm:$0xf]
    %v5708 = vld [vmem:[%s5687 + $0x50] sm:$0xf]
    %v5709 = vld [vmem:[%s5687 + $0x54] sm:$0xf]
    %v5710 = vld [vmem:[%s5687 + $0x58] sm:$0xf]
    %v5711 = vld [vmem:[%s5687 + $0x5c] sm:$0xf]
    %v5712 = vld [vmem:[%s5687 + $0x60] sm:$0xf]
    %v5713 = vld [vmem:[%s5687 + $0x64] sm:$0xf]
    %v5714 = vld [vmem:[%s5687 + $0x68] sm:$0xf]
    %v5715 = vld [vmem:[%s5687 + $0x6c] sm:$0xf]
    %v5716 = vld [vmem:[%s5687 + $0x70] sm:$0xf]
    %v5717 = vld [vmem:[%s5687 + $0x74] sm:$0xf]
    %v5718 = vld [vmem:[%s5687 + $0x78] sm:$0xf]
    %v5719 = vld [vmem:[%s5687 + $0x7c] sm:$0xf]
    %v5720 = vld [vmem:[%s5687 + $0x80] sm:$0xf]
    %v5721 = vld [vmem:[%s5687 + $0x84] sm:$0xf]
    %v5722 = vld [vmem:[%s5687 + $0x88] sm:$0xf]
    %v5723 = vld [vmem:[%s5687 + $0x8c] sm:$0xf]
    %v5724 = vld [vmem:[%s5687 + $0x90] sm:$0xf]
    %v5725 = vld [vmem:[%s5687 + $0x94] sm:$0xf]
    %v5726 = vld [vmem:[%s5687 + $0x98] sm:$0xf]
    %v5727 = vld [vmem:[%s5687 + $0x9c] sm:$0xf]
    %vm5770 = vcmask 1044480
    %v5771 = vrot.slane %v5582, 3
    %v5772 = vrot.slane %v5584, 3
    %v5773 = vsel %vm5770, %v5771, %v5772
    %v5774 = vrot.slane %v5626, 3
    %v5775 = vrot.slane %v5629, 3
    %v5776 = vsel %vm5770, %v5774, %v5775
    %v5777 = vrot.slane %v5540, 3
    %v5778 = vrot.slane %v5542, 3
    %v5779 = vsel %vm5770, %v5777, %v5778
    %v5780 = vrot.slane %v5586, 3
    %v5781 = vsel %vm5770, %v5772, %v5780
    %v5782 = vrot.slane %v5632, 3
    %v5783 = vsel %vm5770, %v5775, %v5782
    %v5784 = vrot.slane %v5544, 3
    %v5785 = vsel %vm5770, %v5778, %v5784
    %v5786 = vrot.slane %v5588, 3
    %v5787 = vsel %vm5770, %v5780, %v5786
    %v5788 = vrot.slane %v5635, 3
    %v5789 = vsel %vm5770, %v5782, %v5788
    %v5790 = vrot.slane %v5546, 3
    %v5791 = vsel %vm5770, %v5784, %v5790
    %v5792 = vrot.slane %v5590, 3
    %v5793 = vsel %vm5770, %v5786, %v5792
    %v5794 = vrot.slane %v5638, 3
    %v5795 = vsel %vm5770, %v5788, %v5794
    %v5796 = vrot.slane %v5548, 3
    %v5797 = vsel %vm5770, %v5790, %v5796
    %v5798 = vrot.slane %v5592, 3
    %v5799 = vsel %vm5770, %v5792, %v5798
    %v5800 = vrot.slane %v5641, 3
    %v5801 = vsel %vm5770, %v5794, %v5800
    %v5802 = vrot.slane %v5550, 3
    %v5803 = vsel %vm5770, %v5796, %v5802
    %v5804 = vrot.slane %v5594, 3
    %v5805 = vsel %vm5770, %v5798, %v5804
    %v5806 = vrot.slane %v5644, 3
    %v5807 = vsel %vm5770, %v5800, %v5806
    %v5808 = vrot.slane %v5552, 3
    %v5809 = vsel %vm5770, %v5802, %v5808
    %v5810 = vrot.slane %v5596, 3
    %v5811 = vsel %vm5770, %v5804, %v5810
    %v5812 = vrot.slane %v5647, 3
    %v5813 = vsel %vm5770, %v5806, %v5812
    %v5814 = vrot.slane %v5554, 3
    %v5815 = vsel %vm5770, %v5808, %v5814
    %v5816 = vrot.slane %v5598, 3
    %v5817 = vsel %vm5770, %v5810, %v5816
    %v5818 = vrot.slane %v5650, 3
    %v5819 = vsel %vm5770, %v5812, %v5818
    %v5820 = vrot.slane %v5556, 3
    %v5821 = vsel %vm5770, %v5814, %v5820
    %v5822 = vrot.slane %v5600, 3
    %v5823 = vsel %vm5770, %v5816, %v5822
    %v5824 = vrot.slane %v5653, 3
    %v5825 = vsel %vm5770, %v5818, %v5824
    %v5826 = vrot.slane %v5558, 3
    %v5827 = vsel %vm5770, %v5820, %v5826
    %v5828 = vrot.slane %v5602, 3
    %v5829 = vsel %vm5770, %v5822, %v5828
    %v5830 = vrot.slane %v5656, 3
    %v5831 = vsel %vm5770, %v5824, %v5830
    %v5832 = vrot.slane %v5560, 3
    %v5833 = vsel %vm5770, %v5826, %v5832
    %v5834 = vrot.slane %v5604, 3
    %v5835 = vsel %vm5770, %v5828, %v5834
    %v5836 = vrot.slane %v5659, 3
    %v5837 = vsel %vm5770, %v5830, %v5836
    %v5838 = vrot.slane %v5562, 3
    %v5839 = vsel %vm5770, %v5832, %v5838
    %v5840 = vrot.slane %v5606, 3
    %v5841 = vsel %vm5770, %v5834, %v5840
    %v5842 = vrot.slane %v5662, 3
    %v5843 = vsel %vm5770, %v5836, %v5842
    %v5844 = vrot.slane %v5564, 3
    %v5845 = vsel %vm5770, %v5838, %v5844
    %v5846 = vrot.slane %v5608, 3
    %v5847 = vsel %vm5770, %v5840, %v5846
    %v5848 = vrot.slane %v5665, 3
    %v5849 = vsel %vm5770, %v5842, %v5848
    %v5850 = vrot.slane %v5566, 3
    %v5851 = vsel %vm5770, %v5844, %v5850
    %v5852 = vrot.slane %v5610, 3
    %v5853 = vsel %vm5770, %v5846, %v5852
    %v5854 = vrot.slane %v5668, 3
    %v5855 = vsel %vm5770, %v5848, %v5854
    %v5856 = vrot.slane %v5568, 3
    %v5857 = vsel %vm5770, %v5850, %v5856
    %v5858 = vrot.slane %v5612, 3
    %v5859 = vsel %vm5770, %v5852, %v5858
    %v5860 = vrot.slane %v5671, 3
    %v5861 = vsel %vm5770, %v5854, %v5860
    %v5862 = vrot.slane %v5570, 3
    %v5863 = vsel %vm5770, %v5856, %v5862
    %v5864 = vrot.slane %v5614, 3
    %v5865 = vsel %vm5770, %v5858, %v5864
    %v5866 = vrot.slane %v5674, 3
    %v5867 = vsel %vm5770, %v5860, %v5866
    %v5868 = vrot.slane %v5572, 3
    %v5869 = vsel %vm5770, %v5862, %v5868
    %v5870 = vrot.slane %v5616, 3
    %v5871 = vsel %vm5770, %v5864, %v5870
    %v5872 = vrot.slane %v5677, 3
    %v5873 = vsel %vm5770, %v5866, %v5872
    %v5874 = vrot.slane %v5574, 3
    %v5875 = vsel %vm5770, %v5868, %v5874
    %v5876 = vrot.slane %v5618, 3
    %v5877 = vsel %vm5770, %v5870, %v5876
    %v5878 = vrot.slane %v5680, 3
    %v5879 = vsel %vm5770, %v5872, %v5878
    %v5880 = vrot.slane %v5576, 3
    %v5881 = vsel %vm5770, %v5874, %v5880
    %v5882 = vrot.slane %v5620, 3
    %v5883 = vsel %vm5770, %v5876, %v5882
    %v5884 = vrot.slane %v5683, 3
    %v5885 = vsel %vm5770, %v5878, %v5884
    %v5886 = vrot.slane %v5578, 3
    %v5887 = vsel %vm5770, %v5880, %v5886
    %v5888 = vrot.slane %v5623, 3
    %v5889 = vsel %vm5770, %v5882, %v5888
    %v5890 = vrot.slane %v5686, 3
    %v5891 = vsel %vm5770, %v5884, %v5890
    %v5892 = vrot.slane %v5580, 3
    %v5893 = vsel %vm5770, %v5886, %v5892
    %v5976 = vunpack.c.l.b16 %v5688
    %v5977 = vunpack.c.l.b16 %v5689
    %v5978 = vunpack.c.l.b16 %v5690
    %v5979 = vunpack.c.l.b16 %v5691
    %v5980 = vunpack.c.l.b16 %v5692
    %v5981 = vunpack.c.l.b16 %v5693
    %v5982 = vunpack.c.l.b16 %v5694
    %v5983 = vunpack.c.l.b16 %v5695
    %v5984 = vunpack.c.l.b16 %v5696
    %v5985 = vunpack.c.l.b16 %v5697
    %v5986 = vunpack.c.l.b16 %v5698
    %v5987 = vunpack.c.l.b16 %v5699
    %v5988 = vunpack.c.l.b16 %v5700
    %v5989 = vunpack.c.l.b16 %v5701
    %v5990 = vunpack.c.l.b16 %v5702
    %v5991 = vunpack.c.l.b16 %v5703
    %v5992 = vunpack.c.l.b16 %v5704
    %v5993 = vunpack.c.l.b16 %v5705
    %v5994 = vunpack.c.l.b16 %v5706
    %v5995 = vunpack.c.l.b16 %v5707
    %v5996 = vunpack.c.l.b16 %v5708
    %v5997 = vunpack.c.l.b16 %v5709
    %v5998 = vunpack.c.l.b16 %v5710
    %v5999 = vunpack.c.l.b16 %v5711
    %v6000 = vunpack.c.l.b16 %v5712
    %v6001 = vunpack.c.l.b16 %v5713
    %v6002 = vunpack.c.l.b16 %v5714
    %v6003 = vunpack.c.l.b16 %v5715
    %v6004 = vunpack.c.l.b16 %v5716
    %v6005 = vunpack.c.l.b16 %v5717
    %v6006 = vunpack.c.l.b16 %v5718
    %v6007 = vunpack.c.l.b16 %v5719
    %v6008 = vunpack.c.l.b16 %v5720
    %v6009 = vunpack.c.l.b16 %v5721
    %v6010 = vunpack.c.l.b16 %v5722
    %v6011 = vunpack.c.l.b16 %v5723
    %v6012 = vunpack.c.l.b16 %v5724
    %v6013 = vunpack.c.l.b16 %v5725
    %v6014 = vunpack.c.l.b16 %v5726
    %v6015 = vunpack.c.l.b16 %v5727
    %v6016 = vpack.c.b16 %v5977, %v5976
    %v6017 = vpack.c.b16 %v5979, %v5978
    %v6018 = vpack.c.b16 %v5981, %v5980
    %v6019 = vpack.c.b16 %v5983, %v5982
    %v6020 = vpack.c.b16 %v5985, %v5984
    %v6021 = vpack.c.b16 %v5987, %v5986
    %v6022 = vpack.c.b16 %v5989, %v5988
    %v6023 = vpack.c.b16 %v5991, %v5990
    %v6024 = vpack.c.b16 %v5993, %v5992
    %v6025 = vpack.c.b16 %v5995, %v5994
    %v6026 = vpack.c.b16 %v5997, %v5996
    %v6027 = vpack.c.b16 %v5999, %v5998
    %v6028 = vpack.c.b16 %v6001, %v6000
    %v6029 = vpack.c.b16 %v6003, %v6002
    %v6030 = vpack.c.b16 %v6005, %v6004
    %v6031 = vpack.c.b16 %v6007, %v6006
    %v6032 = vpack.c.b16 %v6009, %v6008
    %v6033 = vpack.c.b16 %v6011, %v6010
    %v6034 = vpack.c.b16 %v6013, %v6012
    %v6035 = vpack.c.b16 %v6015, %v6014
    %v6057 = vsel %vm242, %v5779, 0
    %v6060 = vsel %vm242, %v5785, 0
    %v6063 = vsel %vm242, %v5791, 0
    %v6066 = vsel %vm242, %v5797, 0
    %v6069 = vsel %vm242, %v5803, 0
    %v6072 = vsel %vm242, %v5809, 0
    %v6075 = vsel %vm242, %v5815, 0
    %v6078 = vsel %vm242, %v5821, 0
    %v6081 = vsel %vm242, %v5827, 0
    %v6084 = vsel %vm242, %v5833, 0
    %v6087 = vsel %vm242, %v5839, 0
    %v6090 = vsel %vm242, %v5845, 0
    %v6093 = vsel %vm242, %v5851, 0
    %v6096 = vsel %vm242, %v5857, 0
    %v6099 = vsel %vm242, %v5863, 0
    %v6102 = vsel %vm242, %v5869, 0
    %v6105 = vsel %vm242, %v5875, 0
    %v6108 = vsel %vm242, %v5881, 0
    %v6111 = vsel %vm242, %v5887, 0
    %v6114 = vsel %vm242, %v5893, 0
    %v6117 = vsel %vm242, %v5892, 0
    %6119 = vmatpush.bf16.msra.mxu0 %v6023
    %6120 = vmatpush.bf16.msra.mxu0 %v6022
    %6121 = vmatpush.bf16.msra.mxu0 %v6021
    %6122 = vmatpush.bf16.msra.mxu0 %v6020
    %6123 = vmatpush.bf16.msra.mxu0 %v6019
    %6124 = vmatpush.bf16.msra.mxu0 %v6018
    %6125 = vmatpush.bf16.msra.mxu0 %v6017
    %6126 = vmatpush.bf16.msra.mxu0 %v6016
    %6127 = vmatmul.bf16.gmra.mxu0 %v5773
    %v6128 = vpop.f32.mrf.mxu0
    %v6129 = vadd.f32 0.0, %v6128
    %v6130 = vpop.f32.mrf.mxu0
    %v6131 = vadd.f32 0.0, %v6130
    %6132 = vmatmul.bf16.gmra.mxu0 %v5781
    %v6133 = vpop.f32.mrf.mxu0
    %v6134 = vadd.f32 0.0, %v6133
    %v6135 = vpop.f32.mrf.mxu0
    %v6136 = vadd.f32 0.0, %v6135
    %6137 = vmatmul.bf16.gmra.mxu0 %v5787
    %v6138 = vpop.f32.mrf.mxu0
    %v6139 = vadd.f32 0.0, %v6138
    %v6140 = vpop.f32.mrf.mxu0
    %v6141 = vadd.f32 0.0, %v6140
    %6142 = vmatmul.bf16.gmra.mxu0 %v5793
    %v6143 = vpop.f32.mrf.mxu0
    %v6144 = vadd.f32 0.0, %v6143
    %v6145 = vpop.f32.mrf.mxu0
    %v6146 = vadd.f32 0.0, %v6145
    %6147 = vmatmul.bf16.gmra.mxu0 %v5799
    %v6148 = vpop.f32.mrf.mxu0
    %v6149 = vadd.f32 0.0, %v6148
    %v6150 = vpop.f32.mrf.mxu0
    %v6151 = vadd.f32 0.0, %v6150
    %6152 = vmatmul.bf16.gmra.mxu0 %v5805
    %v6153 = vpop.f32.mrf.mxu0
    %v6154 = vadd.f32 0.0, %v6153
    %v6155 = vpop.f32.mrf.mxu0
    %v6156 = vadd.f32 0.0, %v6155
    %6157 = vmatmul.bf16.gmra.mxu0 %v5811
    %v6158 = vpop.f32.mrf.mxu0
    %v6159 = vadd.f32 0.0, %v6158
    %v6160 = vpop.f32.mrf.mxu0
    %v6161 = vadd.f32 0.0, %v6160
    %6162 = vmatmul.bf16.gmra.mxu0 %v5817
    %v6163 = vpop.f32.mrf.mxu0
    %v6164 = vadd.f32 0.0, %v6163
    %v6165 = vpop.f32.mrf.mxu0
    %v6166 = vadd.f32 0.0, %v6165
    %6167 = vmatmul.bf16.gmra.mxu0 %v5823
    %v6168 = vpop.f32.mrf.mxu0
    %v6169 = vadd.f32 0.0, %v6168
    %v6170 = vpop.f32.mrf.mxu0
    %v6171 = vadd.f32 0.0, %v6170
    %6172 = vmatmul.bf16.gmra.mxu0 %v5829
    %v6173 = vpop.f32.mrf.mxu0
    %v6174 = vadd.f32 0.0, %v6173
    %v6175 = vpop.f32.mrf.mxu0
    %v6176 = vadd.f32 0.0, %v6175
    %6177 = vmatmul.bf16.gmra.mxu0 %v5835
    %v6178 = vpop.f32.mrf.mxu0
    %v6179 = vadd.f32 0.0, %v6178
    %v6180 = vpop.f32.mrf.mxu0
    %v6181 = vadd.f32 0.0, %v6180
    %6182 = vmatmul.bf16.gmra.mxu0 %v5841
    %v6183 = vpop.f32.mrf.mxu0
    %v6184 = vadd.f32 0.0, %v6183
    %v6185 = vpop.f32.mrf.mxu0
    %v6186 = vadd.f32 0.0, %v6185
    %6187 = vmatmul.bf16.gmra.mxu0 %v5847
    %v6188 = vpop.f32.mrf.mxu0
    %v6189 = vadd.f32 0.0, %v6188
    %v6190 = vpop.f32.mrf.mxu0
    %v6191 = vadd.f32 0.0, %v6190
    %6192 = vmatmul.bf16.gmra.mxu0 %v5853
    %v6193 = vpop.f32.mrf.mxu0
    %v6194 = vadd.f32 0.0, %v6193
    %v6195 = vpop.f32.mrf.mxu0
    %v6196 = vadd.f32 0.0, %v6195
    %6197 = vmatmul.bf16.gmra.mxu0 %v5859
    %v6198 = vpop.f32.mrf.mxu0
    %v6199 = vadd.f32 0.0, %v6198
    %v6200 = vpop.f32.mrf.mxu0
    %v6201 = vadd.f32 0.0, %v6200
    %6202 = vmatmul.bf16.gmra.mxu0 %v5865
    %v6203 = vpop.f32.mrf.mxu0
    %v6204 = vadd.f32 0.0, %v6203
    %v6205 = vpop.f32.mrf.mxu0
    %v6206 = vadd.f32 0.0, %v6205
    %6207 = vmatmul.bf16.gmra.mxu0 %v5871
    %v6208 = vpop.f32.mrf.mxu0
    %v6209 = vadd.f32 0.0, %v6208
    %v6210 = vpop.f32.mrf.mxu0
    %v6211 = vadd.f32 0.0, %v6210
    %6212 = vmatmul.bf16.gmra.mxu0 %v5877
    %v6213 = vpop.f32.mrf.mxu0
    %v6214 = vadd.f32 0.0, %v6213
    %v6215 = vpop.f32.mrf.mxu0
    %v6216 = vadd.f32 0.0, %v6215
    %6217 = vmatmul.bf16.gmra.mxu0 %v5883
    %v6218 = vpop.f32.mrf.mxu0
    %v6219 = vadd.f32 0.0, %v6218
    %v6220 = vpop.f32.mrf.mxu0
    %v6221 = vadd.f32 0.0, %v6220
    %6222 = vmatmul.bf16.gmra.mxu0 %v5889
    %v6223 = vpop.f32.mrf.mxu0
    %v6224 = vadd.f32 0.0, %v6223
    %v6225 = vpop.f32.mrf.mxu0
    %v6226 = vadd.f32 0.0, %v6225
    %6227 = vmatmul.bf16.gmra.mxu0 %v5888
    %v6228 = vpop.f32.mrf.mxu0
    %v6229 = vadd.f32 0.0, %v6228
    %v6230 = vpop.f32.mrf.mxu0
    %6231 = vdwg.mxu0
    %6232 = vmatpush.bf16.msra.mxu0 %v6031
    %6233 = vmatpush.bf16.msra.mxu0 %v6030
    %6234 = vmatpush.bf16.msra.mxu0 %v6029
    %6235 = vmatpush.bf16.msra.mxu0 %v6028
    %6236 = vmatpush.bf16.msra.mxu0 %v6027
    %6237 = vmatpush.bf16.msra.mxu0 %v6026
    %6238 = vmatpush.bf16.msra.mxu0 %v6025
    %6239 = vmatpush.bf16.msra.mxu0 %v6024
    %6240 = vmatmul.bf16.gmra.mxu0 %v5776
    %v6241 = vpop.f32.mrf.mxu0
    %v6242 = vadd.f32 %v6129, %v6241
    %v6243 = vpop.f32.mrf.mxu0
    %v6244 = vadd.f32 %v6131, %v6243
    %6245 = vmatmul.bf16.gmra.mxu0 %v5783
    %v6246 = vpop.f32.mrf.mxu0
    %v6247 = vadd.f32 %v6134, %v6246
    %v6248 = vpop.f32.mrf.mxu0
    %v6249 = vadd.f32 %v6136, %v6248
    %6250 = vmatmul.bf16.gmra.mxu0 %v5789
    %v6251 = vpop.f32.mrf.mxu0
    %v6252 = vadd.f32 %v6139, %v6251
    %v6253 = vpop.f32.mrf.mxu0
    %v6254 = vadd.f32 %v6141, %v6253
    %6255 = vmatmul.bf16.gmra.mxu0 %v5795
    %v6256 = vpop.f32.mrf.mxu0
    %v6257 = vadd.f32 %v6144, %v6256
    %v6258 = vpop.f32.mrf.mxu0
    %v6259 = vadd.f32 %v6146, %v6258
    %6260 = vmatmul.bf16.gmra.mxu0 %v5801
    %v6261 = vpop.f32.mrf.mxu0
    %v6262 = vadd.f32 %v6149, %v6261
    %v6263 = vpop.f32.mrf.mxu0
    %v6264 = vadd.f32 %v6151, %v6263
    %6265 = vmatmul.bf16.gmra.mxu0 %v5807
    %v6266 = vpop.f32.mrf.mxu0
    %v6267 = vadd.f32 %v6154, %v6266
    %v6268 = vpop.f32.mrf.mxu0
    %v6269 = vadd.f32 %v6156, %v6268
    %6270 = vmatmul.bf16.gmra.mxu0 %v5813
    %v6271 = vpop.f32.mrf.mxu0
    %v6272 = vadd.f32 %v6159, %v6271
    %v6273 = vpop.f32.mrf.mxu0
    %v6274 = vadd.f32 %v6161, %v6273
    %6275 = vmatmul.bf16.gmra.mxu0 %v5819
    %v6276 = vpop.f32.mrf.mxu0
    %v6277 = vadd.f32 %v6164, %v6276
    %v6278 = vpop.f32.mrf.mxu0
    %v6279 = vadd.f32 %v6166, %v6278
    %6280 = vmatmul.bf16.gmra.mxu0 %v5825
    %v6281 = vpop.f32.mrf.mxu0
    %v6282 = vadd.f32 %v6169, %v6281
    %v6283 = vpop.f32.mrf.mxu0
    %v6284 = vadd.f32 %v6171, %v6283
    %6285 = vmatmul.bf16.gmra.mxu0 %v5831
    %v6286 = vpop.f32.mrf.mxu0
    %v6287 = vadd.f32 %v6174, %v6286
    %v6288 = vpop.f32.mrf.mxu0
    %v6289 = vadd.f32 %v6176, %v6288
    %6290 = vmatmul.bf16.gmra.mxu0 %v5837
    %v6291 = vpop.f32.mrf.mxu0
    %v6292 = vadd.f32 %v6179, %v6291
    %v6293 = vpop.f32.mrf.mxu0
    %v6294 = vadd.f32 %v6181, %v6293
    %6295 = vmatmul.bf16.gmra.mxu0 %v5843
    %v6296 = vpop.f32.mrf.mxu0
    %v6297 = vadd.f32 %v6184, %v6296
    %v6298 = vpop.f32.mrf.mxu0
    %v6299 = vadd.f32 %v6186, %v6298
    %6300 = vmatmul.bf16.gmra.mxu0 %v5849
    %v6301 = vpop.f32.mrf.mxu0
    %v6302 = vadd.f32 %v6189, %v6301
    %v6303 = vpop.f32.mrf.mxu0
    %v6304 = vadd.f32 %v6191, %v6303
    %6305 = vmatmul.bf16.gmra.mxu0 %v5855
    %v6306 = vpop.f32.mrf.mxu0
    %v6307 = vadd.f32 %v6194, %v6306
    %v6308 = vpop.f32.mrf.mxu0
    %v6309 = vadd.f32 %v6196, %v6308
    %6310 = vmatmul.bf16.gmra.mxu0 %v5861
    %v6311 = vpop.f32.mrf.mxu0
    %v6312 = vadd.f32 %v6199, %v6311
    %v6313 = vpop.f32.mrf.mxu0
    %v6314 = vadd.f32 %v6201, %v6313
    %6315 = vmatmul.bf16.gmra.mxu0 %v5867
    %v6316 = vpop.f32.mrf.mxu0
    %v6317 = vadd.f32 %v6204, %v6316
    %v6318 = vpop.f32.mrf.mxu0
    %v6319 = vadd.f32 %v6206, %v6318
    %6320 = vmatmul.bf16.gmra.mxu0 %v5873
    %v6321 = vpop.f32.mrf.mxu0
    %v6322 = vadd.f32 %v6209, %v6321
    %v6323 = vpop.f32.mrf.mxu0
    %v6324 = vadd.f32 %v6211, %v6323
    %6325 = vmatmul.bf16.gmra.mxu0 %v5879
    %v6326 = vpop.f32.mrf.mxu0
    %v6327 = vadd.f32 %v6214, %v6326
    %v6328 = vpop.f32.mrf.mxu0
    %v6329 = vadd.f32 %v6216, %v6328
    %6330 = vmatmul.bf16.gmra.mxu0 %v5885
    %v6331 = vpop.f32.mrf.mxu0
    %v6332 = vadd.f32 %v6219, %v6331
    %v6333 = vpop.f32.mrf.mxu0
    %v6334 = vadd.f32 %v6221, %v6333
    %6335 = vmatmul.bf16.gmra.mxu0 %v5891
    %v6336 = vpop.f32.mrf.mxu0
    %v6337 = vadd.f32 %v6224, %v6336
    %v6338 = vpop.f32.mrf.mxu0
    %v6339 = vadd.f32 %v6226, %v6338
    %6340 = vmatmul.bf16.gmra.mxu0 %v5890
    %v6341 = vpop.f32.mrf.mxu0
    %v6342 = vadd.f32 %v6229, %v6341
    %v6343 = vpop.f32.mrf.mxu0
    %6344 = vdwg.mxu0
    %6345 = vmatpush.bf16.msra.mxu0 0
    %6346 = vmatpush.bf16.msra.mxu0 0
    %6347 = vmatpush.bf16.msra.mxu0 0
    %6348 = vmatpush.bf16.msra.mxu0 0
    %6349 = vmatpush.bf16.msra.mxu0 %v6035
    %6350 = vmatpush.bf16.msra.mxu0 %v6034
    %6351 = vmatpush.bf16.msra.mxu0 %v6033
    %6352 = vmatpush.bf16.msra.mxu0 %v6032
    %6353 = vmatmul.bf16.gmra.mxu0 %v6057
    %v6354 = vpop.f32.mrf.mxu0
    %v6355 = vadd.f32 %v6242, %v6354
    %v6356 = vpop.f32.mrf.mxu0
    %v6357 = vadd.f32 %v6244, %v6356
    %6358 = vmatmul.bf16.gmra.mxu0 %v6060
    %v6359 = vpop.f32.mrf.mxu0
    %v6360 = vadd.f32 %v6247, %v6359
    %v6361 = vpop.f32.mrf.mxu0
    %v6362 = vadd.f32 %v6249, %v6361
    %6363 = vmatmul.bf16.gmra.mxu0 %v6063
    %v6364 = vpop.f32.mrf.mxu0
    %v6365 = vadd.f32 %v6252, %v6364
    %v6366 = vpop.f32.mrf.mxu0
    %v6367 = vadd.f32 %v6254, %v6366
    %6368 = vmatmul.bf16.gmra.mxu0 %v6066
    %v6369 = vpop.f32.mrf.mxu0
    %v6370 = vadd.f32 %v6257, %v6369
    %v6371 = vpop.f32.mrf.mxu0
    %v6372 = vadd.f32 %v6259, %v6371
    %6373 = vmatmul.bf16.gmra.mxu0 %v6069
    %v6374 = vpop.f32.mrf.mxu0
    %v6375 = vadd.f32 %v6262, %v6374
    %v6376 = vpop.f32.mrf.mxu0
    %v6377 = vadd.f32 %v6264, %v6376
    %6378 = vmatmul.bf16.gmra.mxu0 %v6072
    %v6379 = vpop.f32.mrf.mxu0
    %v6380 = vadd.f32 %v6267, %v6379
    %v6381 = vpop.f32.mrf.mxu0
    %v6382 = vadd.f32 %v6269, %v6381
    %6383 = vmatmul.bf16.gmra.mxu0 %v6075
    %v6384 = vpop.f32.mrf.mxu0
    %v6385 = vadd.f32 %v6272, %v6384
    %v6386 = vpop.f32.mrf.mxu0
    %v6387 = vadd.f32 %v6274, %v6386
    %6388 = vmatmul.bf16.gmra.mxu0 %v6078
    %v6389 = vpop.f32.mrf.mxu0
    %v6390 = vadd.f32 %v6277, %v6389
    %v6391 = vpop.f32.mrf.mxu0
    %v6392 = vadd.f32 %v6279, %v6391
    %6393 = vmatmul.bf16.gmra.mxu0 %v6081
    %v6394 = vpop.f32.mrf.mxu0
    %v6395 = vadd.f32 %v6282, %v6394
    %v6396 = vpop.f32.mrf.mxu0
    %v6397 = vadd.f32 %v6284, %v6396
    %6398 = vmatmul.bf16.gmra.mxu0 %v6084
    %v6399 = vpop.f32.mrf.mxu0
    %v6400 = vadd.f32 %v6287, %v6399
    %v6401 = vpop.f32.mrf.mxu0
    %v6402 = vadd.f32 %v6289, %v6401
    %6403 = vmatmul.bf16.gmra.mxu0 %v6087
    %v6404 = vpop.f32.mrf.mxu0
    %v6405 = vadd.f32 %v6292, %v6404
    %v6406 = vpop.f32.mrf.mxu0
    %v6407 = vadd.f32 %v6294, %v6406
    %6408 = vmatmul.bf16.gmra.mxu0 %v6090
    %v6409 = vpop.f32.mrf.mxu0
    %v6410 = vadd.f32 %v6297, %v6409
    %v6411 = vpop.f32.mrf.mxu0
    %v6412 = vadd.f32 %v6299, %v6411
    %6413 = vmatmul.bf16.gmra.mxu0 %v6093
    %v6414 = vpop.f32.mrf.mxu0
    %v6415 = vadd.f32 %v6302, %v6414
    %v6416 = vpop.f32.mrf.mxu0
    %v6417 = vadd.f32 %v6304, %v6416
    %6418 = vmatmul.bf16.gmra.mxu0 %v6096
    %v6419 = vpop.f32.mrf.mxu0
    %v6420 = vadd.f32 %v6307, %v6419
    %v6421 = vpop.f32.mrf.mxu0
    %v6422 = vadd.f32 %v6309, %v6421
    %6423 = vmatmul.bf16.gmra.mxu0 %v6099
    %v6424 = vpop.f32.mrf.mxu0
    %v6425 = vadd.f32 %v6312, %v6424
    %v6426 = vpop.f32.mrf.mxu0
    %v6427 = vadd.f32 %v6314, %v6426
    %6428 = vmatmul.bf16.gmra.mxu0 %v6102
    %v6429 = vpop.f32.mrf.mxu0
    %v6430 = vadd.f32 %v6317, %v6429
    %v6431 = vpop.f32.mrf.mxu0
    %v6432 = vadd.f32 %v6319, %v6431
    %6433 = vmatmul.bf16.gmra.mxu0 %v6105
    %v6434 = vpop.f32.mrf.mxu0
    %v6435 = vadd.f32 %v6322, %v6434
    %v6436 = vpop.f32.mrf.mxu0
    %v6437 = vadd.f32 %v6324, %v6436
    %6438 = vmatmul.bf16.gmra.mxu0 %v6108
    %v6439 = vpop.f32.mrf.mxu0
    %v6440 = vadd.f32 %v6327, %v6439
    %v6441 = vpop.f32.mrf.mxu0
    %v6442 = vadd.f32 %v6329, %v6441
    %6443 = vmatmul.bf16.gmra.mxu0 %v6111
    %v6444 = vpop.f32.mrf.mxu0
    %v6445 = vadd.f32 %v6332, %v6444
    %v6446 = vpop.f32.mrf.mxu0
    %v6447 = vadd.f32 %v6334, %v6446
    %6448 = vmatmul.bf16.gmra.mxu0 %v6114
    %v6449 = vpop.f32.mrf.mxu0
    %v6450 = vadd.f32 %v6337, %v6449
    %v6451 = vpop.f32.mrf.mxu0
    %v6452 = vadd.f32 %v6339, %v6451
    %6453 = vmatmul.bf16.gmra.mxu0 %v6117
    %v6454 = vpop.f32.mrf.mxu0
    %v6455 = vadd.f32 %v6342, %v6454
    %v6456 = vpop.f32.mrf.mxu0
    %6457 = vdwg.mxu0
    %v6458 = vadd.f32 %v4837, %v6355
    %v6459 = vadd.f32 %v4838, %v6357
    %v6460 = vadd.f32 %v4839, %v6360
    %v6461 = vadd.f32 %v4840, %v6362
    %v6462 = vadd.f32 %v4841, %v6365
    %v6463 = vadd.f32 %v4842, %v6367
    %v6464 = vadd.f32 %v4843, %v6370
    %v6465 = vadd.f32 %v4844, %v6372
    %v6466 = vadd.f32 %v4845, %v6375
    %v6467 = vadd.f32 %v4846, %v6377
    %v6468 = vadd.f32 %v4847, %v6380
    %v6469 = vadd.f32 %v4848, %v6382
    %v6470 = vadd.f32 %v4849, %v6385
    %v6471 = vadd.f32 %v4850, %v6387
    %v6472 = vadd.f32 %v4851, %v6390
    %v6473 = vadd.f32 %v4852, %v6392
    %v6474 = vadd.f32 %v4853, %v6395
    %v6475 = vadd.f32 %v4854, %v6397
    %v6476 = vadd.f32 %v4855, %v6400
    %v6477 = vadd.f32 %v4856, %v6402
    %v6478 = vadd.f32 %v4857, %v6405
    %v6479 = vadd.f32 %v4858, %v6407
    %v6480 = vadd.f32 %v4859, %v6410
    %v6481 = vadd.f32 %v4860, %v6412
    %v6482 = vadd.f32 %v4861, %v6415
    %v6483 = vadd.f32 %v4862, %v6417
    %v6484 = vadd.f32 %v4863, %v6420
    %v6485 = vadd.f32 %v4864, %v6422
    %v6486 = vadd.f32 %v4865, %v6425
    %v6487 = vadd.f32 %v4866, %v6427
    %v6488 = vadd.f32 %v4867, %v6430
    %v6489 = vadd.f32 %v4868, %v6432
    %v6490 = vadd.f32 %v4869, %v6435
    %v6491 = vadd.f32 %v4870, %v6437
    %v6492 = vadd.f32 %v4871, %v6440
    %v6493 = vadd.f32 %v4872, %v6442
    %v6494 = vadd.f32 %v4873, %v6445
    %v6495 = vadd.f32 %v4874, %v6447
    %v6496 = vadd.f32 %v4875, %v6450
    %v6497 = vadd.f32 %v4876, %v6452
    %v6498 = vadd.f32 %v4877, %v6455
    %v6499 = vld [vmem:[#allocation2 + $0x24] sm:$0xf]
    %v6500 = vld [vmem:[#allocation2 + $0x28] sm:$0xf]
    %v6501 = vld [vmem:[#allocation2 + $0x2c] sm:$0xf]
    %v6502 = vld [vmem:[#allocation2 + $0x30] sm:$0xf]
    %v6503 = vld [vmem:[#allocation2 + $0x34] sm:$0xf]
    %v6504 = vld [vmem:[#allocation2 + $0x38] sm:$0xf]
    %v6505 = vld [vmem:[#allocation2 + $0x3c] sm:$0xf]
    %v6506 = vld [vmem:[#allocation2 + $0x40] sm:$0xf]
    %v6507 = vld [vmem:[#allocation2 + $0x44] sm:$0xf]
    %v6508 = vld [vmem:[#allocation2 + $0x48] sm:$0xf]
    %v6509 = vld [vmem:[#allocation2 + $0x4c] sm:$0xf]
    %v6510 = vld [vmem:[#allocation2 + $0x50] sm:$0xf]
    %v6511 = vld [vmem:[#allocation2 + $0x54] sm:$0xf]
    %v6512 = vld [vmem:[#allocation2 + $0x58] sm:$0xf]
    %v6513 = vld [vmem:[#allocation2 + $0x5c] sm:$0xf]
    %v6514 = vld [vmem:[#allocation2 + $0x60] sm:$0xf]
    %v6515 = vld [vmem:[#allocation2 + $0x64] sm:$0xf]
    %v6516 = vld [vmem:[#allocation2 + $0x68] sm:$0xf]
    %v6517 = vld [vmem:[#allocation2 + $0x6c] sm:$0xf]
    %v6518 = vld [vmem:[#allocation2 + $0x70] sm:$0xf]
    %v6519 = vld [vmem:[#allocation2 + $0x74] sm:$0xf]
    %v6520 = vld [vmem:[#allocation2 + $0x78] sm:$0xf]
    %v6521 = vld [vmem:[#allocation2 + $0x7c] sm:$0xf]
    %v6522 = vld [vmem:[#allocation2 + $0x80] sm:$0xf]
    %v6523 = vld [vmem:[#allocation2 + $0x84] sm:$0xf]
    %v6524 = vld [vmem:[#allocation2 + $0x88] sm:$0xf]
    %v6525 = vld [vmem:[#allocation2 + $0x8c] sm:$0xf]
    %v6526 = vld [vmem:[#allocation2 + $0x90] sm:$0xf]
    %v6527 = vld [vmem:[#allocation2 + $0x94] sm:$0xf]
    %v6528 = vld [vmem:[#allocation2 + $0x98] sm:$0xf]
    %v6529 = vld [vmem:[#allocation2 + $0x9c] sm:$0xf]
    %v6530 = vld [vmem:[#allocation2 + $0xa0] sm:$0xf]
    %v6531 = vld [vmem:[#allocation2 + $0xa4] sm:$0xf]
    %v6532 = vld [vmem:[#allocation2 + $0xa8] sm:$0xf]
    %v6533 = vld [vmem:[#allocation2 + $0xac] sm:$0xf]
    %v6534 = vld [vmem:[#allocation2 + $0xb0] sm:$0xf]
    %v6535 = vld [vmem:[#allocation2 + $0xb4] sm:$0xf]
    %v6536 = vld [vmem:[#allocation2 + $0xb8] sm:$0xf]
    %v6537 = vld [vmem:[#allocation2 + $0xbc] sm:$0xf]
    %v6538 = vld [vmem:[#allocation2 + $0xc0] sm:$0xf]
    %v6539 = vld [vmem:[#allocation2 + $0xc4] sm:$0x3]
    %v6540 = vld [vmem:[#allocation2 + $0xc4] sm:$0x7]
    %v6541 = vld [vmem:[#allocation2 + $0x24] sm:$0xe]
    %v6542 = vld [vmem:[#allocation2 + $0xc4] sm:$0xf]
    %v6543 = vld [vmem:[#allocation2 + $0x24] sm:$0xc]
    %v6585 = vunpack.c.l.b16 %v6499
    %v6586 = vunpack.c.l.b16 %v6500
    %v6587 = vunpack.c.l.b16 %v6501
    %v6588 = vunpack.c.l.b16 %v6502
    %v6589 = vunpack.c.l.b16 %v6503
    %v6590 = vunpack.c.l.b16 %v6504
    %v6591 = vunpack.c.l.b16 %v6505
    %v6592 = vunpack.c.l.b16 %v6506
    %v6593 = vunpack.c.l.b16 %v6507
    %v6594 = vunpack.c.l.b16 %v6508
    %v6595 = vunpack.c.l.b16 %v6509
    %v6596 = vunpack.c.l.b16 %v6510
    %v6597 = vunpack.c.l.b16 %v6511
    %v6598 = vunpack.c.l.b16 %v6512
    %v6599 = vunpack.c.l.b16 %v6513
    %v6600 = vunpack.c.l.b16 %v6514
    %v6601 = vunpack.c.l.b16 %v6515
    %v6602 = vunpack.c.l.b16 %v6516
    %v6603 = vunpack.c.l.b16 %v6517
    %v6604 = vunpack.c.l.b16 %v6518
    %v6605 = vunpack.c.l.b16 %v6519
    %v6606 = vunpack.c.l.b16 %v6520
    %v6607 = vunpack.c.l.b16 %v6521
    %v6608 = vunpack.c.l.b16 %v6522
    %v6609 = vunpack.c.l.b16 %v6523
    %v6610 = vunpack.c.l.b16 %v6524
    %v6611 = vunpack.c.l.b16 %v6525
    %v6612 = vunpack.c.l.b16 %v6526
    %v6613 = vunpack.c.l.b16 %v6527
    %v6614 = vunpack.c.l.b16 %v6528
    %v6615 = vunpack.c.l.b16 %v6529
    %v6616 = vunpack.c.l.b16 %v6530
    %v6617 = vunpack.c.l.b16 %v6531
    %v6618 = vunpack.c.l.b16 %v6532
    %v6619 = vunpack.c.l.b16 %v6533
    %v6620 = vunpack.c.l.b16 %v6534
    %v6621 = vunpack.c.l.b16 %v6535
    %v6622 = vunpack.c.l.b16 %v6536
    %v6623 = vunpack.c.l.b16 %v6537
    %v6624 = vunpack.c.l.b16 %v6538
    %v6625 = vunpack.c.l.b16 %v6539
    %v6626 = vpack.c.b16 %v6586, %v6585
    %v6627 = vpack.c.b16 %v6588, %v6587
    %v6628 = vpack.c.b16 %v6590, %v6589
    %v6629 = vpack.c.b16 %v6592, %v6591
    %v6630 = vpack.c.b16 %v6594, %v6593
    %v6631 = vpack.c.b16 %v6596, %v6595
    %v6632 = vpack.c.b16 %v6598, %v6597
    %v6633 = vpack.c.b16 %v6600, %v6599
    %v6634 = vpack.c.b16 %v6602, %v6601
    %v6635 = vpack.c.b16 %v6604, %v6603
    %v6636 = vpack.c.b16 %v6606, %v6605
    %v6637 = vpack.c.b16 %v6608, %v6607
    %v6638 = vpack.c.b16 %v6610, %v6609
    %v6639 = vpack.c.b16 %v6612, %v6611
    %v6640 = vpack.c.b16 %v6614, %v6613
    %v6641 = vpack.c.b16 %v6616, %v6615
    %v6642 = vpack.c.b16 %v6618, %v6617
    %v6643 = vpack.c.b16 %v6620, %v6619
    %v6644 = vpack.c.b16 %v6622, %v6621
    %v6645 = vpack.c.b16 %v6624, %v6623
    %v6646 = vpack.c.b16 %v6625, %v6625
    %v6648 = vunpack.c.l.b16 %v6540
    %v6649 = vpack.c.b16 %v6648, %v6648
    %v6651 = vshrl.u32 %v6626, 16
    %v6653 = vshll.u32 %v6626, 16
    %v6655 = vrot.slane %v6653, 1
    %v6656 = vor.u32 %v6651, %v6655
    %v6658 = vshll.u32 %v6627, 16
    %v6660 = vrot.slane %v6658, 1
    %v6661 = vsel %vm1315, %v6656, %v6660
    %v6662 = vshrl.u32 %v6627, 16
    %v6664 = vor.u32 %v6662, %v6660
    %v6666 = vshll.u32 %v6628, 16
    %v6668 = vrot.slane %v6666, 1
    %v6669 = vsel %vm1315, %v6664, %v6668
    %v6670 = vshrl.u32 %v6628, 16
    %v6672 = vor.u32 %v6670, %v6668
    %v6674 = vshll.u32 %v6629, 16
    %v6676 = vrot.slane %v6674, 1
    %v6677 = vsel %vm1315, %v6672, %v6676
    %v6678 = vshrl.u32 %v6629, 16
    %v6680 = vor.u32 %v6678, %v6676
    %v6682 = vshll.u32 %v6630, 16
    %v6684 = vrot.slane %v6682, 1
    %v6685 = vsel %vm1315, %v6680, %v6684
    %v6686 = vshrl.u32 %v6630, 16
    %v6688 = vor.u32 %v6686, %v6684
    %v6690 = vshll.u32 %v6631, 16
    %v6692 = vrot.slane %v6690, 1
    %v6693 = vsel %vm1315, %v6688, %v6692
    %v6694 = vshrl.u32 %v6631, 16
    %v6696 = vor.u32 %v6694, %v6692
    %v6698 = vshll.u32 %v6632, 16
    %v6700 = vrot.slane %v6698, 1
    %v6701 = vsel %vm1315, %v6696, %v6700
    %v6702 = vshrl.u32 %v6632, 16
    %v6704 = vor.u32 %v6702, %v6700
    %v6706 = vshll.u32 %v6633, 16
    %v6708 = vrot.slane %v6706, 1
    %v6709 = vsel %vm1315, %v6704, %v6708
    %v6710 = vshrl.u32 %v6633, 16
    %v6712 = vor.u32 %v6710, %v6708
    %v6714 = vshll.u32 %v6634, 16
    %v6716 = vrot.slane %v6714, 1
    %v6717 = vsel %vm1315, %v6712, %v6716
    %v6718 = vshrl.u32 %v6634, 16
    %v6720 = vor.u32 %v6718, %v6716
    %v6722 = vshll.u32 %v6635, 16
    %v6724 = vrot.slane %v6722, 1
    %v6725 = vsel %vm1315, %v6720, %v6724
    %v6726 = vshrl.u32 %v6635, 16
    %v6728 = vor.u32 %v6726, %v6724
    %v6730 = vshll.u32 %v6636, 16
    %v6732 = vrot.slane %v6730, 1
    %v6733 = vsel %vm1315, %v6728, %v6732
    %v6734 = vshrl.u32 %v6636, 16
    %v6736 = vor.u32 %v6734, %v6732
    %v6738 = vshll.u32 %v6637, 16
    %v6740 = vrot.slane %v6738, 1
    %v6741 = vsel %vm1315, %v6736, %v6740
    %v6742 = vshrl.u32 %v6637, 16
    %v6744 = vor.u32 %v6742, %v6740
    %v6746 = vshll.u32 %v6638, 16
    %v6748 = vrot.slane %v6746, 1
    %v6749 = vsel %vm1315, %v6744, %v6748
    %v6750 = vshrl.u32 %v6638, 16
    %v6752 = vor.u32 %v6750, %v6748
    %v6754 = vshll.u32 %v6639, 16
    %v6756 = vrot.slane %v6754, 1
    %v6757 = vsel %vm1315, %v6752, %v6756
    %v6758 = vshrl.u32 %v6639, 16
    %v6760 = vor.u32 %v6758, %v6756
    %v6762 = vshll.u32 %v6640, 16
    %v6764 = vrot.slane %v6762, 1
    %v6765 = vsel %vm1315, %v6760, %v6764
    %v6766 = vshrl.u32 %v6640, 16
    %v6768 = vor.u32 %v6766, %v6764
    %v6770 = vshll.u32 %v6641, 16
    %v6772 = vrot.slane %v6770, 1
    %v6773 = vsel %vm1315, %v6768, %v6772
    %v6774 = vshrl.u32 %v6641, 16
    %v6776 = vor.u32 %v6774, %v6772
    %v6778 = vshll.u32 %v6642, 16
    %v6780 = vrot.slane %v6778, 1
    %v6781 = vsel %vm1315, %v6776, %v6780
    %v6782 = vshrl.u32 %v6642, 16
    %v6784 = vor.u32 %v6782, %v6780
    %v6786 = vshll.u32 %v6643, 16
    %v6788 = vrot.slane %v6786, 1
    %v6789 = vsel %vm1315, %v6784, %v6788
    %v6790 = vshrl.u32 %v6643, 16
    %v6792 = vor.u32 %v6790, %v6788
    %v6794 = vshll.u32 %v6644, 16
    %v6796 = vrot.slane %v6794, 1
    %v6797 = vsel %vm1315, %v6792, %v6796
    %v6798 = vshrl.u32 %v6644, 16
    %v6800 = vor.u32 %v6798, %v6796
    %v6802 = vshll.u32 %v6645, 16
    %v6804 = vrot.slane %v6802, 1
    %v6805 = vsel %vm1315, %v6800, %v6804
    %v6806 = vshrl.u32 %v6645, 16
    %v6808 = vor.u32 %v6806, %v6804
    %v6810 = vshll.u32 %v6649, 16
    %v6812 = vrot.slane %v6810, 1
    %v6813 = vsel %vm1315, %v6808, %v6812
    %v6814 = vshrl.u32 %v6649, 16
    %v6816 = vor.u32 %v6814, %v6812
    %6817 = vrot.lane.b32.xlu0 %v6661, 64
    %v6818 = vpop.permute.xlu0 %6817
    %6819 = vrot.lane.b32.xlu0 %v6669, 64
    %v6820 = vpop.permute.xlu0 %6819
    %6821 = vrot.lane.b32.xlu0 %v6677, 64
    %v6822 = vpop.permute.xlu0 %6821
    %6823 = vrot.lane.b32.xlu0 %v6685, 64
    %v6824 = vpop.permute.xlu0 %6823
    %6825 = vrot.lane.b32.xlu0 %v6693, 64
    %v6826 = vpop.permute.xlu0 %6825
    %6827 = vrot.lane.b32.xlu0 %v6701, 64
    %v6828 = vpop.permute.xlu0 %6827
    %6829 = vrot.lane.b32.xlu0 %v6709, 64
    %v6830 = vpop.permute.xlu0 %6829
    %6831 = vrot.lane.b32.xlu0 %v6717, 64
    %v6832 = vpop.permute.xlu0 %6831
    %6833 = vrot.lane.b32.xlu0 %v6725, 64
    %v6834 = vpop.permute.xlu0 %6833
    %6835 = vrot.lane.b32.xlu0 %v6733, 64
    %v6836 = vpop.permute.xlu0 %6835
    %6837 = vrot.lane.b32.xlu0 %v6741, 64
    %v6838 = vpop.permute.xlu0 %6837
    %6839 = vrot.lane.b32.xlu0 %v6749, 64
    %v6840 = vpop.permute.xlu0 %6839
    %6841 = vrot.lane.b32.xlu0 %v6757, 64
    %v6842 = vpop.permute.xlu0 %6841
    %6843 = vrot.lane.b32.xlu0 %v6765, 64
    %v6844 = vpop.permute.xlu0 %6843
    %6845 = vrot.lane.b32.xlu0 %v6773, 64
    %v6846 = vpop.permute.xlu0 %6845
    %6847 = vrot.lane.b32.xlu0 %v6781, 64
    %v6848 = vpop.permute.xlu0 %6847
    %6849 = vrot.lane.b32.xlu0 %v6789, 64
    %v6850 = vpop.permute.xlu0 %6849
    %6851 = vrot.lane.b32.xlu0 %v6797, 64
    %v6852 = vpop.permute.xlu0 %6851
    %6853 = vrot.lane.b32.xlu0 %v6805, 64
    %v6854 = vpop.permute.xlu0 %6853
    %6855 = vrot.lane.b32.xlu0 %v6813, 64
    %v6856 = vpop.permute.xlu0 %6855
    %6857 = vrot.lane.b32.xlu0 %v6816, 64
    %v6858 = vpop.permute.xlu0 %6857
    %v6860 = vunpack.c.l.b16 %v6541
    %v6861 = vpack.c.b16 %v6586, %v6860
    %v6862 = vrot.slane %v6861, 1
    %v6863 = vrot.slane %v6627, 1
    %v6864 = vsel %vm1528, %v6862, %v6863
    %v6865 = vrot.slane %v6628, 1
    %v6866 = vsel %vm1528, %v6863, %v6865
    %v6867 = vrot.slane %v6629, 1
    %v6868 = vsel %vm1528, %v6865, %v6867
    %v6869 = vrot.slane %v6630, 1
    %v6870 = vsel %vm1528, %v6867, %v6869
    %v6871 = vrot.slane %v6631, 1
    %v6872 = vsel %vm1528, %v6869, %v6871
    %v6873 = vrot.slane %v6632, 1
    %v6874 = vsel %vm1528, %v6871, %v6873
    %v6875 = vrot.slane %v6633, 1
    %v6876 = vsel %vm1528, %v6873, %v6875
    %v6877 = vrot.slane %v6634, 1
    %v6878 = vsel %vm1528, %v6875, %v6877
    %v6879 = vrot.slane %v6635, 1
    %v6880 = vsel %vm1528, %v6877, %v6879
    %v6881 = vrot.slane %v6636, 1
    %v6882 = vsel %vm1528, %v6879, %v6881
    %v6883 = vrot.slane %v6637, 1
    %v6884 = vsel %vm1528, %v6881, %v6883
    %v6885 = vrot.slane %v6638, 1
    %v6886 = vsel %vm1528, %v6883, %v6885
    %v6887 = vrot.slane %v6639, 1
    %v6888 = vsel %vm1528, %v6885, %v6887
    %v6889 = vrot.slane %v6640, 1
    %v6890 = vsel %vm1528, %v6887, %v6889
    %v6891 = vrot.slane %v6641, 1
    %v6892 = vsel %vm1528, %v6889, %v6891
    %v6893 = vrot.slane %v6642, 1
    %v6894 = vsel %vm1528, %v6891, %v6893
    %v6895 = vrot.slane %v6643, 1
    %v6896 = vsel %vm1528, %v6893, %v6895
    %v6897 = vrot.slane %v6644, 1
    %v6898 = vsel %vm1528, %v6895, %v6897
    %v6899 = vrot.slane %v6645, 1
    %v6900 = vsel %vm1528, %v6897, %v6899
    %v6901 = vrot.slane %v6649, 1
    %v6902 = vsel %vm1528, %v6899, %v6901
    %v6904 = vunpack.c.l.b16 %v6542
    %v6905 = vpack.c.b16 %v6904, %v6904
    %v6907 = vshrl.u32 %v6861, 16
    %v6909 = vrot.slane %v6907, 1
    %v6910 = vshll.u32 %v6861, 16
    %v6912 = vrot.slane %v6910, 2
    %v6913 = vor.u32 %v6909, %v6912
    %v6914 = vrot.slane %v6662, 1
    %v6915 = vrot.slane %v6658, 2
    %v6916 = vor.u32 %v6914, %v6915
    %v6917 = vsel %vm1573, %v6913, %v6916
    %v6918 = vrot.slane %v6670, 1
    %v6919 = vrot.slane %v6666, 2
    %v6920 = vor.u32 %v6918, %v6919
    %v6921 = vsel %vm1573, %v6916, %v6920
    %v6922 = vrot.slane %v6678, 1
    %v6923 = vrot.slane %v6674, 2
    %v6924 = vor.u32 %v6922, %v6923
    %v6925 = vsel %vm1573, %v6920, %v6924
    %v6926 = vrot.slane %v6686, 1
    %v6927 = vrot.slane %v6682, 2
    %v6928 = vor.u32 %v6926, %v6927
    %v6929 = vsel %vm1573, %v6924, %v6928
    %v6930 = vrot.slane %v6694, 1
    %v6931 = vrot.slane %v6690, 2
    %v6932 = vor.u32 %v6930, %v6931
    %v6933 = vsel %vm1573, %v6928, %v6932
    %v6934 = vrot.slane %v6702, 1
    %v6935 = vrot.slane %v6698, 2
    %v6936 = vor.u32 %v6934, %v6935
    %v6937 = vsel %vm1573, %v6932, %v6936
    %v6938 = vrot.slane %v6710, 1
    %v6939 = vrot.slane %v6706, 2
    %v6940 = vor.u32 %v6938, %v6939
    %v6941 = vsel %vm1573, %v6936, %v6940
    %v6942 = vrot.slane %v6718, 1
    %v6943 = vrot.slane %v6714, 2
    %v6944 = vor.u32 %v6942, %v6943
    %v6945 = vsel %vm1573, %v6940, %v6944
    %v6946 = vrot.slane %v6726, 1
    %v6947 = vrot.slane %v6722, 2
    %v6948 = vor.u32 %v6946, %v6947
    %v6949 = vsel %vm1573, %v6944, %v6948
    %v6950 = vrot.slane %v6734, 1
    %v6951 = vrot.slane %v6730, 2
    %v6952 = vor.u32 %v6950, %v6951
    %v6953 = vsel %vm1573, %v6948, %v6952
    %v6954 = vrot.slane %v6742, 1
    %v6955 = vrot.slane %v6738, 2
    %v6956 = vor.u32 %v6954, %v6955
    %v6957 = vsel %vm1573, %v6952, %v6956
    %v6958 = vrot.slane %v6750, 1
    %v6959 = vrot.slane %v6746, 2
    %v6960 = vor.u32 %v6958, %v6959
    %v6961 = vsel %vm1573, %v6956, %v6960
    %v6962 = vrot.slane %v6758, 1
    %v6963 = vrot.slane %v6754, 2
    %v6964 = vor.u32 %v6962, %v6963
    %v6965 = vsel %vm1573, %v6960, %v6964
    %v6966 = vrot.slane %v6766, 1
    %v6967 = vrot.slane %v6762, 2
    %v6968 = vor.u32 %v6966, %v6967
    %v6969 = vsel %vm1573, %v6964, %v6968
    %v6970 = vrot.slane %v6774, 1
    %v6971 = vrot.slane %v6770, 2
    %v6972 = vor.u32 %v6970, %v6971
    %v6973 = vsel %vm1573, %v6968, %v6972
    %v6974 = vrot.slane %v6782, 1
    %v6975 = vrot.slane %v6778, 2
    %v6976 = vor.u32 %v6974, %v6975
    %v6977 = vsel %vm1573, %v6972, %v6976
    %v6978 = vrot.slane %v6790, 1
    %v6979 = vrot.slane %v6786, 2
    %v6980 = vor.u32 %v6978, %v6979
    %v6981 = vsel %vm1573, %v6976, %v6980
    %v6982 = vrot.slane %v6798, 1
    %v6983 = vrot.slane %v6794, 2
    %v6984 = vor.u32 %v6982, %v6983
    %v6985 = vsel %vm1573, %v6980, %v6984
    %v6986 = vrot.slane %v6806, 1
    %v6987 = vrot.slane %v6802, 2
    %v6988 = vor.u32 %v6986, %v6987
    %v6989 = vsel %vm1573, %v6984, %v6988
    %v6991 = vshrl.u32 %v6905, 16
    %v6993 = vrot.slane %v6991, 1
    %v6994 = vshll.u32 %v6905, 16
    %v6996 = vrot.slane %v6994, 2
    %v6997 = vor.u32 %v6993, %v6996
    %v6998 = vsel %vm1573, %v6988, %v6997
    %6999 = vrot.lane.b32.xlu0 %v6917, 64
    %v7000 = vpop.permute.xlu0 %6999
    %7001 = vrot.lane.b32.xlu0 %v6921, 64
    %v7002 = vpop.permute.xlu0 %7001
    %7003 = vrot.lane.b32.xlu0 %v6925, 64
    %v7004 = vpop.permute.xlu0 %7003
    %7005 = vrot.lane.b32.xlu0 %v6929, 64
    %v7006 = vpop.permute.xlu0 %7005
    %7007 = vrot.lane.b32.xlu0 %v6933, 64
    %v7008 = vpop.permute.xlu0 %7007
    %7009 = vrot.lane.b32.xlu0 %v6937, 64
    %v7010 = vpop.permute.xlu0 %7009
    %7011 = vrot.lane.b32.xlu0 %v6941, 64
    %v7012 = vpop.permute.xlu0 %7011
    %7013 = vrot.lane.b32.xlu0 %v6945, 64
    %v7014 = vpop.permute.xlu0 %7013
    %7015 = vrot.lane.b32.xlu0 %v6949, 64
    %v7016 = vpop.permute.xlu0 %7015
    %7017 = vrot.lane.b32.xlu0 %v6953, 64
    %v7018 = vpop.permute.xlu0 %7017
    %7019 = vrot.lane.b32.xlu0 %v6957, 64
    %v7020 = vpop.permute.xlu0 %7019
    %7021 = vrot.lane.b32.xlu0 %v6961, 64
    %v7022 = vpop.permute.xlu0 %7021
    %7023 = vrot.lane.b32.xlu0 %v6965, 64
    %v7024 = vpop.permute.xlu0 %7023
    %7025 = vrot.lane.b32.xlu0 %v6969, 64
    %v7026 = vpop.permute.xlu0 %7025
    %7027 = vrot.lane.b32.xlu0 %v6973, 64
    %v7028 = vpop.permute.xlu0 %7027
    %7029 = vrot.lane.b32.xlu0 %v6977, 64
    %v7030 = vpop.permute.xlu0 %7029
    %7031 = vrot.lane.b32.xlu0 %v6981, 64
    %v7032 = vpop.permute.xlu0 %7031
    %7033 = vrot.lane.b32.xlu0 %v6985, 64
    %v7034 = vpop.permute.xlu0 %7033
    %7035 = vrot.lane.b32.xlu0 %v6989, 64
    %v7036 = vpop.permute.xlu0 %7035
    %7037 = vrot.lane.b32.xlu0 %v6998, 64
    %v7038 = vpop.permute.xlu0 %7037
    %7039 = vrot.lane.b32.xlu0 %v6997, 64
    %v7040 = vpop.permute.xlu0 %7039
    %v7042 = vunpack.c.l.b16 %v6543
    %v7043 = vpack.c.b16 %v6586, %v7042
    %v7044 = vrot.slane %v7043, 2
    %v7045 = vrot.slane %v6627, 2
    %v7046 = vsel %vm1712, %v7044, %v7045
    %v7047 = vrot.slane %v6628, 2
    %v7048 = vsel %vm1712, %v7045, %v7047
    %v7049 = vrot.slane %v6629, 2
    %v7050 = vsel %vm1712, %v7047, %v7049
    %v7051 = vrot.slane %v6630, 2
    %v7052 = vsel %vm1712, %v7049, %v7051
    %v7053 = vrot.slane %v6631, 2
    %v7054 = vsel %vm1712, %v7051, %v7053
    %v7055 = vrot.slane %v6632, 2
    %v7056 = vsel %vm1712, %v7053, %v7055
    %v7057 = vrot.slane %v6633, 2
    %v7058 = vsel %vm1712, %v7055, %v7057
    %v7059 = vrot.slane %v6634, 2
    %v7060 = vsel %vm1712, %v7057, %v7059
    %v7061 = vrot.slane %v6635, 2
    %v7062 = vsel %vm1712, %v7059, %v7061
    %v7063 = vrot.slane %v6636, 2
    %v7064 = vsel %vm1712, %v7061, %v7063
    %v7065 = vrot.slane %v6637, 2
    %v7066 = vsel %vm1712, %v7063, %v7065
    %v7067 = vrot.slane %v6638, 2
    %v7068 = vsel %vm1712, %v7065, %v7067
    %v7069 = vrot.slane %v6639, 2
    %v7070 = vsel %vm1712, %v7067, %v7069
    %v7071 = vrot.slane %v6640, 2
    %v7072 = vsel %vm1712, %v7069, %v7071
    %v7073 = vrot.slane %v6641, 2
    %v7074 = vsel %vm1712, %v7071, %v7073
    %v7075 = vrot.slane %v6642, 2
    %v7076 = vsel %vm1712, %v7073, %v7075
    %v7077 = vrot.slane %v6643, 2
    %v7078 = vsel %vm1712, %v7075, %v7077
    %v7079 = vrot.slane %v6644, 2
    %v7080 = vsel %vm1712, %v7077, %v7079
    %v7081 = vrot.slane %v6645, 2
    %v7082 = vsel %vm1712, %v7079, %v7081
    %v7083 = vrot.slane %v6905, 2
    %v7084 = vsel %vm1712, %v7081, %v7083
    %v7086 = vsel %vm242, %v6626, %v6818
    %v7089 = vsel %vm242, %v6627, %v6820
    %v7092 = vsel %vm242, %v6628, %v6822
    %v7095 = vsel %vm242, %v6629, %v6824
    %v7098 = vsel %vm242, %v6630, %v6826
    %v7101 = vsel %vm242, %v6631, %v6828
    %v7104 = vsel %vm242, %v6632, %v6830
    %v7107 = vsel %vm242, %v6633, %v6832
    %v7110 = vsel %vm242, %v6634, %v6834
    %v7113 = vsel %vm242, %v6635, %v6836
    %v7116 = vsel %vm242, %v6636, %v6838
    %v7119 = vsel %vm242, %v6637, %v6840
    %v7122 = vsel %vm242, %v6638, %v6842
    %v7125 = vsel %vm242, %v6639, %v6844
    %v7128 = vsel %vm242, %v6640, %v6846
    %v7131 = vsel %vm242, %v6641, %v6848
    %v7134 = vsel %vm242, %v6642, %v6850
    %v7137 = vsel %vm242, %v6643, %v6852
    %v7140 = vsel %vm242, %v6644, %v6854
    %v7143 = vsel %vm242, %v6645, %v6856
    %v7147 = vsel %vm242, %v6646, %v6858
    %v7151 = vsel %vm242, %v6864, %v7000
    %v7155 = vsel %vm242, %v6866, %v7002
    %v7159 = vsel %vm242, %v6868, %v7004
    %v7163 = vsel %vm242, %v6870, %v7006
    %v7167 = vsel %vm242, %v6872, %v7008
    %v7171 = vsel %vm242, %v6874, %v7010
    %v7175 = vsel %vm242, %v6876, %v7012
    %v7179 = vsel %vm242, %v6878, %v7014
    %v7183 = vsel %vm242, %v6880, %v7016
    %v7187 = vsel %vm242, %v6882, %v7018
    %v7191 = vsel %vm242, %v6884, %v7020
    %v7195 = vsel %vm242, %v6886, %v7022
    %v7199 = vsel %vm242, %v6888, %v7024
    %v7203 = vsel %vm242, %v6890, %v7026
    %v7207 = vsel %vm242, %v6892, %v7028
    %v7211 = vsel %vm242, %v6894, %v7030
    %v7215 = vsel %vm242, %v6896, %v7032
    %v7219 = vsel %vm242, %v6898, %v7034
    %v7223 = vsel %vm242, %v6900, %v7036
    %v7227 = vsel %vm242, %v6902, %v7038
    %v7231 = vsel %vm242, %v6901, %v7040
    %s7233 = scalar_lea.vmem %s2, 640
    %v7234 = vld [vmem:[%s7233] sm:$0xf]
    %v7235 = vld [vmem:[%s7233 + $0x4] sm:$0xf]
    %v7236 = vld [vmem:[%s7233 + $0x8] sm:$0xf]
    %v7237 = vld [vmem:[%s7233 + $0xc] sm:$0xf]
    %v7238 = vld [vmem:[%s7233 + $0x10] sm:$0xf]
    %v7239 = vld [vmem:[%s7233 + $0x14] sm:$0xf]
    %v7240 = vld [vmem:[%s7233 + $0x18] sm:$0xf]
    %v7241 = vld [vmem:[%s7233 + $0x1c] sm:$0xf]
    %v7242 = vld [vmem:[%s7233 + $0x20] sm:$0xf]
    %v7243 = vld [vmem:[%s7233 + $0x24] sm:$0xf]
    %v7244 = vld [vmem:[%s7233 + $0x28] sm:$0xf]
    %v7245 = vld [vmem:[%s7233 + $0x2c] sm:$0xf]
    %v7246 = vld [vmem:[%s7233 + $0x30] sm:$0xf]
    %v7247 = vld [vmem:[%s7233 + $0x34] sm:$0xf]
    %v7248 = vld [vmem:[%s7233 + $0x38] sm:$0xf]
    %v7249 = vld [vmem:[%s7233 + $0x3c] sm:$0xf]
    %v7250 = vld [vmem:[%s7233 + $0x40] sm:$0xf]
    %v7251 = vld [vmem:[%s7233 + $0x44] sm:$0xf]
    %v7252 = vld [vmem:[%s7233 + $0x48] sm:$0xf]
    %v7253 = vld [vmem:[%s7233 + $0x4c] sm:$0xf]
    %v7254 = vld [vmem:[%s7233 + $0x50] sm:$0xf]
    %v7255 = vld [vmem:[%s7233 + $0x54] sm:$0xf]
    %v7256 = vld [vmem:[%s7233 + $0x58] sm:$0xf]
    %v7257 = vld [vmem:[%s7233 + $0x5c] sm:$0xf]
    %v7258 = vld [vmem:[%s7233 + $0x60] sm:$0xf]
    %v7259 = vld [vmem:[%s7233 + $0x64] sm:$0xf]
    %v7260 = vld [vmem:[%s7233 + $0x68] sm:$0xf]
    %v7261 = vld [vmem:[%s7233 + $0x6c] sm:$0xf]
    %v7262 = vld [vmem:[%s7233 + $0x70] sm:$0xf]
    %v7263 = vld [vmem:[%s7233 + $0x74] sm:$0xf]
    %v7264 = vld [vmem:[%s7233 + $0x78] sm:$0xf]
    %v7265 = vld [vmem:[%s7233 + $0x7c] sm:$0xf]
    %v7266 = vld [vmem:[%s7233 + $0x80] sm:$0xf]
    %v7267 = vld [vmem:[%s7233 + $0x84] sm:$0xf]
    %v7268 = vld [vmem:[%s7233 + $0x88] sm:$0xf]
    %v7269 = vld [vmem:[%s7233 + $0x8c] sm:$0xf]
    %v7270 = vld [vmem:[%s7233 + $0x90] sm:$0xf]
    %v7271 = vld [vmem:[%s7233 + $0x94] sm:$0xf]
    %v7272 = vld [vmem:[%s7233 + $0x98] sm:$0xf]
    %v7273 = vld [vmem:[%s7233 + $0x9c] sm:$0xf]
    %v7314 = vunpack.c.l.b16 %v7234
    %v7315 = vunpack.c.l.b16 %v7235
    %v7316 = vunpack.c.l.b16 %v7236
    %v7317 = vunpack.c.l.b16 %v7237
    %v7318 = vunpack.c.l.b16 %v7238
    %v7319 = vunpack.c.l.b16 %v7239
    %v7320 = vunpack.c.l.b16 %v7240
    %v7321 = vunpack.c.l.b16 %v7241
    %v7322 = vunpack.c.l.b16 %v7242
    %v7323 = vunpack.c.l.b16 %v7243
    %v7324 = vunpack.c.l.b16 %v7244
    %v7325 = vunpack.c.l.b16 %v7245
    %v7326 = vunpack.c.l.b16 %v7246
    %v7327 = vunpack.c.l.b16 %v7247
    %v7328 = vunpack.c.l.b16 %v7248
    %v7329 = vunpack.c.l.b16 %v7249
    %v7330 = vunpack.c.l.b16 %v7250
    %v7331 = vunpack.c.l.b16 %v7251
    %v7332 = vunpack.c.l.b16 %v7252
    %v7333 = vunpack.c.l.b16 %v7253
    %v7334 = vunpack.c.l.b16 %v7254
    %v7335 = vunpack.c.l.b16 %v7255
    %v7336 = vunpack.c.l.b16 %v7256
    %v7337 = vunpack.c.l.b16 %v7257
    %v7338 = vunpack.c.l.b16 %v7258
    %v7339 = vunpack.c.l.b16 %v7259
    %v7340 = vunpack.c.l.b16 %v7260
    %v7341 = vunpack.c.l.b16 %v7261
    %v7342 = vunpack.c.l.b16 %v7262
    %v7343 = vunpack.c.l.b16 %v7263
    %v7344 = vunpack.c.l.b16 %v7264
    %v7345 = vunpack.c.l.b16 %v7265
    %v7346 = vunpack.c.l.b16 %v7266
    %v7347 = vunpack.c.l.b16 %v7267
    %v7348 = vunpack.c.l.b16 %v7268
    %v7349 = vunpack.c.l.b16 %v7269
    %v7350 = vunpack.c.l.b16 %v7270
    %v7351 = vunpack.c.l.b16 %v7271
    %v7352 = vunpack.c.l.b16 %v7272
    %v7353 = vunpack.c.l.b16 %v7273
    %v7354 = vpack.c.b16 %v7315, %v7314
    %v7355 = vpack.c.b16 %v7317, %v7316
    %v7356 = vpack.c.b16 %v7319, %v7318
    %v7357 = vpack.c.b16 %v7321, %v7320
    %v7358 = vpack.c.b16 %v7323, %v7322
    %v7359 = vpack.c.b16 %v7325, %v7324
    %v7360 = vpack.c.b16 %v7327, %v7326
    %v7361 = vpack.c.b16 %v7329, %v7328
    %v7362 = vpack.c.b16 %v7331, %v7330
    %v7363 = vpack.c.b16 %v7333, %v7332
    %v7364 = vpack.c.b16 %v7335, %v7334
    %v7365 = vpack.c.b16 %v7337, %v7336
    %v7366 = vpack.c.b16 %v7339, %v7338
    %v7367 = vpack.c.b16 %v7341, %v7340
    %v7368 = vpack.c.b16 %v7343, %v7342
    %v7369 = vpack.c.b16 %v7345, %v7344
    %v7370 = vpack.c.b16 %v7347, %v7346
    %v7371 = vpack.c.b16 %v7349, %v7348
    %v7372 = vpack.c.b16 %v7351, %v7350
    %v7373 = vpack.c.b16 %v7353, %v7352
    %v7395 = vsel %vm242, %v7046, 0
    %v7398 = vsel %vm242, %v7048, 0
    %v7401 = vsel %vm242, %v7050, 0
    %v7404 = vsel %vm242, %v7052, 0
    %v7407 = vsel %vm242, %v7054, 0
    %v7410 = vsel %vm242, %v7056, 0
    %v7413 = vsel %vm242, %v7058, 0
    %v7416 = vsel %vm242, %v7060, 0
    %v7419 = vsel %vm242, %v7062, 0
    %v7422 = vsel %vm242, %v7064, 0
    %v7425 = vsel %vm242, %v7066, 0
    %v7428 = vsel %vm242, %v7068, 0
    %v7431 = vsel %vm242, %v7070, 0
    %v7434 = vsel %vm242, %v7072, 0
    %v7437 = vsel %vm242, %v7074, 0
    %v7440 = vsel %vm242, %v7076, 0
    %v7443 = vsel %vm242, %v7078, 0
    %v7446 = vsel %vm242, %v7080, 0
    %v7449 = vsel %vm242, %v7082, 0
    %v7452 = vsel %vm242, %v7084, 0
    %v7455 = vsel %vm242, %v7083, 0
    %7457 = vmatpush.bf16.msra.mxu0 %v7361
    %7458 = vmatpush.bf16.msra.mxu0 %v7360
    %7459 = vmatpush.bf16.msra.mxu0 %v7359
    %7460 = vmatpush.bf16.msra.mxu0 %v7358
    %7461 = vmatpush.bf16.msra.mxu0 %v7357
    %7462 = vmatpush.bf16.msra.mxu0 %v7356
    %7463 = vmatpush.bf16.msra.mxu0 %v7355
    %7464 = vmatpush.bf16.msra.mxu0 %v7354
    %7465 = vmatmul.bf16.gmra.mxu0 %v7086
    %v7466 = vpop.f32.mrf.mxu0
    %v7467 = vadd.f32 0.0, %v7466
    %v7468 = vpop.f32.mrf.mxu0
    %v7469 = vadd.f32 0.0, %v7468
    %7470 = vmatmul.bf16.gmra.mxu0 %v7089
    %v7471 = vpop.f32.mrf.mxu0
    %v7472 = vadd.f32 0.0, %v7471
    %v7473 = vpop.f32.mrf.mxu0
    %v7474 = vadd.f32 0.0, %v7473
    %7475 = vmatmul.bf16.gmra.mxu0 %v7092
    %v7476 = vpop.f32.mrf.mxu0
    %v7477 = vadd.f32 0.0, %v7476
    %v7478 = vpop.f32.mrf.mxu0
    %v7479 = vadd.f32 0.0, %v7478
    %7480 = vmatmul.bf16.gmra.mxu0 %v7095
    %v7481 = vpop.f32.mrf.mxu0
    %v7482 = vadd.f32 0.0, %v7481
    %v7483 = vpop.f32.mrf.mxu0
    %v7484 = vadd.f32 0.0, %v7483
    %7485 = vmatmul.bf16.gmra.mxu0 %v7098
    %v7486 = vpop.f32.mrf.mxu0
    %v7487 = vadd.f32 0.0, %v7486
    %v7488 = vpop.f32.mrf.mxu0
    %v7489 = vadd.f32 0.0, %v7488
    %7490 = vmatmul.bf16.gmra.mxu0 %v7101
    %v7491 = vpop.f32.mrf.mxu0
    %v7492 = vadd.f32 0.0, %v7491
    %v7493 = vpop.f32.mrf.mxu0
    %v7494 = vadd.f32 0.0, %v7493
    %7495 = vmatmul.bf16.gmra.mxu0 %v7104
    %v7496 = vpop.f32.mrf.mxu0
    %v7497 = vadd.f32 0.0, %v7496
    %v7498 = vpop.f32.mrf.mxu0
    %v7499 = vadd.f32 0.0, %v7498
    %7500 = vmatmul.bf16.gmra.mxu0 %v7107
    %v7501 = vpop.f32.mrf.mxu0
    %v7502 = vadd.f32 0.0, %v7501
    %v7503 = vpop.f32.mrf.mxu0
    %v7504 = vadd.f32 0.0, %v7503
    %7505 = vmatmul.bf16.gmra.mxu0 %v7110
    %v7506 = vpop.f32.mrf.mxu0
    %v7507 = vadd.f32 0.0, %v7506
    %v7508 = vpop.f32.mrf.mxu0
    %v7509 = vadd.f32 0.0, %v7508
    %7510 = vmatmul.bf16.gmra.mxu0 %v7113
    %v7511 = vpop.f32.mrf.mxu0
    %v7512 = vadd.f32 0.0, %v7511
    %v7513 = vpop.f32.mrf.mxu0
    %v7514 = vadd.f32 0.0, %v7513
    %7515 = vmatmul.bf16.gmra.mxu0 %v7116
    %v7516 = vpop.f32.mrf.mxu0
    %v7517 = vadd.f32 0.0, %v7516
    %v7518 = vpop.f32.mrf.mxu0
    %v7519 = vadd.f32 0.0, %v7518
    %7520 = vmatmul.bf16.gmra.mxu0 %v7119
    %v7521 = vpop.f32.mrf.mxu0
    %v7522 = vadd.f32 0.0, %v7521
    %v7523 = vpop.f32.mrf.mxu0
    %v7524 = vadd.f32 0.0, %v7523
    %7525 = vmatmul.bf16.gmra.mxu0 %v7122
    %v7526 = vpop.f32.mrf.mxu0
    %v7527 = vadd.f32 0.0, %v7526
    %v7528 = vpop.f32.mrf.mxu0
    %v7529 = vadd.f32 0.0, %v7528
    %7530 = vmatmul.bf16.gmra.mxu0 %v7125
    %v7531 = vpop.f32.mrf.mxu0
    %v7532 = vadd.f32 0.0, %v7531
    %v7533 = vpop.f32.mrf.mxu0
    %v7534 = vadd.f32 0.0, %v7533
    %7535 = vmatmul.bf16.gmra.mxu0 %v7128
    %v7536 = vpop.f32.mrf.mxu0
    %v7537 = vadd.f32 0.0, %v7536
    %v7538 = vpop.f32.mrf.mxu0
    %v7539 = vadd.f32 0.0, %v7538
    %7540 = vmatmul.bf16.gmra.mxu0 %v7131
    %v7541 = vpop.f32.mrf.mxu0
    %v7542 = vadd.f32 0.0, %v7541
    %v7543 = vpop.f32.mrf.mxu0
    %v7544 = vadd.f32 0.0, %v7543
    %7545 = vmatmul.bf16.gmra.mxu0 %v7134
    %v7546 = vpop.f32.mrf.mxu0
    %v7547 = vadd.f32 0.0, %v7546
    %v7548 = vpop.f32.mrf.mxu0
    %v7549 = vadd.f32 0.0, %v7548
    %7550 = vmatmul.bf16.gmra.mxu0 %v7137
    %v7551 = vpop.f32.mrf.mxu0
    %v7552 = vadd.f32 0.0, %v7551
    %v7553 = vpop.f32.mrf.mxu0
    %v7554 = vadd.f32 0.0, %v7553
    %7555 = vmatmul.bf16.gmra.mxu0 %v7140
    %v7556 = vpop.f32.mrf.mxu0
    %v7557 = vadd.f32 0.0, %v7556
    %v7558 = vpop.f32.mrf.mxu0
    %v7559 = vadd.f32 0.0, %v7558
    %7560 = vmatmul.bf16.gmra.mxu0 %v7143
    %v7561 = vpop.f32.mrf.mxu0
    %v7562 = vadd.f32 0.0, %v7561
    %v7563 = vpop.f32.mrf.mxu0
    %v7564 = vadd.f32 0.0, %v7563
    %7565 = vmatmul.bf16.gmra.mxu0 %v7147
    %v7566 = vpop.f32.mrf.mxu0
    %v7567 = vadd.f32 0.0, %v7566
    %v7568 = vpop.f32.mrf.mxu0
    %7569 = vdwg.mxu0
    %7570 = vmatpush.bf16.msra.mxu0 %v7369
    %7571 = vmatpush.bf16.msra.mxu0 %v7368
    %7572 = vmatpush.bf16.msra.mxu0 %v7367
    %7573 = vmatpush.bf16.msra.mxu0 %v7366
    %7574 = vmatpush.bf16.msra.mxu0 %v7365
    %7575 = vmatpush.bf16.msra.mxu0 %v7364
    %7576 = vmatpush.bf16.msra.mxu0 %v7363
    %7577 = vmatpush.bf16.msra.mxu0 %v7362
    %7578 = vmatmul.bf16.gmra.mxu0 %v7151
    %v7579 = vpop.f32.mrf.mxu0
    %v7580 = vadd.f32 %v7467, %v7579
    %v7581 = vpop.f32.mrf.mxu0
    %v7582 = vadd.f32 %v7469, %v7581
    %7583 = vmatmul.bf16.gmra.mxu0 %v7155
    %v7584 = vpop.f32.mrf.mxu0
    %v7585 = vadd.f32 %v7472, %v7584
    %v7586 = vpop.f32.mrf.mxu0
    %v7587 = vadd.f32 %v7474, %v7586
    %7588 = vmatmul.bf16.gmra.mxu0 %v7159
    %v7589 = vpop.f32.mrf.mxu0
    %v7590 = vadd.f32 %v7477, %v7589
    %v7591 = vpop.f32.mrf.mxu0
    %v7592 = vadd.f32 %v7479, %v7591
    %7593 = vmatmul.bf16.gmra.mxu0 %v7163
    %v7594 = vpop.f32.mrf.mxu0
    %v7595 = vadd.f32 %v7482, %v7594
    %v7596 = vpop.f32.mrf.mxu0
    %v7597 = vadd.f32 %v7484, %v7596
    %7598 = vmatmul.bf16.gmra.mxu0 %v7167
    %v7599 = vpop.f32.mrf.mxu0
    %v7600 = vadd.f32 %v7487, %v7599
    %v7601 = vpop.f32.mrf.mxu0
    %v7602 = vadd.f32 %v7489, %v7601
    %7603 = vmatmul.bf16.gmra.mxu0 %v7171
    %v7604 = vpop.f32.mrf.mxu0
    %v7605 = vadd.f32 %v7492, %v7604
    %v7606 = vpop.f32.mrf.mxu0
    %v7607 = vadd.f32 %v7494, %v7606
    %7608 = vmatmul.bf16.gmra.mxu0 %v7175
    %v7609 = vpop.f32.mrf.mxu0
    %v7610 = vadd.f32 %v7497, %v7609
    %v7611 = vpop.f32.mrf.mxu0
    %v7612 = vadd.f32 %v7499, %v7611
    %7613 = vmatmul.bf16.gmra.mxu0 %v7179
    %v7614 = vpop.f32.mrf.mxu0
    %v7615 = vadd.f32 %v7502, %v7614
    %v7616 = vpop.f32.mrf.mxu0
    %v7617 = vadd.f32 %v7504, %v7616
    %7618 = vmatmul.bf16.gmra.mxu0 %v7183
    %v7619 = vpop.f32.mrf.mxu0
    %v7620 = vadd.f32 %v7507, %v7619
    %v7621 = vpop.f32.mrf.mxu0
    %v7622 = vadd.f32 %v7509, %v7621
    %7623 = vmatmul.bf16.gmra.mxu0 %v7187
    %v7624 = vpop.f32.mrf.mxu0
    %v7625 = vadd.f32 %v7512, %v7624
    %v7626 = vpop.f32.mrf.mxu0
    %v7627 = vadd.f32 %v7514, %v7626
    %7628 = vmatmul.bf16.gmra.mxu0 %v7191
    %v7629 = vpop.f32.mrf.mxu0
    %v7630 = vadd.f32 %v7517, %v7629
    %v7631 = vpop.f32.mrf.mxu0
    %v7632 = vadd.f32 %v7519, %v7631
    %7633 = vmatmul.bf16.gmra.mxu0 %v7195
    %v7634 = vpop.f32.mrf.mxu0
    %v7635 = vadd.f32 %v7522, %v7634
    %v7636 = vpop.f32.mrf.mxu0
    %v7637 = vadd.f32 %v7524, %v7636
    %7638 = vmatmul.bf16.gmra.mxu0 %v7199
    %v7639 = vpop.f32.mrf.mxu0
    %v7640 = vadd.f32 %v7527, %v7639
    %v7641 = vpop.f32.mrf.mxu0
    %v7642 = vadd.f32 %v7529, %v7641
    %7643 = vmatmul.bf16.gmra.mxu0 %v7203
    %v7644 = vpop.f32.mrf.mxu0
    %v7645 = vadd.f32 %v7532, %v7644
    %v7646 = vpop.f32.mrf.mxu0
    %v7647 = vadd.f32 %v7534, %v7646
    %7648 = vmatmul.bf16.gmra.mxu0 %v7207
    %v7649 = vpop.f32.mrf.mxu0
    %v7650 = vadd.f32 %v7537, %v7649
    %v7651 = vpop.f32.mrf.mxu0
    %v7652 = vadd.f32 %v7539, %v7651
    %7653 = vmatmul.bf16.gmra.mxu0 %v7211
    %v7654 = vpop.f32.mrf.mxu0
    %v7655 = vadd.f32 %v7542, %v7654
    %v7656 = vpop.f32.mrf.mxu0
    %v7657 = vadd.f32 %v7544, %v7656
    %7658 = vmatmul.bf16.gmra.mxu0 %v7215
    %v7659 = vpop.f32.mrf.mxu0
    %v7660 = vadd.f32 %v7547, %v7659
    %v7661 = vpop.f32.mrf.mxu0
    %v7662 = vadd.f32 %v7549, %v7661
    %7663 = vmatmul.bf16.gmra.mxu0 %v7219
    %v7664 = vpop.f32.mrf.mxu0
    %v7665 = vadd.f32 %v7552, %v7664
    %v7666 = vpop.f32.mrf.mxu0
    %v7667 = vadd.f32 %v7554, %v7666
    %7668 = vmatmul.bf16.gmra.mxu0 %v7223
    %v7669 = vpop.f32.mrf.mxu0
    %v7670 = vadd.f32 %v7557, %v7669
    %v7671 = vpop.f32.mrf.mxu0
    %v7672 = vadd.f32 %v7559, %v7671
    %7673 = vmatmul.bf16.gmra.mxu0 %v7227
    %v7674 = vpop.f32.mrf.mxu0
    %v7675 = vadd.f32 %v7562, %v7674
    %v7676 = vpop.f32.mrf.mxu0
    %v7677 = vadd.f32 %v7564, %v7676
    %7678 = vmatmul.bf16.gmra.mxu0 %v7231
    %v7679 = vpop.f32.mrf.mxu0
    %v7680 = vadd.f32 %v7567, %v7679
    %v7681 = vpop.f32.mrf.mxu0
    %7682 = vdwg.mxu0
    %7683 = vmatpush.bf16.msra.mxu0 0
    %7684 = vmatpush.bf16.msra.mxu0 0
    %7685 = vmatpush.bf16.msra.mxu0 0
    %7686 = vmatpush.bf16.msra.mxu0 0
    %7687 = vmatpush.bf16.msra.mxu0 %v7373
    %7688 = vmatpush.bf16.msra.mxu0 %v7372
    %7689 = vmatpush.bf16.msra.mxu0 %v7371
    %7690 = vmatpush.bf16.msra.mxu0 %v7370
    %7691 = vmatmul.bf16.gmra.mxu0 %v7395
    %v7692 = vpop.f32.mrf.mxu0
    %v7693 = vadd.f32 %v7580, %v7692
    %v7694 = vpop.f32.mrf.mxu0
    %v7695 = vadd.f32 %v7582, %v7694
    %7696 = vmatmul.bf16.gmra.mxu0 %v7398
    %v7697 = vpop.f32.mrf.mxu0
    %v7698 = vadd.f32 %v7585, %v7697
    %v7699 = vpop.f32.mrf.mxu0
    %v7700 = vadd.f32 %v7587, %v7699
    %7701 = vmatmul.bf16.gmra.mxu0 %v7401
    %v7702 = vpop.f32.mrf.mxu0
    %v7703 = vadd.f32 %v7590, %v7702
    %v7704 = vpop.f32.mrf.mxu0
    %v7705 = vadd.f32 %v7592, %v7704
    %7706 = vmatmul.bf16.gmra.mxu0 %v7404
    %v7707 = vpop.f32.mrf.mxu0
    %v7708 = vadd.f32 %v7595, %v7707
    %v7709 = vpop.f32.mrf.mxu0
    %v7710 = vadd.f32 %v7597, %v7709
    %7711 = vmatmul.bf16.gmra.mxu0 %v7407
    %v7712 = vpop.f32.mrf.mxu0
    %v7713 = vadd.f32 %v7600, %v7712
    %v7714 = vpop.f32.mrf.mxu0
    %v7715 = vadd.f32 %v7602, %v7714
    %7716 = vmatmul.bf16.gmra.mxu0 %v7410
    %v7717 = vpop.f32.mrf.mxu0
    %v7718 = vadd.f32 %v7605, %v7717
    %v7719 = vpop.f32.mrf.mxu0
    %v7720 = vadd.f32 %v7607, %v7719
    %7721 = vmatmul.bf16.gmra.mxu0 %v7413
    %v7722 = vpop.f32.mrf.mxu0
    %v7723 = vadd.f32 %v7610, %v7722
    %v7724 = vpop.f32.mrf.mxu0
    %v7725 = vadd.f32 %v7612, %v7724
    %7726 = vmatmul.bf16.gmra.mxu0 %v7416
    %v7727 = vpop.f32.mrf.mxu0
    %v7728 = vadd.f32 %v7615, %v7727
    %v7729 = vpop.f32.mrf.mxu0
    %v7730 = vadd.f32 %v7617, %v7729
    %7731 = vmatmul.bf16.gmra.mxu0 %v7419
    %v7732 = vpop.f32.mrf.mxu0
    %v7733 = vadd.f32 %v7620, %v7732
    %v7734 = vpop.f32.mrf.mxu0
    %v7735 = vadd.f32 %v7622, %v7734
    %7736 = vmatmul.bf16.gmra.mxu0 %v7422
    %v7737 = vpop.f32.mrf.mxu0
    %v7738 = vadd.f32 %v7625, %v7737
    %v7739 = vpop.f32.mrf.mxu0
    %v7740 = vadd.f32 %v7627, %v7739
    %7741 = vmatmul.bf16.gmra.mxu0 %v7425
    %v7742 = vpop.f32.mrf.mxu0
    %v7743 = vadd.f32 %v7630, %v7742
    %v7744 = vpop.f32.mrf.mxu0
    %v7745 = vadd.f32 %v7632, %v7744
    %7746 = vmatmul.bf16.gmra.mxu0 %v7428
    %v7747 = vpop.f32.mrf.mxu0
    %v7748 = vadd.f32 %v7635, %v7747
    %v7749 = vpop.f32.mrf.mxu0
    %v7750 = vadd.f32 %v7637, %v7749
    %7751 = vmatmul.bf16.gmra.mxu0 %v7431
    %v7752 = vpop.f32.mrf.mxu0
    %v7753 = vadd.f32 %v7640, %v7752
    %v7754 = vpop.f32.mrf.mxu0
    %v7755 = vadd.f32 %v7642, %v7754
    %7756 = vmatmul.bf16.gmra.mxu0 %v7434
    %v7757 = vpop.f32.mrf.mxu0
    %v7758 = vadd.f32 %v7645, %v7757
    %v7759 = vpop.f32.mrf.mxu0
    %v7760 = vadd.f32 %v7647, %v7759
    %7761 = vmatmul.bf16.gmra.mxu0 %v7437
    %v7762 = vpop.f32.mrf.mxu0
    %v7763 = vadd.f32 %v7650, %v7762
    %v7764 = vpop.f32.mrf.mxu0
    %v7765 = vadd.f32 %v7652, %v7764
    %7766 = vmatmul.bf16.gmra.mxu0 %v7440
    %v7767 = vpop.f32.mrf.mxu0
    %v7768 = vadd.f32 %v7655, %v7767
    %v7769 = vpop.f32.mrf.mxu0
    %v7770 = vadd.f32 %v7657, %v7769
    %7771 = vmatmul.bf16.gmra.mxu0 %v7443
    %v7772 = vpop.f32.mrf.mxu0
    %v7773 = vadd.f32 %v7660, %v7772
    %v7774 = vpop.f32.mrf.mxu0
    %v7775 = vadd.f32 %v7662, %v7774
    %7776 = vmatmul.bf16.gmra.mxu0 %v7446
    %v7777 = vpop.f32.mrf.mxu0
    %v7778 = vadd.f32 %v7665, %v7777
    %v7779 = vpop.f32.mrf.mxu0
    %v7780 = vadd.f32 %v7667, %v7779
    %7781 = vmatmul.bf16.gmra.mxu0 %v7449
    %v7782 = vpop.f32.mrf.mxu0
    %v7783 = vadd.f32 %v7670, %v7782
    %v7784 = vpop.f32.mrf.mxu0
    %v7785 = vadd.f32 %v7672, %v7784
    %7786 = vmatmul.bf16.gmra.mxu0 %v7452
    %v7787 = vpop.f32.mrf.mxu0
    %v7788 = vadd.f32 %v7675, %v7787
    %v7789 = vpop.f32.mrf.mxu0
    %v7790 = vadd.f32 %v7677, %v7789
    %7791 = vmatmul.bf16.gmra.mxu0 %v7455
    %v7792 = vpop.f32.mrf.mxu0
    %v7793 = vadd.f32 %v7680, %v7792
    %v7794 = vpop.f32.mrf.mxu0
    %7795 = vdwg.mxu0
    %v7796 = vadd.f32 %v6458, %v7693
    %v7797 = vadd.f32 %v6459, %v7695
    %v7798 = vadd.f32 %v6460, %v7698
    %v7799 = vadd.f32 %v6461, %v7700
    %v7800 = vadd.f32 %v6462, %v7703
    %v7801 = vadd.f32 %v6463, %v7705
    %v7802 = vadd.f32 %v6464, %v7708
    %v7803 = vadd.f32 %v6465, %v7710
    %v7804 = vadd.f32 %v6466, %v7713
    %v7805 = vadd.f32 %v6467, %v7715
    %v7806 = vadd.f32 %v6468, %v7718
    %v7807 = vadd.f32 %v6469, %v7720
    %v7808 = vadd.f32 %v6470, %v7723
    %v7809 = vadd.f32 %v6471, %v7725
    %v7810 = vadd.f32 %v6472, %v7728
    %v7811 = vadd.f32 %v6473, %v7730
    %v7812 = vadd.f32 %v6474, %v7733
    %v7813 = vadd.f32 %v6475, %v7735
    %v7814 = vadd.f32 %v6476, %v7738
    %v7815 = vadd.f32 %v6477, %v7740
    %v7816 = vadd.f32 %v6478, %v7743
    %v7817 = vadd.f32 %v6479, %v7745
    %v7818 = vadd.f32 %v6480, %v7748
    %v7819 = vadd.f32 %v6481, %v7750
    %v7820 = vadd.f32 %v6482, %v7753
    %v7821 = vadd.f32 %v6483, %v7755
    %v7822 = vadd.f32 %v6484, %v7758
    %v7823 = vadd.f32 %v6485, %v7760
    %v7824 = vadd.f32 %v6486, %v7763
    %v7825 = vadd.f32 %v6487, %v7765
    %v7826 = vadd.f32 %v6488, %v7768
    %v7827 = vadd.f32 %v6489, %v7770
    %v7828 = vadd.f32 %v6490, %v7773
    %v7829 = vadd.f32 %v6491, %v7775
    %v7830 = vadd.f32 %v6492, %v7778
    %v7831 = vadd.f32 %v6493, %v7780
    %v7832 = vadd.f32 %v6494, %v7783
    %v7833 = vadd.f32 %v6495, %v7785
    %v7834 = vadd.f32 %v6496, %v7788
    %v7835 = vadd.f32 %v6497, %v7790
    %v7836 = vadd.f32 %v6498, %v7793
    %v7838 = vperm.slane %v38, 0
    %v7840 = vadd.f32 %v7796, %v7838
    %v7841 = vadd.f32 %v7797, %v7838
    %v7842 = vadd.f32 %v7798, %v7838
    %v7843 = vadd.f32 %v7799, %v7838
    %v7844 = vadd.f32 %v7800, %v7838
    %v7845 = vadd.f32 %v7801, %v7838
    %v7846 = vadd.f32 %v7802, %v7838
    %v7847 = vadd.f32 %v7803, %v7838
    %v7848 = vadd.f32 %v7804, %v7838
    %v7849 = vadd.f32 %v7805, %v7838
    %v7850 = vadd.f32 %v7806, %v7838
    %v7851 = vadd.f32 %v7807, %v7838
    %v7852 = vadd.f32 %v7808, %v7838
    %v7853 = vadd.f32 %v7809, %v7838
    %v7854 = vadd.f32 %v7810, %v7838
    %v7855 = vadd.f32 %v7811, %v7838
    %v7856 = vadd.f32 %v7812, %v7838
    %v7857 = vadd.f32 %v7813, %v7838
    %v7858 = vadd.f32 %v7814, %v7838
    %v7859 = vadd.f32 %v7815, %v7838
    %v7860 = vadd.f32 %v7816, %v7838
    %v7861 = vadd.f32 %v7817, %v7838
    %v7862 = vadd.f32 %v7818, %v7838
    %v7863 = vadd.f32 %v7819, %v7838
    %v7864 = vadd.f32 %v7820, %v7838
    %v7865 = vadd.f32 %v7821, %v7838
    %v7866 = vadd.f32 %v7822, %v7838
    %v7867 = vadd.f32 %v7823, %v7838
    %v7868 = vadd.f32 %v7824, %v7838
    %v7869 = vadd.f32 %v7825, %v7838
    %v7870 = vadd.f32 %v7826, %v7838
    %v7871 = vadd.f32 %v7827, %v7838
    %v7872 = vadd.f32 %v7828, %v7838
    %v7873 = vadd.f32 %v7829, %v7838
    %v7874 = vadd.f32 %v7830, %v7838
    %v7875 = vadd.f32 %v7831, %v7838
    %v7876 = vadd.f32 %v7832, %v7838
    %v7877 = vadd.f32 %v7833, %v7838
    %v7878 = vadd.f32 %v7834, %v7838
    %v7879 = vadd.f32 %v7835, %v7838
    %v7880 = vadd.f32 %v7836, %v7838
    %v7881 = vmax.f32 %v7840, 0.0
    %v7882 = vmax.f32 %v7841, 0.0
    %v7883 = vmax.f32 %v7842, 0.0
    %v7884 = vmax.f32 %v7843, 0.0
    %v7885 = vmax.f32 %v7844, 0.0
    %v7886 = vmax.f32 %v7845, 0.0
    %v7887 = vmax.f32 %v7846, 0.0
    %v7888 = vmax.f32 %v7847, 0.0
    %v7889 = vmax.f32 %v7848, 0.0
    %v7890 = vmax.f32 %v7849, 0.0
    %v7891 = vmax.f32 %v7850, 0.0
    %v7892 = vmax.f32 %v7851, 0.0
    %v7893 = vmax.f32 %v7852, 0.0
    %v7894 = vmax.f32 %v7853, 0.0
    %v7895 = vmax.f32 %v7854, 0.0
    %v7896 = vmax.f32 %v7855, 0.0
    %v7897 = vmax.f32 %v7856, 0.0
    %v7898 = vmax.f32 %v7857, 0.0
    %v7899 = vmax.f32 %v7858, 0.0
    %v7900 = vmax.f32 %v7859, 0.0
    %v7901 = vmax.f32 %v7860, 0.0
    %v7902 = vmax.f32 %v7861, 0.0
    %v7903 = vmax.f32 %v7862, 0.0
    %v7904 = vmax.f32 %v7863, 0.0
    %v7905 = vmax.f32 %v7864, 0.0
    %v7906 = vmax.f32 %v7865, 0.0
    %v7907 = vmax.f32 %v7866, 0.0
    %v7908 = vmax.f32 %v7867, 0.0
    %v7909 = vmax.f32 %v7868, 0.0
    %v7910 = vmax.f32 %v7869, 0.0
    %v7911 = vmax.f32 %v7870, 0.0
    %v7912 = vmax.f32 %v7871, 0.0
    %v7913 = vmax.f32 %v7872, 0.0
    %v7914 = vmax.f32 %v7873, 0.0
    %v7915 = vmax.f32 %v7874, 0.0
    %v7916 = vmax.f32 %v7875, 0.0
    %v7917 = vmax.f32 %v7876, 0.0
    %v7918 = vmax.f32 %v7877, 0.0
    %v7919 = vmax.f32 %v7878, 0.0
    %v7920 = vmax.f32 %v7879, 0.0
    %v7921 = vmax.f32 %v7880, 0.0
    %7922 = vst.msk [vmem:[#allocation3] sm:$0xff] %vm242, %v7881
    %7923 = vst.msk [vmem:[#allocation3 + $0x8] sm:$0xff] %vm242, %v7882
    %7924 = vst.msk [vmem:[#allocation3 + $0x10] sm:$0xff] %vm242, %v7883
    %7925 = vst.msk [vmem:[#allocation3 + $0x18] sm:$0xff] %vm242, %v7884
    %7926 = vst.msk [vmem:[#allocation3 + $0x20] sm:$0xff] %vm242, %v7885
    %7927 = vst.msk [vmem:[#allocation3 + $0x28] sm:$0xff] %vm242, %v7886
    %7928 = vst.msk [vmem:[#allocation3 + $0x30] sm:$0xff] %vm242, %v7887
    %7929 = vst.msk [vmem:[#allocation3 + $0x38] sm:$0xff] %vm242, %v7888
    %7930 = vst.msk [vmem:[#allocation3 + $0x40] sm:$0xff] %vm242, %v7889
    %7931 = vst.msk [vmem:[#allocation3 + $0x48] sm:$0xff] %vm242, %v7890
    %7932 = vst.msk [vmem:[#allocation3 + $0x50] sm:$0xff] %vm242, %v7891
    %7933 = vst.msk [vmem:[#allocation3 + $0x58] sm:$0xff] %vm242, %v7892
    %7934 = vst.msk [vmem:[#allocation3 + $0x60] sm:$0xff] %vm242, %v7893
    %7935 = vst.msk [vmem:[#allocation3 + $0x68] sm:$0xff] %vm242, %v7894
    %7936 = vst.msk [vmem:[#allocation3 + $0x70] sm:$0xff] %vm242, %v7895
    %7937 = vst.msk [vmem:[#allocation3 + $0x78] sm:$0xff] %vm242, %v7896
    %7938 = vst.msk [vmem:[#allocation3 + $0x80] sm:$0xff] %vm242, %v7897
    %7939 = vst.msk [vmem:[#allocation3 + $0x88] sm:$0xff] %vm242, %v7898
    %7940 = vst.msk [vmem:[#allocation3 + $0x90] sm:$0xff] %vm242, %v7899
    %7941 = vst.msk [vmem:[#allocation3 + $0x98] sm:$0xff] %vm242, %v7900
    %7942 = vst.msk [vmem:[#allocation3 + $0xa0] sm:$0xff] %vm242, %v7901
    %7943 = vst.msk [vmem:[#allocation3 + $0xa8] sm:$0xff] %vm242, %v7902
    %7944 = vst.msk [vmem:[#allocation3 + $0xb0] sm:$0xff] %vm242, %v7903
    %7945 = vst.msk [vmem:[#allocation3 + $0xb8] sm:$0xff] %vm242, %v7904
    %7946 = vst.msk [vmem:[#allocation3 + $0xc0] sm:$0xff] %vm242, %v7905
    %7947 = vst.msk [vmem:[#allocation3 + $0xc8] sm:$0xff] %vm242, %v7906
    %7948 = vst.msk [vmem:[#allocation3 + $0xd0] sm:$0xff] %vm242, %v7907
    %7949 = vst.msk [vmem:[#allocation3 + $0xd8] sm:$0xff] %vm242, %v7908
    %7950 = vst.msk [vmem:[#allocation3 + $0xe0] sm:$0xff] %vm242, %v7909
    %7951 = vst.msk [vmem:[#allocation3 + $0xe8] sm:$0xff] %vm242, %v7910
    %7952 = vst.msk [vmem:[#allocation3 + $0xf0] sm:$0xff] %vm242, %v7911
    %7953 = vst.msk [vmem:[#allocation3 + $0xf8] sm:$0xff] %vm242, %v7912
    %7954 = vst.msk [vmem:[#allocation3 + $0x100] sm:$0xff] %vm242, %v7913
    %7955 = vst.msk [vmem:[#allocation3 + $0x108] sm:$0xff] %vm242, %v7914
    %7956 = vst.msk [vmem:[#allocation3 + $0x110] sm:$0xff] %vm242, %v7915
    %7957 = vst.msk [vmem:[#allocation3 + $0x118] sm:$0xff] %vm242, %v7916
    %7958 = vst.msk [vmem:[#allocation3 + $0x120] sm:$0xff] %vm242, %v7917
    %7959 = vst.msk [vmem:[#allocation3 + $0x128] sm:$0xff] %vm242, %v7918
    %7960 = vst.msk [vmem:[#allocation3 + $0x130] sm:$0xff] %vm242, %v7919
    %7961 = vst.msk [vmem:[#allocation3 + $0x138] sm:$0xff] %vm242, %v7920
    %7962 = vst.msk [vmem:[#allocation3 + $0x140] sm:$0xf] %vm21, %v7921
    %v7963 = vld [vmem:[#allocation3] sm:$0xff]
    %v7964 = vld [vmem:[#allocation3 + $0x8] sm:$0xff]
    %v7965 = vld [vmem:[#allocation3 + $0x10] sm:$0xff]
    %v7966 = vld [vmem:[#allocation3 + $0x18] sm:$0xff]
    %v7967 = vld [vmem:[#allocation3 + $0x20] sm:$0xff]
    %v7968 = vld [vmem:[#allocation3 + $0x28] sm:$0xff]
    %v7969 = vld [vmem:[#allocation3 + $0x30] sm:$0xff]
    %v7970 = vld [vmem:[#allocation3 + $0x38] sm:$0xff]
    %v7971 = vld [vmem:[#allocation3 + $0x40] sm:$0xff]
    %v7972 = vld [vmem:[#allocation3 + $0x48] sm:$0xff]
    %v7973 = vld [vmem:[#allocation3 + $0x50] sm:$0xff]
    %v7974 = vld [vmem:[#allocation3 + $0x58] sm:$0xff]
    %v7975 = vld [vmem:[#allocation3 + $0x60] sm:$0xff]
    %v7976 = vld [vmem:[#allocation3 + $0x68] sm:$0xff]
    %v7977 = vld [vmem:[#allocation3 + $0x70] sm:$0xff]
    %v7978 = vld [vmem:[#allocation3 + $0x78] sm:$0xff]
    %v7979 = vld [vmem:[#allocation3 + $0x80] sm:$0xff]
    %v7980 = vld [vmem:[#allocation3 + $0x88] sm:$0xff]
    %v7981 = vld [vmem:[#allocation3 + $0x90] sm:$0xff]
    %v7982 = vld [vmem:[#allocation3 + $0x98] sm:$0xff]
    %v7983 = vld [vmem:[#allocation3 + $0xa0] sm:$0xff]
    %v7984 = vld [vmem:[#allocation3 + $0xa8] sm:$0xff]
    %v7985 = vld [vmem:[#allocation3 + $0xb0] sm:$0xff]
    %v7986 = vld [vmem:[#allocation3 + $0xb8] sm:$0xff]
    %v7987 = vld [vmem:[#allocation3 + $0xc0] sm:$0xff]
    %v7988 = vld [vmem:[#allocation3 + $0xc8] sm:$0xff]
    %v7989 = vld [vmem:[#allocation3 + $0xd0] sm:$0xff]
    %v7990 = vld [vmem:[#allocation3 + $0xd8] sm:$0xff]
    %v7991 = vld [vmem:[#allocation3 + $0xe0] sm:$0xff]
    %v7992 = vld [vmem:[#allocation3 + $0xe8] sm:$0xff]
    %v7993 = vld [vmem:[#allocation3 + $0xf0] sm:$0xff]
    %v7994 = vld [vmem:[#allocation3 + $0x1] sm:$0xff]
    %v7995 = vld [vmem:[#allocation3 + $0x9] sm:$0xff]
    %v7996 = vld [vmem:[#allocation3 + $0x11] sm:$0xff]
    %v7997 = vld [vmem:[#allocation3 + $0x19] sm:$0xff]
    %v7998 = vld [vmem:[#allocation3 + $0x21] sm:$0xff]
    %v7999 = vld [vmem:[#allocation3 + $0x29] sm:$0xff]
    %v8000 = vld [vmem:[#allocation3 + $0x31] sm:$0xff]
    %v8001 = vld [vmem:[#allocation3 + $0x39] sm:$0xff]
    %v8002 = vld [vmem:[#allocation3 + $0x41] sm:$0xff]
    %v8003 = vld [vmem:[#allocation3 + $0x49] sm:$0xff]
    %v8004 = vld [vmem:[#allocation3 + $0x51] sm:$0xff]
    %v8005 = vld [vmem:[#allocation3 + $0x59] sm:$0xff]
    %v8006 = vld [vmem:[#allocation3 + $0x61] sm:$0xff]
    %v8007 = vld [vmem:[#allocation3 + $0x69] sm:$0xff]
    %v8008 = vld [vmem:[#allocation3 + $0x71] sm:$0xff]
    %v8009 = vld [vmem:[#allocation3 + $0x79] sm:$0xff]
    %v8010 = vld [vmem:[#allocation3 + $0x81] sm:$0xff]
    %v8011 = vld [vmem:[#allocation3 + $0x89] sm:$0xff]
    %v8012 = vld [vmem:[#allocation3 + $0x91] sm:$0xff]
    %v8013 = vld [vmem:[#allocation3 + $0x99] sm:$0xff]
    %v8014 = vld [vmem:[#allocation3 + $0xa1] sm:$0xff]
    %v8015 = vld [vmem:[#allocation3 + $0xa9] sm:$0xff]
    %v8016 = vld [vmem:[#allocation3 + $0xb1] sm:$0xff]
    %v8017 = vld [vmem:[#allocation3 + $0xb9] sm:$0xff]
    %v8018 = vld [vmem:[#allocation3 + $0xc1] sm:$0xff]
    %v8019 = vld [vmem:[#allocation3 + $0xc9] sm:$0xff]
    %v8020 = vld [vmem:[#allocation3 + $0xd1] sm:$0xff]
    %v8021 = vld [vmem:[#allocation3 + $0xd9] sm:$0xff]
    %v8022 = vld [vmem:[#allocation3 + $0xe1] sm:$0xff]
    %v8023 = vld [vmem:[#allocation3 + $0xe9] sm:$0xff]
    %v8024 = vld [vmem:[#allocation3 + $0xf1] sm:$0xff]
    %v8025 = vmax.f32 %v7963, %v7994
    %v8026 = vmax.f32 %v7964, %v7995
    %v8027 = vmax.f32 %v7965, %v7996
    %v8028 = vmax.f32 %v7966, %v7997
    %v8029 = vmax.f32 %v7967, %v7998
    %v8030 = vmax.f32 %v7968, %v7999
    %v8031 = vmax.f32 %v7969, %v8000
    %v8032 = vmax.f32 %v7970, %v8001
    %v8033 = vmax.f32 %v7971, %v8002
    %v8034 = vmax.f32 %v7972, %v8003
    %v8035 = vmax.f32 %v7973, %v8004
    %v8036 = vmax.f32 %v7974, %v8005
    %v8037 = vmax.f32 %v7975, %v8006
    %v8038 = vmax.f32 %v7976, %v8007
    %v8039 = vmax.f32 %v7977, %v8008
    %v8040 = vmax.f32 %v7978, %v8009
    %v8041 = vmax.f32 %v7979, %v8010
    %v8042 = vmax.f32 %v7980, %v8011
    %v8043 = vmax.f32 %v7981, %v8012
    %v8044 = vmax.f32 %v7982, %v8013
    %v8045 = vmax.f32 %v7983, %v8014
    %v8046 = vmax.f32 %v7984, %v8015
    %v8047 = vmax.f32 %v7985, %v8016
    %v8048 = vmax.f32 %v7986, %v8017
    %v8049 = vmax.f32 %v7987, %v8018
    %v8050 = vmax.f32 %v7988, %v8019
    %v8051 = vmax.f32 %v7989, %v8020
    %v8052 = vmax.f32 %v7990, %v8021
    %v8053 = vmax.f32 %v7991, %v8022
    %v8054 = vmax.f32 %v7992, %v8023
    %v8055 = vmax.f32 %v7993, %v8024
    %v8056 = vld [vmem:[#allocation3 + $0x12] sm:$0xff]
    %v8057 = vld [vmem:[#allocation3 + $0x1a] sm:$0xff]
    %v8058 = vld [vmem:[#allocation3 + $0x22] sm:$0xff]
    %v8059 = vld [vmem:[#allocation3 + $0x2a] sm:$0xff]
    %v8060 = vld [vmem:[#allocation3 + $0x32] sm:$0xff]
    %v8061 = vld [vmem:[#allocation3 + $0x3a] sm:$0xff]
    %v8062 = vld [vmem:[#allocation3 + $0x42] sm:$0xff]
    %v8063 = vld [vmem:[#allocation3 + $0x4a] sm:$0xff]
    %v8064 = vld [vmem:[#allocation3 + $0x52] sm:$0xff]
    %v8065 = vld [vmem:[#allocation3 + $0x5a] sm:$0xff]
    %v8066 = vld [vmem:[#allocation3 + $0x62] sm:$0xff]
    %v8067 = vld [vmem:[#allocation3 + $0x6a] sm:$0xff]
    %v8068 = vld [vmem:[#allocation3 + $0x72] sm:$0xff]
    %v8069 = vld [vmem:[#allocation3 + $0x7a] sm:$0xff]
    %v8070 = vld [vmem:[#allocation3 + $0x82] sm:$0xff]
    %v8071 = vld [vmem:[#allocation3 + $0x8a] sm:$0xff]
    %v8072 = vld [vmem:[#allocation3 + $0x92] sm:$0xff]
    %v8073 = vld [vmem:[#allocation3 + $0x9a] sm:$0xff]
    %v8074 = vld [vmem:[#allocation3 + $0xa2] sm:$0xff]
    %v8075 = vld [vmem:[#allocation3 + $0xaa] sm:$0xff]
    %v8076 = vld [vmem:[#allocation3 + $0xb2] sm:$0xff]
    %v8077 = vld [vmem:[#allocation3 + $0xba] sm:$0xff]
    %v8078 = vld [vmem:[#allocation3 + $0xc2] sm:$0xff]
    %v8079 = vld [vmem:[#allocation3 + $0xca] sm:$0xff]
    %v8080 = vld [vmem:[#allocation3 + $0xd2] sm:$0xff]
    %v8081 = vld [vmem:[#allocation3 + $0xda] sm:$0xff]
    %v8082 = vld [vmem:[#allocation3 + $0xe2] sm:$0xff]
    %v8083 = vld [vmem:[#allocation3 + $0xea] sm:$0xff]
    %v8084 = vld [vmem:[#allocation3 + $0xf2] sm:$0xff]
    %v8085 = vld [vmem:[#allocation3 + $0xfa] sm:$0xff]
    %v8086 = vld [vmem:[#allocation3 + $0x102] sm:$0xff]
    %v8087 = vld [vmem:[#allocation3 + $0x13] sm:$0xff]
    %v8088 = vld [vmem:[#allocation3 + $0x1b] sm:$0xff]
    %v8089 = vld [vmem:[#allocation3 + $0x23] sm:$0xff]
    %v8090 = vld [vmem:[#allocation3 + $0x2b] sm:$0xff]
    %v8091 = vld [vmem:[#allocation3 + $0x33] sm:$0xff]
    %v8092 = vld [vmem:[#allocation3 + $0x3b] sm:$0xff]
    %v8093 = vld [vmem:[#allocation3 + $0x43] sm:$0xff]
    %v8094 = vld [vmem:[#allocation3 + $0x4b] sm:$0xff]
    %v8095 = vld [vmem:[#allocation3 + $0x53] sm:$0xff]
    %v8096 = vld [vmem:[#allocation3 + $0x5b] sm:$0xff]
    %v8097 = vld [vmem:[#allocation3 + $0x63] sm:$0xff]
    %v8098 = vld [vmem:[#allocation3 + $0x6b] sm:$0xff]
    %v8099 = vld [vmem:[#allocation3 + $0x73] sm:$0xff]
    %v8100 = vld [vmem:[#allocation3 + $0x7b] sm:$0xff]
    %v8101 = vld [vmem:[#allocation3 + $0x83] sm:$0xff]
    %v8102 = vld [vmem:[#allocation3 + $0x8b] sm:$0xff]
    %v8103 = vld [vmem:[#allocation3 + $0x93] sm:$0xff]
    %v8104 = vld [vmem:[#allocation3 + $0x9b] sm:$0xff]
    %v8105 = vld [vmem:[#allocation3 + $0xa3] sm:$0xff]
    %v8106 = vld [vmem:[#allocation3 + $0xab] sm:$0xff]
    %v8107 = vld [vmem:[#allocation3 + $0xb3] sm:$0xff]
    %v8108 = vld [vmem:[#allocation3 + $0xbb] sm:$0xff]
    %v8109 = vld [vmem:[#allocation3 + $0xc3] sm:$0xff]
    %v8110 = vld [vmem:[#allocation3 + $0xcb] sm:$0xff]
    %v8111 = vld [vmem:[#allocation3 + $0xd3] sm:$0xff]
    %v8112 = vld [vmem:[#allocation3 + $0xdb] sm:$0xff]
    %v8113 = vld [vmem:[#allocation3 + $0xe3] sm:$0xff]
    %v8114 = vld [vmem:[#allocation3 + $0xeb] sm:$0xff]
    %v8115 = vld [vmem:[#allocation3 + $0xf3] sm:$0xff]
    %v8116 = vld [vmem:[#allocation3 + $0xfb] sm:$0xff]
    %v8117 = vld [vmem:[#allocation3 + $0x103] sm:$0xff]
    %v8118 = vmax.f32 %v8056, %v8087
    %v8119 = vmax.f32 %v8057, %v8088
    %v8120 = vmax.f32 %v8058, %v8089
    %v8121 = vmax.f32 %v8059, %v8090
    %v8122 = vmax.f32 %v8060, %v8091
    %v8123 = vmax.f32 %v8061, %v8092
    %v8124 = vmax.f32 %v8062, %v8093
    %v8125 = vmax.f32 %v8063, %v8094
    %v8126 = vmax.f32 %v8064, %v8095
    %v8127 = vmax.f32 %v8065, %v8096
    %v8128 = vmax.f32 %v8066, %v8097
    %v8129 = vmax.f32 %v8067, %v8098
    %v8130 = vmax.f32 %v8068, %v8099
    %v8131 = vmax.f32 %v8069, %v8100
    %v8132 = vmax.f32 %v8070, %v8101
    %v8133 = vmax.f32 %v8071, %v8102
    %v8134 = vmax.f32 %v8072, %v8103
    %v8135 = vmax.f32 %v8073, %v8104
    %v8136 = vmax.f32 %v8074, %v8105
    %v8137 = vmax.f32 %v8075, %v8106
    %v8138 = vmax.f32 %v8076, %v8107
    %v8139 = vmax.f32 %v8077, %v8108
    %v8140 = vmax.f32 %v8078, %v8109
    %v8141 = vmax.f32 %v8079, %v8110
    %v8142 = vmax.f32 %v8080, %v8111
    %v8143 = vmax.f32 %v8081, %v8112
    %v8144 = vmax.f32 %v8082, %v8113
    %v8145 = vmax.f32 %v8083, %v8114
    %v8146 = vmax.f32 %v8084, %v8115
    %v8147 = vmax.f32 %v8085, %v8116
    %v8148 = vmax.f32 %v8086, %v8117
    %v8149 = vmax.f32 %v8025, %v8118
    %v8150 = vmax.f32 %v8026, %v8119
    %v8151 = vmax.f32 %v8027, %v8120
    %v8152 = vmax.f32 %v8028, %v8121
    %v8153 = vmax.f32 %v8029, %v8122
    %v8154 = vmax.f32 %v8030, %v8123
    %v8155 = vmax.f32 %v8031, %v8124
    %v8156 = vmax.f32 %v8032, %v8125
    %v8157 = vmax.f32 %v8033, %v8126
    %v8158 = vmax.f32 %v8034, %v8127
    %v8159 = vmax.f32 %v8035, %v8128
    %v8160 = vmax.f32 %v8036, %v8129
    %v8161 = vmax.f32 %v8037, %v8130
    %v8162 = vmax.f32 %v8038, %v8131
    %v8163 = vmax.f32 %v8039, %v8132
    %v8164 = vmax.f32 %v8040, %v8133
    %v8165 = vmax.f32 %v8041, %v8134
    %v8166 = vmax.f32 %v8042, %v8135
    %v8167 = vmax.f32 %v8043, %v8136
    %v8168 = vmax.f32 %v8044, %v8137
    %v8169 = vmax.f32 %v8045, %v8138
    %v8170 = vmax.f32 %v8046, %v8139
    %v8171 = vmax.f32 %v8047, %v8140
    %v8172 = vmax.f32 %v8048, %v8141
    %v8173 = vmax.f32 %v8049, %v8142
    %v8174 = vmax.f32 %v8050, %v8143
    %v8175 = vmax.f32 %v8051, %v8144
    %v8176 = vmax.f32 %v8052, %v8145
    %v8177 = vmax.f32 %v8053, %v8146
    %v8178 = vmax.f32 %v8054, %v8147
    %v8179 = vmax.f32 %v8055, %v8148
    %v8180 = vpack.c.bf16 %v8150, %v8149
    %v8181 = vpack.c.bf16 %v8152, %v8151
    %v8182 = vpack.c.bf16 %v8154, %v8153
    %v8183 = vpack.c.bf16 %v8156, %v8155
    %v8184 = vpack.c.bf16 %v8158, %v8157
    %v8185 = vpack.c.bf16 %v8160, %v8159
    %v8186 = vpack.c.bf16 %v8162, %v8161
    %v8187 = vpack.c.bf16 %v8164, %v8163
    %v8188 = vpack.c.bf16 %v8166, %v8165
    %v8189 = vpack.c.bf16 %v8168, %v8167
    %v8190 = vpack.c.bf16 %v8170, %v8169
    %v8191 = vpack.c.bf16 %v8172, %v8171
    %v8192 = vpack.c.bf16 %v8174, %v8173
    %v8193 = vpack.c.bf16 %v8176, %v8175
    %v8194 = vpack.c.bf16 %v8178, %v8177
    %v8195 = vpack.c.bf16 %v8179, %v8179
    %v8203 = vunpack.c.l.b16 %v39
    %v8204 = vunpack.c.h.b16 %v39
    %v8205 = vunpack.c.l.b16 %v40
    %v8206 = vunpack.c.h.b16 %v40
    %v8207 = vunpack.c.l.b16 %v41
    %v8208 = vunpack.c.h.b16 %v41
    %v8209 = vunpack.c.l.b16 %v42
    %v8210 = vunpack.c.h.b16 %v42
    %v8211 = vunpack.c.l.b16 %v43
    %v8212 = vunpack.c.h.b16 %v43
    %v8213 = vunpack.c.l.b16 %v44
    %v8214 = vunpack.c.h.b16 %v44
    %v8215 = vunpack.c.l.b16 %v45
    %v8216 = vunpack.c.h.b16 %v45
    %v8217 = vpack.c.b16 %v8205, %v8203
    %v8218 = vpack.c.b16 %v8206, %v8204
    %v8219 = vpack.c.b16 %v8209, %v8207
    %v8220 = vpack.c.b16 %v8210, %v8208
    %v8221 = vpack.c.b16 %v8213, %v8211
    %v8222 = vpack.c.b16 %v8214, %v8212
    %v8223 = vpack.c.b16 %v8215, %v8215
    %v8224 = vpack.c.b16 %v8216, %v8216
    %vm8229 = vcmask 982016
    %v8231 = vsel %vm8229, %v8218, 0
    %v8234 = vsel %vm8229, %v8220, 0
    %v8237 = vsel %vm8229, %v8222, 0
    %v8240 = vsel %vm8229, %v8224, 0
    %vm8242 = vcmask 1043456
    %v8244 = vsel %vm8242, %v8195, 0
    %8246 = vmatpush.bf16.msra.mxu0 %v8187
    %8247 = vmatpush.bf16.msra.mxu0 %v8186
    %8248 = vmatpush.bf16.msra.mxu0 %v8185
    %8249 = vmatpush.bf16.msra.mxu0 %v8184
    %8250 = vmatpush.bf16.msra.mxu0 %v8183
    %8251 = vmatpush.bf16.msra.mxu0 %v8182
    %8252 = vmatpush.bf16.msra.mxu0 %v8181
    %8253 = vmatpush.bf16.msra.mxu0 %v8180
    %8254 = vmatmul.bf16.gmra.mxu0 %v8217
    %v8255 = vpop.f32.mrf.mxu0
    %v8256 = vadd.f32 0.0, %v8255
    %v8257 = vpop.f32.mrf.mxu0
    %v8258 = vadd.f32 0.0, %v8257
    %8259 = vmatmul.bf16.gmra.mxu0 %v8219
    %v8260 = vpop.f32.mrf.mxu0
    %v8261 = vadd.f32 0.0, %v8260
    %v8262 = vpop.f32.mrf.mxu0
    %v8263 = vadd.f32 0.0, %v8262
    %8264 = vmatmul.bf16.gmra.mxu0 %v8221
    %v8265 = vpop.f32.mrf.mxu0
    %v8266 = vadd.f32 0.0, %v8265
    %v8267 = vpop.f32.mrf.mxu0
    %v8268 = vadd.f32 0.0, %v8267
    %8269 = vmatmul.bf16.gmra.mxu0 %v8223
    %v8270 = vpop.f32.mrf.mxu0
    %v8271 = vadd.f32 0.0, %v8270
    %v8272 = vpop.f32.mrf.mxu0
    %8273 = vdwg.mxu0
    %8274 = vmatpush.bf16.msra.mxu0 %v8244
    %8275 = vmatpush.bf16.msra.mxu0 %v8194
    %8276 = vmatpush.bf16.msra.mxu0 %v8193
    %8277 = vmatpush.bf16.msra.mxu0 %v8192
    %8278 = vmatpush.bf16.msra.mxu0 %v8191
    %8279 = vmatpush.bf16.msra.mxu0 %v8190
    %8280 = vmatpush.bf16.msra.mxu0 %v8189
    %8281 = vmatpush.bf16.msra.mxu0 %v8188
    %8282 = vmatmul.bf16.gmra.mxu0 %v8231
    %v8283 = vpop.f32.mrf.mxu0
    %v8284 = vadd.f32 %v8256, %v8283
    %v8285 = vpop.f32.mrf.mxu0
    %v8286 = vadd.f32 %v8258, %v8285
    %8287 = vmatmul.bf16.gmra.mxu0 %v8234
    %v8288 = vpop.f32.mrf.mxu0
    %v8289 = vadd.f32 %v8261, %v8288
    %v8290 = vpop.f32.mrf.mxu0
    %v8291 = vadd.f32 %v8263, %v8290
    %8292 = vmatmul.bf16.gmra.mxu0 %v8237
    %v8293 = vpop.f32.mrf.mxu0
    %v8294 = vadd.f32 %v8266, %v8293
    %v8295 = vpop.f32.mrf.mxu0
    %v8296 = vadd.f32 %v8268, %v8295
    %8297 = vmatmul.bf16.gmra.mxu0 %v8240
    %v8298 = vpop.f32.mrf.mxu0
    %v8299 = vadd.f32 %v8271, %v8298
    %v8300 = vpop.f32.mrf.mxu0
    %8301 = vdwg.mxu0
    %v8302 = vpack.c.bf16 %v8284, %v8284
    %v8303 = vpack.c.bf16 %v8286, %v8286
    %v8304 = vpack.c.bf16 %v8289, %v8289
    %v8305 = vpack.c.bf16 %v8291, %v8291
    %v8306 = vpack.c.bf16 %v8294, %v8294
    %v8307 = vpack.c.bf16 %v8296, %v8296
    %v8308 = vpack.c.bf16 %v8299, %v8299
    %s8309 = smul.u32 %s47, 7
    %s8310 = smul.addr %s8309, 4
    %s8311 = scalar_lea.vmem %s5, %s8310
    %8312 = vst.msk [vmem:[%s8311] sm:$0xf] %vm21, %v8302
    %8313 = vst.msk [vmem:[%s8311 + $0x4] sm:$0xf] %vm21, %v8303
    %8314 = vst.msk [vmem:[%s8311 + $0x8] sm:$0xf] %vm21, %v8304
    %8315 = vst.msk [vmem:[%s8311 + $0xc] sm:$0xf] %vm21, %v8305
    %8316 = vst.msk [vmem:[%s8311 + $0x10] sm:$0xf] %vm21, %v8306
    %8317 = vst.msk [vmem:[%s8311 + $0x14] sm:$0xf] %vm21, %v8307
    %vm8318 = vcmask 516096
    %vm8319 = vsmask.f32 256
    %vm8320 = vmand %vm8318, %vm8319
    %v8321 = vld [vmem:[%s8311 + $0x18] sm:$0x1]
    %v8322 = vsel %vm8320, %v8308, %v8321
    %8323 = vst [vmem:[%s8311 + $0x18] sm:$0x1] %v8322
  $region26: #{cnn_forward.2} parent=0 // loop_footer
    %s51 = sadd.s32 1, %s47
  $region27: #{cnn_forward.2} parent=0 // loop_footer_branch
    %46 = sbr.rel target = $region23
  $region28: #{cnn_forward.2} parent=0 // loop_exit
    _
  // Predicated region
  $region29: #{cnn_forward.2} parent=0 // pred_check
    _
  $region30: #{cnn_forward.2} parent=0 // pred_check_branch
    %8325 = sbr.rel (0) target = $region32
  $region31: #{cnn_forward.2} parent=0 // pred_region
    _
  $region32: #{cnn_forward.2} parent=0 // pred_fallthru
    _
  // Predicated region
  $region33: #{cnn_forward.2} parent=0 // pred_check
    _
  $region34: #{cnn_forward.2} parent=0 // pred_check_branch
    %8327 = sbr.rel (0) target = $region36
  $region35: #{cnn_forward.2} parent=0 // pred_region
    _
  $region36: #{cnn_forward.2} parent=0 // pred_fallthru
    _

</llo_original>
